<compile_context>
chip_gen: v7x
topology: tpu7x:2x2x1
jax: 0.10.0
libtpu: 0.0.40
codegen_flags: <defaults>
</compile_context>

<pallas_src>
import functools

import jax
import jax.numpy as jnp
import numpy as np
from jax import lax
from jax.experimental import pallas as pl
from jax.experimental.pallas import tpu as pltpu


_N_SCALE = 15       # radial features: exp(-0.5 / 2.25**s * r2), s = 0..14
_GEO_NF = 12        # per-node geometric features: coord(3) + nforce(3 orders x 3)
_RADIAL_COEFS = np.array([-0.5 / 2.25 ** s for s in range(_N_SCALE)],
                         dtype=np.float32).reshape(1, _N_SCALE)
_HIGHEST = jax.lax.Precision.HIGHEST


def _mm(a, b):
    # Full-precision f32 matmul on the XLA side (matches the in-kernel MXU f32 path).
    return jnp.dot(a, b, precision=_HIGHEST)


def _silu(x):
    return x * jax.nn.sigmoid(x)


# ------------------------------------------------------------------ kernel ---

def ch_pos_gcl_kernel(
    # per-edge inputs (tiled over edges)
    rc_ref,        # (TE, 2)     int32  [row, col]
    ea_ref,        # (TE, D)     f32    edge_attr
    # grid-invariant consts (VMEM resident across grid steps)
    rowT_ref,      # (Np, H+12)  f32    [h @ w1c[:H],   coord, nforce]
    colT_ref,      # (Np, H+12)  f32    [h @ w1c[H:2H], coord, nforce]
    wsmall_ref,    # (18+D, 2H)  f32    [[w1p] | [0 ; w1c_ea]]
    wstack_ref,    # (4, H, H)   f32    [w2c, w2p, ws1, ws2]
    bstack_ref,    # (7, H)      f32    [b1c, b2c, b1p, b2p, bs1, bs2, wa^T]
    ba_ref,        # (1, 1)      f32    attention bias
    rcoef_ref,     # (1, 15)     f32    radial coefficients -0.5/2.25**s
    # outputs (tiled over edges)
    out_ref, chem_ref, pos_ref, cdiff_ref,
):
    f32 = jnp.float32
    te = rc_ref.shape[0]
    n_nodes = rowT_ref.shape[0]
    hdim = wstack_ref.shape[1]

    # ---- node gather via one-hot MXU matmul (first chem linear pre-folded) ------
    idx = rc_ref[...]                                               # (TE, 2)
    node_ids = lax.broadcasted_iota(jnp.int32, (te, n_nodes), 1)    # (TE, Np)
    oh_row = (idx[:, 0:1] == node_ids).astype(f32)
    oh_col = (idx[:, 1:2] == node_ids).astype(f32)
    rowG = jnp.dot(oh_row, rowT_ref[...], preferred_element_type=f32)  # (TE, H+12)
    colG = jnp.dot(oh_col, colT_ref[...], preferred_element_type=f32)
    hW_row = rowG[:, :hdim]                    # h[row] @ w1c[:H]
    hW_col = colG[:, :hdim]                    # h[col] @ w1c[H:2H]
    crow, nvrow = rowG[:, hdim:hdim + 3], rowG[:, hdim + 3:hdim + _GEO_NF]
    ccol, nvcol = colG[:, hdim:hdim + 3], colG[:, hdim + 3:hdim + _GEO_NF]

    # ---- coord2radialplus --------------------------------------------------------
    cdiff = crow - ccol                                             # (TE, 3)
    r2 = jnp.sum(cdiff * cdiff, axis=1, keepdims=True)              # (TE, 1)
    radial = jnp.exp(r2 * rcoef_ref[...])                           # (TE, 15)
    inv_norm = 1.0 / (jnp.sqrt(r2) + 1e-8)                          # reference eps
    cdiff_ref[...] = (cdiff * inv_norm).astype(cdiff_ref.dtype)

    # ---- vec2product on the nforce vectors (flattened [order, dim] -> 9) --------
    prod = nvrow * nvcol                                            # (TE, 9)
    nprod = jnp.concatenate(
        [jnp.sum(prod[:, 0:3], axis=1, keepdims=True),
         jnp.sum(prod[:, 3:6], axis=1, keepdims=True),
         jnp.sum(prod[:, 6:9], axis=1, keepdims=True)], axis=1)     # (TE, 3)

    # ---- fused small matmul: [nprod | radial | ea] @ [[w1p] | [0 ; w1c_ea]] ------
    small_in = jnp.concatenate([nprod, radial, ea_ref[...]], axis=1)   # (TE, 18+D)
    small_out = jnp.dot(small_in, wsmall_ref[...], preferred_element_type=f32)
    pos_pre = small_out[:, :hdim]           # pos first linear, no bias yet
    chem_ea = small_out[:, hdim:]           # edge_attr @ w1c_ea

    b1c, b2c = bstack_ref[0:1, :], bstack_ref[1:2, :]
    b1p, b2p = bstack_ref[2:3, :], bstack_ref[3:4, :]
    bs1, bs2 = bstack_ref[4:5, :], bstack_ref[5:6, :]
    wa_row = bstack_ref[6:7, :]

    # ---- ch_edge_mlp / pos_edge_mlp (Dropout = identity, eval mode) -------------
    chem_lin = hW_row + hW_col + chem_ea + b1c
    chem = jnp.dot(_silu(chem_lin), wstack_ref[0], preferred_element_type=f32) + b2c
    pos_lin = pos_pre + b1p
    pos = jnp.dot(_silu(pos_lin), wstack_ref[1], preferred_element_type=f32) + b2p

    # ---- shallow_mlp(chem) * pos + attention gate (fused epilogue) --------------
    sh_lin = jnp.dot(chem, wstack_ref[2], preferred_element_type=f32) + bs1
    sh = jnp.dot(_silu(sh_lin), wstack_ref[3], preferred_element_type=f32) + bs2
    out = sh * pos
    att_logit = jnp.sum(out * wa_row, axis=1, keepdims=True) + ba_ref[...]
    out = out * jax.nn.sigmoid(att_logit)

    out_ref[...] = out.astype(out_ref.dtype)
    chem_ref[...] = chem.astype(chem_ref.dtype)
    pos_ref[...] = pos.astype(pos_ref.dtype)


# ------------------------------------------------------------------ JAX glue ---

def coord2nforce_jax(row, col, coord, order):
    """Segment-mean of inverse-power-weighted coord differences (per node)."""
    eps = 1e-8
    n = coord.shape[0]
    cdiff = coord[row] - coord[col]                                  # (E, 3)
    norm = jnp.linalg.norm(cdiff, axis=-1, keepdims=True)            # (E, 1)
    nvecs = []
    for alpha in order:
        ordered = (norm ** (-1.0 - alpha)) * cdiff
        summed = jax.ops.segment_sum(ordered, row, num_segments=n)
        count = jax.ops.segment_sum(jnp.ones_like(ordered), row, num_segments=n)
        nforce = summed / jnp.maximum(count, 1.0)
        nforce = nforce / (jnp.linalg.norm(nforce, axis=-1, keepdims=True) + eps)
        nvecs.append(nforce)
    return jnp.stack(nvecs, axis=1)                                  # (N, 3, 3)


def make_params(key, hidden_nf, edges_in_d):
    input_edge = 2 * hidden_nf
    edge_coords_nf = 18

    def lin(k, fan_in, fan_out):
        kw, kb = jax.random.split(k)
        lim = 1.0 / np.sqrt(fan_in)
        w = jax.random.uniform(kw, (fan_in, fan_out), jnp.float32, -lim, lim)
        b = jax.random.uniform(kb, (1, fan_out), jnp.float32, -lim, lim)
        return w, b

    keys = jax.random.split(key, 7)
    p = {}
    p["w1c"], p["b1c"] = lin(keys[0], input_edge + edges_in_d, hidden_nf)
    p["w2c"], p["b2c"] = lin(keys[1], hidden_nf, hidden_nf)
    p["w1p"], p["b1p"] = lin(keys[2], edge_coords_nf + edges_in_d, hidden_nf)
    p["w2p"], p["b2p"] = lin(keys[3], hidden_nf, hidden_nf)
    p["ws1"], p["bs1"] = lin(keys[4], hidden_nf, hidden_nf)
    p["ws2"], p["bs2"] = lin(keys[5], hidden_nf, hidden_nf)
    p["wa"],  p["ba"]  = lin(keys[6], hidden_nf, 1)
    return p


@functools.partial(jax.jit, static_argnames=("tile_e",))
def ch_pos_gcl_forward(params, h, coord, edges, edge_attr, tile_e=1024):
    row = edges[0].astype(jnp.int32)
    col = edges[1].astype(jnp.int32)
    E = row.shape[0]
    N, H = h.shape
    D = edge_attr.shape[1]

    if N > 512:
        # TODO(synk): in-kernel one-hot gather scales O(E*N) in MACs and VMEM;
        # fall back to wrapper-side gathers / paged DMA gather for large graphs.
        raise NotImplementedError("Ch_Pos_GCL Pallas kernel: node table too large "
                                  "for the in-kernel one-hot gather path")

    # Keep enough grid steps that both v7x TensorCores get pipelined work.
    while tile_e > 256 and pl.cdiv(E, tile_e) < 4:
        tile_e //= 2
    tile_e = max(8, tile_e)
    assert tile_e % 8 == 0

    # Node-level scatter work (segment mean) stays in XLA; all per-edge work,
    # including the row/col gathers, happens inside the Pallas kernel.
    nvecs = coord2nforce_jax(row, col, coord, order=[2, 3, 4])        # (N, 3, 3)
    node_geo = jnp.concatenate([coord, nvecs.reshape(N, 9)], axis=1)  # (N, 12)

    # Fold the first chem linear into the gather tables (cheap XLA matmuls).
    w1c, w1p = params["w1c"], params["w1p"]
    rowT = jnp.concatenate([_mm(h, w1c[:H]), node_geo], axis=1)       # (N, H+12)
    colT = jnp.concatenate([_mm(h, w1c[H:2 * H]), node_geo], axis=1)
    n_pad = (-N) % 8
    if n_pad:
        rowT = jnp.pad(rowT, ((0, n_pad), (0, 0)))
        colT = jnp.pad(colT, ((0, n_pad), (0, 0)))

    # Fused small first-layer weight: [nprod|radial|ea] -> [pos_lin | ea@w1c_ea].
    w_small = jnp.concatenate(
        [w1p, jnp.concatenate([jnp.zeros((18, H), w1p.dtype), w1c[2 * H:]], axis=0)],
        axis=1)                                                       # (18+D, 2H)

    w_stack = jnp.stack(
        [params["w2c"], params["w2p"], params["ws1"], params["ws2"]], axis=0)  # (4,H,H)
    b_stack = jnp.concatenate(
        [params["b1c"], params["b2c"], params["b1p"], params["b2p"],
         params["bs1"], params["bs2"], params["wa"].T], axis=0)       # (7, H)
    ba = params["ba"]                                                 # (1, 1)
    rcoef = jnp.asarray(_RADIAL_COEFS)                                # (1, 15)

    # Pad edge streams to a multiple of tile_e (pad edges point at node 0; sliced off).
    e_pad = (-E) % tile_e
    rc = jnp.stack([row, col], axis=1)                                # (E, 2) int32
    ea = edge_attr
    if e_pad:
        rc = jnp.pad(rc, ((0, e_pad), (0, 0)))
        ea = jnp.pad(ea, ((0, e_pad), (0, 0)))
    e_total = E + e_pad
    grid = (e_total // tile_e,)

    def edge_spec(d):
        return pl.BlockSpec((tile_e, d), lambda i: (i, 0))

    def const_spec(shape):
        return pl.BlockSpec(shape, lambda i: (0,) * len(shape))

    consts = [rowT, colT, w_small, w_stack, b_stack, ba, rcoef]
    in_specs = [edge_spec(2), edge_spec(D)] + [const_spec(c.shape) for c in consts]
    out_specs = [edge_spec(H), edge_spec(H), edge_spec(H), edge_spec(3)]
    out_shape = (
        jax.ShapeDtypeStruct((e_total, H), jnp.float32),   # out
        jax.ShapeDtypeStruct((e_total, H), jnp.float32),   # chem
        jax.ShapeDtypeStruct((e_total, H), jnp.float32),   # pos
        jax.ShapeDtypeStruct((e_total, 3), jnp.float32),   # coord_diff
    )

    call = pl.pallas_call(
        ch_pos_gcl_kernel,
        out_shape=out_shape,
        grid_spec=pltpu.PrefetchScalarGridSpec(
            num_scalar_prefetch=0,
            grid=grid,
            in_specs=in_specs,
            out_specs=out_specs,
        ),
        compiler_params=pltpu.CompilerParams(
            dimension_semantics=("parallel",),
            # Per-step footprint at tile_e<=1024, H=128 is ~10 MiB; 40 MiB leaves
            # headroom on every generation including the 64 MiB-VMEM v7x.
            vmem_limit_bytes=40 * 1024 * 1024,
        ),
    )
    out, chem, pos, cdiff = call(rc, ea, *consts)
    if e_pad:
        out, chem, pos, cdiff = out[:E], chem[:E], pos[:E], cdiff[:E]
    return out, chem, pos, cdiff


# ------------------------------------------------------------ pure-JAX reference ---

def reference_forward(params, h, coord, edges, edge_attr):
    row, col = edges[0], edges[1]
    cdiff = coord[row] - coord[col]
    r2 = jnp.sum(cdiff ** 2, axis=1, keepdims=True)
    radial = jnp.concatenate(
        [jnp.exp(-0.5 / 2.25 ** s * r2) for s in range(_N_SCALE)], axis=-1)
    norm = jnp.linalg.norm(cdiff, axis=-1, keepdims=True) + 1e-8
    cdiff_n = cdiff / norm
    nvecs = coord2nforce_jax(row, col, coord, order=[2, 3, 4])
    nprod = (nvecs[row] * nvecs[col]).sum(-1)                         # (E, 3)

    chem_in = jnp.concatenate([h[row], h[col], edge_attr], axis=1)
    pos_in = jnp.concatenate([nprod, radial, edge_attr], axis=1)
    silu = jax.nn.silu
    chem = _mm(silu(_mm(chem_in, params["w1c"]) + params["b1c"]),
               params["w2c"]) + params["b2c"]
    pos = _mm(silu(_mm(pos_in, params["w1p"]) + params["b1p"]),
              params["w2p"]) + params["b2p"]
    sh = _mm(silu(_mm(chem, params["ws1"]) + params["bs1"]),
             params["ws2"]) + params["bs2"]
    out = sh * pos
    att = jax.nn.sigmoid(_mm(out, params["wa"]) + params["ba"])
    out = out * att
    return out, chem, pos, cdiff_n


# ----------------------------------------------------------------------- main ---

if __name__ == "__main__":
    N_NODES = 32
    N_EDGES = 2048
    HIDDEN_NF = 128        # lane-dense (E, H) outputs
    EDGES_IN_D = 4
    TILE_E = 512           # grid (4,) -> >= 2 pipelined steps per v7x TensorCore

    key = jax.random.PRNGKey(0)
    k_h, k_c, k_r, k_o, k_ea, k_p = jax.random.split(key, 6)

    h = jax.random.normal(k_h, (N_NODES, HIDDEN_NF), jnp.float32)
    coord = jax.random.normal(k_c, (N_NODES, 3), jnp.float32)
    row = jax.random.randint(k_r, (N_EDGES,), 0, N_NODES)
    offset = jax.random.randint(k_o, (N_EDGES,), 1, N_NODES)
    col = (row + offset) % N_NODES                    # no self-loops (avoids 0-norm)
    edges = jnp.stack([row, col], axis=0).astype(jnp.int32)           # (2, E)
    edge_attr = jax.random.normal(k_ea, (N_EDGES, EDGES_IN_D), jnp.float32)

    params = make_params(k_p, HIDDEN_NF, EDGES_IN_D)

    out, chem, pos, coord_diff = ch_pos_gcl_forward(
        params, h, coord, edges, edge_attr, tile_e=TILE_E)
    jax.block_until_ready((out, chem, pos, coord_diff))

    ref_out, ref_chem, ref_pos, ref_cdiff = reference_forward(
        params, h, coord, edges, edge_attr)
    np.testing.assert_allclose(np.asarray(out), np.asarray(ref_out), rtol=1e-3, atol=1e-4)
    np.testing.assert_allclose(np.asarray(chem), np.asarray(ref_chem), rtol=1e-3, atol=1e-4)
    np.testing.assert_allclose(np.asarray(pos), np.asarray(ref_pos), rtol=1e-3, atol=1e-4)
    np.testing.assert_allclose(np.asarray(coord_diff), np.asarray(ref_cdiff),
                               rtol=1e-3, atol=1e-4)

    print("KERNEL_OK")
</pallas_src>

<mosaic_0001>
module attributes {stable_mosaic.version = 11 : i64} {
  func.func @ch_pos_gcl_kernel(%arg0: i32, %arg1: memref<512x2xi32, #tpu.memory_space<vmem>>, %arg2: memref<512x4xf32, #tpu.memory_space<vmem>>, %arg3: memref<32x140xf32, #tpu.memory_space<vmem>>, %arg4: memref<32x140xf32, #tpu.memory_space<vmem>>, %arg5: memref<22x256xf32, #tpu.memory_space<vmem>>, %arg6: memref<4x128x128xf32, #tpu.memory_space<vmem>>, %arg7: memref<7x128xf32, #tpu.memory_space<vmem>>, %arg8: memref<1x1xf32, #tpu.memory_space<vmem>>, %arg9: memref<1x15xf32, #tpu.memory_space<vmem>>, %arg10: memref<512x128xf32, #tpu.memory_space<vmem>>, %arg11: memref<512x128xf32, #tpu.memory_space<vmem>>, %arg12: memref<512x128xf32, #tpu.memory_space<vmem>>, %arg13: memref<512x3xf32, #tpu.memory_space<vmem>>) attributes {dimension_semantics = [#tpu.dimension_semantics<parallel>], iteration_bounds = array<i64: 4>, scalar_prefetch = 0 : i64, scratch_operands = 0 : i64, tpu.core_type = #tpu.core_type<tc>, window_params = [{transform_indices = @transform_0, window_bounds = array<i64: 512, 2>}, {transform_indices = @transform_1, window_bounds = array<i64: 512, 4>}, {pipeline_mode = #tpu.pipeline_mode<synchronous>, transform_indices = @transform_2, window_bounds = array<i64: 32, 140>}, {pipeline_mode = #tpu.pipeline_mode<synchronous>, transform_indices = @transform_3, window_bounds = array<i64: 32, 140>}, {pipeline_mode = #tpu.pipeline_mode<synchronous>, transform_indices = @transform_4, window_bounds = array<i64: 22, 256>}, {pipeline_mode = #tpu.pipeline_mode<synchronous>, transform_indices = @transform_5, window_bounds = array<i64: 4, 128, 128>}, {pipeline_mode = #tpu.pipeline_mode<synchronous>, transform_indices = @transform_6, window_bounds = array<i64: 7, 128>}, {pipeline_mode = #tpu.pipeline_mode<synchronous>, transform_indices = @transform_7, window_bounds = array<i64: 1, 1>}, {pipeline_mode = #tpu.pipeline_mode<synchronous>, transform_indices = @transform_8, window_bounds = array<i64: 1, 15>}, {transform_indices = @transform_9, window_bounds = array<i64: 512, 128>}, {transform_indices = @transform_10, window_bounds = array<i64: 512, 128>}, {transform_indices = @transform_11, window_bounds = array<i64: 512, 128>}, {transform_indices = @transform_12, window_bounds = array<i64: 512, 3>}]} {
    %c0 = arith.constant 0 : index
    %c0_0 = arith.constant 0 : index
    %0 = vector.load %arg1[%c0, %c0_0] : memref<512x2xi32, #tpu.memory_space<vmem>>, vector<512x2xi32>
    %1 = tpu.iota {dimensions = array<i32: 1>} : vector<512x32xi32>
    %2 = vector.extract_strided_slice %0 {offsets = [0, 0], sizes = [512, 1], strides = [1, 1]} : vector<512x2xi32> to vector<512x1xi32>
    %3 = vector.broadcast %2 : vector<512x1xi32> to vector<512x32xi32>
    %4 = arith.cmpi eq, %3, %1 : vector<512x32xi32>
    %5 = arith.extui %4 : vector<512x32xi1> to vector<512x32xi32>
    %6 = arith.sitofp %5 : vector<512x32xi32> to vector<512x32xf32>
    %7 = vector.extract_strided_slice %0 {offsets = [0, 1], sizes = [512, 1], strides = [1, 1]} : vector<512x2xi32> to vector<512x1xi32>
    %8 = vector.broadcast %7 : vector<512x1xi32> to vector<512x32xi32>
    %9 = arith.cmpi eq, %8, %1 : vector<512x32xi32>
    %10 = arith.extui %9 : vector<512x32xi1> to vector<512x32xi32>
    %11 = arith.sitofp %10 : vector<512x32xi32> to vector<512x32xf32>
    %c0_1 = arith.constant 0 : index
    %c0_2 = arith.constant 0 : index
    %12 = vector.load %arg3[%c0_1, %c0_2] : memref<32x140xf32, #tpu.memory_space<vmem>>, vector<32x140xf32>
    %cst = arith.constant dense<0.000000e+00> : vector<512x140xf32>
    %13 = tpu.matmul %6, %12, %cst {dimension_numbers = #tpu.dot_dimension_numbers<[1], [0], [0], [1], [0, 0, 1, 1], [], []>} : vector<512x32xf32>, vector<32x140xf32>, vector<512x140xf32> -> vector<512x140xf32>
    %c0_3 = arith.constant 0 : index
    %c0_4 = arith.constant 0 : index
    %14 = vector.load %arg4[%c0_3, %c0_4] : memref<32x140xf32, #tpu.memory_space<vmem>>, vector<32x140xf32>
    %cst_5 = arith.constant dense<0.000000e+00> : vector<512x140xf32>
    %15 = tpu.matmul %11, %14, %cst_5 {dimension_numbers = #tpu.dot_dimension_numbers<[1], [0], [0], [1], [0, 0, 1, 1], [], []>} : vector<512x32xf32>, vector<32x140xf32>, vector<512x140xf32> -> vector<512x140xf32>
    %16 = vector.extract_strided_slice %13 {offsets = [0, 0], sizes = [512, 128], strides = [1, 1]} : vector<512x140xf32> to vector<512x128xf32>
    %17 = vector.extract_strided_slice %15 {offsets = [0, 0], sizes = [512, 128], strides = [1, 1]} : vector<512x140xf32> to vector<512x128xf32>
    %18 = vector.extract_strided_slice %13 {offsets = [0, 128], sizes = [512, 3], strides = [1, 1]} : vector<512x140xf32> to vector<512x3xf32>
    %19 = vector.extract_strided_slice %13 {offsets = [0, 131], sizes = [512, 9], strides = [1, 1]} : vector<512x140xf32> to vector<512x9xf32>
    %20 = vector.extract_strided_slice %15 {offsets = [0, 128], sizes = [512, 3], strides = [1, 1]} : vector<512x140xf32> to vector<512x3xf32>
    %21 = vector.extract_strided_slice %15 {offsets = [0, 131], sizes = [512, 9], strides = [1, 1]} : vector<512x140xf32> to vector<512x9xf32>
    %22 = arith.subf %18, %20 : vector<512x3xf32>
    %23 = arith.mulf %22, %22 : vector<512x3xf32>
    %cst_6 = arith.constant dense<0.000000e+00> : vector<512xf32>
    %24 = vector.multi_reduction <add>, %23, %cst_6 [1] : vector<512x3xf32> to vector<512xf32>
    %25 = vector.shape_cast %24 : vector<512xf32> to vector<512x1xf32>
    %c0_7 = arith.constant 0 : index
    %c0_8 = arith.constant 0 : index
    %26 = vector.load %arg9[%c0_7, %c0_8] : memref<1x15xf32, #tpu.memory_space<vmem>>, vector<1x15xf32>
    %27 = vector.broadcast %25 : vector<512x1xf32> to vector<512x15xf32>
    %28 = vector.broadcast %26 : vector<1x15xf32> to vector<512x15xf32>
    %29 = arith.mulf %27, %28 : vector<512x15xf32>
    %30 = math.exp %29 : vector<512x15xf32>
    %31 = math.sqrt %25 : vector<512x1xf32>
    %cst_9 = arith.constant 9.99999993E-9 : f32
    %32 = vector.broadcast %cst_9 : f32 to vector<512x1xf32>
    %33 = arith.addf %31, %32 : vector<512x1xf32>
    %cst_10 = arith.constant 1.000000e+00 : f32
    %34 = vector.broadcast %cst_10 : f32 to vector<512x1xf32>
    %35 = arith.divf %34, %33 : vector<512x1xf32>
    %36 = vector.broadcast %35 : vector<512x1xf32> to vector<512x3xf32>
    %37 = arith.mulf %22, %36 : vector<512x3xf32>
    %c0_11 = arith.constant 0 : index
    %c0_12 = arith.constant 0 : index
    %38 = vector.load %arg13[%c0_11, %c0_12] : memref<512x3xf32, #tpu.memory_space<vmem>>, vector<512x3xf32>
    tpu.vector_store %arg13[%c0_11, %c0_12], %37 {strides = array<i32>} : memref<512x3xf32, #tpu.memory_space<vmem>>, vector<512x3xf32>,
    %39 = arith.mulf %19, %21 : vector<512x9xf32>
    %40 = vector.extract_strided_slice %39 {offsets = [0, 0], sizes = [512, 3], strides = [1, 1]} : vector<512x9xf32> to vector<512x3xf32>
    %cst_13 = arith.constant dense<0.000000e+00> : vector<512xf32>
    %41 = vector.multi_reduction <add>, %40, %cst_13 [1] : vector<512x3xf32> to vector<512xf32>
    %42 = vector.shape_cast %41 : vector<512xf32> to vector<512x1xf32>
    %43 = vector.extract_strided_slice %39 {offsets = [0, 3], sizes = [512, 3], strides = [1, 1]} : vector<512x9xf32> to vector<512x3xf32>
    %cst_14 = arith.constant dense<0.000000e+00> : vector<512xf32>
    %44 = vector.multi_reduction <add>, %43, %cst_14 [1] : vector<512x3xf32> to vector<512xf32>
    %45 = vector.shape_cast %44 : vector<512xf32> to vector<512x1xf32>
    %46 = vector.extract_strided_slice %39 {offsets = [0, 6], sizes = [512, 3], strides = [1, 1]} : vector<512x9xf32> to vector<512x3xf32>
    %cst_15 = arith.constant dense<0.000000e+00> : vector<512xf32>
    %47 = vector.multi_reduction <add>, %46, %cst_15 [1] : vector<512x3xf32> to vector<512xf32>
    %48 = vector.shape_cast %47 : vector<512xf32> to vector<512x1xf32>
    %49 = tpu.concatenate %42, %45, %48 in 1 : vector<512x1xf32>, vector<512x1xf32>, vector<512x1xf32> -> vector<512x3xf32>
    %c0_16 = arith.constant 0 : index
    %c0_17 = arith.constant 0 : index
    %50 = vector.load %arg2[%c0_16, %c0_17] : memref<512x4xf32, #tpu.memory_space<vmem>>, vector<512x4xf32>
    %51 = tpu.concatenate %49, %30, %50 in 1 : vector<512x3xf32>, vector<512x15xf32>, vector<512x4xf32> -> vector<512x22xf32>
    %c0_18 = arith.constant 0 : index
    %c0_19 = arith.constant 0 : index
    %52 = vector.load %arg5[%c0_18, %c0_19] : memref<22x256xf32, #tpu.memory_space<vmem>>, vector<22x256xf32>
    %cst_20 = arith.constant dense<0.000000e+00> : vector<512x256xf32>
    %53 = tpu.matmul %51, %52, %cst_20 {dimension_numbers = #tpu.dot_dimension_numbers<[1], [0], [0], [1], [0, 0, 1, 1], [], []>} : vector<512x22xf32>, vector<22x256xf32>, vector<512x256xf32> -> vector<512x256xf32>
    %54 = vector.extract_strided_slice %53 {offsets = [0, 0], sizes = [512, 128], strides = [1, 1]} : vector<512x256xf32> to vector<512x128xf32>
    %55 = vector.extract_strided_slice %53 {offsets = [0, 128], sizes = [512, 128], strides = [1, 1]} : vector<512x256xf32> to vector<512x128xf32>
    %c0_21 = arith.constant 0 : index
    %c0_22 = arith.constant 0 : index
    %56 = vector.load %arg7[%c0_21, %c0_22] : memref<7x128xf32, #tpu.memory_space<vmem>>, vector<1x128xf32>
    %c1 = arith.constant 1 : index
    %c0_23 = arith.constant 0 : index
    %57 = vector.load %arg7[%c1, %c0_23] : memref<7x128xf32, #tpu.memory_space<vmem>>, vector<1x128xf32>
    %c2 = arith.constant 2 : index
    %c0_24 = arith.constant 0 : index
    %58 = vector.load %arg7[%c2, %c0_24] : memref<7x128xf32, #tpu.memory_space<vmem>>, vector<1x128xf32>
    %c3 = arith.constant 3 : index
    %c0_25 = arith.constant 0 : index
    %59 = vector.load %arg7[%c3, %c0_25] : memref<7x128xf32, #tpu.memory_space<vmem>>, vector<1x128xf32>
    %c4 = arith.constant 4 : index
    %c0_26 = arith.constant 0 : index
    %60 = vector.load %arg7[%c4, %c0_26] : memref<7x128xf32, #tpu.memory_space<vmem>>, vector<1x128xf32>
    %c5 = arith.constant 5 : index
    %c0_27 = arith.constant 0 : index
    %61 = vector.load %arg7[%c5, %c0_27] : memref<7x128xf32, #tpu.memory_space<vmem>>, vector<1x128xf32>
    %c6 = arith.constant 6 : index
    %c0_28 = arith.constant 0 : index
    %62 = vector.load %arg7[%c6, %c0_28] : memref<7x128xf32, #tpu.memory_space<vmem>>, vector<1x128xf32>
    %63 = arith.addf %16, %17 : vector<512x128xf32>
    %64 = arith.addf %63, %55 : vector<512x128xf32>
    %65 = vector.broadcast %56 : vector<1x128xf32> to vector<512x128xf32>
    %66 = arith.addf %64, %65 : vector<512x128xf32>
    %67 = arith.negf %66 : vector<512x128xf32>
    %68 = math.exp %67 : vector<512x128xf32>
    %cst_29 = arith.constant 1.000000e+00 : f32
    %69 = vector.broadcast %cst_29 : f32 to vector<512x128xf32>
    %70 = arith.addf %69, %68 : vector<512x128xf32>
    %71 = arith.divf %69, %70 : vector<512x128xf32>
    %72 = arith.mulf %66, %71 : vector<512x128xf32>
    %c0_30 = arith.constant 0 : index
    %c0_31 = arith.constant 0 : index
    %c0_32 = arith.constant 0 : index
    %73 = vector.load %arg6[%c0_30, %c0_31, %c0_32] : memref<4x128x128xf32, #tpu.memory_space<vmem>>, vector<1x128x128xf32>
    %74 = vector.shape_cast %73 : vector<1x128x128xf32> to vector<128x128xf32>
    %cst_33 = arith.constant dense<0.000000e+00> : vector<512x128xf32>
    %75 = tpu.matmul %72, %74, %cst_33 {dimension_numbers = #tpu.dot_dimension_numbers<[1], [0], [0], [1], [0, 0, 1, 1], [], []>} : vector<512x128xf32>, vector<128x128xf32>, vector<512x128xf32> -> vector<512x128xf32>
    %76 = vector.broadcast %57 : vector<1x128xf32> to vector<512x128xf32>
    %77 = arith.addf %75, %76 : vector<512x128xf32>
    %78 = vector.broadcast %58 : vector<1x128xf32> to vector<512x128xf32>
    %79 = arith.addf %54, %78 : vector<512x128xf32>
    %80 = arith.negf %79 : vector<512x128xf32>
    %81 = math.exp %80 : vector<512x128xf32>
    %cst_34 = arith.constant 1.000000e+00 : f32
    %82 = vector.broadcast %cst_34 : f32 to vector<512x128xf32>
    %83 = arith.addf %82, %81 : vector<512x128xf32>
    %84 = arith.divf %82, %83 : vector<512x128xf32>
    %85 = arith.mulf %79, %84 : vector<512x128xf32>
    %c1_35 = arith.constant 1 : index
    %c0_36 = arith.constant 0 : index
    %c0_37 = arith.constant 0 : index
    %86 = vector.load %arg6[%c1_35, %c0_36, %c0_37] : memref<4x128x128xf32, #tpu.memory_space<vmem>>, vector<1x128x128xf32>
    %87 = vector.shape_cast %86 : vector<1x128x128xf32> to vector<128x128xf32>
    %cst_38 = arith.constant dense<0.000000e+00> : vector<512x128xf32>
    %88 = tpu.matmul %85, %87, %cst_38 {dimension_numbers = #tpu.dot_dimension_numbers<[1], [0], [0], [1], [0, 0, 1, 1], [], []>} : vector<512x128xf32>, vector<128x128xf32>, vector<512x128xf32> -> vector<512x128xf32>
    %89 = vector.broadcast %59 : vector<1x128xf32> to vector<512x128xf32>
    %90 = arith.addf %88, %89 : vector<512x128xf32>
    %c2_39 = arith.constant 2 : index
    %c0_40 = arith.constant 0 : index
    %c0_41 = arith.constant 0 : index
    %91 = vector.load %arg6[%c2_39, %c0_40, %c0_41] : memref<4x128x128xf32, #tpu.memory_space<vmem>>, vector<1x128x128xf32>
    %92 = vector.shape_cast %91 : vector<1x128x128xf32> to vector<128x128xf32>
    %cst_42 = arith.constant dense<0.000000e+00> : vector<512x128xf32>
    %93 = tpu.matmul %77, %92, %cst_42 {dimension_numbers = #tpu.dot_dimension_numbers<[1], [0], [0], [1], [0, 0, 1, 1], [], []>} : vector<512x128xf32>, vector<128x128xf32>, vector<512x128xf32> -> vector<512x128xf32>
    %94 = vector.broadcast %60 : vector<1x128xf32> to vector<512x128xf32>
    %95 = arith.addf %93, %94 : vector<512x128xf32>
    %96 = arith.negf %95 : vector<512x128xf32>
    %97 = math.exp %96 : vector<512x128xf32>
    %cst_43 = arith.constant 1.000000e+00 : f32
    %98 = vector.broadcast %cst_43 : f32 to vector<512x128xf32>
    %99 = arith.addf %98, %97 : vector<512x128xf32>
    %100 = arith.divf %98, %99 : vector<512x128xf32>
    %101 = arith.mulf %95, %100 : vector<512x128xf32>
    %c3_44 = arith.constant 3 : index
    %c0_45 = arith.constant 0 : index
    %c0_46 = arith.constant 0 : index
    %102 = vector.load %arg6[%c3_44, %c0_45, %c0_46] : memref<4x128x128xf32, #tpu.memory_space<vmem>>, vector<1x128x128xf32>
    %103 = vector.shape_cast %102 : vector<1x128x128xf32> to vector<128x128xf32>
    %cst_47 = arith.constant dense<0.000000e+00> : vector<512x128xf32>
    %104 = tpu.matmul %101, %103, %cst_47 {dimension_numbers = #tpu.dot_dimension_numbers<[1], [0], [0], [1], [0, 0, 1, 1], [], []>} : vector<512x128xf32>, vector<128x128xf32>, vector<512x128xf32> -> vector<512x128xf32>
    %105 = vector.broadcast %61 : vector<1x128xf32> to vector<512x128xf32>
    %106 = arith.addf %104, %105 : vector<512x128xf32>
    %107 = arith.mulf %106, %90 : vector<512x128xf32>
    %108 = vector.broadcast %62 : vector<1x128xf32> to vector<512x128xf32>
    %109 = arith.mulf %107, %108 : vector<512x128xf32>
    %cst_48 = arith.constant dense<0.000000e+00> : vector<512xf32>
    %110 = vector.multi_reduction <add>, %109, %cst_48 [1] : vector<512x128xf32> to vector<512xf32>
    %111 = vector.shape_cast %110 : vector<512xf32> to vector<512x1xf32>
    %c0_49 = arith.constant 0 : index
    %c0_50 = arith.constant 0 : index
    %112 = vector.load %arg8[%c0_49, %c0_50] : memref<1x1xf32, #tpu.memory_space<vmem>>, vector<1x1xf32>
    %113 = vector.broadcast %112 : vector<1x1xf32> to vector<512x1xf32>
    %114 = arith.addf %111, %113 : vector<512x1xf32>
    %115 = arith.negf %114 : vector<512x1xf32>
    %116 = math.exp %115 : vector<512x1xf32>
    %cst_51 = arith.constant 1.000000e+00 : f32
    %117 = vector.broadcast %cst_51 : f32 to vector<512x1xf32>
    %118 = arith.addf %117, %116 : vector<512x1xf32>
    %119 = arith.divf %117, %118 : vector<512x1xf32>
    %120 = vector.broadcast %119 : vector<512x1xf32> to vector<512x128xf32>
    %121 = arith.mulf %107, %120 : vector<512x128xf32>
    %c0_52 = arith.constant 0 : index
    %c0_53 = arith.constant 0 : index
    %122 = vector.load %arg10[%c0_52, %c0_53] : memref<512x128xf32, #tpu.memory_space<vmem>>, vector<512x128xf32>
    tpu.vector_store %arg10[%c0_52, %c0_53], %121 {strides = array<i32>} : memref<512x128xf32, #tpu.memory_space<vmem>>, vector<512x128xf32>,
    %c0_54 = arith.constant 0 : index
    %c0_55 = arith.constant 0 : index
    %123 = vector.load %arg11[%c0_54, %c0_55] : memref<512x128xf32, #tpu.memory_space<vmem>>, vector<512x128xf32>
    tpu.vector_store %arg11[%c0_54, %c0_55], %77 {strides = array<i32>} : memref<512x128xf32, #tpu.memory_space<vmem>>, vector<512x128xf32>,
    %c0_56 = arith.constant 0 : index
    %c0_57 = arith.constant 0 : index
    %124 = vector.load %arg12[%c0_56, %c0_57] : memref<512x128xf32, #tpu.memory_space<vmem>>, vector<512x128xf32>
    tpu.vector_store %arg12[%c0_56, %c0_57], %90 {strides = array<i32>} : memref<512x128xf32, #tpu.memory_space<vmem>>, vector<512x128xf32>,
    return
  }
  func.func @transform_0(%arg0: i32) -> (i32, i32) {
    %c0_i32 = arith.constant 0 : i32
    %c0_i32_0 = arith.constant 0 : i32
    return %arg0, %c0_i32 : i32, i32
  }
  func.func @transform_1(%arg0: i32) -> (i32, i32) {
    %c0_i32 = arith.constant 0 : i32
    %c0_i32_0 = arith.constant 0 : i32
    return %arg0, %c0_i32 : i32, i32
  }
  func.func @transform_2(%arg0: i32) -> (i32, i32) {
    %c0_i32 = arith.constant 0 : i32
    %c0_i32_0 = arith.constant 0 : i32
    %c0_i32_1 = arith.constant 0 : i32
    return %c0_i32, %c0_i32_0 : i32, i32
  }
  func.func @transform_3(%arg0: i32) -> (i32, i32) {
    %c0_i32 = arith.constant 0 : i32
    %c0_i32_0 = arith.constant 0 : i32
    %c0_i32_1 = arith.constant 0 : i32
    return %c0_i32, %c0_i32_0 : i32, i32
  }
  func.func @transform_4(%arg0: i32) -> (i32, i32) {
    %c0_i32 = arith.constant 0 : i32
    %c0_i32_0 = arith.constant 0 : i32
    %c0_i32_1 = arith.constant 0 : i32
    return %c0_i32, %c0_i32_0 : i32, i32
  }
  func.func @transform_5(%arg0: i32) -> (i32, i32, i32) {
    %c0_i32 = arith.constant 0 : i32
    %c0_i32_0 = arith.constant 0 : i32
    %c0_i32_1 = arith.constant 0 : i32
    %c0_i32_2 = arith.constant 0 : i32
    return %c0_i32, %c0_i32_0, %c0_i32_1 : i32, i32, i32
  }
  func.func @transform_6(%arg0: i32) -> (i32, i32) {
    %c0_i32 = arith.constant 0 : i32
    %c0_i32_0 = arith.constant 0 : i32
    %c0_i32_1 = arith.constant 0 : i32
    return %c0_i32, %c0_i32_0 : i32, i32
  }
  func.func @transform_7(%arg0: i32) -> (i32, i32) {
    %c0_i32 = arith.constant 0 : i32
    %c0_i32_0 = arith.constant 0 : i32
    %c0_i32_1 = arith.constant 0 : i32
    return %c0_i32, %c0_i32_0 : i32, i32
  }
  func.func @transform_8(%arg0: i32) -> (i32, i32) {
    %c0_i32 = arith.constant 0 : i32
    %c0_i32_0 = arith.constant 0 : i32
    %c0_i32_1 = arith.constant 0 : i32
    return %c0_i32, %c0_i32_0 : i32, i32
  }
  func.func @transform_9(%arg0: i32) -> (i32, i32) {
    %c0_i32 = arith.constant 0 : i32
    %c0_i32_0 = arith.constant 0 : i32
    return %arg0, %c0_i32 : i32, i32
  }
  func.func @transform_10(%arg0: i32) -> (i32, i32) {
    %c0_i32 = arith.constant 0 : i32
    %c0_i32_0 = arith.constant 0 : i32
    return %arg0, %c0_i32 : i32, i32
  }
  func.func @transform_11(%arg0: i32) -> (i32, i32) {
    %c0_i32 = arith.constant 0 : i32
    %c0_i32_0 = arith.constant 0 : i32
    return %arg0, %c0_i32 : i32, i32
  }
  func.func @transform_12(%arg0: i32) -> (i32, i32) {
    %c0_i32 = arith.constant 0 : i32
    %c0_i32_0 = arith.constant 0 : i32
    return %arg0, %c0_i32 : i32, i32
  }
}

</mosaic_0001>

<llo_original>
// kernel: ch_pos_gcl_forward.1
$region0: #{ch_pos_gcl_forward.1}
  #allocation0 [shape = 'u32[]', space=smem, size = 0x4, offset = 0x4, fixed_abs, tag = 'smem constant byte address 0x4 - core index']
  #allocation1 [shape = 'u32[144,128]{1,0:T(1,128)}', space=vmem, size = 0x12000, scoped, tag = 'internal scratch']
  #allocation2 [shape = 'f32[1,1]{1,0:T(1,128)S(1)}', space=vmem, size = 0x200, scoped, tag = 'scoped memory for ch_pos_gcl_forward.1']
  %s0 = inlined_call_operand.vmem [shape: s32[2048,2], index: 0, kind: input, shape index: {}]
  %s1 = inlined_call_operand.vmem [shape: f32[2048,4], index: 1, kind: input, shape index: {}]
  %s2 = inlined_call_operand.vmem [shape: f32[32,140], index: 2, kind: input, shape index: {}]
  %s3 = inlined_call_operand.vmem [shape: f32[32,140], index: 3, kind: input, shape index: {}]
  %s4 = inlined_call_operand.vmem [shape: f32[22,256], index: 4, kind: input, shape index: {}]
  %s5 = inlined_call_operand.vmem [shape: f32[4,128,128], index: 5, kind: input, shape index: {}]
  %s6 = inlined_call_operand.vmem [shape: f32[7,128], index: 6, kind: input, shape index: {}]
  %s7 = inlined_call_operand.<no memory space> [shape: f32[1,1], index: 7, kind: input, shape index: {}]
  %s8 = inlined_call_operand.vmem [shape: f32[1,15], index: 8, kind: input, shape index: {}]
  %s9 = inlined_call_operand.hbm [shape: f32[2048,128], index: 9, kind: output, shape index: {0}]
  %s10 = inlined_call_operand.hbm [shape: f32[2048,128], index: 10, kind: output, shape index: {1}]
  %s11 = inlined_call_operand.hbm [shape: f32[2048,128], index: 11, kind: output, shape index: {2}]
  %s12 = inlined_call_operand.vmem [shape: f32[2048,3], index: 12, kind: output, shape index: {3}]
  %13 = xla_tuple %s9, %s10, %s11, %s12
  %s14 = sld [smem:[#allocation0]]
  $region93: #{ch_pos_gcl_forward.1} parent=0
    _
  %s16 = ssub.s32 1, %s14
  %s17 = scalar_select 0, %s16, %s14
  %v18 = vstv %s7
  %19 = vst [vmem:[#allocation2] sm:$0x1] %v18
  $region1: #{ch_pos_gcl_forward.1} parent=0
    #allocation3 [shape = 'u8[524288]{0}', space=vmem, size = 0x80000, scoped, tag = 'output window, operand 0']
    #allocation4 [shape = 's32[2]{0}', space=sflag, size = 0x8, scoped, tag = 'scoped memory for ch_pos_gcl_forward.1']
    #allocation5 [shape = 'u8[524288]{0}', space=vmem, size = 0x80000, scoped, tag = 'output window, operand 1']
    #allocation6 [shape = 's32[2]{0}', space=sflag, size = 0x8, scoped, tag = 'scoped memory for ch_pos_gcl_forward.1']
    #allocation7 [shape = 'u8[524288]{0}', space=vmem, size = 0x80000, scoped, tag = 'output window, operand 2']
    %20 = vsyncpa [#allocation4], 0
    %s21 = scalar_lea.sflag [#allocation4], 1
    %22 = vsyncpa %s21, 0
    %23 = vsyncpa [#allocation6], 0
    %s24 = scalar_lea.sflag [#allocation6], 1
    %25 = vsyncpa %s24, 0
    loop: start=0, step=1, limit=6
    $region2: #{ch_pos_gcl_forward.1} parent=1 // loop_pre_header
      _
    $region3: #{ch_pos_gcl_forward.1} parent=1 // loop_header
      %s27 = sphi 0, %s31
      %p28 = scmp.ge.s32.totalorder %s27, 6
      %s37 = sphi 0, %s39
      %s40 = sphi 0, %s37
      %s41 = sphi 0, %s40
      %s57 = sphi 0, %s41
      %s63 = sphi 0, %s65
      %s66 = sphi 0, %s63
      %s67 = sphi 0, %s66
      %s83 = sphi 0, %s67
      %s87 = sphi 0, %s87
      %s89 = sphi 0, %s87
      %s90 = sphi 0, %s89
      %s104 = sphi 0, %s90
      %s108 = sphi 0, %s108
      %s110 = sphi 0, %s108
      %s111 = sphi 0, %s110
      %s125 = sphi 0, %s111
      %s129 = sphi 0, %s129
      %s131 = sphi 0, %s129
      %s132 = sphi 0, %s131
      %s146 = sphi 0, %s132
      %s150 = sphi 0, %s150
      %s152 = sphi 0, %s150
      %s153 = sphi 0, %s152
      %s167 = sphi 0, %s153
      %s171 = sphi 0, %s171
      %s173 = sphi 0, %s171
      %s174 = sphi 0, %s173
      %s188 = sphi 0, %s174
      %s192 = sphi 0, %s192
      %s194 = sphi 0, %s192
      %s195 = sphi 0, %s194
      %s209 = sphi 0, %s195
      %s213 = sphi 0, %s213
      %s215 = sphi 0, %s213
      %s216 = sphi 0, %s215
      %s230 = sphi 0, %s216
      %s236 = sphi 0, %s238
      %s239 = sphi 0, %s236
      %s240 = sphi 0, %s239
      %s256 = sphi 0, %s240
      %s262 = sphi 0, %s264
      %s265 = sphi 0, %s262
      %s266 = sphi 0, %s265
      %s282 = sphi 0, %s266
      %s288 = sphi 0, %s290
      %s291 = sphi 0, %s288
      %s292 = sphi 0, %s291
      %s308 = sphi 0, %s292
      %s314 = sphi 0, %s316
      %s317 = sphi 0, %s314
      %s318 = sphi 0, %s317
      %s334 = sphi 0, %s318
    $region4: #{ch_pos_gcl_forward.1} parent=1 // loop_header_branch
      %30 = sbr.rel (%p28) target = $region8
    $region5: #{ch_pos_gcl_forward.1} parent=1 // loop_body
      %s32 = ssub.s32 %s27, 1
      %s33 = ssub.s32 %s27, 2
      %s34 = sadd.s32 %s27, 1
      %s35 = ssub.s32 %s27, %s34
      %p36 = scmp.eq.s32.totalorder %s35, 0
      %s38 = sadd.s32 %s37, 1
      %s39 = scalar_select %p36, %s37, %s38
      %p42 = pneg %p36
      %p43 = scmp.eq.s32.totalorder %s27, 3
      %p44 = por %p42, %p43
      %p45 = scmp.ne.s32.totalorder %s37, %s40
      %p46 = scmp.eq.s32.totalorder %s27, 0
      %p47 = por %p45, %p46
      %p48 = scmp.ne.s32.totalorder %s37, %s40
      %p49 = scmp.eq.s32.totalorder %s32, 3
      %p50 = por %p48, %p49
      %p51 = scmp.ne.s32.totalorder %s40, %s41
      %p52 = scmp.eq.s32.totalorder %s32, 0
      %p53 = por %p51, %p52
      %p54 = scmp.ne.s32.totalorder %s40, %s41
      %p55 = scmp.eq.s32.totalorder %s33, 3
      %p56 = por %p54, %p55
      %p58 = scmp.ne.s32.totalorder %s41, %s57
      %p59 = scmp.eq.s32.totalorder %s33, 0
      %p60 = por %p58, %p59
      %s61 = ssub.s32 %s27, %s34
      %p62 = scmp.eq.s32.totalorder %s61, 0
      %s64 = sadd.s32 %s63, 1
      %s65 = scalar_select %p62, %s63, %s64
      %p68 = pneg %p62
      %p69 = scmp.eq.s32.totalorder %s27, 3
      %p70 = por %p68, %p69
      %p71 = scmp.ne.s32.totalorder %s63, %s66
      %p72 = scmp.eq.s32.totalorder %s27, 0
      %p73 = por %p71, %p72
      %p74 = scmp.ne.s32.totalorder %s63, %s66
      %p75 = scmp.eq.s32.totalorder %s32, 3
      %p76 = por %p74, %p75
      %p77 = scmp.ne.s32.totalorder %s66, %s67
      %p78 = scmp.eq.s32.totalorder %s32, 0
      %p79 = por %p77, %p78
      %p80 = scmp.ne.s32.totalorder %s66, %s67
      %p81 = scmp.eq.s32.totalorder %s33, 3
      %p82 = por %p80, %p81
      %p84 = scmp.ne.s32.totalorder %s67, %s83
      %p85 = scmp.eq.s32.totalorder %s33, 0
      %p86 = por %p84, %p85
      %s88 = sadd.s32 %s87, 1
      %p91 = scmp.eq.s32.totalorder %s27, 3
      %p92 = scmp.ne.s32.totalorder %s87, %s89
      %p93 = scmp.eq.s32.totalorder %s27, 0
      %p94 = por %p92, %p93
      %p95 = scmp.ne.s32.totalorder %s87, %s89
      %p96 = scmp.eq.s32.totalorder %s32, 3
      %p97 = por %p95, %p96
      %p98 = scmp.ne.s32.totalorder %s89, %s90
      %p99 = scmp.eq.s32.totalorder %s32, 0
      %p100 = por %p98, %p99
      %p101 = scmp.ne.s32.totalorder %s89, %s90
      %p102 = scmp.eq.s32.totalorder %s33, 3
      %p103 = por %p101, %p102
      %p105 = scmp.ne.s32.totalorder %s90, %s104
      %p106 = scmp.eq.s32.totalorder %s33, 0
      %p107 = por %p105, %p106
      %s109 = sadd.s32 %s108, 1
      %p112 = scmp.eq.s32.totalorder %s27, 3
      %p113 = scmp.ne.s32.totalorder %s108, %s110
      %p114 = scmp.eq.s32.totalorder %s27, 0
      %p115 = por %p113, %p114
      %p116 = scmp.ne.s32.totalorder %s108, %s110
      %p117 = scmp.eq.s32.totalorder %s32, 3
      %p118 = por %p116, %p117
      %p119 = scmp.ne.s32.totalorder %s110, %s111
      %p120 = scmp.eq.s32.totalorder %s32, 0
      %p121 = por %p119, %p120
      %p122 = scmp.ne.s32.totalorder %s110, %s111
      %p123 = scmp.eq.s32.totalorder %s33, 3
      %p124 = por %p122, %p123
      %p126 = scmp.ne.s32.totalorder %s111, %s125
      %p127 = scmp.eq.s32.totalorder %s33, 0
      %p128 = por %p126, %p127
      %s130 = sadd.s32 %s129, 1
      %p133 = scmp.eq.s32.totalorder %s27, 3
      %p134 = scmp.ne.s32.totalorder %s129, %s131
      %p135 = scmp.eq.s32.totalorder %s27, 0
      %p136 = por %p134, %p135
      %p137 = scmp.ne.s32.totalorder %s129, %s131
      %p138 = scmp.eq.s32.totalorder %s32, 3
      %p139 = por %p137, %p138
      %p140 = scmp.ne.s32.totalorder %s131, %s132
      %p141 = scmp.eq.s32.totalorder %s32, 0
      %p142 = por %p140, %p141
      %p143 = scmp.ne.s32.totalorder %s131, %s132
      %p144 = scmp.eq.s32.totalorder %s33, 3
      %p145 = por %p143, %p144
      %p147 = scmp.ne.s32.totalorder %s132, %s146
      %p148 = scmp.eq.s32.totalorder %s33, 0
      %p149 = por %p147, %p148
      %s151 = sadd.s32 %s150, 1
      %p154 = scmp.eq.s32.totalorder %s27, 3
      %p155 = scmp.ne.s32.totalorder %s150, %s152
      %p156 = scmp.eq.s32.totalorder %s27, 0
      %p157 = por %p155, %p156
      %p158 = scmp.ne.s32.totalorder %s150, %s152
      %p159 = scmp.eq.s32.totalorder %s32, 3
      %p160 = por %p158, %p159
      %p161 = scmp.ne.s32.totalorder %s152, %s153
      %p162 = scmp.eq.s32.totalorder %s32, 0
      %p163 = por %p161, %p162
      %p164 = scmp.ne.s32.totalorder %s152, %s153
      %p165 = scmp.eq.s32.totalorder %s33, 3
      %p166 = por %p164, %p165
      %p168 = scmp.ne.s32.totalorder %s153, %s167
      %p169 = scmp.eq.s32.totalorder %s33, 0
      %p170 = por %p168, %p169
      %s172 = sadd.s32 %s171, 1
      %p175 = scmp.eq.s32.totalorder %s27, 3
      %p176 = scmp.ne.s32.totalorder %s171, %s173
      %p177 = scmp.eq.s32.totalorder %s27, 0
      %p178 = por %p176, %p177
      %p179 = scmp.ne.s32.totalorder %s171, %s173
      %p180 = scmp.eq.s32.totalorder %s32, 3
      %p181 = por %p179, %p180
      %p182 = scmp.ne.s32.totalorder %s173, %s174
      %p183 = scmp.eq.s32.totalorder %s32, 0
      %p184 = por %p182, %p183
      %p185 = scmp.ne.s32.totalorder %s173, %s174
      %p186 = scmp.eq.s32.totalorder %s33, 3
      %p187 = por %p185, %p186
      %p189 = scmp.ne.s32.totalorder %s174, %s188
      %p190 = scmp.eq.s32.totalorder %s33, 0
      %p191 = por %p189, %p190
      %s193 = sadd.s32 %s192, 1
      %p196 = scmp.eq.s32.totalorder %s27, 3
      %p197 = scmp.ne.s32.totalorder %s192, %s194
      %p198 = scmp.eq.s32.totalorder %s27, 0
      %p199 = por %p197, %p198
      %p200 = scmp.ne.s32.totalorder %s192, %s194
      %p201 = scmp.eq.s32.totalorder %s32, 3
      %p202 = por %p200, %p201
      %p203 = scmp.ne.s32.totalorder %s194, %s195
      %p204 = scmp.eq.s32.totalorder %s32, 0
      %p205 = por %p203, %p204
      %p206 = scmp.ne.s32.totalorder %s194, %s195
      %p207 = scmp.eq.s32.totalorder %s33, 3
      %p208 = por %p206, %p207
      %p210 = scmp.ne.s32.totalorder %s195, %s209
      %p211 = scmp.eq.s32.totalorder %s33, 0
      %p212 = por %p210, %p211
      %s214 = sadd.s32 %s213, 1
      %p217 = scmp.eq.s32.totalorder %s27, 3
      %p218 = scmp.ne.s32.totalorder %s213, %s215
      %p219 = scmp.eq.s32.totalorder %s27, 0
      %p220 = por %p218, %p219
      %p221 = scmp.ne.s32.totalorder %s213, %s215
      %p222 = scmp.eq.s32.totalorder %s32, 3
      %p223 = por %p221, %p222
      %p224 = scmp.ne.s32.totalorder %s215, %s216
      %p225 = scmp.eq.s32.totalorder %s32, 0
      %p226 = por %p224, %p225
      %p227 = scmp.ne.s32.totalorder %s215, %s216
      %p228 = scmp.eq.s32.totalorder %s33, 3
      %p229 = por %p227, %p228
      %p231 = scmp.ne.s32.totalorder %s216, %s230
      %p232 = scmp.eq.s32.totalorder %s33, 0
      %p233 = por %p231, %p232
      %s234 = ssub.s32 %s27, %s34
      %p235 = scmp.eq.s32.totalorder %s234, 0
      %s237 = sadd.s32 %s236, 1
      %s238 = scalar_select %p235, %s236, %s237
      %p241 = pneg %p235
      %p242 = scmp.eq.s32.totalorder %s27, 3
      %p243 = por %p241, %p242
      %p244 = scmp.ne.s32.totalorder %s236, %s239
      %p245 = scmp.eq.s32.totalorder %s27, 0
      %p246 = por %p244, %p245
      %p247 = scmp.ne.s32.totalorder %s236, %s239
      %p248 = scmp.eq.s32.totalorder %s32, 3
      %p249 = por %p247, %p248
      %p250 = scmp.ne.s32.totalorder %s239, %s240
      %p251 = scmp.eq.s32.totalorder %s32, 0
      %p252 = por %p250, %p251
      %p253 = scmp.ne.s32.totalorder %s239, %s240
      %p254 = scmp.eq.s32.totalorder %s33, 3
      %p255 = por %p253, %p254
      %p257 = scmp.ne.s32.totalorder %s240, %s256
      %p258 = scmp.eq.s32.totalorder %s33, 0
      %p259 = por %p257, %p258
      %s260 = ssub.s32 %s27, %s34
      %p261 = scmp.eq.s32.totalorder %s260, 0
      %s263 = sadd.s32 %s262, 1
      %s264 = scalar_select %p261, %s262, %s263
      %p267 = pneg %p261
      %p268 = scmp.eq.s32.totalorder %s27, 3
      %p269 = por %p267, %p268
      %p270 = scmp.ne.s32.totalorder %s262, %s265
      %p271 = scmp.eq.s32.totalorder %s27, 0
      %p272 = por %p270, %p271
      %p273 = scmp.ne.s32.totalorder %s262, %s265
      %p274 = scmp.eq.s32.totalorder %s32, 3
      %p275 = por %p273, %p274
      %p276 = scmp.ne.s32.totalorder %s265, %s266
      %p277 = scmp.eq.s32.totalorder %s32, 0
      %p278 = por %p276, %p277
      %p279 = scmp.ne.s32.totalorder %s265, %s266
      %p280 = scmp.eq.s32.totalorder %s33, 3
      %p281 = por %p279, %p280
      %p283 = scmp.ne.s32.totalorder %s266, %s282
      %p284 = scmp.eq.s32.totalorder %s33, 0
      %p285 = por %p283, %p284
      %s286 = ssub.s32 %s27, %s34
      %p287 = scmp.eq.s32.totalorder %s286, 0
      %s289 = sadd.s32 %s288, 1
      %s290 = scalar_select %p287, %s288, %s289
      %p293 = pneg %p287
      %p294 = scmp.eq.s32.totalorder %s27, 3
      %p295 = por %p293, %p294
      %p296 = scmp.ne.s32.totalorder %s288, %s291
      %p297 = scmp.eq.s32.totalorder %s27, 0
      %p298 = por %p296, %p297
      %p299 = scmp.ne.s32.totalorder %s288, %s291
      %p300 = scmp.eq.s32.totalorder %s32, 3
      %p301 = por %p299, %p300
      %p302 = scmp.ne.s32.totalorder %s291, %s292
      %p303 = scmp.eq.s32.totalorder %s32, 0
      %p304 = por %p302, %p303
      %p305 = scmp.ne.s32.totalorder %s291, %s292
      %p306 = scmp.eq.s32.totalorder %s33, 3
      %p307 = por %p305, %p306
      %p309 = scmp.ne.s32.totalorder %s292, %s308
      %p310 = scmp.eq.s32.totalorder %s33, 0
      %p311 = por %p309, %p310
      %s312 = ssub.s32 %s27, %s34
      %p313 = scmp.eq.s32.totalorder %s312, 0
      %s315 = sadd.s32 %s314, 1
      %s316 = scalar_select %p313, %s314, %s315
      %p319 = pneg %p313
      %p320 = scmp.eq.s32.totalorder %s27, 3
      %p321 = por %p319, %p320
      %p322 = scmp.ne.s32.totalorder %s314, %s317
      %p323 = scmp.eq.s32.totalorder %s27, 0
      %p324 = por %p322, %p323
      %p325 = scmp.ne.s32.totalorder %s314, %s317
      %p326 = scmp.eq.s32.totalorder %s32, 3
      %p327 = por %p325, %p326
      %p328 = scmp.ne.s32.totalorder %s317, %s318
      %p329 = scmp.eq.s32.totalorder %s32, 0
      %p330 = por %p328, %p329
      %p331 = scmp.ne.s32.totalorder %s317, %s318
      %p332 = scmp.eq.s32.totalorder %s33, 3
      %p333 = por %p331, %p332
      %p335 = scmp.ne.s32.totalorder %s318, %s334
      %p336 = scmp.eq.s32.totalorder %s33, 0
      %p337 = por %p335, %p336
      %p338 = scmp.le.s32.totalorder 1, %s27
      %p339 = scmp.lt.s32.totalorder %s27, 5
      %p340 = pnand %p338, %p339
      %p341 = pneg %p340
      // Predicated region
      $region9: #{ch_pos_gcl_forward.1} parent=5 // pred_check
        _
      $region10: #{ch_pos_gcl_forward.1} parent=5 // pred_check_branch
        %343 = sbr.rel (%p340) target = $region12
      $region11: #{ch_pos_gcl_forward.1} parent=5 // pred_region
        %s344 = ssub.s32 %s27, 1
        // Predicated region
        $region13: #{ch_pos_gcl_forward.1} parent=11 // pred_check
          %p345 = pneg %p100
        $region14: #{ch_pos_gcl_forward.1} parent=11 // pred_check_branch
          %347 = sbr.rel (%p345) target = $region16
        $region15: #{ch_pos_gcl_forward.1} parent=11 // pred_region
          _
        $region16: #{ch_pos_gcl_forward.1} parent=11 // pred_fallthru
          _
        // Predicated region
        $region17: #{ch_pos_gcl_forward.1} parent=11 // pred_check
          %p348 = pneg %p121
        $region18: #{ch_pos_gcl_forward.1} parent=11 // pred_check_branch
          %350 = sbr.rel (%p348) target = $region20
        $region19: #{ch_pos_gcl_forward.1} parent=11 // pred_region
          _
        $region20: #{ch_pos_gcl_forward.1} parent=11 // pred_fallthru
          _
        // Predicated region
        $region21: #{ch_pos_gcl_forward.1} parent=11 // pred_check
          %p351 = pneg %p142
        $region22: #{ch_pos_gcl_forward.1} parent=11 // pred_check_branch
          %353 = sbr.rel (%p351) target = $region24
        $region23: #{ch_pos_gcl_forward.1} parent=11 // pred_region
          _
        $region24: #{ch_pos_gcl_forward.1} parent=11 // pred_fallthru
          _
        // Predicated region
        $region25: #{ch_pos_gcl_forward.1} parent=11 // pred_check
          %p354 = pneg %p163
        $region26: #{ch_pos_gcl_forward.1} parent=11 // pred_check_branch
          %356 = sbr.rel (%p354) target = $region28
        $region27: #{ch_pos_gcl_forward.1} parent=11 // pred_region
          _
        $region28: #{ch_pos_gcl_forward.1} parent=11 // pred_fallthru
          _
        // Predicated region
        $region29: #{ch_pos_gcl_forward.1} parent=11 // pred_check
          %p357 = pneg %p184
        $region30: #{ch_pos_gcl_forward.1} parent=11 // pred_check_branch
          %359 = sbr.rel (%p357) target = $region32
        $region31: #{ch_pos_gcl_forward.1} parent=11 // pred_region
          _
        $region32: #{ch_pos_gcl_forward.1} parent=11 // pred_fallthru
          _
        // Predicated region
        $region33: #{ch_pos_gcl_forward.1} parent=11 // pred_check
          %p360 = pneg %p205
        $region34: #{ch_pos_gcl_forward.1} parent=11 // pred_check_branch
          %362 = sbr.rel (%p360) target = $region36
        $region35: #{ch_pos_gcl_forward.1} parent=11 // pred_region
          _
        $region36: #{ch_pos_gcl_forward.1} parent=11 // pred_fallthru
          _
        // Predicated region
        $region37: #{ch_pos_gcl_forward.1} parent=11 // pred_check
          %p363 = pneg %p226
        $region38: #{ch_pos_gcl_forward.1} parent=11 // pred_check_branch
          %365 = sbr.rel (%p363) target = $region40
        $region39: #{ch_pos_gcl_forward.1} parent=11 // pred_region
          _
        $region40: #{ch_pos_gcl_forward.1} parent=11 // pred_fallthru
          _
      $region12: #{ch_pos_gcl_forward.1} parent=5 // pred_fallthru
        _
      %p366 = scmp.lt.s32.totalorder %s27, 4
      // Predicated region
      $region41: #{ch_pos_gcl_forward.1} parent=5 // pred_check
        %p367 = pneg %p366
      $region42: #{ch_pos_gcl_forward.1} parent=5 // pred_check_branch
        %369 = sbr.rel (%p367) target = $region44
      $region43: #{ch_pos_gcl_forward.1} parent=5 // pred_region
        // Predicated region
        $region45: #{ch_pos_gcl_forward.1} parent=43 // pred_check
          %p370 = pneg %p47
        $region46: #{ch_pos_gcl_forward.1} parent=43 // pred_check_branch
          %372 = sbr.rel (%p370) target = $region48
        $region47: #{ch_pos_gcl_forward.1} parent=43 // pred_region
          %s373 = smul.u32 64, %s27
          %p374 = scmp.lt.s32.totalorder %s373, 255
          %s375 = scalar_select %p374, %s373, 255
          %s376 = smul.addr %s375, 8
          %s377 = scalar_lea.vmem %s0, %s376
          %s378 = smul.u32 64, %s27
        $region48: #{ch_pos_gcl_forward.1} parent=43 // pred_fallthru
          _
        // Predicated region
        $region49: #{ch_pos_gcl_forward.1} parent=43 // pred_check
          %p379 = pneg %p73
        $region50: #{ch_pos_gcl_forward.1} parent=43 // pred_check_branch
          %381 = sbr.rel (%p379) target = $region52
        $region51: #{ch_pos_gcl_forward.1} parent=43 // pred_region
          %s382 = smul.u32 64, %s27
          %p383 = scmp.lt.s32.totalorder %s382, 255
          %s384 = scalar_select %p383, %s382, 255
          %s385 = smul.addr %s384, 8
          %s386 = scalar_lea.vmem %s1, %s385
          %s387 = smul.u32 64, %s27
        $region52: #{ch_pos_gcl_forward.1} parent=43 // pred_fallthru
          _
      $region44: #{ch_pos_gcl_forward.1} parent=5 // pred_fallthru
        _
      %p388 = scmp.le.s32.totalorder 1, %s27
      %p389 = scmp.lt.s32.totalorder %s27, 5
      %p390 = pnand %p388, %p389
      %p391 = pneg %p390
      // Predicated region
      $region53: #{ch_pos_gcl_forward.1} parent=5 // pred_check
        _
      $region54: #{ch_pos_gcl_forward.1} parent=5 // pred_check_branch
        %393 = sbr.rel (%p390) target = $region56
      $region55: #{ch_pos_gcl_forward.1} parent=5 // pred_region
        %s394 = ssub.s32 %s27, 1
        %s395 = smul.u32 64, %s32
        %p396 = scmp.lt.s32.totalorder %s395, 255
        %s397 = scalar_select %p396, %s395, 255
        %s398 = smul.addr %s397, 8
        %s399 = scalar_lea.vmem %s0, %s398
        %p400 = pneg %p53
        %p401 = pneg %p50
        %s402 = smul.u32 64, %s32
        %p403 = scmp.lt.s32.totalorder %s402, 255
        %s404 = scalar_select %p403, %s402, 255
        %s405 = smul.addr %s404, 8
        %s406 = scalar_lea.vmem %s1, %s405
        %p407 = pneg %p79
        %p408 = pneg %p76
        %p409 = pneg %p100
        %p410 = pneg %p97
        %p411 = pneg %p121
        %p412 = pneg %p118
        %p413 = pneg %p142
        %p414 = pneg %p139
        %p415 = pneg %p163
        %p416 = pneg %p160
        %p417 = pneg %p184
        %p418 = pneg %p181
        %p419 = pneg %p205
        %p420 = pneg %p202
        %p421 = pneg %p226
        %p422 = pneg %p223
        %p423 = pneg %p252
        %p424 = pneg %p249
        %s425 = sand.u32 %s239, 1
        %s426 = scalar_lea.sflag [#allocation4], %s425
        %s427 = sand.u32 %s239, 1
        %s428 = smul.addr %s427, 512
        %s429 = scalar_lea.vmem [#allocation3], %s428
        %p430 = pneg %p278
        %p431 = pneg %p275
        %s432 = sand.u32 %s32, 1
        %s433 = scalar_lea.sflag [#allocation6], %s432
        %s434 = sand.u32 %s265, 1
        %s435 = smul.addr %s434, 512
        %s436 = scalar_lea.vmem [#allocation5], %s435
        %p437 = pneg %p304
        %p438 = pneg %p301
        %s439 = sand.u32 %s32, 1
        %s440 = scalar_lea.sflag [#allocation6], %s439
        %s441 = sand.u32 %s291, 1
        %s442 = smul.addr %s441, 512
        %s443 = scalar_lea.vmem [#allocation7], %s442
        %p444 = pneg %p330
        %p445 = pneg %p327
        %s446 = smul.u32 64, %s32
        %p447 = scmp.lt.s32.totalorder %s446, 255
        %s448 = scalar_select %p447, %s446, 255
        %s449 = smul.addr %s448, 8
        %s450 = scalar_lea.vmem %s12, %s449
        %s451 = smul.u32 64, %s32
        %p452 = scmp.lt.s32.totalorder %s451, 255
        %s453 = scalar_select %p452, %s451, 255
        %s454 = smul.addr %s453, 8
        %s455 = scalar_lea.vmem %s0, %s454
        %s456 = smul.u32 64, %s32
        %s457 = smul.u32 64, %s32
        %p458 = scmp.lt.s32.totalorder %s457, 255
        %s459 = scalar_select %p458, %s457, 255
        %s460 = smul.addr %s459, 8
        %s461 = scalar_lea.vmem %s1, %s460
        %s462 = smul.u32 64, %s32
        %s463 = smul.u32 64, %s32
        %s464 = smul.u32 64, %s32
        %s465 = smul.u32 64, %s32
        %s466 = smul.u32 64, %s32
        %p467 = scmp.lt.s32.totalorder %s466, 255
        %s468 = scalar_select %p467, %s466, 255
        %s469 = smul.addr %s468, 8
        %s470 = scalar_lea.vmem %s12, %s469
        %s471 = smul.u32 64, %s32
        %v472 = vld [vmem:[%s455] sm:$0xff]
        %v473 = vld [vmem:[%s455 + $0x8] sm:$0xff]
        %v474 = vld [vmem:[%s455 + $0x10] sm:$0xff]
        %v475 = vld [vmem:[%s455 + $0x18] sm:$0xff]
        %v476 = vld [vmem:[%s455 + $0x20] sm:$0xff]
        %v477 = vld [vmem:[%s455 + $0x28] sm:$0xff]
        %v478 = vld [vmem:[%s455 + $0x30] sm:$0xff]
        %v479 = vld [vmem:[%s455 + $0x38] sm:$0xff]
        %v480 = vld [vmem:[%s455 + $0x40] sm:$0xff]
        %v481 = vld [vmem:[%s455 + $0x48] sm:$0xff]
        %v482 = vld [vmem:[%s455 + $0x50] sm:$0xff]
        %v483 = vld [vmem:[%s455 + $0x58] sm:$0xff]
        %v484 = vld [vmem:[%s455 + $0x60] sm:$0xff]
        %v485 = vld [vmem:[%s455 + $0x68] sm:$0xff]
        %v486 = vld [vmem:[%s455 + $0x70] sm:$0xff]
        %v487 = vld [vmem:[%s455 + $0x78] sm:$0xff]
        %v488 = vld [vmem:[%s455 + $0x80] sm:$0xff]
        %v489 = vld [vmem:[%s455 + $0x88] sm:$0xff]
        %v490 = vld [vmem:[%s455 + $0x90] sm:$0xff]
        %v491 = vld [vmem:[%s455 + $0x98] sm:$0xff]
        %v492 = vld [vmem:[%s455 + $0xa0] sm:$0xff]
        %v493 = vld [vmem:[%s455 + $0xa8] sm:$0xff]
        %v494 = vld [vmem:[%s455 + $0xb0] sm:$0xff]
        %v495 = vld [vmem:[%s455 + $0xb8] sm:$0xff]
        %v496 = vld [vmem:[%s455 + $0xc0] sm:$0xff]
        %v497 = vld [vmem:[%s455 + $0xc8] sm:$0xff]
        %v498 = vld [vmem:[%s455 + $0xd0] sm:$0xff]
        %v499 = vld [vmem:[%s455 + $0xd8] sm:$0xff]
        %v500 = vld [vmem:[%s455 + $0xe0] sm:$0xff]
        %v501 = vld [vmem:[%s455 + $0xe8] sm:$0xff]
        %v502 = vld [vmem:[%s455 + $0xf0] sm:$0xff]
        %v503 = vld [vmem:[%s455 + $0xf8] sm:$0xff]
        %v504 = vld [vmem:[%s455 + $0x100] sm:$0xff]
        %v505 = vld [vmem:[%s455 + $0x108] sm:$0xff]
        %v506 = vld [vmem:[%s455 + $0x110] sm:$0xff]
        %v507 = vld [vmem:[%s455 + $0x118] sm:$0xff]
        %v508 = vld [vmem:[%s455 + $0x120] sm:$0xff]
        %v509 = vld [vmem:[%s455 + $0x128] sm:$0xff]
        %v510 = vld [vmem:[%s455 + $0x130] sm:$0xff]
        %v511 = vld [vmem:[%s455 + $0x138] sm:$0xff]
        %v512 = vld [vmem:[%s455 + $0x140] sm:$0xff]
        %v513 = vld [vmem:[%s455 + $0x148] sm:$0xff]
        %v514 = vld [vmem:[%s455 + $0x150] sm:$0xff]
        %v515 = vld [vmem:[%s455 + $0x158] sm:$0xff]
        %v516 = vld [vmem:[%s455 + $0x160] sm:$0xff]
        %v517 = vld [vmem:[%s455 + $0x168] sm:$0xff]
        %v518 = vld [vmem:[%s455 + $0x170] sm:$0xff]
        %v519 = vld [vmem:[%s455 + $0x178] sm:$0xff]
        %v520 = vld [vmem:[%s455 + $0x180] sm:$0xff]
        %v521 = vld [vmem:[%s455 + $0x188] sm:$0xff]
        %v522 = vld [vmem:[%s455 + $0x190] sm:$0xff]
        %v523 = vld [vmem:[%s455 + $0x198] sm:$0xff]
        %v524 = vld [vmem:[%s455 + $0x1a0] sm:$0xff]
        %v525 = vld [vmem:[%s455 + $0x1a8] sm:$0xff]
        %v526 = vld [vmem:[%s455 + $0x1b0] sm:$0xff]
        %v527 = vld [vmem:[%s455 + $0x1b8] sm:$0xff]
        %v528 = vld [vmem:[%s455 + $0x1c0] sm:$0xff]
        %v529 = vld [vmem:[%s455 + $0x1c8] sm:$0xff]
        %v530 = vld [vmem:[%s455 + $0x1d0] sm:$0xff]
        %v531 = vld [vmem:[%s455 + $0x1d8] sm:$0xff]
        %v532 = vld [vmem:[%s455 + $0x1e0] sm:$0xff]
        %v533 = vld [vmem:[%s455 + $0x1e8] sm:$0xff]
        %v534 = vld [vmem:[%s455 + $0x1f0] sm:$0xff]
        %v535 = vld [vmem:[%s455 + $0x1f8] sm:$0xff]
        %v536 = vlaneseq
        %v537 = vand.u32 %v536, 127
        %538 = vset.pattern.permute.xlu0 0
        %539 = vperm.xlu0 %538, %v472
        %v540 = vpop.permute.xlu0 %539
        %541 = vset.pattern.permute.xlu0 0
        %542 = vperm.xlu0 %541, %v473
        %v543 = vpop.permute.xlu0 %542
        %544 = vset.pattern.permute.xlu0 0
        %545 = vperm.xlu0 %544, %v474
        %v546 = vpop.permute.xlu0 %545
        %547 = vset.pattern.permute.xlu0 0
        %548 = vperm.xlu0 %547, %v475
        %v549 = vpop.permute.xlu0 %548
        %550 = vset.pattern.permute.xlu0 0
        %551 = vperm.xlu0 %550, %v476
        %v552 = vpop.permute.xlu0 %551
        %553 = vset.pattern.permute.xlu0 0
        %554 = vperm.xlu0 %553, %v477
        %v555 = vpop.permute.xlu0 %554
        %556 = vset.pattern.permute.xlu0 0
        %557 = vperm.xlu0 %556, %v478
        %v558 = vpop.permute.xlu0 %557
        %559 = vset.pattern.permute.xlu0 0
        %560 = vperm.xlu0 %559, %v479
        %v561 = vpop.permute.xlu0 %560
        %562 = vset.pattern.permute.xlu0 0
        %563 = vperm.xlu0 %562, %v480
        %v564 = vpop.permute.xlu0 %563
        %565 = vset.pattern.permute.xlu0 0
        %566 = vperm.xlu0 %565, %v481
        %v567 = vpop.permute.xlu0 %566
        %568 = vset.pattern.permute.xlu0 0
        %569 = vperm.xlu0 %568, %v482
        %v570 = vpop.permute.xlu0 %569
        %571 = vset.pattern.permute.xlu0 0
        %572 = vperm.xlu0 %571, %v483
        %v573 = vpop.permute.xlu0 %572
        %574 = vset.pattern.permute.xlu0 0
        %575 = vperm.xlu0 %574, %v484
        %v576 = vpop.permute.xlu0 %575
        %577 = vset.pattern.permute.xlu0 0
        %578 = vperm.xlu0 %577, %v485
        %v579 = vpop.permute.xlu0 %578
        %580 = vset.pattern.permute.xlu0 0
        %581 = vperm.xlu0 %580, %v486
        %v582 = vpop.permute.xlu0 %581
        %583 = vset.pattern.permute.xlu0 0
        %584 = vperm.xlu0 %583, %v487
        %v585 = vpop.permute.xlu0 %584
        %586 = vset.pattern.permute.xlu0 0
        %587 = vperm.xlu0 %586, %v488
        %v588 = vpop.permute.xlu0 %587
        %589 = vset.pattern.permute.xlu0 0
        %590 = vperm.xlu0 %589, %v489
        %v591 = vpop.permute.xlu0 %590
        %592 = vset.pattern.permute.xlu0 0
        %593 = vperm.xlu0 %592, %v490
        %v594 = vpop.permute.xlu0 %593
        %595 = vset.pattern.permute.xlu0 0
        %596 = vperm.xlu0 %595, %v491
        %v597 = vpop.permute.xlu0 %596
        %598 = vset.pattern.permute.xlu0 0
        %599 = vperm.xlu0 %598, %v492
        %v600 = vpop.permute.xlu0 %599
        %601 = vset.pattern.permute.xlu0 0
        %602 = vperm.xlu0 %601, %v493
        %v603 = vpop.permute.xlu0 %602
        %604 = vset.pattern.permute.xlu0 0
        %605 = vperm.xlu0 %604, %v494
        %v606 = vpop.permute.xlu0 %605
        %607 = vset.pattern.permute.xlu0 0
        %608 = vperm.xlu0 %607, %v495
        %v609 = vpop.permute.xlu0 %608
        %610 = vset.pattern.permute.xlu0 0
        %611 = vperm.xlu0 %610, %v496
        %v612 = vpop.permute.xlu0 %611
        %613 = vset.pattern.permute.xlu0 0
        %614 = vperm.xlu0 %613, %v497
        %v615 = vpop.permute.xlu0 %614
        %616 = vset.pattern.permute.xlu0 0
        %617 = vperm.xlu0 %616, %v498
        %v618 = vpop.permute.xlu0 %617
        %619 = vset.pattern.permute.xlu0 0
        %620 = vperm.xlu0 %619, %v499
        %v621 = vpop.permute.xlu0 %620
        %622 = vset.pattern.permute.xlu0 0
        %623 = vperm.xlu0 %622, %v500
        %v624 = vpop.permute.xlu0 %623
        %625 = vset.pattern.permute.xlu0 0
        %626 = vperm.xlu0 %625, %v501
        %v627 = vpop.permute.xlu0 %626
        %628 = vset.pattern.permute.xlu0 0
        %629 = vperm.xlu0 %628, %v502
        %v630 = vpop.permute.xlu0 %629
        %631 = vset.pattern.permute.xlu0 0
        %632 = vperm.xlu0 %631, %v503
        %v633 = vpop.permute.xlu0 %632
        %634 = vset.pattern.permute.xlu0 0
        %635 = vperm.xlu0 %634, %v504
        %v636 = vpop.permute.xlu0 %635
        %637 = vset.pattern.permute.xlu0 0
        %638 = vperm.xlu0 %637, %v505
        %v639 = vpop.permute.xlu0 %638
        %640 = vset.pattern.permute.xlu0 0
        %641 = vperm.xlu0 %640, %v506
        %v642 = vpop.permute.xlu0 %641
        %643 = vset.pattern.permute.xlu0 0
        %644 = vperm.xlu0 %643, %v507
        %v645 = vpop.permute.xlu0 %644
        %646 = vset.pattern.permute.xlu0 0
        %647 = vperm.xlu0 %646, %v508
        %v648 = vpop.permute.xlu0 %647
        %649 = vset.pattern.permute.xlu0 0
        %650 = vperm.xlu0 %649, %v509
        %v651 = vpop.permute.xlu0 %650
        %652 = vset.pattern.permute.xlu0 0
        %653 = vperm.xlu0 %652, %v510
        %v654 = vpop.permute.xlu0 %653
        %655 = vset.pattern.permute.xlu0 0
        %656 = vperm.xlu0 %655, %v511
        %v657 = vpop.permute.xlu0 %656
        %658 = vset.pattern.permute.xlu0 0
        %659 = vperm.xlu0 %658, %v512
        %v660 = vpop.permute.xlu0 %659
        %661 = vset.pattern.permute.xlu0 0
        %662 = vperm.xlu0 %661, %v513
        %v663 = vpop.permute.xlu0 %662
        %664 = vset.pattern.permute.xlu0 0
        %665 = vperm.xlu0 %664, %v514
        %v666 = vpop.permute.xlu0 %665
        %667 = vset.pattern.permute.xlu0 0
        %668 = vperm.xlu0 %667, %v515
        %v669 = vpop.permute.xlu0 %668
        %670 = vset.pattern.permute.xlu0 0
        %671 = vperm.xlu0 %670, %v516
        %v672 = vpop.permute.xlu0 %671
        %673 = vset.pattern.permute.xlu0 0
        %674 = vperm.xlu0 %673, %v517
        %v675 = vpop.permute.xlu0 %674
        %676 = vset.pattern.permute.xlu0 0
        %677 = vperm.xlu0 %676, %v518
        %v678 = vpop.permute.xlu0 %677
        %679 = vset.pattern.permute.xlu0 0
        %680 = vperm.xlu0 %679, %v519
        %v681 = vpop.permute.xlu0 %680
        %682 = vset.pattern.permute.xlu0 0
        %683 = vperm.xlu0 %682, %v520
        %v684 = vpop.permute.xlu0 %683
        %685 = vset.pattern.permute.xlu0 0
        %686 = vperm.xlu0 %685, %v521
        %v687 = vpop.permute.xlu0 %686
        %688 = vset.pattern.permute.xlu0 0
        %689 = vperm.xlu0 %688, %v522
        %v690 = vpop.permute.xlu0 %689
        %691 = vset.pattern.permute.xlu0 0
        %692 = vperm.xlu0 %691, %v523
        %v693 = vpop.permute.xlu0 %692
        %694 = vset.pattern.permute.xlu0 0
        %695 = vperm.xlu0 %694, %v524
        %v696 = vpop.permute.xlu0 %695
        %697 = vset.pattern.permute.xlu0 0
        %698 = vperm.xlu0 %697, %v525
        %v699 = vpop.permute.xlu0 %698
        %700 = vset.pattern.permute.xlu0 0
        %701 = vperm.xlu0 %700, %v526
        %v702 = vpop.permute.xlu0 %701
        %703 = vset.pattern.permute.xlu0 0
        %704 = vperm.xlu0 %703, %v527
        %v705 = vpop.permute.xlu0 %704
        %706 = vset.pattern.permute.xlu0 0
        %707 = vperm.xlu0 %706, %v528
        %v708 = vpop.permute.xlu0 %707
        %709 = vset.pattern.permute.xlu0 0
        %710 = vperm.xlu0 %709, %v529
        %v711 = vpop.permute.xlu0 %710
        %712 = vset.pattern.permute.xlu0 0
        %713 = vperm.xlu0 %712, %v530
        %v714 = vpop.permute.xlu0 %713
        %715 = vset.pattern.permute.xlu0 0
        %716 = vperm.xlu0 %715, %v531
        %v717 = vpop.permute.xlu0 %716
        %718 = vset.pattern.permute.xlu0 0
        %719 = vperm.xlu0 %718, %v532
        %v720 = vpop.permute.xlu0 %719
        %721 = vset.pattern.permute.xlu0 0
        %722 = vperm.xlu0 %721, %v533
        %v723 = vpop.permute.xlu0 %722
        %724 = vset.pattern.permute.xlu0 0
        %725 = vperm.xlu0 %724, %v534
        %v726 = vpop.permute.xlu0 %725
        %727 = vset.pattern.permute.xlu0 0
        %728 = vperm.xlu0 %727, %v535
        %v729 = vpop.permute.xlu0 %728
        %vm730 = vcmp.eq.s32.totalorder %v540, %v537
        %vm731 = vcmp.eq.s32.totalorder %v543, %v537
        %vm732 = vcmp.eq.s32.totalorder %v546, %v537
        %vm733 = vcmp.eq.s32.totalorder %v549, %v537
        %vm734 = vcmp.eq.s32.totalorder %v552, %v537
        %vm735 = vcmp.eq.s32.totalorder %v555, %v537
        %vm736 = vcmp.eq.s32.totalorder %v558, %v537
        %vm737 = vcmp.eq.s32.totalorder %v561, %v537
        %vm738 = vcmp.eq.s32.totalorder %v564, %v537
        %vm739 = vcmp.eq.s32.totalorder %v567, %v537
        %vm740 = vcmp.eq.s32.totalorder %v570, %v537
        %vm741 = vcmp.eq.s32.totalorder %v573, %v537
        %vm742 = vcmp.eq.s32.totalorder %v576, %v537
        %vm743 = vcmp.eq.s32.totalorder %v579, %v537
        %vm744 = vcmp.eq.s32.totalorder %v582, %v537
        %vm745 = vcmp.eq.s32.totalorder %v585, %v537
        %vm746 = vcmp.eq.s32.totalorder %v588, %v537
        %vm747 = vcmp.eq.s32.totalorder %v591, %v537
        %vm748 = vcmp.eq.s32.totalorder %v594, %v537
        %vm749 = vcmp.eq.s32.totalorder %v597, %v537
        %vm750 = vcmp.eq.s32.totalorder %v600, %v537
        %vm751 = vcmp.eq.s32.totalorder %v603, %v537
        %vm752 = vcmp.eq.s32.totalorder %v606, %v537
        %vm753 = vcmp.eq.s32.totalorder %v609, %v537
        %vm754 = vcmp.eq.s32.totalorder %v612, %v537
        %vm755 = vcmp.eq.s32.totalorder %v615, %v537
        %vm756 = vcmp.eq.s32.totalorder %v618, %v537
        %vm757 = vcmp.eq.s32.totalorder %v621, %v537
        %vm758 = vcmp.eq.s32.totalorder %v624, %v537
        %vm759 = vcmp.eq.s32.totalorder %v627, %v537
        %vm760 = vcmp.eq.s32.totalorder %v630, %v537
        %vm761 = vcmp.eq.s32.totalorder %v633, %v537
        %vm762 = vcmp.eq.s32.totalorder %v636, %v537
        %vm763 = vcmp.eq.s32.totalorder %v639, %v537
        %vm764 = vcmp.eq.s32.totalorder %v642, %v537
        %vm765 = vcmp.eq.s32.totalorder %v645, %v537
        %vm766 = vcmp.eq.s32.totalorder %v648, %v537
        %vm767 = vcmp.eq.s32.totalorder %v651, %v537
        %vm768 = vcmp.eq.s32.totalorder %v654, %v537
        %vm769 = vcmp.eq.s32.totalorder %v657, %v537
        %vm770 = vcmp.eq.s32.totalorder %v660, %v537
        %vm771 = vcmp.eq.s32.totalorder %v663, %v537
        %vm772 = vcmp.eq.s32.totalorder %v666, %v537
        %vm773 = vcmp.eq.s32.totalorder %v669, %v537
        %vm774 = vcmp.eq.s32.totalorder %v672, %v537
        %vm775 = vcmp.eq.s32.totalorder %v675, %v537
        %vm776 = vcmp.eq.s32.totalorder %v678, %v537
        %vm777 = vcmp.eq.s32.totalorder %v681, %v537
        %vm778 = vcmp.eq.s32.totalorder %v684, %v537
        %vm779 = vcmp.eq.s32.totalorder %v687, %v537
        %vm780 = vcmp.eq.s32.totalorder %v690, %v537
        %vm781 = vcmp.eq.s32.totalorder %v693, %v537
        %vm782 = vcmp.eq.s32.totalorder %v696, %v537
        %vm783 = vcmp.eq.s32.totalorder %v699, %v537
        %vm784 = vcmp.eq.s32.totalorder %v702, %v537
        %vm785 = vcmp.eq.s32.totalorder %v705, %v537
        %vm786 = vcmp.eq.s32.totalorder %v708, %v537
        %vm787 = vcmp.eq.s32.totalorder %v711, %v537
        %vm788 = vcmp.eq.s32.totalorder %v714, %v537
        %vm789 = vcmp.eq.s32.totalorder %v717, %v537
        %vm790 = vcmp.eq.s32.totalorder %v720, %v537
        %vm791 = vcmp.eq.s32.totalorder %v723, %v537
        %vm792 = vcmp.eq.s32.totalorder %v726, %v537
        %vm793 = vcmp.eq.s32.totalorder %v729, %v537
        %v794 = vsel %vm730, 1, 0
        %v795 = vsel %vm731, 1, 0
        %v796 = vsel %vm732, 1, 0
        %v797 = vsel %vm733, 1, 0
        %v798 = vsel %vm734, 1, 0
        %v799 = vsel %vm735, 1, 0
        %v800 = vsel %vm736, 1, 0
        %v801 = vsel %vm737, 1, 0
        %v802 = vsel %vm738, 1, 0
        %v803 = vsel %vm739, 1, 0
        %v804 = vsel %vm740, 1, 0
        %v805 = vsel %vm741, 1, 0
        %v806 = vsel %vm742, 1, 0
        %v807 = vsel %vm743, 1, 0
        %v808 = vsel %vm744, 1, 0
        %v809 = vsel %vm745, 1, 0
        %v810 = vsel %vm746, 1, 0
        %v811 = vsel %vm747, 1, 0
        %v812 = vsel %vm748, 1, 0
        %v813 = vsel %vm749, 1, 0
        %v814 = vsel %vm750, 1, 0
        %v815 = vsel %vm751, 1, 0
        %v816 = vsel %vm752, 1, 0
        %v817 = vsel %vm753, 1, 0
        %v818 = vsel %vm754, 1, 0
        %v819 = vsel %vm755, 1, 0
        %v820 = vsel %vm756, 1, 0
        %v821 = vsel %vm757, 1, 0
        %v822 = vsel %vm758, 1, 0
        %v823 = vsel %vm759, 1, 0
        %v824 = vsel %vm760, 1, 0
        %v825 = vsel %vm761, 1, 0
        %v826 = vsel %vm762, 1, 0
        %v827 = vsel %vm763, 1, 0
        %v828 = vsel %vm764, 1, 0
        %v829 = vsel %vm765, 1, 0
        %v830 = vsel %vm766, 1, 0
        %v831 = vsel %vm767, 1, 0
        %v832 = vsel %vm768, 1, 0
        %v833 = vsel %vm769, 1, 0
        %v834 = vsel %vm770, 1, 0
        %v835 = vsel %vm771, 1, 0
        %v836 = vsel %vm772, 1, 0
        %v837 = vsel %vm773, 1, 0
        %v838 = vsel %vm774, 1, 0
        %v839 = vsel %vm775, 1, 0
        %v840 = vsel %vm776, 1, 0
        %v841 = vsel %vm777, 1, 0
        %v842 = vsel %vm778, 1, 0
        %v843 = vsel %vm779, 1, 0
        %v844 = vsel %vm780, 1, 0
        %v845 = vsel %vm781, 1, 0
        %v846 = vsel %vm782, 1, 0
        %v847 = vsel %vm783, 1, 0
        %v848 = vsel %vm784, 1, 0
        %v849 = vsel %vm785, 1, 0
        %v850 = vsel %vm786, 1, 0
        %v851 = vsel %vm787, 1, 0
        %v852 = vsel %vm788, 1, 0
        %v853 = vsel %vm789, 1, 0
        %v854 = vsel %vm790, 1, 0
        %v855 = vsel %vm791, 1, 0
        %v856 = vsel %vm792, 1, 0
        %v857 = vsel %vm793, 1, 0
        %v858 = vcvt.s32.f32 %v794
        %v859 = vcvt.s32.f32 %v795
        %v860 = vcvt.s32.f32 %v796
        %v861 = vcvt.s32.f32 %v797
        %v862 = vcvt.s32.f32 %v798
        %v863 = vcvt.s32.f32 %v799
        %v864 = vcvt.s32.f32 %v800
        %v865 = vcvt.s32.f32 %v801
        %v866 = vcvt.s32.f32 %v802
        %v867 = vcvt.s32.f32 %v803
        %v868 = vcvt.s32.f32 %v804
        %v869 = vcvt.s32.f32 %v805
        %v870 = vcvt.s32.f32 %v806
        %v871 = vcvt.s32.f32 %v807
        %v872 = vcvt.s32.f32 %v808
        %v873 = vcvt.s32.f32 %v809
        %v874 = vcvt.s32.f32 %v810
        %v875 = vcvt.s32.f32 %v811
        %v876 = vcvt.s32.f32 %v812
        %v877 = vcvt.s32.f32 %v813
        %v878 = vcvt.s32.f32 %v814
        %v879 = vcvt.s32.f32 %v815
        %v880 = vcvt.s32.f32 %v816
        %v881 = vcvt.s32.f32 %v817
        %v882 = vcvt.s32.f32 %v818
        %v883 = vcvt.s32.f32 %v819
        %v884 = vcvt.s32.f32 %v820
        %v885 = vcvt.s32.f32 %v821
        %v886 = vcvt.s32.f32 %v822
        %v887 = vcvt.s32.f32 %v823
        %v888 = vcvt.s32.f32 %v824
        %v889 = vcvt.s32.f32 %v825
        %v890 = vcvt.s32.f32 %v826
        %v891 = vcvt.s32.f32 %v827
        %v892 = vcvt.s32.f32 %v828
        %v893 = vcvt.s32.f32 %v829
        %v894 = vcvt.s32.f32 %v830
        %v895 = vcvt.s32.f32 %v831
        %v896 = vcvt.s32.f32 %v832
        %v897 = vcvt.s32.f32 %v833
        %v898 = vcvt.s32.f32 %v834
        %v899 = vcvt.s32.f32 %v835
        %v900 = vcvt.s32.f32 %v836
        %v901 = vcvt.s32.f32 %v837
        %v902 = vcvt.s32.f32 %v838
        %v903 = vcvt.s32.f32 %v839
        %v904 = vcvt.s32.f32 %v840
        %v905 = vcvt.s32.f32 %v841
        %v906 = vcvt.s32.f32 %v842
        %v907 = vcvt.s32.f32 %v843
        %v908 = vcvt.s32.f32 %v844
        %v909 = vcvt.s32.f32 %v845
        %v910 = vcvt.s32.f32 %v846
        %v911 = vcvt.s32.f32 %v847
        %v912 = vcvt.s32.f32 %v848
        %v913 = vcvt.s32.f32 %v849
        %v914 = vcvt.s32.f32 %v850
        %v915 = vcvt.s32.f32 %v851
        %v916 = vcvt.s32.f32 %v852
        %v917 = vcvt.s32.f32 %v853
        %v918 = vcvt.s32.f32 %v854
        %v919 = vcvt.s32.f32 %v855
        %v920 = vcvt.s32.f32 %v856
        %v921 = vcvt.s32.f32 %v857
        %922 = vset.pattern.permute.xlu0 1
        %923 = vperm.xlu0 %922, %v472
        %v924 = vpop.permute.xlu0 %923
        %925 = vset.pattern.permute.xlu0 1
        %926 = vperm.xlu0 %925, %v473
        %v927 = vpop.permute.xlu0 %926
        %928 = vset.pattern.permute.xlu0 1
        %929 = vperm.xlu0 %928, %v474
        %v930 = vpop.permute.xlu0 %929
        %931 = vset.pattern.permute.xlu0 1
        %932 = vperm.xlu0 %931, %v475
        %v933 = vpop.permute.xlu0 %932
        %934 = vset.pattern.permute.xlu0 1
        %935 = vperm.xlu0 %934, %v476
        %v936 = vpop.permute.xlu0 %935
        %937 = vset.pattern.permute.xlu0 1
        %938 = vperm.xlu0 %937, %v477
        %v939 = vpop.permute.xlu0 %938
        %940 = vset.pattern.permute.xlu0 1
        %941 = vperm.xlu0 %940, %v478
        %v942 = vpop.permute.xlu0 %941
        %943 = vset.pattern.permute.xlu0 1
        %944 = vperm.xlu0 %943, %v479
        %v945 = vpop.permute.xlu0 %944
        %946 = vset.pattern.permute.xlu0 1
        %947 = vperm.xlu0 %946, %v480
        %v948 = vpop.permute.xlu0 %947
        %949 = vset.pattern.permute.xlu0 1
        %950 = vperm.xlu0 %949, %v481
        %v951 = vpop.permute.xlu0 %950
        %952 = vset.pattern.permute.xlu0 1
        %953 = vperm.xlu0 %952, %v482
        %v954 = vpop.permute.xlu0 %953
        %955 = vset.pattern.permute.xlu0 1
        %956 = vperm.xlu0 %955, %v483
        %v957 = vpop.permute.xlu0 %956
        %958 = vset.pattern.permute.xlu0 1
        %959 = vperm.xlu0 %958, %v484
        %v960 = vpop.permute.xlu0 %959
        %961 = vset.pattern.permute.xlu0 1
        %962 = vperm.xlu0 %961, %v485
        %v963 = vpop.permute.xlu0 %962
        %964 = vset.pattern.permute.xlu0 1
        %965 = vperm.xlu0 %964, %v486
        %v966 = vpop.permute.xlu0 %965
        %967 = vset.pattern.permute.xlu0 1
        %968 = vperm.xlu0 %967, %v487
        %v969 = vpop.permute.xlu0 %968
        %970 = vset.pattern.permute.xlu0 1
        %971 = vperm.xlu0 %970, %v488
        %v972 = vpop.permute.xlu0 %971
        %973 = vset.pattern.permute.xlu0 1
        %974 = vperm.xlu0 %973, %v489
        %v975 = vpop.permute.xlu0 %974
        %976 = vset.pattern.permute.xlu0 1
        %977 = vperm.xlu0 %976, %v490
        %v978 = vpop.permute.xlu0 %977
        %979 = vset.pattern.permute.xlu0 1
        %980 = vperm.xlu0 %979, %v491
        %v981 = vpop.permute.xlu0 %980
        %982 = vset.pattern.permute.xlu0 1
        %983 = vperm.xlu0 %982, %v492
        %v984 = vpop.permute.xlu0 %983
        %985 = vset.pattern.permute.xlu0 1
        %986 = vperm.xlu0 %985, %v493
        %v987 = vpop.permute.xlu0 %986
        %988 = vset.pattern.permute.xlu0 1
        %989 = vperm.xlu0 %988, %v494
        %v990 = vpop.permute.xlu0 %989
        %991 = vset.pattern.permute.xlu0 1
        %992 = vperm.xlu0 %991, %v495
        %v993 = vpop.permute.xlu0 %992
        %994 = vset.pattern.permute.xlu0 1
        %995 = vperm.xlu0 %994, %v496
        %v996 = vpop.permute.xlu0 %995
        %997 = vset.pattern.permute.xlu0 1
        %998 = vperm.xlu0 %997, %v497
        %v999 = vpop.permute.xlu0 %998
        %1000 = vset.pattern.permute.xlu0 1
        %1001 = vperm.xlu0 %1000, %v498
        %v1002 = vpop.permute.xlu0 %1001
        %1003 = vset.pattern.permute.xlu0 1
        %1004 = vperm.xlu0 %1003, %v499
        %v1005 = vpop.permute.xlu0 %1004
        %1006 = vset.pattern.permute.xlu0 1
        %1007 = vperm.xlu0 %1006, %v500
        %v1008 = vpop.permute.xlu0 %1007
        %1009 = vset.pattern.permute.xlu0 1
        %1010 = vperm.xlu0 %1009, %v501
        %v1011 = vpop.permute.xlu0 %1010
        %1012 = vset.pattern.permute.xlu0 1
        %1013 = vperm.xlu0 %1012, %v502
        %v1014 = vpop.permute.xlu0 %1013
        %1015 = vset.pattern.permute.xlu0 1
        %1016 = vperm.xlu0 %1015, %v503
        %v1017 = vpop.permute.xlu0 %1016
        %1018 = vset.pattern.permute.xlu0 1
        %1019 = vperm.xlu0 %1018, %v504
        %v1020 = vpop.permute.xlu0 %1019
        %1021 = vset.pattern.permute.xlu0 1
        %1022 = vperm.xlu0 %1021, %v505
        %v1023 = vpop.permute.xlu0 %1022
        %1024 = vset.pattern.permute.xlu0 1
        %1025 = vperm.xlu0 %1024, %v506
        %v1026 = vpop.permute.xlu0 %1025
        %1027 = vset.pattern.permute.xlu0 1
        %1028 = vperm.xlu0 %1027, %v507
        %v1029 = vpop.permute.xlu0 %1028
        %1030 = vset.pattern.permute.xlu0 1
        %1031 = vperm.xlu0 %1030, %v508
        %v1032 = vpop.permute.xlu0 %1031
        %1033 = vset.pattern.permute.xlu0 1
        %1034 = vperm.xlu0 %1033, %v509
        %v1035 = vpop.permute.xlu0 %1034
        %1036 = vset.pattern.permute.xlu0 1
        %1037 = vperm.xlu0 %1036, %v510
        %v1038 = vpop.permute.xlu0 %1037
        %1039 = vset.pattern.permute.xlu0 1
        %1040 = vperm.xlu0 %1039, %v511
        %v1041 = vpop.permute.xlu0 %1040
        %1042 = vset.pattern.permute.xlu0 1
        %1043 = vperm.xlu0 %1042, %v512
        %v1044 = vpop.permute.xlu0 %1043
        %1045 = vset.pattern.permute.xlu0 1
        %1046 = vperm.xlu0 %1045, %v513
        %v1047 = vpop.permute.xlu0 %1046
        %1048 = vset.pattern.permute.xlu0 1
        %1049 = vperm.xlu0 %1048, %v514
        %v1050 = vpop.permute.xlu0 %1049
        %1051 = vset.pattern.permute.xlu0 1
        %1052 = vperm.xlu0 %1051, %v515
        %v1053 = vpop.permute.xlu0 %1052
        %1054 = vset.pattern.permute.xlu0 1
        %1055 = vperm.xlu0 %1054, %v516
        %v1056 = vpop.permute.xlu0 %1055
        %1057 = vset.pattern.permute.xlu0 1
        %1058 = vperm.xlu0 %1057, %v517
        %v1059 = vpop.permute.xlu0 %1058
        %1060 = vset.pattern.permute.xlu0 1
        %1061 = vperm.xlu0 %1060, %v518
        %v1062 = vpop.permute.xlu0 %1061
        %1063 = vset.pattern.permute.xlu0 1
        %1064 = vperm.xlu0 %1063, %v519
        %v1065 = vpop.permute.xlu0 %1064
        %1066 = vset.pattern.permute.xlu0 1
        %1067 = vperm.xlu0 %1066, %v520
        %v1068 = vpop.permute.xlu0 %1067
        %1069 = vset.pattern.permute.xlu0 1
        %1070 = vperm.xlu0 %1069, %v521
        %v1071 = vpop.permute.xlu0 %1070
        %1072 = vset.pattern.permute.xlu0 1
        %1073 = vperm.xlu0 %1072, %v522
        %v1074 = vpop.permute.xlu0 %1073
        %1075 = vset.pattern.permute.xlu0 1
        %1076 = vperm.xlu0 %1075, %v523
        %v1077 = vpop.permute.xlu0 %1076
        %1078 = vset.pattern.permute.xlu0 1
        %1079 = vperm.xlu0 %1078, %v524
        %v1080 = vpop.permute.xlu0 %1079
        %1081 = vset.pattern.permute.xlu0 1
        %1082 = vperm.xlu0 %1081, %v525
        %v1083 = vpop.permute.xlu0 %1082
        %1084 = vset.pattern.permute.xlu0 1
        %1085 = vperm.xlu0 %1084, %v526
        %v1086 = vpop.permute.xlu0 %1085
        %1087 = vset.pattern.permute.xlu0 1
        %1088 = vperm.xlu0 %1087, %v527
        %v1089 = vpop.permute.xlu0 %1088
        %1090 = vset.pattern.permute.xlu0 1
        %1091 = vperm.xlu0 %1090, %v528
        %v1092 = vpop.permute.xlu0 %1091
        %1093 = vset.pattern.permute.xlu0 1
        %1094 = vperm.xlu0 %1093, %v529
        %v1095 = vpop.permute.xlu0 %1094
        %1096 = vset.pattern.permute.xlu0 1
        %1097 = vperm.xlu0 %1096, %v530
        %v1098 = vpop.permute.xlu0 %1097
        %1099 = vset.pattern.permute.xlu0 1
        %1100 = vperm.xlu0 %1099, %v531
        %v1101 = vpop.permute.xlu0 %1100
        %1102 = vset.pattern.permute.xlu0 1
        %1103 = vperm.xlu0 %1102, %v532
        %v1104 = vpop.permute.xlu0 %1103
        %1105 = vset.pattern.permute.xlu0 1
        %1106 = vperm.xlu0 %1105, %v533
        %v1107 = vpop.permute.xlu0 %1106
        %1108 = vset.pattern.permute.xlu0 1
        %1109 = vperm.xlu0 %1108, %v534
        %v1110 = vpop.permute.xlu0 %1109
        %1111 = vset.pattern.permute.xlu0 1
        %1112 = vperm.xlu0 %1111, %v535
        %v1113 = vpop.permute.xlu0 %1112
        %vm1114 = vcmp.eq.s32.totalorder %v924, %v537
        %vm1115 = vcmp.eq.s32.totalorder %v927, %v537
        %vm1116 = vcmp.eq.s32.totalorder %v930, %v537
        %vm1117 = vcmp.eq.s32.totalorder %v933, %v537
        %vm1118 = vcmp.eq.s32.totalorder %v936, %v537
        %vm1119 = vcmp.eq.s32.totalorder %v939, %v537
        %vm1120 = vcmp.eq.s32.totalorder %v942, %v537
        %vm1121 = vcmp.eq.s32.totalorder %v945, %v537
        %vm1122 = vcmp.eq.s32.totalorder %v948, %v537
        %vm1123 = vcmp.eq.s32.totalorder %v951, %v537
        %vm1124 = vcmp.eq.s32.totalorder %v954, %v537
        %vm1125 = vcmp.eq.s32.totalorder %v957, %v537
        %vm1126 = vcmp.eq.s32.totalorder %v960, %v537
        %vm1127 = vcmp.eq.s32.totalorder %v963, %v537
        %vm1128 = vcmp.eq.s32.totalorder %v966, %v537
        %vm1129 = vcmp.eq.s32.totalorder %v969, %v537
        %vm1130 = vcmp.eq.s32.totalorder %v972, %v537
        %vm1131 = vcmp.eq.s32.totalorder %v975, %v537
        %vm1132 = vcmp.eq.s32.totalorder %v978, %v537
        %vm1133 = vcmp.eq.s32.totalorder %v981, %v537
        %vm1134 = vcmp.eq.s32.totalorder %v984, %v537
        %vm1135 = vcmp.eq.s32.totalorder %v987, %v537
        %vm1136 = vcmp.eq.s32.totalorder %v990, %v537
        %vm1137 = vcmp.eq.s32.totalorder %v993, %v537
        %vm1138 = vcmp.eq.s32.totalorder %v996, %v537
        %vm1139 = vcmp.eq.s32.totalorder %v999, %v537
        %vm1140 = vcmp.eq.s32.totalorder %v1002, %v537
        %vm1141 = vcmp.eq.s32.totalorder %v1005, %v537
        %vm1142 = vcmp.eq.s32.totalorder %v1008, %v537
        %vm1143 = vcmp.eq.s32.totalorder %v1011, %v537
        %vm1144 = vcmp.eq.s32.totalorder %v1014, %v537
        %vm1145 = vcmp.eq.s32.totalorder %v1017, %v537
        %vm1146 = vcmp.eq.s32.totalorder %v1020, %v537
        %vm1147 = vcmp.eq.s32.totalorder %v1023, %v537
        %vm1148 = vcmp.eq.s32.totalorder %v1026, %v537
        %vm1149 = vcmp.eq.s32.totalorder %v1029, %v537
        %vm1150 = vcmp.eq.s32.totalorder %v1032, %v537
        %vm1151 = vcmp.eq.s32.totalorder %v1035, %v537
        %vm1152 = vcmp.eq.s32.totalorder %v1038, %v537
        %vm1153 = vcmp.eq.s32.totalorder %v1041, %v537
        %vm1154 = vcmp.eq.s32.totalorder %v1044, %v537
        %vm1155 = vcmp.eq.s32.totalorder %v1047, %v537
        %vm1156 = vcmp.eq.s32.totalorder %v1050, %v537
        %vm1157 = vcmp.eq.s32.totalorder %v1053, %v537
        %vm1158 = vcmp.eq.s32.totalorder %v1056, %v537
        %vm1159 = vcmp.eq.s32.totalorder %v1059, %v537
        %vm1160 = vcmp.eq.s32.totalorder %v1062, %v537
        %vm1161 = vcmp.eq.s32.totalorder %v1065, %v537
        %vm1162 = vcmp.eq.s32.totalorder %v1068, %v537
        %vm1163 = vcmp.eq.s32.totalorder %v1071, %v537
        %vm1164 = vcmp.eq.s32.totalorder %v1074, %v537
        %vm1165 = vcmp.eq.s32.totalorder %v1077, %v537
        %vm1166 = vcmp.eq.s32.totalorder %v1080, %v537
        %vm1167 = vcmp.eq.s32.totalorder %v1083, %v537
        %vm1168 = vcmp.eq.s32.totalorder %v1086, %v537
        %vm1169 = vcmp.eq.s32.totalorder %v1089, %v537
        %vm1170 = vcmp.eq.s32.totalorder %v1092, %v537
        %vm1171 = vcmp.eq.s32.totalorder %v1095, %v537
        %vm1172 = vcmp.eq.s32.totalorder %v1098, %v537
        %vm1173 = vcmp.eq.s32.totalorder %v1101, %v537
        %vm1174 = vcmp.eq.s32.totalorder %v1104, %v537
        %vm1175 = vcmp.eq.s32.totalorder %v1107, %v537
        %vm1176 = vcmp.eq.s32.totalorder %v1110, %v537
        %vm1177 = vcmp.eq.s32.totalorder %v1113, %v537
        %v1178 = vsel %vm1114, 1, 0
        %v1179 = vsel %vm1115, 1, 0
        %v1180 = vsel %vm1116, 1, 0
        %v1181 = vsel %vm1117, 1, 0
        %v1182 = vsel %vm1118, 1, 0
        %v1183 = vsel %vm1119, 1, 0
        %v1184 = vsel %vm1120, 1, 0
        %v1185 = vsel %vm1121, 1, 0
        %v1186 = vsel %vm1122, 1, 0
        %v1187 = vsel %vm1123, 1, 0
        %v1188 = vsel %vm1124, 1, 0
        %v1189 = vsel %vm1125, 1, 0
        %v1190 = vsel %vm1126, 1, 0
        %v1191 = vsel %vm1127, 1, 0
        %v1192 = vsel %vm1128, 1, 0
        %v1193 = vsel %vm1129, 1, 0
        %v1194 = vsel %vm1130, 1, 0
        %v1195 = vsel %vm1131, 1, 0
        %v1196 = vsel %vm1132, 1, 0
        %v1197 = vsel %vm1133, 1, 0
        %v1198 = vsel %vm1134, 1, 0
        %v1199 = vsel %vm1135, 1, 0
        %v1200 = vsel %vm1136, 1, 0
        %v1201 = vsel %vm1137, 1, 0
        %v1202 = vsel %vm1138, 1, 0
        %v1203 = vsel %vm1139, 1, 0
        %v1204 = vsel %vm1140, 1, 0
        %v1205 = vsel %vm1141, 1, 0
        %v1206 = vsel %vm1142, 1, 0
        %v1207 = vsel %vm1143, 1, 0
        %v1208 = vsel %vm1144, 1, 0
        %v1209 = vsel %vm1145, 1, 0
        %v1210 = vsel %vm1146, 1, 0
        %v1211 = vsel %vm1147, 1, 0
        %v1212 = vsel %vm1148, 1, 0
        %v1213 = vsel %vm1149, 1, 0
        %v1214 = vsel %vm1150, 1, 0
        %v1215 = vsel %vm1151, 1, 0
        %v1216 = vsel %vm1152, 1, 0
        %v1217 = vsel %vm1153, 1, 0
        %v1218 = vsel %vm1154, 1, 0
        %v1219 = vsel %vm1155, 1, 0
        %v1220 = vsel %vm1156, 1, 0
        %v1221 = vsel %vm1157, 1, 0
        %v1222 = vsel %vm1158, 1, 0
        %v1223 = vsel %vm1159, 1, 0
        %v1224 = vsel %vm1160, 1, 0
        %v1225 = vsel %vm1161, 1, 0
        %v1226 = vsel %vm1162, 1, 0
        %v1227 = vsel %vm1163, 1, 0
        %v1228 = vsel %vm1164, 1, 0
        %v1229 = vsel %vm1165, 1, 0
        %v1230 = vsel %vm1166, 1, 0
        %v1231 = vsel %vm1167, 1, 0
        %v1232 = vsel %vm1168, 1, 0
        %v1233 = vsel %vm1169, 1, 0
        %v1234 = vsel %vm1170, 1, 0
        %v1235 = vsel %vm1171, 1, 0
        %v1236 = vsel %vm1172, 1, 0
        %v1237 = vsel %vm1173, 1, 0
        %v1238 = vsel %vm1174, 1, 0
        %v1239 = vsel %vm1175, 1, 0
        %v1240 = vsel %vm1176, 1, 0
        %v1241 = vsel %vm1177, 1, 0
        %v1242 = vcvt.s32.f32 %v1178
        %v1243 = vcvt.s32.f32 %v1179
        %v1244 = vcvt.s32.f32 %v1180
        %v1245 = vcvt.s32.f32 %v1181
        %v1246 = vcvt.s32.f32 %v1182
        %v1247 = vcvt.s32.f32 %v1183
        %v1248 = vcvt.s32.f32 %v1184
        %v1249 = vcvt.s32.f32 %v1185
        %v1250 = vcvt.s32.f32 %v1186
        %v1251 = vcvt.s32.f32 %v1187
        %v1252 = vcvt.s32.f32 %v1188
        %v1253 = vcvt.s32.f32 %v1189
        %v1254 = vcvt.s32.f32 %v1190
        %v1255 = vcvt.s32.f32 %v1191
        %v1256 = vcvt.s32.f32 %v1192
        %v1257 = vcvt.s32.f32 %v1193
        %v1258 = vcvt.s32.f32 %v1194
        %v1259 = vcvt.s32.f32 %v1195
        %v1260 = vcvt.s32.f32 %v1196
        %v1261 = vcvt.s32.f32 %v1197
        %v1262 = vcvt.s32.f32 %v1198
        %v1263 = vcvt.s32.f32 %v1199
        %v1264 = vcvt.s32.f32 %v1200
        %v1265 = vcvt.s32.f32 %v1201
        %v1266 = vcvt.s32.f32 %v1202
        %v1267 = vcvt.s32.f32 %v1203
        %v1268 = vcvt.s32.f32 %v1204
        %v1269 = vcvt.s32.f32 %v1205
        %v1270 = vcvt.s32.f32 %v1206
        %v1271 = vcvt.s32.f32 %v1207
        %v1272 = vcvt.s32.f32 %v1208
        %v1273 = vcvt.s32.f32 %v1209
        %v1274 = vcvt.s32.f32 %v1210
        %v1275 = vcvt.s32.f32 %v1211
        %v1276 = vcvt.s32.f32 %v1212
        %v1277 = vcvt.s32.f32 %v1213
        %v1278 = vcvt.s32.f32 %v1214
        %v1279 = vcvt.s32.f32 %v1215
        %v1280 = vcvt.s32.f32 %v1216
        %v1281 = vcvt.s32.f32 %v1217
        %v1282 = vcvt.s32.f32 %v1218
        %v1283 = vcvt.s32.f32 %v1219
        %v1284 = vcvt.s32.f32 %v1220
        %v1285 = vcvt.s32.f32 %v1221
        %v1286 = vcvt.s32.f32 %v1222
        %v1287 = vcvt.s32.f32 %v1223
        %v1288 = vcvt.s32.f32 %v1224
        %v1289 = vcvt.s32.f32 %v1225
        %v1290 = vcvt.s32.f32 %v1226
        %v1291 = vcvt.s32.f32 %v1227
        %v1292 = vcvt.s32.f32 %v1228
        %v1293 = vcvt.s32.f32 %v1229
        %v1294 = vcvt.s32.f32 %v1230
        %v1295 = vcvt.s32.f32 %v1231
        %v1296 = vcvt.s32.f32 %v1232
        %v1297 = vcvt.s32.f32 %v1233
        %v1298 = vcvt.s32.f32 %v1234
        %v1299 = vcvt.s32.f32 %v1235
        %v1300 = vcvt.s32.f32 %v1236
        %v1301 = vcvt.s32.f32 %v1237
        %v1302 = vcvt.s32.f32 %v1238
        %v1303 = vcvt.s32.f32 %v1239
        %v1304 = vcvt.s32.f32 %v1240
        %v1305 = vcvt.s32.f32 %v1241
        %v1306 = vld [vmem:[%s2] sm:$0xff]
        %v1307 = vld [vmem:[%s2 + $0x8] sm:$0xff]
        %v1308 = vld [vmem:[%s2 + $0x10] sm:$0xff]
        %v1309 = vld [vmem:[%s2 + $0x18] sm:$0xff]
        %v1310 = vld [vmem:[%s2 + $0x20] sm:$0xff]
        %v1311 = vld [vmem:[%s2 + $0x28] sm:$0xff]
        %v1312 = vld [vmem:[%s2 + $0x30] sm:$0xff]
        %v1313 = vld [vmem:[%s2 + $0x38] sm:$0xff]
        %vm1314 = vcmask 261120
        %v1316 = vsel %vm1314, %v858, 0
        %v1319 = vsel %vm1314, %v859, 0
        %v1322 = vsel %vm1314, %v860, 0
        %v1325 = vsel %vm1314, %v861, 0
        %v1328 = vsel %vm1314, %v862, 0
        %v1331 = vsel %vm1314, %v863, 0
        %v1334 = vsel %vm1314, %v864, 0
        %v1337 = vsel %vm1314, %v865, 0
        %v1340 = vsel %vm1314, %v866, 0
        %v1343 = vsel %vm1314, %v867, 0
        %v1346 = vsel %vm1314, %v868, 0
        %v1349 = vsel %vm1314, %v869, 0
        %v1352 = vsel %vm1314, %v870, 0
        %v1355 = vsel %vm1314, %v871, 0
        %v1358 = vsel %vm1314, %v872, 0
        %v1361 = vsel %vm1314, %v873, 0
        %v1364 = vsel %vm1314, %v874, 0
        %v1367 = vsel %vm1314, %v875, 0
        %v1370 = vsel %vm1314, %v876, 0
        %v1373 = vsel %vm1314, %v877, 0
        %v1376 = vsel %vm1314, %v878, 0
        %v1379 = vsel %vm1314, %v879, 0
        %v1382 = vsel %vm1314, %v880, 0
        %v1385 = vsel %vm1314, %v881, 0
        %v1388 = vsel %vm1314, %v882, 0
        %v1391 = vsel %vm1314, %v883, 0
        %v1394 = vsel %vm1314, %v884, 0
        %v1397 = vsel %vm1314, %v885, 0
        %v1400 = vsel %vm1314, %v886, 0
        %v1403 = vsel %vm1314, %v887, 0
        %v1406 = vsel %vm1314, %v888, 0
        %v1409 = vsel %vm1314, %v889, 0
        %v1412 = vsel %vm1314, %v890, 0
        %v1415 = vsel %vm1314, %v891, 0
        %v1418 = vsel %vm1314, %v892, 0
        %v1421 = vsel %vm1314, %v893, 0
        %v1424 = vsel %vm1314, %v894, 0
        %v1427 = vsel %vm1314, %v895, 0
        %v1430 = vsel %vm1314, %v896, 0
        %v1433 = vsel %vm1314, %v897, 0
        %v1436 = vsel %vm1314, %v898, 0
        %v1439 = vsel %vm1314, %v899, 0
        %v1442 = vsel %vm1314, %v900, 0
        %v1445 = vsel %vm1314, %v901, 0
        %v1448 = vsel %vm1314, %v902, 0
        %v1451 = vsel %vm1314, %v903, 0
        %v1454 = vsel %vm1314, %v904, 0
        %v1457 = vsel %vm1314, %v905, 0
        %v1460 = vsel %vm1314, %v906, 0
        %v1463 = vsel %vm1314, %v907, 0
        %v1466 = vsel %vm1314, %v908, 0
        %v1469 = vsel %vm1314, %v909, 0
        %v1472 = vsel %vm1314, %v910, 0
        %v1475 = vsel %vm1314, %v911, 0
        %v1478 = vsel %vm1314, %v912, 0
        %v1481 = vsel %vm1314, %v913, 0
        %v1484 = vsel %vm1314, %v914, 0
        %v1487 = vsel %vm1314, %v915, 0
        %v1490 = vsel %vm1314, %v916, 0
        %v1493 = vsel %vm1314, %v917, 0
        %v1496 = vsel %vm1314, %v918, 0
        %v1499 = vsel %vm1314, %v919, 0
        %v1502 = vsel %vm1314, %v920, 0
        %v1505 = vsel %vm1314, %v921, 0
        %1507 = vmatprep.subr.mxu0 %v1307
        %1508 = vmatpush1.msra.mxu0 %v1306
        %1509 = vmatprep.subr.mxu0 %v1309
        %1510 = vmatpush1.msra.mxu0 %v1308
        %1511 = vmatprep.subr.mxu0 %v1311
        %1512 = vmatpush1.msra.mxu0 %v1310
        %1513 = vmatprep.subr.mxu0 %v1313
        %1514 = vmatpush1.msra.mxu0 %v1312
        %1515 = vmatprep.subr.mxu0 0.0
        %1516 = vmatpush1.msra.mxu0 0.0
        %1517 = vmatprep.subr.mxu0 0.0
        %1518 = vmatpush1.msra.mxu0 0.0
        %1519 = vmatprep.subr.mxu0 0.0
        %1520 = vmatpush1.msra.mxu0 0.0
        %1521 = vmatprep.subr.mxu0 0.0
        %1522 = vmatpush1.msra.mxu0 0.0
        %1523 = vmatprep.subr.mxu0 0.0
        %1524 = vmatpush1.msra.mxu0 0.0
        %1525 = vmatprep.subr.mxu0 0.0
        %1526 = vmatpush1.msra.mxu0 0.0
        %1527 = vmatprep.subr.mxu0 0.0
        %1528 = vmatpush1.msra.mxu0 0.0
        %1529 = vmatprep.subr.mxu0 0.0
        %1530 = vmatpush1.msra.mxu0 0.0
        %1531 = vmatprep.subr.mxu0 0.0
        %1532 = vmatpush1.msra.mxu0 0.0
        %1533 = vmatprep.subr.mxu0 0.0
        %1534 = vmatpush1.msra.mxu0 0.0
        %1535 = vmatprep.subr.mxu0 0.0
        %1536 = vmatpush1.msra.mxu0 0.0
        %1537 = vmatprep.subr.mxu0 0.0
        %1538 = vmatpush1.msra.mxu0 0.0
        %1539 = vmatprep.subr.mxu0 0.0
        %1540 = vmatpush1.msra.mxu0 0.0
        %1541 = vmatprep.subr.mxu0 0.0
        %1542 = vmatpush1.msra.mxu0 0.0
        %1543 = vmatprep.subr.mxu0 0.0
        %1544 = vmatpush1.msra.mxu0 0.0
        %1545 = vmatprep.subr.mxu0 0.0
        %1546 = vmatpush1.msra.mxu0 0.0
        %1547 = vmatprep.subr.mxu0 0.0
        %1548 = vmatpush1.msra.mxu0 0.0
        %1549 = vmatprep.subr.mxu0 0.0
        %1550 = vmatpush1.msra.mxu0 0.0
        %1551 = vmatprep.subr.mxu0 0.0
        %1552 = vmatpush1.msra.mxu0 0.0
        %1553 = vmatprep.subr.mxu0 0.0
        %1554 = vmatpush1.msra.mxu0 0.0
        %1555 = vmatprep.subr.mxu0 0.0
        %1556 = vmatpush1.msra.mxu0 0.0
        %1557 = vmatprep.subr.mxu0 0.0
        %1558 = vmatpush1.msra.mxu0 0.0
        %1559 = vmatprep.subr.mxu0 0.0
        %1560 = vmatpush1.msra.mxu0 0.0
        %1561 = vmatprep.subr.mxu0 0.0
        %1562 = vmatpush1.msra.mxu0 0.0
        %1563 = vmatprep.subr.mxu0 0.0
        %1564 = vmatpush1.msra.mxu0 0.0
        %1565 = vmatprep.subr.mxu0 0.0
        %1566 = vmatpush1.msra.mxu0 0.0
        %1567 = vmatprep.subr.mxu0 0.0
        %1568 = vmatpush1.msra.mxu0 0.0
        %1569 = vmatprep.subr.mxu0 0.0
        %1570 = vmatpush1.msra.mxu0 0.0
        %1571 = vmatprep.mubr.f32.mxu0 0.0
        %1572 = vmatmul.mubr.f32.gmra.mrb[0].mxu0 %v1316
        %v1573 = vpop.f32.mrb[0].mxu0
        %v1574 = vadd.f32 0.0, %v1573
        %v1575 = vpop.f32.mrb[0].mxu0
        %v1576 = vadd.f32 0.0, %v1575
        %1577 = vmatprep.mubr.f32.mxu0 0.0
        %1578 = vmatmul.mubr.f32.gmra.mrb[0].mxu0 %v1319
        %v1579 = vpop.f32.mrb[0].mxu0
        %v1580 = vadd.f32 0.0, %v1579
        %v1581 = vpop.f32.mrb[0].mxu0
        %v1582 = vadd.f32 0.0, %v1581
        %1583 = vmatprep.mubr.f32.mxu0 0.0
        %1584 = vmatmul.mubr.f32.gmra.mrb[0].mxu0 %v1322
        %v1585 = vpop.f32.mrb[0].mxu0
        %v1586 = vadd.f32 0.0, %v1585
        %v1587 = vpop.f32.mrb[0].mxu0
        %v1588 = vadd.f32 0.0, %v1587
        %1589 = vmatprep.mubr.f32.mxu0 0.0
        %1590 = vmatmul.mubr.f32.gmra.mrb[0].mxu0 %v1325
        %v1591 = vpop.f32.mrb[0].mxu0
        %v1592 = vadd.f32 0.0, %v1591
        %v1593 = vpop.f32.mrb[0].mxu0
        %v1594 = vadd.f32 0.0, %v1593
        %1595 = vmatprep.mubr.f32.mxu0 0.0
        %1596 = vmatmul.mubr.f32.gmra.mrb[0].mxu0 %v1328
        %v1597 = vpop.f32.mrb[0].mxu0
        %v1598 = vadd.f32 0.0, %v1597
        %v1599 = vpop.f32.mrb[0].mxu0
        %v1600 = vadd.f32 0.0, %v1599
        %1601 = vmatprep.mubr.f32.mxu0 0.0
        %1602 = vmatmul.mubr.f32.gmra.mrb[0].mxu0 %v1331
        %v1603 = vpop.f32.mrb[0].mxu0
        %v1604 = vadd.f32 0.0, %v1603
        %v1605 = vpop.f32.mrb[0].mxu0
        %v1606 = vadd.f32 0.0, %v1605
        %1607 = vmatprep.mubr.f32.mxu0 0.0
        %1608 = vmatmul.mubr.f32.gmra.mrb[0].mxu0 %v1334
        %v1609 = vpop.f32.mrb[0].mxu0
        %v1610 = vadd.f32 0.0, %v1609
        %v1611 = vpop.f32.mrb[0].mxu0
        %v1612 = vadd.f32 0.0, %v1611
        %1613 = vmatprep.mubr.f32.mxu0 0.0
        %1614 = vmatmul.mubr.f32.gmra.mrb[0].mxu0 %v1337
        %v1615 = vpop.f32.mrb[0].mxu0
        %v1616 = vadd.f32 0.0, %v1615
        %v1617 = vpop.f32.mrb[0].mxu0
        %v1618 = vadd.f32 0.0, %v1617
        %1619 = vmatprep.mubr.f32.mxu0 0.0
        %1620 = vmatmul.mubr.f32.gmra.mrb[0].mxu0 %v1340
        %v1621 = vpop.f32.mrb[0].mxu0
        %v1622 = vadd.f32 0.0, %v1621
        %v1623 = vpop.f32.mrb[0].mxu0
        %v1624 = vadd.f32 0.0, %v1623
        %1625 = vmatprep.mubr.f32.mxu0 0.0
        %1626 = vmatmul.mubr.f32.gmra.mrb[0].mxu0 %v1343
        %v1627 = vpop.f32.mrb[0].mxu0
        %v1628 = vadd.f32 0.0, %v1627
        %v1629 = vpop.f32.mrb[0].mxu0
        %v1630 = vadd.f32 0.0, %v1629
        %1631 = vmatprep.mubr.f32.mxu0 0.0
        %1632 = vmatmul.mubr.f32.gmra.mrb[0].mxu0 %v1346
        %v1633 = vpop.f32.mrb[0].mxu0
        %v1634 = vadd.f32 0.0, %v1633
        %v1635 = vpop.f32.mrb[0].mxu0
        %v1636 = vadd.f32 0.0, %v1635
        %1637 = vmatprep.mubr.f32.mxu0 0.0
        %1638 = vmatmul.mubr.f32.gmra.mrb[0].mxu0 %v1349
        %v1639 = vpop.f32.mrb[0].mxu0
        %v1640 = vadd.f32 0.0, %v1639
        %v1641 = vpop.f32.mrb[0].mxu0
        %v1642 = vadd.f32 0.0, %v1641
        %1643 = vmatprep.mubr.f32.mxu0 0.0
        %1644 = vmatmul.mubr.f32.gmra.mrb[0].mxu0 %v1352
        %v1645 = vpop.f32.mrb[0].mxu0
        %v1646 = vadd.f32 0.0, %v1645
        %v1647 = vpop.f32.mrb[0].mxu0
        %v1648 = vadd.f32 0.0, %v1647
        %1649 = vmatprep.mubr.f32.mxu0 0.0
        %1650 = vmatmul.mubr.f32.gmra.mrb[0].mxu0 %v1355
        %v1651 = vpop.f32.mrb[0].mxu0
        %v1652 = vadd.f32 0.0, %v1651
        %v1653 = vpop.f32.mrb[0].mxu0
        %v1654 = vadd.f32 0.0, %v1653
        %1655 = vmatprep.mubr.f32.mxu0 0.0
        %1656 = vmatmul.mubr.f32.gmra.mrb[0].mxu0 %v1358
        %v1657 = vpop.f32.mrb[0].mxu0
        %v1658 = vadd.f32 0.0, %v1657
        %v1659 = vpop.f32.mrb[0].mxu0
        %v1660 = vadd.f32 0.0, %v1659
        %1661 = vmatprep.mubr.f32.mxu0 0.0
        %1662 = vmatmul.mubr.f32.gmra.mrb[0].mxu0 %v1361
        %v1663 = vpop.f32.mrb[0].mxu0
        %v1664 = vadd.f32 0.0, %v1663
        %v1665 = vpop.f32.mrb[0].mxu0
        %v1666 = vadd.f32 0.0, %v1665
        %1667 = vmatprep.mubr.f32.mxu0 0.0
        %1668 = vmatmul.mubr.f32.gmra.mrb[0].mxu0 %v1364
        %v1669 = vpop.f32.mrb[0].mxu0
        %v1670 = vadd.f32 0.0, %v1669
        %v1671 = vpop.f32.mrb[0].mxu0
        %v1672 = vadd.f32 0.0, %v1671
        %1673 = vmatprep.mubr.f32.mxu0 0.0
        %1674 = vmatmul.mubr.f32.gmra.mrb[0].mxu0 %v1367
        %v1675 = vpop.f32.mrb[0].mxu0
        %v1676 = vadd.f32 0.0, %v1675
        %v1677 = vpop.f32.mrb[0].mxu0
        %v1678 = vadd.f32 0.0, %v1677
        %1679 = vmatprep.mubr.f32.mxu0 0.0
        %1680 = vmatmul.mubr.f32.gmra.mrb[0].mxu0 %v1370
        %v1681 = vpop.f32.mrb[0].mxu0
        %v1682 = vadd.f32 0.0, %v1681
        %v1683 = vpop.f32.mrb[0].mxu0
        %v1684 = vadd.f32 0.0, %v1683
        %1685 = vmatprep.mubr.f32.mxu0 0.0
        %1686 = vmatmul.mubr.f32.gmra.mrb[0].mxu0 %v1373
        %v1687 = vpop.f32.mrb[0].mxu0
        %v1688 = vadd.f32 0.0, %v1687
        %v1689 = vpop.f32.mrb[0].mxu0
        %v1690 = vadd.f32 0.0, %v1689
        %1691 = vmatprep.mubr.f32.mxu0 0.0
        %1692 = vmatmul.mubr.f32.gmra.mrb[0].mxu0 %v1376
        %v1693 = vpop.f32.mrb[0].mxu0
        %v1694 = vadd.f32 0.0, %v1693
        %v1695 = vpop.f32.mrb[0].mxu0
        %v1696 = vadd.f32 0.0, %v1695
        %1697 = vmatprep.mubr.f32.mxu0 0.0
        %1698 = vmatmul.mubr.f32.gmra.mrb[0].mxu0 %v1379
        %v1699 = vpop.f32.mrb[0].mxu0
        %v1700 = vadd.f32 0.0, %v1699
        %v1701 = vpop.f32.mrb[0].mxu0
        %v1702 = vadd.f32 0.0, %v1701
        %1703 = vmatprep.mubr.f32.mxu0 0.0
        %1704 = vmatmul.mubr.f32.gmra.mrb[0].mxu0 %v1382
        %v1705 = vpop.f32.mrb[0].mxu0
        %v1706 = vadd.f32 0.0, %v1705
        %v1707 = vpop.f32.mrb[0].mxu0
        %v1708 = vadd.f32 0.0, %v1707
        %1709 = vmatprep.mubr.f32.mxu0 0.0
        %1710 = vmatmul.mubr.f32.gmra.mrb[0].mxu0 %v1385
        %v1711 = vpop.f32.mrb[0].mxu0
        %v1712 = vadd.f32 0.0, %v1711
        %v1713 = vpop.f32.mrb[0].mxu0
        %v1714 = vadd.f32 0.0, %v1713
        %1715 = vmatprep.mubr.f32.mxu0 0.0
        %1716 = vmatmul.mubr.f32.gmra.mrb[0].mxu0 %v1388
        %v1717 = vpop.f32.mrb[0].mxu0
        %v1718 = vadd.f32 0.0, %v1717
        %v1719 = vpop.f32.mrb[0].mxu0
        %v1720 = vadd.f32 0.0, %v1719
        %1721 = vmatprep.mubr.f32.mxu0 0.0
        %1722 = vmatmul.mubr.f32.gmra.mrb[0].mxu0 %v1391
        %v1723 = vpop.f32.mrb[0].mxu0
        %v1724 = vadd.f32 0.0, %v1723
        %v1725 = vpop.f32.mrb[0].mxu0
        %v1726 = vadd.f32 0.0, %v1725
        %1727 = vmatprep.mubr.f32.mxu0 0.0
        %1728 = vmatmul.mubr.f32.gmra.mrb[0].mxu0 %v1394
        %v1729 = vpop.f32.mrb[0].mxu0
        %v1730 = vadd.f32 0.0, %v1729
        %v1731 = vpop.f32.mrb[0].mxu0
        %v1732 = vadd.f32 0.0, %v1731
        %1733 = vmatprep.mubr.f32.mxu0 0.0
        %1734 = vmatmul.mubr.f32.gmra.mrb[0].mxu0 %v1397
        %v1735 = vpop.f32.mrb[0].mxu0
        %v1736 = vadd.f32 0.0, %v1735
        %v1737 = vpop.f32.mrb[0].mxu0
        %v1738 = vadd.f32 0.0, %v1737
        %1739 = vmatprep.mubr.f32.mxu0 0.0
        %1740 = vmatmul.mubr.f32.gmra.mrb[0].mxu0 %v1400
        %v1741 = vpop.f32.mrb[0].mxu0
        %v1742 = vadd.f32 0.0, %v1741
        %v1743 = vpop.f32.mrb[0].mxu0
        %v1744 = vadd.f32 0.0, %v1743
        %1745 = vmatprep.mubr.f32.mxu0 0.0
        %1746 = vmatmul.mubr.f32.gmra.mrb[0].mxu0 %v1403
        %v1747 = vpop.f32.mrb[0].mxu0
        %v1748 = vadd.f32 0.0, %v1747
        %v1749 = vpop.f32.mrb[0].mxu0
        %v1750 = vadd.f32 0.0, %v1749
        %1751 = vmatprep.mubr.f32.mxu0 0.0
        %1752 = vmatmul.mubr.f32.gmra.mrb[0].mxu0 %v1406
        %v1753 = vpop.f32.mrb[0].mxu0
        %v1754 = vadd.f32 0.0, %v1753
        %v1755 = vpop.f32.mrb[0].mxu0
        %v1756 = vadd.f32 0.0, %v1755
        %1757 = vmatprep.mubr.f32.mxu0 0.0
        %1758 = vmatmul.mubr.f32.gmra.mrb[0].mxu0 %v1409
        %v1759 = vpop.f32.mrb[0].mxu0
        %v1760 = vadd.f32 0.0, %v1759
        %v1761 = vpop.f32.mrb[0].mxu0
        %v1762 = vadd.f32 0.0, %v1761
        %1763 = vmatprep.mubr.f32.mxu0 0.0
        %1764 = vmatmul.mubr.f32.gmra.mrb[0].mxu0 %v1412
        %v1765 = vpop.f32.mrb[0].mxu0
        %v1766 = vadd.f32 0.0, %v1765
        %v1767 = vpop.f32.mrb[0].mxu0
        %v1768 = vadd.f32 0.0, %v1767
        %1769 = vmatprep.mubr.f32.mxu0 0.0
        %1770 = vmatmul.mubr.f32.gmra.mrb[0].mxu0 %v1415
        %v1771 = vpop.f32.mrb[0].mxu0
        %v1772 = vadd.f32 0.0, %v1771
        %v1773 = vpop.f32.mrb[0].mxu0
        %v1774 = vadd.f32 0.0, %v1773
        %1775 = vmatprep.mubr.f32.mxu0 0.0
        %1776 = vmatmul.mubr.f32.gmra.mrb[0].mxu0 %v1418
        %v1777 = vpop.f32.mrb[0].mxu0
        %v1778 = vadd.f32 0.0, %v1777
        %v1779 = vpop.f32.mrb[0].mxu0
        %v1780 = vadd.f32 0.0, %v1779
        %1781 = vmatprep.mubr.f32.mxu0 0.0
        %1782 = vmatmul.mubr.f32.gmra.mrb[0].mxu0 %v1421
        %v1783 = vpop.f32.mrb[0].mxu0
        %v1784 = vadd.f32 0.0, %v1783
        %v1785 = vpop.f32.mrb[0].mxu0
        %v1786 = vadd.f32 0.0, %v1785
        %1787 = vmatprep.mubr.f32.mxu0 0.0
        %1788 = vmatmul.mubr.f32.gmra.mrb[0].mxu0 %v1424
        %v1789 = vpop.f32.mrb[0].mxu0
        %v1790 = vadd.f32 0.0, %v1789
        %v1791 = vpop.f32.mrb[0].mxu0
        %v1792 = vadd.f32 0.0, %v1791
        %1793 = vmatprep.mubr.f32.mxu0 0.0
        %1794 = vmatmul.mubr.f32.gmra.mrb[0].mxu0 %v1427
        %v1795 = vpop.f32.mrb[0].mxu0
        %v1796 = vadd.f32 0.0, %v1795
        %v1797 = vpop.f32.mrb[0].mxu0
        %v1798 = vadd.f32 0.0, %v1797
        %1799 = vmatprep.mubr.f32.mxu0 0.0
        %1800 = vmatmul.mubr.f32.gmra.mrb[0].mxu0 %v1430
        %v1801 = vpop.f32.mrb[0].mxu0
        %v1802 = vadd.f32 0.0, %v1801
        %v1803 = vpop.f32.mrb[0].mxu0
        %v1804 = vadd.f32 0.0, %v1803
        %1805 = vmatprep.mubr.f32.mxu0 0.0
        %1806 = vmatmul.mubr.f32.gmra.mrb[0].mxu0 %v1433
        %v1807 = vpop.f32.mrb[0].mxu0
        %v1808 = vadd.f32 0.0, %v1807
        %v1809 = vpop.f32.mrb[0].mxu0
        %v1810 = vadd.f32 0.0, %v1809
        %1811 = vmatprep.mubr.f32.mxu0 0.0
        %1812 = vmatmul.mubr.f32.gmra.mrb[0].mxu0 %v1436
        %v1813 = vpop.f32.mrb[0].mxu0
        %v1814 = vadd.f32 0.0, %v1813
        %v1815 = vpop.f32.mrb[0].mxu0
        %v1816 = vadd.f32 0.0, %v1815
        %1817 = vmatprep.mubr.f32.mxu0 0.0
        %1818 = vmatmul.mubr.f32.gmra.mrb[0].mxu0 %v1439
        %v1819 = vpop.f32.mrb[0].mxu0
        %v1820 = vadd.f32 0.0, %v1819
        %v1821 = vpop.f32.mrb[0].mxu0
        %v1822 = vadd.f32 0.0, %v1821
        %1823 = vmatprep.mubr.f32.mxu0 0.0
        %1824 = vmatmul.mubr.f32.gmra.mrb[0].mxu0 %v1442
        %v1825 = vpop.f32.mrb[0].mxu0
        %v1826 = vadd.f32 0.0, %v1825
        %v1827 = vpop.f32.mrb[0].mxu0
        %v1828 = vadd.f32 0.0, %v1827
        %1829 = vmatprep.mubr.f32.mxu0 0.0
        %1830 = vmatmul.mubr.f32.gmra.mrb[0].mxu0 %v1445
        %v1831 = vpop.f32.mrb[0].mxu0
        %v1832 = vadd.f32 0.0, %v1831
        %v1833 = vpop.f32.mrb[0].mxu0
        %v1834 = vadd.f32 0.0, %v1833
        %1835 = vmatprep.mubr.f32.mxu0 0.0
        %1836 = vmatmul.mubr.f32.gmra.mrb[0].mxu0 %v1448
        %v1837 = vpop.f32.mrb[0].mxu0
        %v1838 = vadd.f32 0.0, %v1837
        %v1839 = vpop.f32.mrb[0].mxu0
        %v1840 = vadd.f32 0.0, %v1839
        %1841 = vmatprep.mubr.f32.mxu0 0.0
        %1842 = vmatmul.mubr.f32.gmra.mrb[0].mxu0 %v1451
        %v1843 = vpop.f32.mrb[0].mxu0
        %v1844 = vadd.f32 0.0, %v1843
        %v1845 = vpop.f32.mrb[0].mxu0
        %v1846 = vadd.f32 0.0, %v1845
        %1847 = vmatprep.mubr.f32.mxu0 0.0
        %1848 = vmatmul.mubr.f32.gmra.mrb[0].mxu0 %v1454
        %v1849 = vpop.f32.mrb[0].mxu0
        %v1850 = vadd.f32 0.0, %v1849
        %v1851 = vpop.f32.mrb[0].mxu0
        %v1852 = vadd.f32 0.0, %v1851
        %1853 = vmatprep.mubr.f32.mxu0 0.0
        %1854 = vmatmul.mubr.f32.gmra.mrb[0].mxu0 %v1457
        %v1855 = vpop.f32.mrb[0].mxu0
        %v1856 = vadd.f32 0.0, %v1855
        %v1857 = vpop.f32.mrb[0].mxu0
        %v1858 = vadd.f32 0.0, %v1857
        %1859 = vmatprep.mubr.f32.mxu0 0.0
        %1860 = vmatmul.mubr.f32.gmra.mrb[0].mxu0 %v1460
        %v1861 = vpop.f32.mrb[0].mxu0
        %v1862 = vadd.f32 0.0, %v1861
        %v1863 = vpop.f32.mrb[0].mxu0
        %v1864 = vadd.f32 0.0, %v1863
        %1865 = vmatprep.mubr.f32.mxu0 0.0
        %1866 = vmatmul.mubr.f32.gmra.mrb[0].mxu0 %v1463
        %v1867 = vpop.f32.mrb[0].mxu0
        %v1868 = vadd.f32 0.0, %v1867
        %v1869 = vpop.f32.mrb[0].mxu0
        %v1870 = vadd.f32 0.0, %v1869
        %1871 = vmatprep.mubr.f32.mxu0 0.0
        %1872 = vmatmul.mubr.f32.gmra.mrb[0].mxu0 %v1466
        %v1873 = vpop.f32.mrb[0].mxu0
        %v1874 = vadd.f32 0.0, %v1873
        %v1875 = vpop.f32.mrb[0].mxu0
        %v1876 = vadd.f32 0.0, %v1875
        %1877 = vmatprep.mubr.f32.mxu0 0.0
        %1878 = vmatmul.mubr.f32.gmra.mrb[0].mxu0 %v1469
        %v1879 = vpop.f32.mrb[0].mxu0
        %v1880 = vadd.f32 0.0, %v1879
        %v1881 = vpop.f32.mrb[0].mxu0
        %v1882 = vadd.f32 0.0, %v1881
        %1883 = vmatprep.mubr.f32.mxu0 0.0
        %1884 = vmatmul.mubr.f32.gmra.mrb[0].mxu0 %v1472
        %v1885 = vpop.f32.mrb[0].mxu0
        %v1886 = vadd.f32 0.0, %v1885
        %v1887 = vpop.f32.mrb[0].mxu0
        %v1888 = vadd.f32 0.0, %v1887
        %1889 = vmatprep.mubr.f32.mxu0 0.0
        %1890 = vmatmul.mubr.f32.gmra.mrb[0].mxu0 %v1475
        %v1891 = vpop.f32.mrb[0].mxu0
        %v1892 = vadd.f32 0.0, %v1891
        %v1893 = vpop.f32.mrb[0].mxu0
        %v1894 = vadd.f32 0.0, %v1893
        %1895 = vmatprep.mubr.f32.mxu0 0.0
        %1896 = vmatmul.mubr.f32.gmra.mrb[0].mxu0 %v1478
        %v1897 = vpop.f32.mrb[0].mxu0
        %v1898 = vadd.f32 0.0, %v1897
        %v1899 = vpop.f32.mrb[0].mxu0
        %v1900 = vadd.f32 0.0, %v1899
        %1901 = vmatprep.mubr.f32.mxu0 0.0
        %1902 = vmatmul.mubr.f32.gmra.mrb[0].mxu0 %v1481
        %v1903 = vpop.f32.mrb[0].mxu0
        %v1904 = vadd.f32 0.0, %v1903
        %v1905 = vpop.f32.mrb[0].mxu0
        %v1906 = vadd.f32 0.0, %v1905
        %1907 = vmatprep.mubr.f32.mxu0 0.0
        %1908 = vmatmul.mubr.f32.gmra.mrb[0].mxu0 %v1484
        %v1909 = vpop.f32.mrb[0].mxu0
        %v1910 = vadd.f32 0.0, %v1909
        %v1911 = vpop.f32.mrb[0].mxu0
        %v1912 = vadd.f32 0.0, %v1911
        %1913 = vmatprep.mubr.f32.mxu0 0.0
        %1914 = vmatmul.mubr.f32.gmra.mrb[0].mxu0 %v1487
        %v1915 = vpop.f32.mrb[0].mxu0
        %v1916 = vadd.f32 0.0, %v1915
        %v1917 = vpop.f32.mrb[0].mxu0
        %v1918 = vadd.f32 0.0, %v1917
        %1919 = vmatprep.mubr.f32.mxu0 0.0
        %1920 = vmatmul.mubr.f32.gmra.mrb[0].mxu0 %v1490
        %v1921 = vpop.f32.mrb[0].mxu0
        %v1922 = vadd.f32 0.0, %v1921
        %v1923 = vpop.f32.mrb[0].mxu0
        %v1924 = vadd.f32 0.0, %v1923
        %1925 = vmatprep.mubr.f32.mxu0 0.0
        %1926 = vmatmul.mubr.f32.gmra.mrb[0].mxu0 %v1493
        %v1927 = vpop.f32.mrb[0].mxu0
        %v1928 = vadd.f32 0.0, %v1927
        %v1929 = vpop.f32.mrb[0].mxu0
        %v1930 = vadd.f32 0.0, %v1929
        %1931 = vmatprep.mubr.f32.mxu0 0.0
        %1932 = vmatmul.mubr.f32.gmra.mrb[0].mxu0 %v1496
        %v1933 = vpop.f32.mrb[0].mxu0
        %v1934 = vadd.f32 0.0, %v1933
        %v1935 = vpop.f32.mrb[0].mxu0
        %v1936 = vadd.f32 0.0, %v1935
        %1937 = vmatprep.mubr.f32.mxu0 0.0
        %1938 = vmatmul.mubr.f32.gmra.mrb[0].mxu0 %v1499
        %v1939 = vpop.f32.mrb[0].mxu0
        %v1940 = vadd.f32 0.0, %v1939
        %v1941 = vpop.f32.mrb[0].mxu0
        %v1942 = vadd.f32 0.0, %v1941
        %1943 = vmatprep.mubr.f32.mxu0 0.0
        %1944 = vmatmul.mubr.f32.gmra.mrb[0].mxu0 %v1502
        %v1945 = vpop.f32.mrb[0].mxu0
        %v1946 = vadd.f32 0.0, %v1945
        %v1947 = vpop.f32.mrb[0].mxu0
        %v1948 = vadd.f32 0.0, %v1947
        %1949 = vmatprep.mubr.f32.mxu0 0.0
        %1950 = vmatmul.mubr.f32.gmra.mrb[0].mxu0 %v1505
        %v1951 = vpop.f32.mrb[0].mxu0
        %v1952 = vadd.f32 0.0, %v1951
        %v1953 = vpop.f32.mrb[0].mxu0
        %v1954 = vadd.f32 0.0, %v1953
        %1955 = vdwg.mxu0
        %v1956 = vld [vmem:[%s3] sm:$0xff]
        %v1957 = vld [vmem:[%s3 + $0x8] sm:$0xff]
        %v1958 = vld [vmem:[%s3 + $0x10] sm:$0xff]
        %v1959 = vld [vmem:[%s3 + $0x18] sm:$0xff]
        %v1960 = vld [vmem:[%s3 + $0x20] sm:$0xff]
        %v1961 = vld [vmem:[%s3 + $0x28] sm:$0xff]
        %v1962 = vld [vmem:[%s3 + $0x30] sm:$0xff]
        %v1963 = vld [vmem:[%s3 + $0x38] sm:$0xff]
        %v1965 = vsel %vm1314, %v1242, 0
        %v1968 = vsel %vm1314, %v1243, 0
        %v1971 = vsel %vm1314, %v1244, 0
        %v1974 = vsel %vm1314, %v1245, 0
        %v1977 = vsel %vm1314, %v1246, 0
        %v1980 = vsel %vm1314, %v1247, 0
        %v1983 = vsel %vm1314, %v1248, 0
        %v1986 = vsel %vm1314, %v1249, 0
        %v1989 = vsel %vm1314, %v1250, 0
        %v1992 = vsel %vm1314, %v1251, 0
        %v1995 = vsel %vm1314, %v1252, 0
        %v1998 = vsel %vm1314, %v1253, 0
        %v2001 = vsel %vm1314, %v1254, 0
        %v2004 = vsel %vm1314, %v1255, 0
        %v2007 = vsel %vm1314, %v1256, 0
        %v2010 = vsel %vm1314, %v1257, 0
        %v2013 = vsel %vm1314, %v1258, 0
        %v2016 = vsel %vm1314, %v1259, 0
        %v2019 = vsel %vm1314, %v1260, 0
        %v2022 = vsel %vm1314, %v1261, 0
        %v2025 = vsel %vm1314, %v1262, 0
        %v2028 = vsel %vm1314, %v1263, 0
        %v2031 = vsel %vm1314, %v1264, 0
        %v2034 = vsel %vm1314, %v1265, 0
        %v2037 = vsel %vm1314, %v1266, 0
        %v2040 = vsel %vm1314, %v1267, 0
        %v2043 = vsel %vm1314, %v1268, 0
        %v2046 = vsel %vm1314, %v1269, 0
        %v2049 = vsel %vm1314, %v1270, 0
        %v2052 = vsel %vm1314, %v1271, 0
        %v2055 = vsel %vm1314, %v1272, 0
        %v2058 = vsel %vm1314, %v1273, 0
        %v2061 = vsel %vm1314, %v1274, 0
        %v2064 = vsel %vm1314, %v1275, 0
        %v2067 = vsel %vm1314, %v1276, 0
        %v2070 = vsel %vm1314, %v1277, 0
        %v2073 = vsel %vm1314, %v1278, 0
        %v2076 = vsel %vm1314, %v1279, 0
        %v2079 = vsel %vm1314, %v1280, 0
        %v2082 = vsel %vm1314, %v1281, 0
        %v2085 = vsel %vm1314, %v1282, 0
        %v2088 = vsel %vm1314, %v1283, 0
        %v2091 = vsel %vm1314, %v1284, 0
        %v2094 = vsel %vm1314, %v1285, 0
        %v2097 = vsel %vm1314, %v1286, 0
        %v2100 = vsel %vm1314, %v1287, 0
        %v2103 = vsel %vm1314, %v1288, 0
        %v2106 = vsel %vm1314, %v1289, 0
        %v2109 = vsel %vm1314, %v1290, 0
        %v2112 = vsel %vm1314, %v1291, 0
        %v2115 = vsel %vm1314, %v1292, 0
        %v2118 = vsel %vm1314, %v1293, 0
        %v2121 = vsel %vm1314, %v1294, 0
        %v2124 = vsel %vm1314, %v1295, 0
        %v2127 = vsel %vm1314, %v1296, 0
        %v2130 = vsel %vm1314, %v1297, 0
        %v2133 = vsel %vm1314, %v1298, 0
        %v2136 = vsel %vm1314, %v1299, 0
        %v2139 = vsel %vm1314, %v1300, 0
        %v2142 = vsel %vm1314, %v1301, 0
        %v2145 = vsel %vm1314, %v1302, 0
        %v2148 = vsel %vm1314, %v1303, 0
        %v2151 = vsel %vm1314, %v1304, 0
        %v2154 = vsel %vm1314, %v1305, 0
        %2156 = vmatprep.subr.mxu0 %v1957
        %2157 = vmatpush1.msra.mxu0 %v1956
        %2158 = vmatprep.subr.mxu0 %v1959
        %2159 = vmatpush1.msra.mxu0 %v1958
        %2160 = vmatprep.subr.mxu0 %v1961
        %2161 = vmatpush1.msra.mxu0 %v1960
        %2162 = vmatprep.subr.mxu0 %v1963
        %2163 = vmatpush1.msra.mxu0 %v1962
        %2164 = vmatprep.subr.mxu0 0.0
        %2165 = vmatpush1.msra.mxu0 0.0
        %2166 = vmatprep.subr.mxu0 0.0
        %2167 = vmatpush1.msra.mxu0 0.0
        %2168 = vmatprep.subr.mxu0 0.0
        %2169 = vmatpush1.msra.mxu0 0.0
        %2170 = vmatprep.subr.mxu0 0.0
        %2171 = vmatpush1.msra.mxu0 0.0
        %2172 = vmatprep.subr.mxu0 0.0
        %2173 = vmatpush1.msra.mxu0 0.0
        %2174 = vmatprep.subr.mxu0 0.0
        %2175 = vmatpush1.msra.mxu0 0.0
        %2176 = vmatprep.subr.mxu0 0.0
        %2177 = vmatpush1.msra.mxu0 0.0
        %2178 = vmatprep.subr.mxu0 0.0
        %2179 = vmatpush1.msra.mxu0 0.0
        %2180 = vmatprep.subr.mxu0 0.0
        %2181 = vmatpush1.msra.mxu0 0.0
        %2182 = vmatprep.subr.mxu0 0.0
        %2183 = vmatpush1.msra.mxu0 0.0
        %2184 = vmatprep.subr.mxu0 0.0
        %2185 = vmatpush1.msra.mxu0 0.0
        %2186 = vmatprep.subr.mxu0 0.0
        %2187 = vmatpush1.msra.mxu0 0.0
        %2188 = vmatprep.subr.mxu0 0.0
        %2189 = vmatpush1.msra.mxu0 0.0
        %2190 = vmatprep.subr.mxu0 0.0
        %2191 = vmatpush1.msra.mxu0 0.0
        %2192 = vmatprep.subr.mxu0 0.0
        %2193 = vmatpush1.msra.mxu0 0.0
        %2194 = vmatprep.subr.mxu0 0.0
        %2195 = vmatpush1.msra.mxu0 0.0
        %2196 = vmatprep.subr.mxu0 0.0
        %2197 = vmatpush1.msra.mxu0 0.0
        %2198 = vmatprep.subr.mxu0 0.0
        %2199 = vmatpush1.msra.mxu0 0.0
        %2200 = vmatprep.subr.mxu0 0.0
        %2201 = vmatpush1.msra.mxu0 0.0
        %2202 = vmatprep.subr.mxu0 0.0
        %2203 = vmatpush1.msra.mxu0 0.0
        %2204 = vmatprep.subr.mxu0 0.0
        %2205 = vmatpush1.msra.mxu0 0.0
        %2206 = vmatprep.subr.mxu0 0.0
        %2207 = vmatpush1.msra.mxu0 0.0
        %2208 = vmatprep.subr.mxu0 0.0
        %2209 = vmatpush1.msra.mxu0 0.0
        %2210 = vmatprep.subr.mxu0 0.0
        %2211 = vmatpush1.msra.mxu0 0.0
        %2212 = vmatprep.subr.mxu0 0.0
        %2213 = vmatpush1.msra.mxu0 0.0
        %2214 = vmatprep.subr.mxu0 0.0
        %2215 = vmatpush1.msra.mxu0 0.0
        %2216 = vmatprep.subr.mxu0 0.0
        %2217 = vmatpush1.msra.mxu0 0.0
        %2218 = vmatprep.subr.mxu0 0.0
        %2219 = vmatpush1.msra.mxu0 0.0
        %2220 = vmatprep.mubr.f32.mxu0 0.0
        %2221 = vmatmul.mubr.f32.gmra.mrb[0].mxu0 %v1965
        %v2222 = vpop.f32.mrb[0].mxu0
        %v2223 = vadd.f32 0.0, %v2222
        %v2224 = vpop.f32.mrb[0].mxu0
        %v2225 = vadd.f32 0.0, %v2224
        %2226 = vmatprep.mubr.f32.mxu0 0.0
        %2227 = vmatmul.mubr.f32.gmra.mrb[0].mxu0 %v1968
        %v2228 = vpop.f32.mrb[0].mxu0
        %v2229 = vadd.f32 0.0, %v2228
        %v2230 = vpop.f32.mrb[0].mxu0
        %v2231 = vadd.f32 0.0, %v2230
        %2232 = vmatprep.mubr.f32.mxu0 0.0
        %2233 = vmatmul.mubr.f32.gmra.mrb[0].mxu0 %v1971
        %v2234 = vpop.f32.mrb[0].mxu0
        %v2235 = vadd.f32 0.0, %v2234
        %v2236 = vpop.f32.mrb[0].mxu0
        %v2237 = vadd.f32 0.0, %v2236
        %2238 = vmatprep.mubr.f32.mxu0 0.0
        %2239 = vmatmul.mubr.f32.gmra.mrb[0].mxu0 %v1974
        %v2240 = vpop.f32.mrb[0].mxu0
        %v2241 = vadd.f32 0.0, %v2240
        %v2242 = vpop.f32.mrb[0].mxu0
        %v2243 = vadd.f32 0.0, %v2242
        %2244 = vmatprep.mubr.f32.mxu0 0.0
        %2245 = vmatmul.mubr.f32.gmra.mrb[0].mxu0 %v1977
        %v2246 = vpop.f32.mrb[0].mxu0
        %v2247 = vadd.f32 0.0, %v2246
        %v2248 = vpop.f32.mrb[0].mxu0
        %v2249 = vadd.f32 0.0, %v2248
        %2250 = vmatprep.mubr.f32.mxu0 0.0
        %2251 = vmatmul.mubr.f32.gmra.mrb[0].mxu0 %v1980
        %v2252 = vpop.f32.mrb[0].mxu0
        %v2253 = vadd.f32 0.0, %v2252
        %v2254 = vpop.f32.mrb[0].mxu0
        %v2255 = vadd.f32 0.0, %v2254
        %2256 = vmatprep.mubr.f32.mxu0 0.0
        %2257 = vmatmul.mubr.f32.gmra.mrb[0].mxu0 %v1983
        %v2258 = vpop.f32.mrb[0].mxu0
        %v2259 = vadd.f32 0.0, %v2258
        %v2260 = vpop.f32.mrb[0].mxu0
        %v2261 = vadd.f32 0.0, %v2260
        %2262 = vmatprep.mubr.f32.mxu0 0.0
        %2263 = vmatmul.mubr.f32.gmra.mrb[0].mxu0 %v1986
        %v2264 = vpop.f32.mrb[0].mxu0
        %v2265 = vadd.f32 0.0, %v2264
        %v2266 = vpop.f32.mrb[0].mxu0
        %v2267 = vadd.f32 0.0, %v2266
        %2268 = vmatprep.mubr.f32.mxu0 0.0
        %2269 = vmatmul.mubr.f32.gmra.mrb[0].mxu0 %v1989
        %v2270 = vpop.f32.mrb[0].mxu0
        %v2271 = vadd.f32 0.0, %v2270
        %v2272 = vpop.f32.mrb[0].mxu0
        %v2273 = vadd.f32 0.0, %v2272
        %2274 = vmatprep.mubr.f32.mxu0 0.0
        %2275 = vmatmul.mubr.f32.gmra.mrb[0].mxu0 %v1992
        %v2276 = vpop.f32.mrb[0].mxu0
        %v2277 = vadd.f32 0.0, %v2276
        %v2278 = vpop.f32.mrb[0].mxu0
        %v2279 = vadd.f32 0.0, %v2278
        %2280 = vmatprep.mubr.f32.mxu0 0.0
        %2281 = vmatmul.mubr.f32.gmra.mrb[0].mxu0 %v1995
        %v2282 = vpop.f32.mrb[0].mxu0
        %v2283 = vadd.f32 0.0, %v2282
        %v2284 = vpop.f32.mrb[0].mxu0
        %v2285 = vadd.f32 0.0, %v2284
        %2286 = vmatprep.mubr.f32.mxu0 0.0
        %2287 = vmatmul.mubr.f32.gmra.mrb[0].mxu0 %v1998
        %v2288 = vpop.f32.mrb[0].mxu0
        %v2289 = vadd.f32 0.0, %v2288
        %v2290 = vpop.f32.mrb[0].mxu0
        %v2291 = vadd.f32 0.0, %v2290
        %2292 = vmatprep.mubr.f32.mxu0 0.0
        %2293 = vmatmul.mubr.f32.gmra.mrb[0].mxu0 %v2001
        %v2294 = vpop.f32.mrb[0].mxu0
        %v2295 = vadd.f32 0.0, %v2294
        %v2296 = vpop.f32.mrb[0].mxu0
        %v2297 = vadd.f32 0.0, %v2296
        %2298 = vmatprep.mubr.f32.mxu0 0.0
        %2299 = vmatmul.mubr.f32.gmra.mrb[0].mxu0 %v2004
        %v2300 = vpop.f32.mrb[0].mxu0
        %v2301 = vadd.f32 0.0, %v2300
        %v2302 = vpop.f32.mrb[0].mxu0
        %v2303 = vadd.f32 0.0, %v2302
        %2304 = vmatprep.mubr.f32.mxu0 0.0
        %2305 = vmatmul.mubr.f32.gmra.mrb[0].mxu0 %v2007
        %v2306 = vpop.f32.mrb[0].mxu0
        %v2307 = vadd.f32 0.0, %v2306
        %v2308 = vpop.f32.mrb[0].mxu0
        %v2309 = vadd.f32 0.0, %v2308
        %2310 = vmatprep.mubr.f32.mxu0 0.0
        %2311 = vmatmul.mubr.f32.gmra.mrb[0].mxu0 %v2010
        %v2312 = vpop.f32.mrb[0].mxu0
        %v2313 = vadd.f32 0.0, %v2312
        %v2314 = vpop.f32.mrb[0].mxu0
        %v2315 = vadd.f32 0.0, %v2314
        %2316 = vmatprep.mubr.f32.mxu0 0.0
        %2317 = vmatmul.mubr.f32.gmra.mrb[0].mxu0 %v2013
        %v2318 = vpop.f32.mrb[0].mxu0
        %v2319 = vadd.f32 0.0, %v2318
        %v2320 = vpop.f32.mrb[0].mxu0
        %v2321 = vadd.f32 0.0, %v2320
        %2322 = vmatprep.mubr.f32.mxu0 0.0
        %2323 = vmatmul.mubr.f32.gmra.mrb[0].mxu0 %v2016
        %v2324 = vpop.f32.mrb[0].mxu0
        %v2325 = vadd.f32 0.0, %v2324
        %v2326 = vpop.f32.mrb[0].mxu0
        %v2327 = vadd.f32 0.0, %v2326
        %2328 = vmatprep.mubr.f32.mxu0 0.0
        %2329 = vmatmul.mubr.f32.gmra.mrb[0].mxu0 %v2019
        %v2330 = vpop.f32.mrb[0].mxu0
        %v2331 = vadd.f32 0.0, %v2330
        %v2332 = vpop.f32.mrb[0].mxu0
        %v2333 = vadd.f32 0.0, %v2332
        %2334 = vmatprep.mubr.f32.mxu0 0.0
        %2335 = vmatmul.mubr.f32.gmra.mrb[0].mxu0 %v2022
        %v2336 = vpop.f32.mrb[0].mxu0
        %v2337 = vadd.f32 0.0, %v2336
        %v2338 = vpop.f32.mrb[0].mxu0
        %v2339 = vadd.f32 0.0, %v2338
        %2340 = vmatprep.mubr.f32.mxu0 0.0
        %2341 = vmatmul.mubr.f32.gmra.mrb[0].mxu0 %v2025
        %v2342 = vpop.f32.mrb[0].mxu0
        %v2343 = vadd.f32 0.0, %v2342
        %v2344 = vpop.f32.mrb[0].mxu0
        %v2345 = vadd.f32 0.0, %v2344
        %2346 = vmatprep.mubr.f32.mxu0 0.0
        %2347 = vmatmul.mubr.f32.gmra.mrb[0].mxu0 %v2028
        %v2348 = vpop.f32.mrb[0].mxu0
        %v2349 = vadd.f32 0.0, %v2348
        %v2350 = vpop.f32.mrb[0].mxu0
        %v2351 = vadd.f32 0.0, %v2350
        %2352 = vmatprep.mubr.f32.mxu0 0.0
        %2353 = vmatmul.mubr.f32.gmra.mrb[0].mxu0 %v2031
        %v2354 = vpop.f32.mrb[0].mxu0
        %v2355 = vadd.f32 0.0, %v2354
        %v2356 = vpop.f32.mrb[0].mxu0
        %v2357 = vadd.f32 0.0, %v2356
        %2358 = vmatprep.mubr.f32.mxu0 0.0
        %2359 = vmatmul.mubr.f32.gmra.mrb[0].mxu0 %v2034
        %v2360 = vpop.f32.mrb[0].mxu0
        %v2361 = vadd.f32 0.0, %v2360
        %v2362 = vpop.f32.mrb[0].mxu0
        %v2363 = vadd.f32 0.0, %v2362
        %2364 = vmatprep.mubr.f32.mxu0 0.0
        %2365 = vmatmul.mubr.f32.gmra.mrb[0].mxu0 %v2037
        %v2366 = vpop.f32.mrb[0].mxu0
        %v2367 = vadd.f32 0.0, %v2366
        %v2368 = vpop.f32.mrb[0].mxu0
        %v2369 = vadd.f32 0.0, %v2368
        %2370 = vmatprep.mubr.f32.mxu0 0.0
        %2371 = vmatmul.mubr.f32.gmra.mrb[0].mxu0 %v2040
        %v2372 = vpop.f32.mrb[0].mxu0
        %v2373 = vadd.f32 0.0, %v2372
        %v2374 = vpop.f32.mrb[0].mxu0
        %v2375 = vadd.f32 0.0, %v2374
        %2376 = vmatprep.mubr.f32.mxu0 0.0
        %2377 = vmatmul.mubr.f32.gmra.mrb[0].mxu0 %v2043
        %v2378 = vpop.f32.mrb[0].mxu0
        %v2379 = vadd.f32 0.0, %v2378
        %v2380 = vpop.f32.mrb[0].mxu0
        %v2381 = vadd.f32 0.0, %v2380
        %2382 = vmatprep.mubr.f32.mxu0 0.0
        %2383 = vmatmul.mubr.f32.gmra.mrb[0].mxu0 %v2046
        %v2384 = vpop.f32.mrb[0].mxu0
        %v2385 = vadd.f32 0.0, %v2384
        %v2386 = vpop.f32.mrb[0].mxu0
        %v2387 = vadd.f32 0.0, %v2386
        %2388 = vmatprep.mubr.f32.mxu0 0.0
        %2389 = vmatmul.mubr.f32.gmra.mrb[0].mxu0 %v2049
        %v2390 = vpop.f32.mrb[0].mxu0
        %v2391 = vadd.f32 0.0, %v2390
        %v2392 = vpop.f32.mrb[0].mxu0
        %v2393 = vadd.f32 0.0, %v2392
        %2394 = vmatprep.mubr.f32.mxu0 0.0
        %2395 = vmatmul.mubr.f32.gmra.mrb[0].mxu0 %v2052
        %v2396 = vpop.f32.mrb[0].mxu0
        %v2397 = vadd.f32 0.0, %v2396
        %v2398 = vpop.f32.mrb[0].mxu0
        %v2399 = vadd.f32 0.0, %v2398
        %2400 = vmatprep.mubr.f32.mxu0 0.0
        %2401 = vmatmul.mubr.f32.gmra.mrb[0].mxu0 %v2055
        %v2402 = vpop.f32.mrb[0].mxu0
        %v2403 = vadd.f32 0.0, %v2402
        %v2404 = vpop.f32.mrb[0].mxu0
        %v2405 = vadd.f32 0.0, %v2404
        %2406 = vmatprep.mubr.f32.mxu0 0.0
        %2407 = vmatmul.mubr.f32.gmra.mrb[0].mxu0 %v2058
        %v2408 = vpop.f32.mrb[0].mxu0
        %v2409 = vadd.f32 0.0, %v2408
        %v2410 = vpop.f32.mrb[0].mxu0
        %v2411 = vadd.f32 0.0, %v2410
        %2412 = vmatprep.mubr.f32.mxu0 0.0
        %2413 = vmatmul.mubr.f32.gmra.mrb[0].mxu0 %v2061
        %v2414 = vpop.f32.mrb[0].mxu0
        %v2415 = vadd.f32 0.0, %v2414
        %v2416 = vpop.f32.mrb[0].mxu0
        %v2417 = vadd.f32 0.0, %v2416
        %2418 = vmatprep.mubr.f32.mxu0 0.0
        %2419 = vmatmul.mubr.f32.gmra.mrb[0].mxu0 %v2064
        %v2420 = vpop.f32.mrb[0].mxu0
        %v2421 = vadd.f32 0.0, %v2420
        %v2422 = vpop.f32.mrb[0].mxu0
        %v2423 = vadd.f32 0.0, %v2422
        %2424 = vmatprep.mubr.f32.mxu0 0.0
        %2425 = vmatmul.mubr.f32.gmra.mrb[0].mxu0 %v2067
        %v2426 = vpop.f32.mrb[0].mxu0
        %v2427 = vadd.f32 0.0, %v2426
        %v2428 = vpop.f32.mrb[0].mxu0
        %v2429 = vadd.f32 0.0, %v2428
        %2430 = vmatprep.mubr.f32.mxu0 0.0
        %2431 = vmatmul.mubr.f32.gmra.mrb[0].mxu0 %v2070
        %v2432 = vpop.f32.mrb[0].mxu0
        %v2433 = vadd.f32 0.0, %v2432
        %v2434 = vpop.f32.mrb[0].mxu0
        %v2435 = vadd.f32 0.0, %v2434
        %2436 = vmatprep.mubr.f32.mxu0 0.0
        %2437 = vmatmul.mubr.f32.gmra.mrb[0].mxu0 %v2073
        %v2438 = vpop.f32.mrb[0].mxu0
        %v2439 = vadd.f32 0.0, %v2438
        %v2440 = vpop.f32.mrb[0].mxu0
        %v2441 = vadd.f32 0.0, %v2440
        %2442 = vmatprep.mubr.f32.mxu0 0.0
        %2443 = vmatmul.mubr.f32.gmra.mrb[0].mxu0 %v2076
        %v2444 = vpop.f32.mrb[0].mxu0
        %v2445 = vadd.f32 0.0, %v2444
        %v2446 = vpop.f32.mrb[0].mxu0
        %v2447 = vadd.f32 0.0, %v2446
        %2448 = vmatprep.mubr.f32.mxu0 0.0
        %2449 = vmatmul.mubr.f32.gmra.mrb[0].mxu0 %v2079
        %v2450 = vpop.f32.mrb[0].mxu0
        %v2451 = vadd.f32 0.0, %v2450
        %v2452 = vpop.f32.mrb[0].mxu0
        %v2453 = vadd.f32 0.0, %v2452
        %2454 = vmatprep.mubr.f32.mxu0 0.0
        %2455 = vmatmul.mubr.f32.gmra.mrb[0].mxu0 %v2082
        %v2456 = vpop.f32.mrb[0].mxu0
        %v2457 = vadd.f32 0.0, %v2456
        %v2458 = vpop.f32.mrb[0].mxu0
        %v2459 = vadd.f32 0.0, %v2458
        %2460 = vmatprep.mubr.f32.mxu0 0.0
        %2461 = vmatmul.mubr.f32.gmra.mrb[0].mxu0 %v2085
        %v2462 = vpop.f32.mrb[0].mxu0
        %v2463 = vadd.f32 0.0, %v2462
        %v2464 = vpop.f32.mrb[0].mxu0
        %v2465 = vadd.f32 0.0, %v2464
        %2466 = vmatprep.mubr.f32.mxu0 0.0
        %2467 = vmatmul.mubr.f32.gmra.mrb[0].mxu0 %v2088
        %v2468 = vpop.f32.mrb[0].mxu0
        %v2469 = vadd.f32 0.0, %v2468
        %v2470 = vpop.f32.mrb[0].mxu0
        %v2471 = vadd.f32 0.0, %v2470
        %2472 = vmatprep.mubr.f32.mxu0 0.0
        %2473 = vmatmul.mubr.f32.gmra.mrb[0].mxu0 %v2091
        %v2474 = vpop.f32.mrb[0].mxu0
        %v2475 = vadd.f32 0.0, %v2474
        %v2476 = vpop.f32.mrb[0].mxu0
        %v2477 = vadd.f32 0.0, %v2476
        %2478 = vmatprep.mubr.f32.mxu0 0.0
        %2479 = vmatmul.mubr.f32.gmra.mrb[0].mxu0 %v2094
        %v2480 = vpop.f32.mrb[0].mxu0
        %v2481 = vadd.f32 0.0, %v2480
        %v2482 = vpop.f32.mrb[0].mxu0
        %v2483 = vadd.f32 0.0, %v2482
        %2484 = vmatprep.mubr.f32.mxu0 0.0
        %2485 = vmatmul.mubr.f32.gmra.mrb[0].mxu0 %v2097
        %v2486 = vpop.f32.mrb[0].mxu0
        %v2487 = vadd.f32 0.0, %v2486
        %v2488 = vpop.f32.mrb[0].mxu0
        %v2489 = vadd.f32 0.0, %v2488
        %2490 = vmatprep.mubr.f32.mxu0 0.0
        %2491 = vmatmul.mubr.f32.gmra.mrb[0].mxu0 %v2100
        %v2492 = vpop.f32.mrb[0].mxu0
        %v2493 = vadd.f32 0.0, %v2492
        %v2494 = vpop.f32.mrb[0].mxu0
        %v2495 = vadd.f32 0.0, %v2494
        %2496 = vmatprep.mubr.f32.mxu0 0.0
        %2497 = vmatmul.mubr.f32.gmra.mrb[0].mxu0 %v2103
        %v2498 = vpop.f32.mrb[0].mxu0
        %v2499 = vadd.f32 0.0, %v2498
        %v2500 = vpop.f32.mrb[0].mxu0
        %v2501 = vadd.f32 0.0, %v2500
        %2502 = vmatprep.mubr.f32.mxu0 0.0
        %2503 = vmatmul.mubr.f32.gmra.mrb[0].mxu0 %v2106
        %v2504 = vpop.f32.mrb[0].mxu0
        %v2505 = vadd.f32 0.0, %v2504
        %v2506 = vpop.f32.mrb[0].mxu0
        %v2507 = vadd.f32 0.0, %v2506
        %2508 = vmatprep.mubr.f32.mxu0 0.0
        %2509 = vmatmul.mubr.f32.gmra.mrb[0].mxu0 %v2109
        %v2510 = vpop.f32.mrb[0].mxu0
        %v2511 = vadd.f32 0.0, %v2510
        %v2512 = vpop.f32.mrb[0].mxu0
        %v2513 = vadd.f32 0.0, %v2512
        %2514 = vmatprep.mubr.f32.mxu0 0.0
        %2515 = vmatmul.mubr.f32.gmra.mrb[0].mxu0 %v2112
        %v2516 = vpop.f32.mrb[0].mxu0
        %v2517 = vadd.f32 0.0, %v2516
        %v2518 = vpop.f32.mrb[0].mxu0
        %v2519 = vadd.f32 0.0, %v2518
        %2520 = vmatprep.mubr.f32.mxu0 0.0
        %2521 = vmatmul.mubr.f32.gmra.mrb[0].mxu0 %v2115
        %v2522 = vpop.f32.mrb[0].mxu0
        %v2523 = vadd.f32 0.0, %v2522
        %v2524 = vpop.f32.mrb[0].mxu0
        %v2525 = vadd.f32 0.0, %v2524
        %2526 = vmatprep.mubr.f32.mxu0 0.0
        %2527 = vmatmul.mubr.f32.gmra.mrb[0].mxu0 %v2118
        %v2528 = vpop.f32.mrb[0].mxu0
        %v2529 = vadd.f32 0.0, %v2528
        %v2530 = vpop.f32.mrb[0].mxu0
        %v2531 = vadd.f32 0.0, %v2530
        %2532 = vmatprep.mubr.f32.mxu0 0.0
        %2533 = vmatmul.mubr.f32.gmra.mrb[0].mxu0 %v2121
        %v2534 = vpop.f32.mrb[0].mxu0
        %v2535 = vadd.f32 0.0, %v2534
        %v2536 = vpop.f32.mrb[0].mxu0
        %v2537 = vadd.f32 0.0, %v2536
        %2538 = vmatprep.mubr.f32.mxu0 0.0
        %2539 = vmatmul.mubr.f32.gmra.mrb[0].mxu0 %v2124
        %v2540 = vpop.f32.mrb[0].mxu0
        %v2541 = vadd.f32 0.0, %v2540
        %v2542 = vpop.f32.mrb[0].mxu0
        %v2543 = vadd.f32 0.0, %v2542
        %2544 = vmatprep.mubr.f32.mxu0 0.0
        %2545 = vmatmul.mubr.f32.gmra.mrb[0].mxu0 %v2127
        %v2546 = vpop.f32.mrb[0].mxu0
        %v2547 = vadd.f32 0.0, %v2546
        %v2548 = vpop.f32.mrb[0].mxu0
        %v2549 = vadd.f32 0.0, %v2548
        %2550 = vmatprep.mubr.f32.mxu0 0.0
        %2551 = vmatmul.mubr.f32.gmra.mrb[0].mxu0 %v2130
        %v2552 = vpop.f32.mrb[0].mxu0
        %v2553 = vadd.f32 0.0, %v2552
        %v2554 = vpop.f32.mrb[0].mxu0
        %v2555 = vadd.f32 0.0, %v2554
        %2556 = vmatprep.mubr.f32.mxu0 0.0
        %2557 = vmatmul.mubr.f32.gmra.mrb[0].mxu0 %v2133
        %v2558 = vpop.f32.mrb[0].mxu0
        %v2559 = vadd.f32 0.0, %v2558
        %v2560 = vpop.f32.mrb[0].mxu0
        %v2561 = vadd.f32 0.0, %v2560
        %2562 = vmatprep.mubr.f32.mxu0 0.0
        %2563 = vmatmul.mubr.f32.gmra.mrb[0].mxu0 %v2136
        %v2564 = vpop.f32.mrb[0].mxu0
        %v2565 = vadd.f32 0.0, %v2564
        %v2566 = vpop.f32.mrb[0].mxu0
        %v2567 = vadd.f32 0.0, %v2566
        %2568 = vmatprep.mubr.f32.mxu0 0.0
        %2569 = vmatmul.mubr.f32.gmra.mrb[0].mxu0 %v2139
        %v2570 = vpop.f32.mrb[0].mxu0
        %v2571 = vadd.f32 0.0, %v2570
        %v2572 = vpop.f32.mrb[0].mxu0
        %v2573 = vadd.f32 0.0, %v2572
        %2574 = vmatprep.mubr.f32.mxu0 0.0
        %2575 = vmatmul.mubr.f32.gmra.mrb[0].mxu0 %v2142
        %v2576 = vpop.f32.mrb[0].mxu0
        %v2577 = vadd.f32 0.0, %v2576
        %v2578 = vpop.f32.mrb[0].mxu0
        %v2579 = vadd.f32 0.0, %v2578
        %2580 = vmatprep.mubr.f32.mxu0 0.0
        %2581 = vmatmul.mubr.f32.gmra.mrb[0].mxu0 %v2145
        %v2582 = vpop.f32.mrb[0].mxu0
        %v2583 = vadd.f32 0.0, %v2582
        %v2584 = vpop.f32.mrb[0].mxu0
        %v2585 = vadd.f32 0.0, %v2584
        %2586 = vmatprep.mubr.f32.mxu0 0.0
        %2587 = vmatmul.mubr.f32.gmra.mrb[0].mxu0 %v2148
        %v2588 = vpop.f32.mrb[0].mxu0
        %v2589 = vadd.f32 0.0, %v2588
        %v2590 = vpop.f32.mrb[0].mxu0
        %v2591 = vadd.f32 0.0, %v2590
        %2592 = vmatprep.mubr.f32.mxu0 0.0
        %2593 = vmatmul.mubr.f32.gmra.mrb[0].mxu0 %v2151
        %v2594 = vpop.f32.mrb[0].mxu0
        %v2595 = vadd.f32 0.0, %v2594
        %v2596 = vpop.f32.mrb[0].mxu0
        %v2597 = vadd.f32 0.0, %v2596
        %2598 = vmatprep.mubr.f32.mxu0 0.0
        %2599 = vmatmul.mubr.f32.gmra.mrb[0].mxu0 %v2154
        %v2600 = vpop.f32.mrb[0].mxu0
        %v2601 = vadd.f32 0.0, %v2600
        %v2602 = vpop.f32.mrb[0].mxu0
        %v2603 = vadd.f32 0.0, %v2602
        %2604 = vdwg.mxu0
        %v2605 = vsub.f32 %v1576, %v2225
        %v2606 = vsub.f32 %v1582, %v2231
        %v2607 = vsub.f32 %v1588, %v2237
        %v2608 = vsub.f32 %v1594, %v2243
        %v2609 = vsub.f32 %v1600, %v2249
        %v2610 = vsub.f32 %v1606, %v2255
        %v2611 = vsub.f32 %v1612, %v2261
        %v2612 = vsub.f32 %v1618, %v2267
        %v2613 = vsub.f32 %v1624, %v2273
        %v2614 = vsub.f32 %v1630, %v2279
        %v2615 = vsub.f32 %v1636, %v2285
        %v2616 = vsub.f32 %v1642, %v2291
        %v2617 = vsub.f32 %v1648, %v2297
        %v2618 = vsub.f32 %v1654, %v2303
        %v2619 = vsub.f32 %v1660, %v2309
        %v2620 = vsub.f32 %v1666, %v2315
        %v2621 = vsub.f32 %v1672, %v2321
        %v2622 = vsub.f32 %v1678, %v2327
        %v2623 = vsub.f32 %v1684, %v2333
        %v2624 = vsub.f32 %v1690, %v2339
        %v2625 = vsub.f32 %v1696, %v2345
        %v2626 = vsub.f32 %v1702, %v2351
        %v2627 = vsub.f32 %v1708, %v2357
        %v2628 = vsub.f32 %v1714, %v2363
        %v2629 = vsub.f32 %v1720, %v2369
        %v2630 = vsub.f32 %v1726, %v2375
        %v2631 = vsub.f32 %v1732, %v2381
        %v2632 = vsub.f32 %v1738, %v2387
        %v2633 = vsub.f32 %v1744, %v2393
        %v2634 = vsub.f32 %v1750, %v2399
        %v2635 = vsub.f32 %v1756, %v2405
        %v2636 = vsub.f32 %v1762, %v2411
        %v2637 = vsub.f32 %v1768, %v2417
        %v2638 = vsub.f32 %v1774, %v2423
        %v2639 = vsub.f32 %v1780, %v2429
        %v2640 = vsub.f32 %v1786, %v2435
        %v2641 = vsub.f32 %v1792, %v2441
        %v2642 = vsub.f32 %v1798, %v2447
        %v2643 = vsub.f32 %v1804, %v2453
        %v2644 = vsub.f32 %v1810, %v2459
        %v2645 = vsub.f32 %v1816, %v2465
        %v2646 = vsub.f32 %v1822, %v2471
        %v2647 = vsub.f32 %v1828, %v2477
        %v2648 = vsub.f32 %v1834, %v2483
        %v2649 = vsub.f32 %v1840, %v2489
        %v2650 = vsub.f32 %v1846, %v2495
        %v2651 = vsub.f32 %v1852, %v2501
        %v2652 = vsub.f32 %v1858, %v2507
        %v2653 = vsub.f32 %v1864, %v2513
        %v2654 = vsub.f32 %v1870, %v2519
        %v2655 = vsub.f32 %v1876, %v2525
        %v2656 = vsub.f32 %v1882, %v2531
        %v2657 = vsub.f32 %v1888, %v2537
        %v2658 = vsub.f32 %v1894, %v2543
        %v2659 = vsub.f32 %v1900, %v2549
        %v2660 = vsub.f32 %v1906, %v2555
        %v2661 = vsub.f32 %v1912, %v2561
        %v2662 = vsub.f32 %v1918, %v2567
        %v2663 = vsub.f32 %v1924, %v2573
        %v2664 = vsub.f32 %v1930, %v2579
        %v2665 = vsub.f32 %v1936, %v2585
        %v2666 = vsub.f32 %v1942, %v2591
        %v2667 = vsub.f32 %v1948, %v2597
        %v2668 = vsub.f32 %v1954, %v2603
        %v2669 = vmul.f32 %v2605, %v2605
        %v2670 = vmul.f32 %v2606, %v2606
        %v2671 = vmul.f32 %v2607, %v2607
        %v2672 = vmul.f32 %v2608, %v2608
        %v2673 = vmul.f32 %v2609, %v2609
        %v2674 = vmul.f32 %v2610, %v2610
        %v2675 = vmul.f32 %v2611, %v2611
        %v2676 = vmul.f32 %v2612, %v2612
        %v2677 = vmul.f32 %v2613, %v2613
        %v2678 = vmul.f32 %v2614, %v2614
        %v2679 = vmul.f32 %v2615, %v2615
        %v2680 = vmul.f32 %v2616, %v2616
        %v2681 = vmul.f32 %v2617, %v2617
        %v2682 = vmul.f32 %v2618, %v2618
        %v2683 = vmul.f32 %v2619, %v2619
        %v2684 = vmul.f32 %v2620, %v2620
        %v2685 = vmul.f32 %v2621, %v2621
        %v2686 = vmul.f32 %v2622, %v2622
        %v2687 = vmul.f32 %v2623, %v2623
        %v2688 = vmul.f32 %v2624, %v2624
        %v2689 = vmul.f32 %v2625, %v2625
        %v2690 = vmul.f32 %v2626, %v2626
        %v2691 = vmul.f32 %v2627, %v2627
        %v2692 = vmul.f32 %v2628, %v2628
        %v2693 = vmul.f32 %v2629, %v2629
        %v2694 = vmul.f32 %v2630, %v2630
        %v2695 = vmul.f32 %v2631, %v2631
        %v2696 = vmul.f32 %v2632, %v2632
        %v2697 = vmul.f32 %v2633, %v2633
        %v2698 = vmul.f32 %v2634, %v2634
        %v2699 = vmul.f32 %v2635, %v2635
        %v2700 = vmul.f32 %v2636, %v2636
        %v2701 = vmul.f32 %v2637, %v2637
        %v2702 = vmul.f32 %v2638, %v2638
        %v2703 = vmul.f32 %v2639, %v2639
        %v2704 = vmul.f32 %v2640, %v2640
        %v2705 = vmul.f32 %v2641, %v2641
        %v2706 = vmul.f32 %v2642, %v2642
        %v2707 = vmul.f32 %v2643, %v2643
        %v2708 = vmul.f32 %v2644, %v2644
        %v2709 = vmul.f32 %v2645, %v2645
        %v2710 = vmul.f32 %v2646, %v2646
        %v2711 = vmul.f32 %v2647, %v2647
        %v2712 = vmul.f32 %v2648, %v2648
        %v2713 = vmul.f32 %v2649, %v2649
        %v2714 = vmul.f32 %v2650, %v2650
        %v2715 = vmul.f32 %v2651, %v2651
        %v2716 = vmul.f32 %v2652, %v2652
        %v2717 = vmul.f32 %v2653, %v2653
        %v2718 = vmul.f32 %v2654, %v2654
        %v2719 = vmul.f32 %v2655, %v2655
        %v2720 = vmul.f32 %v2656, %v2656
        %v2721 = vmul.f32 %v2657, %v2657
        %v2722 = vmul.f32 %v2658, %v2658
        %v2723 = vmul.f32 %v2659, %v2659
        %v2724 = vmul.f32 %v2660, %v2660
        %v2725 = vmul.f32 %v2661, %v2661
        %v2726 = vmul.f32 %v2662, %v2662
        %v2727 = vmul.f32 %v2663, %v2663
        %v2728 = vmul.f32 %v2664, %v2664
        %v2729 = vmul.f32 %v2665, %v2665
        %v2730 = vmul.f32 %v2666, %v2666
        %v2731 = vmul.f32 %v2667, %v2667
        %v2732 = vmul.f32 %v2668, %v2668
        %vm2733 = vcmask 23552
        %v2734 = vsel %vm2733, %v2669, 0.0
        %2735 = vadd.xlane.f32.xlu0 %v2734
        %v2736 = vpop.xlane.xlu0 %2735
        %v2737 = vsel %vm2733, %v2670, 0.0
        %2738 = vadd.xlane.f32.xlu0 %v2737
        %v2739 = vpop.xlane.xlu0 %2738
        %v2740 = vsel %vm2733, %v2671, 0.0
        %2741 = vadd.xlane.f32.xlu0 %v2740
        %v2742 = vpop.xlane.xlu0 %2741
        %v2743 = vsel %vm2733, %v2672, 0.0
        %2744 = vadd.xlane.f32.xlu0 %v2743
        %v2745 = vpop.xlane.xlu0 %2744
        %v2746 = vsel %vm2733, %v2673, 0.0
        %2747 = vadd.xlane.f32.xlu0 %v2746
        %v2748 = vpop.xlane.xlu0 %2747
        %v2749 = vsel %vm2733, %v2674, 0.0
        %2750 = vadd.xlane.f32.xlu0 %v2749
        %v2751 = vpop.xlane.xlu0 %2750
        %v2752 = vsel %vm2733, %v2675, 0.0
        %2753 = vadd.xlane.f32.xlu0 %v2752
        %v2754 = vpop.xlane.xlu0 %2753
        %v2755 = vsel %vm2733, %v2676, 0.0
        %2756 = vadd.xlane.f32.xlu0 %v2755
        %v2757 = vpop.xlane.xlu0 %2756
        %v2758 = vsel %vm2733, %v2677, 0.0
        %2759 = vadd.xlane.f32.xlu0 %v2758
        %v2760 = vpop.xlane.xlu0 %2759
        %v2761 = vsel %vm2733, %v2678, 0.0
        %2762 = vadd.xlane.f32.xlu0 %v2761
        %v2763 = vpop.xlane.xlu0 %2762
        %v2764 = vsel %vm2733, %v2679, 0.0
        %2765 = vadd.xlane.f32.xlu0 %v2764
        %v2766 = vpop.xlane.xlu0 %2765
        %v2767 = vsel %vm2733, %v2680, 0.0
        %2768 = vadd.xlane.f32.xlu0 %v2767
        %v2769 = vpop.xlane.xlu0 %2768
        %v2770 = vsel %vm2733, %v2681, 0.0
        %2771 = vadd.xlane.f32.xlu0 %v2770
        %v2772 = vpop.xlane.xlu0 %2771
        %v2773 = vsel %vm2733, %v2682, 0.0
        %2774 = vadd.xlane.f32.xlu0 %v2773
        %v2775 = vpop.xlane.xlu0 %2774
        %v2776 = vsel %vm2733, %v2683, 0.0
        %2777 = vadd.xlane.f32.xlu0 %v2776
        %v2778 = vpop.xlane.xlu0 %2777
        %v2779 = vsel %vm2733, %v2684, 0.0
        %2780 = vadd.xlane.f32.xlu0 %v2779
        %v2781 = vpop.xlane.xlu0 %2780
        %v2782 = vsel %vm2733, %v2685, 0.0
        %2783 = vadd.xlane.f32.xlu0 %v2782
        %v2784 = vpop.xlane.xlu0 %2783
        %v2785 = vsel %vm2733, %v2686, 0.0
        %2786 = vadd.xlane.f32.xlu0 %v2785
        %v2787 = vpop.xlane.xlu0 %2786
        %v2788 = vsel %vm2733, %v2687, 0.0
        %2789 = vadd.xlane.f32.xlu0 %v2788
        %v2790 = vpop.xlane.xlu0 %2789
        %v2791 = vsel %vm2733, %v2688, 0.0
        %2792 = vadd.xlane.f32.xlu0 %v2791
        %v2793 = vpop.xlane.xlu0 %2792
        %v2794 = vsel %vm2733, %v2689, 0.0
        %2795 = vadd.xlane.f32.xlu0 %v2794
        %v2796 = vpop.xlane.xlu0 %2795
        %v2797 = vsel %vm2733, %v2690, 0.0
        %2798 = vadd.xlane.f32.xlu0 %v2797
        %v2799 = vpop.xlane.xlu0 %2798
        %v2800 = vsel %vm2733, %v2691, 0.0
        %2801 = vadd.xlane.f32.xlu0 %v2800
        %v2802 = vpop.xlane.xlu0 %2801
        %v2803 = vsel %vm2733, %v2692, 0.0
        %2804 = vadd.xlane.f32.xlu0 %v2803
        %v2805 = vpop.xlane.xlu0 %2804
        %v2806 = vsel %vm2733, %v2693, 0.0
        %2807 = vadd.xlane.f32.xlu0 %v2806
        %v2808 = vpop.xlane.xlu0 %2807
        %v2809 = vsel %vm2733, %v2694, 0.0
        %2810 = vadd.xlane.f32.xlu0 %v2809
        %v2811 = vpop.xlane.xlu0 %2810
        %v2812 = vsel %vm2733, %v2695, 0.0
        %2813 = vadd.xlane.f32.xlu0 %v2812
        %v2814 = vpop.xlane.xlu0 %2813
        %v2815 = vsel %vm2733, %v2696, 0.0
        %2816 = vadd.xlane.f32.xlu0 %v2815
        %v2817 = vpop.xlane.xlu0 %2816
        %v2818 = vsel %vm2733, %v2697, 0.0
        %2819 = vadd.xlane.f32.xlu0 %v2818
        %v2820 = vpop.xlane.xlu0 %2819
        %v2821 = vsel %vm2733, %v2698, 0.0
        %2822 = vadd.xlane.f32.xlu0 %v2821
        %v2823 = vpop.xlane.xlu0 %2822
        %v2824 = vsel %vm2733, %v2699, 0.0
        %2825 = vadd.xlane.f32.xlu0 %v2824
        %v2826 = vpop.xlane.xlu0 %2825
        %v2827 = vsel %vm2733, %v2700, 0.0
        %2828 = vadd.xlane.f32.xlu0 %v2827
        %v2829 = vpop.xlane.xlu0 %2828
        %v2830 = vsel %vm2733, %v2701, 0.0
        %2831 = vadd.xlane.f32.xlu0 %v2830
        %v2832 = vpop.xlane.xlu0 %2831
        %v2833 = vsel %vm2733, %v2702, 0.0
        %2834 = vadd.xlane.f32.xlu0 %v2833
        %v2835 = vpop.xlane.xlu0 %2834
        %v2836 = vsel %vm2733, %v2703, 0.0
        %2837 = vadd.xlane.f32.xlu0 %v2836
        %v2838 = vpop.xlane.xlu0 %2837
        %v2839 = vsel %vm2733, %v2704, 0.0
        %2840 = vadd.xlane.f32.xlu0 %v2839
        %v2841 = vpop.xlane.xlu0 %2840
        %v2842 = vsel %vm2733, %v2705, 0.0
        %2843 = vadd.xlane.f32.xlu0 %v2842
        %v2844 = vpop.xlane.xlu0 %2843
        %v2845 = vsel %vm2733, %v2706, 0.0
        %2846 = vadd.xlane.f32.xlu0 %v2845
        %v2847 = vpop.xlane.xlu0 %2846
        %v2848 = vsel %vm2733, %v2707, 0.0
        %2849 = vadd.xlane.f32.xlu0 %v2848
        %v2850 = vpop.xlane.xlu0 %2849
        %v2851 = vsel %vm2733, %v2708, 0.0
        %2852 = vadd.xlane.f32.xlu0 %v2851
        %v2853 = vpop.xlane.xlu0 %2852
        %v2854 = vsel %vm2733, %v2709, 0.0
        %2855 = vadd.xlane.f32.xlu0 %v2854
        %v2856 = vpop.xlane.xlu0 %2855
        %v2857 = vsel %vm2733, %v2710, 0.0
        %2858 = vadd.xlane.f32.xlu0 %v2857
        %v2859 = vpop.xlane.xlu0 %2858
        %v2860 = vsel %vm2733, %v2711, 0.0
        %2861 = vadd.xlane.f32.xlu0 %v2860
        %v2862 = vpop.xlane.xlu0 %2861
        %v2863 = vsel %vm2733, %v2712, 0.0
        %2864 = vadd.xlane.f32.xlu0 %v2863
        %v2865 = vpop.xlane.xlu0 %2864
        %v2866 = vsel %vm2733, %v2713, 0.0
        %2867 = vadd.xlane.f32.xlu0 %v2866
        %v2868 = vpop.xlane.xlu0 %2867
        %v2869 = vsel %vm2733, %v2714, 0.0
        %2870 = vadd.xlane.f32.xlu0 %v2869
        %v2871 = vpop.xlane.xlu0 %2870
        %v2872 = vsel %vm2733, %v2715, 0.0
        %2873 = vadd.xlane.f32.xlu0 %v2872
        %v2874 = vpop.xlane.xlu0 %2873
        %v2875 = vsel %vm2733, %v2716, 0.0
        %2876 = vadd.xlane.f32.xlu0 %v2875
        %v2877 = vpop.xlane.xlu0 %2876
        %v2878 = vsel %vm2733, %v2717, 0.0
        %2879 = vadd.xlane.f32.xlu0 %v2878
        %v2880 = vpop.xlane.xlu0 %2879
        %v2881 = vsel %vm2733, %v2718, 0.0
        %2882 = vadd.xlane.f32.xlu0 %v2881
        %v2883 = vpop.xlane.xlu0 %2882
        %v2884 = vsel %vm2733, %v2719, 0.0
        %2885 = vadd.xlane.f32.xlu0 %v2884
        %v2886 = vpop.xlane.xlu0 %2885
        %v2887 = vsel %vm2733, %v2720, 0.0
        %2888 = vadd.xlane.f32.xlu0 %v2887
        %v2889 = vpop.xlane.xlu0 %2888
        %v2890 = vsel %vm2733, %v2721, 0.0
        %2891 = vadd.xlane.f32.xlu0 %v2890
        %v2892 = vpop.xlane.xlu0 %2891
        %v2893 = vsel %vm2733, %v2722, 0.0
        %2894 = vadd.xlane.f32.xlu0 %v2893
        %v2895 = vpop.xlane.xlu0 %2894
        %v2896 = vsel %vm2733, %v2723, 0.0
        %2897 = vadd.xlane.f32.xlu0 %v2896
        %v2898 = vpop.xlane.xlu0 %2897
        %v2899 = vsel %vm2733, %v2724, 0.0
        %2900 = vadd.xlane.f32.xlu0 %v2899
        %v2901 = vpop.xlane.xlu0 %2900
        %v2902 = vsel %vm2733, %v2725, 0.0
        %2903 = vadd.xlane.f32.xlu0 %v2902
        %v2904 = vpop.xlane.xlu0 %2903
        %v2905 = vsel %vm2733, %v2726, 0.0
        %2906 = vadd.xlane.f32.xlu0 %v2905
        %v2907 = vpop.xlane.xlu0 %2906
        %v2908 = vsel %vm2733, %v2727, 0.0
        %2909 = vadd.xlane.f32.xlu0 %v2908
        %v2910 = vpop.xlane.xlu0 %2909
        %v2911 = vsel %vm2733, %v2728, 0.0
        %2912 = vadd.xlane.f32.xlu0 %v2911
        %v2913 = vpop.xlane.xlu0 %2912
        %v2914 = vsel %vm2733, %v2729, 0.0
        %2915 = vadd.xlane.f32.xlu0 %v2914
        %v2916 = vpop.xlane.xlu0 %2915
        %v2917 = vsel %vm2733, %v2730, 0.0
        %2918 = vadd.xlane.f32.xlu0 %v2917
        %v2919 = vpop.xlane.xlu0 %2918
        %v2920 = vsel %vm2733, %v2731, 0.0
        %2921 = vadd.xlane.f32.xlu0 %v2920
        %v2922 = vpop.xlane.xlu0 %2921
        %v2923 = vsel %vm2733, %v2732, 0.0
        %2924 = vadd.xlane.f32.xlu0 %v2923
        %v2925 = vpop.xlane.xlu0 %2924
        %v2926 = vld [vmem:[%s8] sm:$0x1]
        %v2928 = vlaneseq
        %v2929 = vshrl.u32 %v2928, 7
        %v2930 = vsub.s32 0, %v2929
        %v2931 = vrot.slane %v2926, %v2930
        %v2933 = vmul.f32 %v2736, %v2931
        %v2934 = vmul.f32 %v2739, %v2931
        %v2935 = vmul.f32 %v2742, %v2931
        %v2936 = vmul.f32 %v2745, %v2931
        %v2937 = vmul.f32 %v2748, %v2931
        %v2938 = vmul.f32 %v2751, %v2931
        %v2939 = vmul.f32 %v2754, %v2931
        %v2940 = vmul.f32 %v2757, %v2931
        %v2941 = vmul.f32 %v2760, %v2931
        %v2942 = vmul.f32 %v2763, %v2931
        %v2943 = vmul.f32 %v2766, %v2931
        %v2944 = vmul.f32 %v2769, %v2931
        %v2945 = vmul.f32 %v2772, %v2931
        %v2946 = vmul.f32 %v2775, %v2931
        %v2947 = vmul.f32 %v2778, %v2931
        %v2948 = vmul.f32 %v2781, %v2931
        %v2949 = vmul.f32 %v2784, %v2931
        %v2950 = vmul.f32 %v2787, %v2931
        %v2951 = vmul.f32 %v2790, %v2931
        %v2952 = vmul.f32 %v2793, %v2931
        %v2953 = vmul.f32 %v2796, %v2931
        %v2954 = vmul.f32 %v2799, %v2931
        %v2955 = vmul.f32 %v2802, %v2931
        %v2956 = vmul.f32 %v2805, %v2931
        %v2957 = vmul.f32 %v2808, %v2931
        %v2958 = vmul.f32 %v2811, %v2931
        %v2959 = vmul.f32 %v2814, %v2931
        %v2960 = vmul.f32 %v2817, %v2931
        %v2961 = vmul.f32 %v2820, %v2931
        %v2962 = vmul.f32 %v2823, %v2931
        %v2963 = vmul.f32 %v2826, %v2931
        %v2964 = vmul.f32 %v2829, %v2931
        %v2965 = vmul.f32 %v2832, %v2931
        %v2966 = vmul.f32 %v2835, %v2931
        %v2967 = vmul.f32 %v2838, %v2931
        %v2968 = vmul.f32 %v2841, %v2931
        %v2969 = vmul.f32 %v2844, %v2931
        %v2970 = vmul.f32 %v2847, %v2931
        %v2971 = vmul.f32 %v2850, %v2931
        %v2972 = vmul.f32 %v2853, %v2931
        %v2973 = vmul.f32 %v2856, %v2931
        %v2974 = vmul.f32 %v2859, %v2931
        %v2975 = vmul.f32 %v2862, %v2931
        %v2976 = vmul.f32 %v2865, %v2931
        %v2977 = vmul.f32 %v2868, %v2931
        %v2978 = vmul.f32 %v2871, %v2931
        %v2979 = vmul.f32 %v2874, %v2931
        %v2980 = vmul.f32 %v2877, %v2931
        %v2981 = vmul.f32 %v2880, %v2931
        %v2982 = vmul.f32 %v2883, %v2931
        %v2983 = vmul.f32 %v2886, %v2931
        %v2984 = vmul.f32 %v2889, %v2931
        %v2985 = vmul.f32 %v2892, %v2931
        %v2986 = vmul.f32 %v2895, %v2931
        %v2987 = vmul.f32 %v2898, %v2931
        %v2988 = vmul.f32 %v2901, %v2931
        %v2989 = vmul.f32 %v2904, %v2931
        %v2990 = vmul.f32 %v2907, %v2931
        %v2991 = vmul.f32 %v2910, %v2931
        %v2992 = vmul.f32 %v2913, %v2931
        %v2993 = vmul.f32 %v2916, %v2931
        %v2994 = vmul.f32 %v2919, %v2931
        %v2995 = vmul.f32 %v2922, %v2931
        %v2996 = vmul.f32 %v2925, %v2931
        %v2997 = vmul.f32 %v2933, 1.442695
        %v2998 = vpow.pop %v2997
        %v2999 = vmul.f32 %v2934, 1.442695
        %v3000 = vpow.pop %v2999
        %v3001 = vmul.f32 %v2935, 1.442695
        %v3002 = vpow.pop %v3001
        %v3003 = vmul.f32 %v2936, 1.442695
        %v3004 = vpow.pop %v3003
        %v3005 = vmul.f32 %v2937, 1.442695
        %v3006 = vpow.pop %v3005
        %v3007 = vmul.f32 %v2938, 1.442695
        %v3008 = vpow.pop %v3007
        %v3009 = vmul.f32 %v2939, 1.442695
        %v3010 = vpow.pop %v3009
        %v3011 = vmul.f32 %v2940, 1.442695
        %v3012 = vpow.pop %v3011
        %v3013 = vmul.f32 %v2941, 1.442695
        %v3014 = vpow.pop %v3013
        %v3015 = vmul.f32 %v2942, 1.442695
        %v3016 = vpow.pop %v3015
        %v3017 = vmul.f32 %v2943, 1.442695
        %v3018 = vpow.pop %v3017
        %v3019 = vmul.f32 %v2944, 1.442695
        %v3020 = vpow.pop %v3019
        %v3021 = vmul.f32 %v2945, 1.442695
        %v3022 = vpow.pop %v3021
        %v3023 = vmul.f32 %v2946, 1.442695
        %v3024 = vpow.pop %v3023
        %v3025 = vmul.f32 %v2947, 1.442695
        %v3026 = vpow.pop %v3025
        %v3027 = vmul.f32 %v2948, 1.442695
        %v3028 = vpow.pop %v3027
        %v3029 = vmul.f32 %v2949, 1.442695
        %v3030 = vpow.pop %v3029
        %v3031 = vmul.f32 %v2950, 1.442695
        %v3032 = vpow.pop %v3031
        %v3033 = vmul.f32 %v2951, 1.442695
        %v3034 = vpow.pop %v3033
        %v3035 = vmul.f32 %v2952, 1.442695
        %v3036 = vpow.pop %v3035
        %v3037 = vmul.f32 %v2953, 1.442695
        %v3038 = vpow.pop %v3037
        %v3039 = vmul.f32 %v2954, 1.442695
        %v3040 = vpow.pop %v3039
        %v3041 = vmul.f32 %v2955, 1.442695
        %v3042 = vpow.pop %v3041
        %v3043 = vmul.f32 %v2956, 1.442695
        %v3044 = vpow.pop %v3043
        %v3045 = vmul.f32 %v2957, 1.442695
        %v3046 = vpow.pop %v3045
        %v3047 = vmul.f32 %v2958, 1.442695
        %v3048 = vpow.pop %v3047
        %v3049 = vmul.f32 %v2959, 1.442695
        %v3050 = vpow.pop %v3049
        %v3051 = vmul.f32 %v2960, 1.442695
        %v3052 = vpow.pop %v3051
        %v3053 = vmul.f32 %v2961, 1.442695
        %v3054 = vpow.pop %v3053
        %v3055 = vmul.f32 %v2962, 1.442695
        %v3056 = vpow.pop %v3055
        %v3057 = vmul.f32 %v2963, 1.442695
        %v3058 = vpow.pop %v3057
        %v3059 = vmul.f32 %v2964, 1.442695
        %v3060 = vpow.pop %v3059
        %v3061 = vmul.f32 %v2965, 1.442695
        %v3062 = vpow.pop %v3061
        %v3063 = vmul.f32 %v2966, 1.442695
        %v3064 = vpow.pop %v3063
        %v3065 = vmul.f32 %v2967, 1.442695
        %v3066 = vpow.pop %v3065
        %v3067 = vmul.f32 %v2968, 1.442695
        %v3068 = vpow.pop %v3067
        %v3069 = vmul.f32 %v2969, 1.442695
        %v3070 = vpow.pop %v3069
        %v3071 = vmul.f32 %v2970, 1.442695
        %v3072 = vpow.pop %v3071
        %v3073 = vmul.f32 %v2971, 1.442695
        %v3074 = vpow.pop %v3073
        %v3075 = vmul.f32 %v2972, 1.442695
        %v3076 = vpow.pop %v3075
        %v3077 = vmul.f32 %v2973, 1.442695
        %v3078 = vpow.pop %v3077
        %v3079 = vmul.f32 %v2974, 1.442695
        %v3080 = vpow.pop %v3079
        %v3081 = vmul.f32 %v2975, 1.442695
        %v3082 = vpow.pop %v3081
        %v3083 = vmul.f32 %v2976, 1.442695
        %v3084 = vpow.pop %v3083
        %v3085 = vmul.f32 %v2977, 1.442695
        %v3086 = vpow.pop %v3085
        %v3087 = vmul.f32 %v2978, 1.442695
        %v3088 = vpow.pop %v3087
        %v3089 = vmul.f32 %v2979, 1.442695
        %v3090 = vpow.pop %v3089
        %v3091 = vmul.f32 %v2980, 1.442695
        %v3092 = vpow.pop %v3091
        %v3093 = vmul.f32 %v2981, 1.442695
        %v3094 = vpow.pop %v3093
        %v3095 = vmul.f32 %v2982, 1.442695
        %v3096 = vpow.pop %v3095
        %v3097 = vmul.f32 %v2983, 1.442695
        %v3098 = vpow.pop %v3097
        %v3099 = vmul.f32 %v2984, 1.442695
        %v3100 = vpow.pop %v3099
        %v3101 = vmul.f32 %v2985, 1.442695
        %v3102 = vpow.pop %v3101
        %v3103 = vmul.f32 %v2986, 1.442695
        %v3104 = vpow.pop %v3103
        %v3105 = vmul.f32 %v2987, 1.442695
        %v3106 = vpow.pop %v3105
        %v3107 = vmul.f32 %v2988, 1.442695
        %v3108 = vpow.pop %v3107
        %v3109 = vmul.f32 %v2989, 1.442695
        %v3110 = vpow.pop %v3109
        %v3111 = vmul.f32 %v2990, 1.442695
        %v3112 = vpow.pop %v3111
        %v3113 = vmul.f32 %v2991, 1.442695
        %v3114 = vpow.pop %v3113
        %v3115 = vmul.f32 %v2992, 1.442695
        %v3116 = vpow.pop %v3115
        %v3117 = vmul.f32 %v2993, 1.442695
        %v3118 = vpow.pop %v3117
        %v3119 = vmul.f32 %v2994, 1.442695
        %v3120 = vpow.pop %v3119
        %v3121 = vmul.f32 %v2995, 1.442695
        %v3122 = vpow.pop %v3121
        %v3123 = vmul.f32 %v2996, 1.442695
        %v3124 = vpow.pop %v3123
        %v3125 = vrsqrt.pop %v2736
        %v3126 = vmul.f32 %v2736, %v3125
        %vm3127 = vcmp.eq.f32.partialorder %v2736, inf
        %v3128 = vsel %vm3127, %v2736, %v3126
        %vm3129 = vcmp.eq.f32.partialorder %v2736, 0.0
        %v3130 = vand.u32 %v2736, 2147483648
        %v3131 = vsel %vm3129, %v3130, %v3128
        %v3132 = vrsqrt.pop %v2739
        %v3133 = vmul.f32 %v2739, %v3132
        %vm3134 = vcmp.eq.f32.partialorder %v2739, inf
        %v3135 = vsel %vm3134, %v2739, %v3133
        %vm3136 = vcmp.eq.f32.partialorder %v2739, 0.0
        %v3137 = vand.u32 %v2739, 2147483648
        %v3138 = vsel %vm3136, %v3137, %v3135
        %v3139 = vrsqrt.pop %v2742
        %v3140 = vmul.f32 %v2742, %v3139
        %vm3141 = vcmp.eq.f32.partialorder %v2742, inf
        %v3142 = vsel %vm3141, %v2742, %v3140
        %vm3143 = vcmp.eq.f32.partialorder %v2742, 0.0
        %v3144 = vand.u32 %v2742, 2147483648
        %v3145 = vsel %vm3143, %v3144, %v3142
        %v3146 = vrsqrt.pop %v2745
        %v3147 = vmul.f32 %v2745, %v3146
        %vm3148 = vcmp.eq.f32.partialorder %v2745, inf
        %v3149 = vsel %vm3148, %v2745, %v3147
        %vm3150 = vcmp.eq.f32.partialorder %v2745, 0.0
        %v3151 = vand.u32 %v2745, 2147483648
        %v3152 = vsel %vm3150, %v3151, %v3149
        %v3153 = vrsqrt.pop %v2748
        %v3154 = vmul.f32 %v2748, %v3153
        %vm3155 = vcmp.eq.f32.partialorder %v2748, inf
        %v3156 = vsel %vm3155, %v2748, %v3154
        %vm3157 = vcmp.eq.f32.partialorder %v2748, 0.0
        %v3158 = vand.u32 %v2748, 2147483648
        %v3159 = vsel %vm3157, %v3158, %v3156
        %v3160 = vrsqrt.pop %v2751
        %v3161 = vmul.f32 %v2751, %v3160
        %vm3162 = vcmp.eq.f32.partialorder %v2751, inf
        %v3163 = vsel %vm3162, %v2751, %v3161
        %vm3164 = vcmp.eq.f32.partialorder %v2751, 0.0
        %v3165 = vand.u32 %v2751, 2147483648
        %v3166 = vsel %vm3164, %v3165, %v3163
        %v3167 = vrsqrt.pop %v2754
        %v3168 = vmul.f32 %v2754, %v3167
        %vm3169 = vcmp.eq.f32.partialorder %v2754, inf
        %v3170 = vsel %vm3169, %v2754, %v3168
        %vm3171 = vcmp.eq.f32.partialorder %v2754, 0.0
        %v3172 = vand.u32 %v2754, 2147483648
        %v3173 = vsel %vm3171, %v3172, %v3170
        %v3174 = vrsqrt.pop %v2757
        %v3175 = vmul.f32 %v2757, %v3174
        %vm3176 = vcmp.eq.f32.partialorder %v2757, inf
        %v3177 = vsel %vm3176, %v2757, %v3175
        %vm3178 = vcmp.eq.f32.partialorder %v2757, 0.0
        %v3179 = vand.u32 %v2757, 2147483648
        %v3180 = vsel %vm3178, %v3179, %v3177
        %v3181 = vrsqrt.pop %v2760
        %v3182 = vmul.f32 %v2760, %v3181
        %vm3183 = vcmp.eq.f32.partialorder %v2760, inf
        %v3184 = vsel %vm3183, %v2760, %v3182
        %vm3185 = vcmp.eq.f32.partialorder %v2760, 0.0
        %v3186 = vand.u32 %v2760, 2147483648
        %v3187 = vsel %vm3185, %v3186, %v3184
        %v3188 = vrsqrt.pop %v2763
        %v3189 = vmul.f32 %v2763, %v3188
        %vm3190 = vcmp.eq.f32.partialorder %v2763, inf
        %v3191 = vsel %vm3190, %v2763, %v3189
        %vm3192 = vcmp.eq.f32.partialorder %v2763, 0.0
        %v3193 = vand.u32 %v2763, 2147483648
        %v3194 = vsel %vm3192, %v3193, %v3191
        %v3195 = vrsqrt.pop %v2766
        %v3196 = vmul.f32 %v2766, %v3195
        %vm3197 = vcmp.eq.f32.partialorder %v2766, inf
        %v3198 = vsel %vm3197, %v2766, %v3196
        %vm3199 = vcmp.eq.f32.partialorder %v2766, 0.0
        %v3200 = vand.u32 %v2766, 2147483648
        %v3201 = vsel %vm3199, %v3200, %v3198
        %v3202 = vrsqrt.pop %v2769
        %v3203 = vmul.f32 %v2769, %v3202
        %vm3204 = vcmp.eq.f32.partialorder %v2769, inf
        %v3205 = vsel %vm3204, %v2769, %v3203
        %vm3206 = vcmp.eq.f32.partialorder %v2769, 0.0
        %v3207 = vand.u32 %v2769, 2147483648
        %v3208 = vsel %vm3206, %v3207, %v3205
        %v3209 = vrsqrt.pop %v2772
        %v3210 = vmul.f32 %v2772, %v3209
        %vm3211 = vcmp.eq.f32.partialorder %v2772, inf
        %v3212 = vsel %vm3211, %v2772, %v3210
        %vm3213 = vcmp.eq.f32.partialorder %v2772, 0.0
        %v3214 = vand.u32 %v2772, 2147483648
        %v3215 = vsel %vm3213, %v3214, %v3212
        %v3216 = vrsqrt.pop %v2775
        %v3217 = vmul.f32 %v2775, %v3216
        %vm3218 = vcmp.eq.f32.partialorder %v2775, inf
        %v3219 = vsel %vm3218, %v2775, %v3217
        %vm3220 = vcmp.eq.f32.partialorder %v2775, 0.0
        %v3221 = vand.u32 %v2775, 2147483648
        %v3222 = vsel %vm3220, %v3221, %v3219
        %v3223 = vrsqrt.pop %v2778
        %v3224 = vmul.f32 %v2778, %v3223
        %vm3225 = vcmp.eq.f32.partialorder %v2778, inf
        %v3226 = vsel %vm3225, %v2778, %v3224
        %vm3227 = vcmp.eq.f32.partialorder %v2778, 0.0
        %v3228 = vand.u32 %v2778, 2147483648
        %v3229 = vsel %vm3227, %v3228, %v3226
        %v3230 = vrsqrt.pop %v2781
        %v3231 = vmul.f32 %v2781, %v3230
        %vm3232 = vcmp.eq.f32.partialorder %v2781, inf
        %v3233 = vsel %vm3232, %v2781, %v3231
        %vm3234 = vcmp.eq.f32.partialorder %v2781, 0.0
        %v3235 = vand.u32 %v2781, 2147483648
        %v3236 = vsel %vm3234, %v3235, %v3233
        %v3237 = vrsqrt.pop %v2784
        %v3238 = vmul.f32 %v2784, %v3237
        %vm3239 = vcmp.eq.f32.partialorder %v2784, inf
        %v3240 = vsel %vm3239, %v2784, %v3238
        %vm3241 = vcmp.eq.f32.partialorder %v2784, 0.0
        %v3242 = vand.u32 %v2784, 2147483648
        %v3243 = vsel %vm3241, %v3242, %v3240
        %v3244 = vrsqrt.pop %v2787
        %v3245 = vmul.f32 %v2787, %v3244
        %vm3246 = vcmp.eq.f32.partialorder %v2787, inf
        %v3247 = vsel %vm3246, %v2787, %v3245
        %vm3248 = vcmp.eq.f32.partialorder %v2787, 0.0
        %v3249 = vand.u32 %v2787, 2147483648
        %v3250 = vsel %vm3248, %v3249, %v3247
        %v3251 = vrsqrt.pop %v2790
        %v3252 = vmul.f32 %v2790, %v3251
        %vm3253 = vcmp.eq.f32.partialorder %v2790, inf
        %v3254 = vsel %vm3253, %v2790, %v3252
        %vm3255 = vcmp.eq.f32.partialorder %v2790, 0.0
        %v3256 = vand.u32 %v2790, 2147483648
        %v3257 = vsel %vm3255, %v3256, %v3254
        %v3258 = vrsqrt.pop %v2793
        %v3259 = vmul.f32 %v2793, %v3258
        %vm3260 = vcmp.eq.f32.partialorder %v2793, inf
        %v3261 = vsel %vm3260, %v2793, %v3259
        %vm3262 = vcmp.eq.f32.partialorder %v2793, 0.0
        %v3263 = vand.u32 %v2793, 2147483648
        %v3264 = vsel %vm3262, %v3263, %v3261
        %v3265 = vrsqrt.pop %v2796
        %v3266 = vmul.f32 %v2796, %v3265
        %vm3267 = vcmp.eq.f32.partialorder %v2796, inf
        %v3268 = vsel %vm3267, %v2796, %v3266
        %vm3269 = vcmp.eq.f32.partialorder %v2796, 0.0
        %v3270 = vand.u32 %v2796, 2147483648
        %v3271 = vsel %vm3269, %v3270, %v3268
        %v3272 = vrsqrt.pop %v2799
        %v3273 = vmul.f32 %v2799, %v3272
        %vm3274 = vcmp.eq.f32.partialorder %v2799, inf
        %v3275 = vsel %vm3274, %v2799, %v3273
        %vm3276 = vcmp.eq.f32.partialorder %v2799, 0.0
        %v3277 = vand.u32 %v2799, 2147483648
        %v3278 = vsel %vm3276, %v3277, %v3275
        %v3279 = vrsqrt.pop %v2802
        %v3280 = vmul.f32 %v2802, %v3279
        %vm3281 = vcmp.eq.f32.partialorder %v2802, inf
        %v3282 = vsel %vm3281, %v2802, %v3280
        %vm3283 = vcmp.eq.f32.partialorder %v2802, 0.0
        %v3284 = vand.u32 %v2802, 2147483648
        %v3285 = vsel %vm3283, %v3284, %v3282
        %v3286 = vrsqrt.pop %v2805
        %v3287 = vmul.f32 %v2805, %v3286
        %vm3288 = vcmp.eq.f32.partialorder %v2805, inf
        %v3289 = vsel %vm3288, %v2805, %v3287
        %vm3290 = vcmp.eq.f32.partialorder %v2805, 0.0
        %v3291 = vand.u32 %v2805, 2147483648
        %v3292 = vsel %vm3290, %v3291, %v3289
        %v3293 = vrsqrt.pop %v2808
        %v3294 = vmul.f32 %v2808, %v3293
        %vm3295 = vcmp.eq.f32.partialorder %v2808, inf
        %v3296 = vsel %vm3295, %v2808, %v3294
        %vm3297 = vcmp.eq.f32.partialorder %v2808, 0.0
        %v3298 = vand.u32 %v2808, 2147483648
        %v3299 = vsel %vm3297, %v3298, %v3296
        %v3300 = vrsqrt.pop %v2811
        %v3301 = vmul.f32 %v2811, %v3300
        %vm3302 = vcmp.eq.f32.partialorder %v2811, inf
        %v3303 = vsel %vm3302, %v2811, %v3301
        %vm3304 = vcmp.eq.f32.partialorder %v2811, 0.0
        %v3305 = vand.u32 %v2811, 2147483648
        %v3306 = vsel %vm3304, %v3305, %v3303
        %v3307 = vrsqrt.pop %v2814
        %v3308 = vmul.f32 %v2814, %v3307
        %vm3309 = vcmp.eq.f32.partialorder %v2814, inf
        %v3310 = vsel %vm3309, %v2814, %v3308
        %vm3311 = vcmp.eq.f32.partialorder %v2814, 0.0
        %v3312 = vand.u32 %v2814, 2147483648
        %v3313 = vsel %vm3311, %v3312, %v3310
        %v3314 = vrsqrt.pop %v2817
        %v3315 = vmul.f32 %v2817, %v3314
        %vm3316 = vcmp.eq.f32.partialorder %v2817, inf
        %v3317 = vsel %vm3316, %v2817, %v3315
        %vm3318 = vcmp.eq.f32.partialorder %v2817, 0.0
        %v3319 = vand.u32 %v2817, 2147483648
        %v3320 = vsel %vm3318, %v3319, %v3317
        %v3321 = vrsqrt.pop %v2820
        %v3322 = vmul.f32 %v2820, %v3321
        %vm3323 = vcmp.eq.f32.partialorder %v2820, inf
        %v3324 = vsel %vm3323, %v2820, %v3322
        %vm3325 = vcmp.eq.f32.partialorder %v2820, 0.0
        %v3326 = vand.u32 %v2820, 2147483648
        %v3327 = vsel %vm3325, %v3326, %v3324
        %v3328 = vrsqrt.pop %v2823
        %v3329 = vmul.f32 %v2823, %v3328
        %vm3330 = vcmp.eq.f32.partialorder %v2823, inf
        %v3331 = vsel %vm3330, %v2823, %v3329
        %vm3332 = vcmp.eq.f32.partialorder %v2823, 0.0
        %v3333 = vand.u32 %v2823, 2147483648
        %v3334 = vsel %vm3332, %v3333, %v3331
        %v3335 = vrsqrt.pop %v2826
        %v3336 = vmul.f32 %v2826, %v3335
        %vm3337 = vcmp.eq.f32.partialorder %v2826, inf
        %v3338 = vsel %vm3337, %v2826, %v3336
        %vm3339 = vcmp.eq.f32.partialorder %v2826, 0.0
        %v3340 = vand.u32 %v2826, 2147483648
        %v3341 = vsel %vm3339, %v3340, %v3338
        %v3342 = vrsqrt.pop %v2829
        %v3343 = vmul.f32 %v2829, %v3342
        %vm3344 = vcmp.eq.f32.partialorder %v2829, inf
        %v3345 = vsel %vm3344, %v2829, %v3343
        %vm3346 = vcmp.eq.f32.partialorder %v2829, 0.0
        %v3347 = vand.u32 %v2829, 2147483648
        %v3348 = vsel %vm3346, %v3347, %v3345
        %v3349 = vrsqrt.pop %v2832
        %v3350 = vmul.f32 %v2832, %v3349
        %vm3351 = vcmp.eq.f32.partialorder %v2832, inf
        %v3352 = vsel %vm3351, %v2832, %v3350
        %vm3353 = vcmp.eq.f32.partialorder %v2832, 0.0
        %v3354 = vand.u32 %v2832, 2147483648
        %v3355 = vsel %vm3353, %v3354, %v3352
        %v3356 = vrsqrt.pop %v2835
        %v3357 = vmul.f32 %v2835, %v3356
        %vm3358 = vcmp.eq.f32.partialorder %v2835, inf
        %v3359 = vsel %vm3358, %v2835, %v3357
        %vm3360 = vcmp.eq.f32.partialorder %v2835, 0.0
        %v3361 = vand.u32 %v2835, 2147483648
        %v3362 = vsel %vm3360, %v3361, %v3359
        %v3363 = vrsqrt.pop %v2838
        %v3364 = vmul.f32 %v2838, %v3363
        %vm3365 = vcmp.eq.f32.partialorder %v2838, inf
        %v3366 = vsel %vm3365, %v2838, %v3364
        %vm3367 = vcmp.eq.f32.partialorder %v2838, 0.0
        %v3368 = vand.u32 %v2838, 2147483648
        %v3369 = vsel %vm3367, %v3368, %v3366
        %v3370 = vrsqrt.pop %v2841
        %v3371 = vmul.f32 %v2841, %v3370
        %vm3372 = vcmp.eq.f32.partialorder %v2841, inf
        %v3373 = vsel %vm3372, %v2841, %v3371
        %vm3374 = vcmp.eq.f32.partialorder %v2841, 0.0
        %v3375 = vand.u32 %v2841, 2147483648
        %v3376 = vsel %vm3374, %v3375, %v3373
        %v3377 = vrsqrt.pop %v2844
        %v3378 = vmul.f32 %v2844, %v3377
        %vm3379 = vcmp.eq.f32.partialorder %v2844, inf
        %v3380 = vsel %vm3379, %v2844, %v3378
        %vm3381 = vcmp.eq.f32.partialorder %v2844, 0.0
        %v3382 = vand.u32 %v2844, 2147483648
        %v3383 = vsel %vm3381, %v3382, %v3380
        %v3384 = vrsqrt.pop %v2847
        %v3385 = vmul.f32 %v2847, %v3384
        %vm3386 = vcmp.eq.f32.partialorder %v2847, inf
        %v3387 = vsel %vm3386, %v2847, %v3385
        %vm3388 = vcmp.eq.f32.partialorder %v2847, 0.0
        %v3389 = vand.u32 %v2847, 2147483648
        %v3390 = vsel %vm3388, %v3389, %v3387
        %v3391 = vrsqrt.pop %v2850
        %v3392 = vmul.f32 %v2850, %v3391
        %vm3393 = vcmp.eq.f32.partialorder %v2850, inf
        %v3394 = vsel %vm3393, %v2850, %v3392
        %vm3395 = vcmp.eq.f32.partialorder %v2850, 0.0
        %v3396 = vand.u32 %v2850, 2147483648
        %v3397 = vsel %vm3395, %v3396, %v3394
        %v3398 = vrsqrt.pop %v2853
        %v3399 = vmul.f32 %v2853, %v3398
        %vm3400 = vcmp.eq.f32.partialorder %v2853, inf
        %v3401 = vsel %vm3400, %v2853, %v3399
        %vm3402 = vcmp.eq.f32.partialorder %v2853, 0.0
        %v3403 = vand.u32 %v2853, 2147483648
        %v3404 = vsel %vm3402, %v3403, %v3401
        %v3405 = vrsqrt.pop %v2856
        %v3406 = vmul.f32 %v2856, %v3405
        %vm3407 = vcmp.eq.f32.partialorder %v2856, inf
        %v3408 = vsel %vm3407, %v2856, %v3406
        %vm3409 = vcmp.eq.f32.partialorder %v2856, 0.0
        %v3410 = vand.u32 %v2856, 2147483648
        %v3411 = vsel %vm3409, %v3410, %v3408
        %v3412 = vrsqrt.pop %v2859
        %v3413 = vmul.f32 %v2859, %v3412
        %vm3414 = vcmp.eq.f32.partialorder %v2859, inf
        %v3415 = vsel %vm3414, %v2859, %v3413
        %vm3416 = vcmp.eq.f32.partialorder %v2859, 0.0
        %v3417 = vand.u32 %v2859, 2147483648
        %v3418 = vsel %vm3416, %v3417, %v3415
        %v3419 = vrsqrt.pop %v2862
        %v3420 = vmul.f32 %v2862, %v3419
        %vm3421 = vcmp.eq.f32.partialorder %v2862, inf
        %v3422 = vsel %vm3421, %v2862, %v3420
        %vm3423 = vcmp.eq.f32.partialorder %v2862, 0.0
        %v3424 = vand.u32 %v2862, 2147483648
        %v3425 = vsel %vm3423, %v3424, %v3422
        %v3426 = vrsqrt.pop %v2865
        %v3427 = vmul.f32 %v2865, %v3426
        %vm3428 = vcmp.eq.f32.partialorder %v2865, inf
        %v3429 = vsel %vm3428, %v2865, %v3427
        %vm3430 = vcmp.eq.f32.partialorder %v2865, 0.0
        %v3431 = vand.u32 %v2865, 2147483648
        %v3432 = vsel %vm3430, %v3431, %v3429
        %v3433 = vrsqrt.pop %v2868
        %v3434 = vmul.f32 %v2868, %v3433
        %vm3435 = vcmp.eq.f32.partialorder %v2868, inf
        %v3436 = vsel %vm3435, %v2868, %v3434
        %vm3437 = vcmp.eq.f32.partialorder %v2868, 0.0
        %v3438 = vand.u32 %v2868, 2147483648
        %v3439 = vsel %vm3437, %v3438, %v3436
        %v3440 = vrsqrt.pop %v2871
        %v3441 = vmul.f32 %v2871, %v3440
        %vm3442 = vcmp.eq.f32.partialorder %v2871, inf
        %v3443 = vsel %vm3442, %v2871, %v3441
        %vm3444 = vcmp.eq.f32.partialorder %v2871, 0.0
        %v3445 = vand.u32 %v2871, 2147483648
        %v3446 = vsel %vm3444, %v3445, %v3443
        %v3447 = vrsqrt.pop %v2874
        %v3448 = vmul.f32 %v2874, %v3447
        %vm3449 = vcmp.eq.f32.partialorder %v2874, inf
        %v3450 = vsel %vm3449, %v2874, %v3448
        %vm3451 = vcmp.eq.f32.partialorder %v2874, 0.0
        %v3452 = vand.u32 %v2874, 2147483648
        %v3453 = vsel %vm3451, %v3452, %v3450
        %v3454 = vrsqrt.pop %v2877
        %v3455 = vmul.f32 %v2877, %v3454
        %vm3456 = vcmp.eq.f32.partialorder %v2877, inf
        %v3457 = vsel %vm3456, %v2877, %v3455
        %vm3458 = vcmp.eq.f32.partialorder %v2877, 0.0
        %v3459 = vand.u32 %v2877, 2147483648
        %v3460 = vsel %vm3458, %v3459, %v3457
        %v3461 = vrsqrt.pop %v2880
        %v3462 = vmul.f32 %v2880, %v3461
        %vm3463 = vcmp.eq.f32.partialorder %v2880, inf
        %v3464 = vsel %vm3463, %v2880, %v3462
        %vm3465 = vcmp.eq.f32.partialorder %v2880, 0.0
        %v3466 = vand.u32 %v2880, 2147483648
        %v3467 = vsel %vm3465, %v3466, %v3464
        %v3468 = vrsqrt.pop %v2883
        %v3469 = vmul.f32 %v2883, %v3468
        %vm3470 = vcmp.eq.f32.partialorder %v2883, inf
        %v3471 = vsel %vm3470, %v2883, %v3469
        %vm3472 = vcmp.eq.f32.partialorder %v2883, 0.0
        %v3473 = vand.u32 %v2883, 2147483648
        %v3474 = vsel %vm3472, %v3473, %v3471
        %v3475 = vrsqrt.pop %v2886
        %v3476 = vmul.f32 %v2886, %v3475
        %vm3477 = vcmp.eq.f32.partialorder %v2886, inf
        %v3478 = vsel %vm3477, %v2886, %v3476
        %vm3479 = vcmp.eq.f32.partialorder %v2886, 0.0
        %v3480 = vand.u32 %v2886, 2147483648
        %v3481 = vsel %vm3479, %v3480, %v3478
        %v3482 = vrsqrt.pop %v2889
        %v3483 = vmul.f32 %v2889, %v3482
        %vm3484 = vcmp.eq.f32.partialorder %v2889, inf
        %v3485 = vsel %vm3484, %v2889, %v3483
        %vm3486 = vcmp.eq.f32.partialorder %v2889, 0.0
        %v3487 = vand.u32 %v2889, 2147483648
        %v3488 = vsel %vm3486, %v3487, %v3485
        %v3489 = vrsqrt.pop %v2892
        %v3490 = vmul.f32 %v2892, %v3489
        %vm3491 = vcmp.eq.f32.partialorder %v2892, inf
        %v3492 = vsel %vm3491, %v2892, %v3490
        %vm3493 = vcmp.eq.f32.partialorder %v2892, 0.0
        %v3494 = vand.u32 %v2892, 2147483648
        %v3495 = vsel %vm3493, %v3494, %v3492
        %v3496 = vrsqrt.pop %v2895
        %v3497 = vmul.f32 %v2895, %v3496
        %vm3498 = vcmp.eq.f32.partialorder %v2895, inf
        %v3499 = vsel %vm3498, %v2895, %v3497
        %vm3500 = vcmp.eq.f32.partialorder %v2895, 0.0
        %v3501 = vand.u32 %v2895, 2147483648
        %v3502 = vsel %vm3500, %v3501, %v3499
        %v3503 = vrsqrt.pop %v2898
        %v3504 = vmul.f32 %v2898, %v3503
        %vm3505 = vcmp.eq.f32.partialorder %v2898, inf
        %v3506 = vsel %vm3505, %v2898, %v3504
        %vm3507 = vcmp.eq.f32.partialorder %v2898, 0.0
        %v3508 = vand.u32 %v2898, 2147483648
        %v3509 = vsel %vm3507, %v3508, %v3506
        %v3510 = vrsqrt.pop %v2901
        %v3511 = vmul.f32 %v2901, %v3510
        %vm3512 = vcmp.eq.f32.partialorder %v2901, inf
        %v3513 = vsel %vm3512, %v2901, %v3511
        %vm3514 = vcmp.eq.f32.partialorder %v2901, 0.0
        %v3515 = vand.u32 %v2901, 2147483648
        %v3516 = vsel %vm3514, %v3515, %v3513
        %v3517 = vrsqrt.pop %v2904
        %v3518 = vmul.f32 %v2904, %v3517
        %vm3519 = vcmp.eq.f32.partialorder %v2904, inf
        %v3520 = vsel %vm3519, %v2904, %v3518
        %vm3521 = vcmp.eq.f32.partialorder %v2904, 0.0
        %v3522 = vand.u32 %v2904, 2147483648
        %v3523 = vsel %vm3521, %v3522, %v3520
        %v3524 = vrsqrt.pop %v2907
        %v3525 = vmul.f32 %v2907, %v3524
        %vm3526 = vcmp.eq.f32.partialorder %v2907, inf
        %v3527 = vsel %vm3526, %v2907, %v3525
        %vm3528 = vcmp.eq.f32.partialorder %v2907, 0.0
        %v3529 = vand.u32 %v2907, 2147483648
        %v3530 = vsel %vm3528, %v3529, %v3527
        %v3531 = vrsqrt.pop %v2910
        %v3532 = vmul.f32 %v2910, %v3531
        %vm3533 = vcmp.eq.f32.partialorder %v2910, inf
        %v3534 = vsel %vm3533, %v2910, %v3532
        %vm3535 = vcmp.eq.f32.partialorder %v2910, 0.0
        %v3536 = vand.u32 %v2910, 2147483648
        %v3537 = vsel %vm3535, %v3536, %v3534
        %v3538 = vrsqrt.pop %v2913
        %v3539 = vmul.f32 %v2913, %v3538
        %vm3540 = vcmp.eq.f32.partialorder %v2913, inf
        %v3541 = vsel %vm3540, %v2913, %v3539
        %vm3542 = vcmp.eq.f32.partialorder %v2913, 0.0
        %v3543 = vand.u32 %v2913, 2147483648
        %v3544 = vsel %vm3542, %v3543, %v3541
        %v3545 = vrsqrt.pop %v2916
        %v3546 = vmul.f32 %v2916, %v3545
        %vm3547 = vcmp.eq.f32.partialorder %v2916, inf
        %v3548 = vsel %vm3547, %v2916, %v3546
        %vm3549 = vcmp.eq.f32.partialorder %v2916, 0.0
        %v3550 = vand.u32 %v2916, 2147483648
        %v3551 = vsel %vm3549, %v3550, %v3548
        %v3552 = vrsqrt.pop %v2919
        %v3553 = vmul.f32 %v2919, %v3552
        %vm3554 = vcmp.eq.f32.partialorder %v2919, inf
        %v3555 = vsel %vm3554, %v2919, %v3553
        %vm3556 = vcmp.eq.f32.partialorder %v2919, 0.0
        %v3557 = vand.u32 %v2919, 2147483648
        %v3558 = vsel %vm3556, %v3557, %v3555
        %v3559 = vrsqrt.pop %v2922
        %v3560 = vmul.f32 %v2922, %v3559
        %vm3561 = vcmp.eq.f32.partialorder %v2922, inf
        %v3562 = vsel %vm3561, %v2922, %v3560
        %vm3563 = vcmp.eq.f32.partialorder %v2922, 0.0
        %v3564 = vand.u32 %v2922, 2147483648
        %v3565 = vsel %vm3563, %v3564, %v3562
        %v3566 = vrsqrt.pop %v2925
        %v3567 = vmul.f32 %v2925, %v3566
        %vm3568 = vcmp.eq.f32.partialorder %v2925, inf
        %v3569 = vsel %vm3568, %v2925, %v3567
        %vm3570 = vcmp.eq.f32.partialorder %v2925, 0.0
        %v3571 = vand.u32 %v2925, 2147483648
        %v3572 = vsel %vm3570, %v3571, %v3569
        %v3573 = vadd.f32 %v3131, 1e-08
        %v3574 = vadd.f32 %v3138, 1e-08
        %v3575 = vadd.f32 %v3145, 1e-08
        %v3576 = vadd.f32 %v3152, 1e-08
        %v3577 = vadd.f32 %v3159, 1e-08
        %v3578 = vadd.f32 %v3166, 1e-08
        %v3579 = vadd.f32 %v3173, 1e-08
        %v3580 = vadd.f32 %v3180, 1e-08
        %v3581 = vadd.f32 %v3187, 1e-08
        %v3582 = vadd.f32 %v3194, 1e-08
        %v3583 = vadd.f32 %v3201, 1e-08
        %v3584 = vadd.f32 %v3208, 1e-08
        %v3585 = vadd.f32 %v3215, 1e-08
        %v3586 = vadd.f32 %v3222, 1e-08
        %v3587 = vadd.f32 %v3229, 1e-08
        %v3588 = vadd.f32 %v3236, 1e-08
        %v3589 = vadd.f32 %v3243, 1e-08
        %v3590 = vadd.f32 %v3250, 1e-08
        %v3591 = vadd.f32 %v3257, 1e-08
        %v3592 = vadd.f32 %v3264, 1e-08
        %v3593 = vadd.f32 %v3271, 1e-08
        %v3594 = vadd.f32 %v3278, 1e-08
        %v3595 = vadd.f32 %v3285, 1e-08
        %v3596 = vadd.f32 %v3292, 1e-08
        %v3597 = vadd.f32 %v3299, 1e-08
        %v3598 = vadd.f32 %v3306, 1e-08
        %v3599 = vadd.f32 %v3313, 1e-08
        %v3600 = vadd.f32 %v3320, 1e-08
        %v3601 = vadd.f32 %v3327, 1e-08
        %v3602 = vadd.f32 %v3334, 1e-08
        %v3603 = vadd.f32 %v3341, 1e-08
        %v3604 = vadd.f32 %v3348, 1e-08
        %v3605 = vadd.f32 %v3355, 1e-08
        %v3606 = vadd.f32 %v3362, 1e-08
        %v3607 = vadd.f32 %v3369, 1e-08
        %v3608 = vadd.f32 %v3376, 1e-08
        %v3609 = vadd.f32 %v3383, 1e-08
        %v3610 = vadd.f32 %v3390, 1e-08
        %v3611 = vadd.f32 %v3397, 1e-08
        %v3612 = vadd.f32 %v3404, 1e-08
        %v3613 = vadd.f32 %v3411, 1e-08
        %v3614 = vadd.f32 %v3418, 1e-08
        %v3615 = vadd.f32 %v3425, 1e-08
        %v3616 = vadd.f32 %v3432, 1e-08
        %v3617 = vadd.f32 %v3439, 1e-08
        %v3618 = vadd.f32 %v3446, 1e-08
        %v3619 = vadd.f32 %v3453, 1e-08
        %v3620 = vadd.f32 %v3460, 1e-08
        %v3621 = vadd.f32 %v3467, 1e-08
        %v3622 = vadd.f32 %v3474, 1e-08
        %v3623 = vadd.f32 %v3481, 1e-08
        %v3624 = vadd.f32 %v3488, 1e-08
        %v3625 = vadd.f32 %v3495, 1e-08
        %v3626 = vadd.f32 %v3502, 1e-08
        %v3627 = vadd.f32 %v3509, 1e-08
        %v3628 = vadd.f32 %v3516, 1e-08
        %v3629 = vadd.f32 %v3523, 1e-08
        %v3630 = vadd.f32 %v3530, 1e-08
        %v3631 = vadd.f32 %v3537, 1e-08
        %v3632 = vadd.f32 %v3544, 1e-08
        %v3633 = vadd.f32 %v3551, 1e-08
        %v3634 = vadd.f32 %v3558, 1e-08
        %v3635 = vadd.f32 %v3565, 1e-08
        %v3636 = vadd.f32 %v3572, 1e-08
        %v3637 = vrcp.pop %v3573
        %v3638 = vmul.f32 1.0, %v3637
        %v3639 = vrcp.pop %v3574
        %v3640 = vmul.f32 1.0, %v3639
        %v3641 = vrcp.pop %v3575
        %v3642 = vmul.f32 1.0, %v3641
        %v3643 = vrcp.pop %v3576
        %v3644 = vmul.f32 1.0, %v3643
        %v3645 = vrcp.pop %v3577
        %v3646 = vmul.f32 1.0, %v3645
        %v3647 = vrcp.pop %v3578
        %v3648 = vmul.f32 1.0, %v3647
        %v3649 = vrcp.pop %v3579
        %v3650 = vmul.f32 1.0, %v3649
        %v3651 = vrcp.pop %v3580
        %v3652 = vmul.f32 1.0, %v3651
        %v3653 = vrcp.pop %v3581
        %v3654 = vmul.f32 1.0, %v3653
        %v3655 = vrcp.pop %v3582
        %v3656 = vmul.f32 1.0, %v3655
        %v3657 = vrcp.pop %v3583
        %v3658 = vmul.f32 1.0, %v3657
        %v3659 = vrcp.pop %v3584
        %v3660 = vmul.f32 1.0, %v3659
        %v3661 = vrcp.pop %v3585
        %v3662 = vmul.f32 1.0, %v3661
        %v3663 = vrcp.pop %v3586
        %v3664 = vmul.f32 1.0, %v3663
        %v3665 = vrcp.pop %v3587
        %v3666 = vmul.f32 1.0, %v3665
        %v3667 = vrcp.pop %v3588
        %v3668 = vmul.f32 1.0, %v3667
        %v3669 = vrcp.pop %v3589
        %v3670 = vmul.f32 1.0, %v3669
        %v3671 = vrcp.pop %v3590
        %v3672 = vmul.f32 1.0, %v3671
        %v3673 = vrcp.pop %v3591
        %v3674 = vmul.f32 1.0, %v3673
        %v3675 = vrcp.pop %v3592
        %v3676 = vmul.f32 1.0, %v3675
        %v3677 = vrcp.pop %v3593
        %v3678 = vmul.f32 1.0, %v3677
        %v3679 = vrcp.pop %v3594
        %v3680 = vmul.f32 1.0, %v3679
        %v3681 = vrcp.pop %v3595
        %v3682 = vmul.f32 1.0, %v3681
        %v3683 = vrcp.pop %v3596
        %v3684 = vmul.f32 1.0, %v3683
        %v3685 = vrcp.pop %v3597
        %v3686 = vmul.f32 1.0, %v3685
        %v3687 = vrcp.pop %v3598
        %v3688 = vmul.f32 1.0, %v3687
        %v3689 = vrcp.pop %v3599
        %v3690 = vmul.f32 1.0, %v3689
        %v3691 = vrcp.pop %v3600
        %v3692 = vmul.f32 1.0, %v3691
        %v3693 = vrcp.pop %v3601
        %v3694 = vmul.f32 1.0, %v3693
        %v3695 = vrcp.pop %v3602
        %v3696 = vmul.f32 1.0, %v3695
        %v3697 = vrcp.pop %v3603
        %v3698 = vmul.f32 1.0, %v3697
        %v3699 = vrcp.pop %v3604
        %v3700 = vmul.f32 1.0, %v3699
        %v3701 = vrcp.pop %v3605
        %v3702 = vmul.f32 1.0, %v3701
        %v3703 = vrcp.pop %v3606
        %v3704 = vmul.f32 1.0, %v3703
        %v3705 = vrcp.pop %v3607
        %v3706 = vmul.f32 1.0, %v3705
        %v3707 = vrcp.pop %v3608
        %v3708 = vmul.f32 1.0, %v3707
        %v3709 = vrcp.pop %v3609
        %v3710 = vmul.f32 1.0, %v3709
        %v3711 = vrcp.pop %v3610
        %v3712 = vmul.f32 1.0, %v3711
        %v3713 = vrcp.pop %v3611
        %v3714 = vmul.f32 1.0, %v3713
        %v3715 = vrcp.pop %v3612
        %v3716 = vmul.f32 1.0, %v3715
        %v3717 = vrcp.pop %v3613
        %v3718 = vmul.f32 1.0, %v3717
        %v3719 = vrcp.pop %v3614
        %v3720 = vmul.f32 1.0, %v3719
        %v3721 = vrcp.pop %v3615
        %v3722 = vmul.f32 1.0, %v3721
        %v3723 = vrcp.pop %v3616
        %v3724 = vmul.f32 1.0, %v3723
        %v3725 = vrcp.pop %v3617
        %v3726 = vmul.f32 1.0, %v3725
        %v3727 = vrcp.pop %v3618
        %v3728 = vmul.f32 1.0, %v3727
        %v3729 = vrcp.pop %v3619
        %v3730 = vmul.f32 1.0, %v3729
        %v3731 = vrcp.pop %v3620
        %v3732 = vmul.f32 1.0, %v3731
        %v3733 = vrcp.pop %v3621
        %v3734 = vmul.f32 1.0, %v3733
        %v3735 = vrcp.pop %v3622
        %v3736 = vmul.f32 1.0, %v3735
        %v3737 = vrcp.pop %v3623
        %v3738 = vmul.f32 1.0, %v3737
        %v3739 = vrcp.pop %v3624
        %v3740 = vmul.f32 1.0, %v3739
        %v3741 = vrcp.pop %v3625
        %v3742 = vmul.f32 1.0, %v3741
        %v3743 = vrcp.pop %v3626
        %v3744 = vmul.f32 1.0, %v3743
        %v3745 = vrcp.pop %v3627
        %v3746 = vmul.f32 1.0, %v3745
        %v3747 = vrcp.pop %v3628
        %v3748 = vmul.f32 1.0, %v3747
        %v3749 = vrcp.pop %v3629
        %v3750 = vmul.f32 1.0, %v3749
        %v3751 = vrcp.pop %v3630
        %v3752 = vmul.f32 1.0, %v3751
        %v3753 = vrcp.pop %v3631
        %v3754 = vmul.f32 1.0, %v3753
        %v3755 = vrcp.pop %v3632
        %v3756 = vmul.f32 1.0, %v3755
        %v3757 = vrcp.pop %v3633
        %v3758 = vmul.f32 1.0, %v3757
        %v3759 = vrcp.pop %v3634
        %v3760 = vmul.f32 1.0, %v3759
        %v3761 = vrcp.pop %v3635
        %v3762 = vmul.f32 1.0, %v3761
        %v3763 = vrcp.pop %v3636
        %v3764 = vmul.f32 1.0, %v3763
        %v3765 = vmul.f32 %v2605, %v3638
        %v3766 = vmul.f32 %v2606, %v3640
        %v3767 = vmul.f32 %v2607, %v3642
        %v3768 = vmul.f32 %v2608, %v3644
        %v3769 = vmul.f32 %v2609, %v3646
        %v3770 = vmul.f32 %v2610, %v3648
        %v3771 = vmul.f32 %v2611, %v3650
        %v3772 = vmul.f32 %v2612, %v3652
        %v3773 = vmul.f32 %v2613, %v3654
        %v3774 = vmul.f32 %v2614, %v3656
        %v3775 = vmul.f32 %v2615, %v3658
        %v3776 = vmul.f32 %v2616, %v3660
        %v3777 = vmul.f32 %v2617, %v3662
        %v3778 = vmul.f32 %v2618, %v3664
        %v3779 = vmul.f32 %v2619, %v3666
        %v3780 = vmul.f32 %v2620, %v3668
        %v3781 = vmul.f32 %v2621, %v3670
        %v3782 = vmul.f32 %v2622, %v3672
        %v3783 = vmul.f32 %v2623, %v3674
        %v3784 = vmul.f32 %v2624, %v3676
        %v3785 = vmul.f32 %v2625, %v3678
        %v3786 = vmul.f32 %v2626, %v3680
        %v3787 = vmul.f32 %v2627, %v3682
        %v3788 = vmul.f32 %v2628, %v3684
        %v3789 = vmul.f32 %v2629, %v3686
        %v3790 = vmul.f32 %v2630, %v3688
        %v3791 = vmul.f32 %v2631, %v3690
        %v3792 = vmul.f32 %v2632, %v3692
        %v3793 = vmul.f32 %v2633, %v3694
        %v3794 = vmul.f32 %v2634, %v3696
        %v3795 = vmul.f32 %v2635, %v3698
        %v3796 = vmul.f32 %v2636, %v3700
        %v3797 = vmul.f32 %v2637, %v3702
        %v3798 = vmul.f32 %v2638, %v3704
        %v3799 = vmul.f32 %v2639, %v3706
        %v3800 = vmul.f32 %v2640, %v3708
        %v3801 = vmul.f32 %v2641, %v3710
        %v3802 = vmul.f32 %v2642, %v3712
        %v3803 = vmul.f32 %v2643, %v3714
        %v3804 = vmul.f32 %v2644, %v3716
        %v3805 = vmul.f32 %v2645, %v3718
        %v3806 = vmul.f32 %v2646, %v3720
        %v3807 = vmul.f32 %v2647, %v3722
        %v3808 = vmul.f32 %v2648, %v3724
        %v3809 = vmul.f32 %v2649, %v3726
        %v3810 = vmul.f32 %v2650, %v3728
        %v3811 = vmul.f32 %v2651, %v3730
        %v3812 = vmul.f32 %v2652, %v3732
        %v3813 = vmul.f32 %v2653, %v3734
        %v3814 = vmul.f32 %v2654, %v3736
        %v3815 = vmul.f32 %v2655, %v3738
        %v3816 = vmul.f32 %v2656, %v3740
        %v3817 = vmul.f32 %v2657, %v3742
        %v3818 = vmul.f32 %v2658, %v3744
        %v3819 = vmul.f32 %v2659, %v3746
        %v3820 = vmul.f32 %v2660, %v3748
        %v3821 = vmul.f32 %v2661, %v3750
        %v3822 = vmul.f32 %v2662, %v3752
        %v3823 = vmul.f32 %v2663, %v3754
        %v3824 = vmul.f32 %v2664, %v3756
        %v3825 = vmul.f32 %v2665, %v3758
        %v3826 = vmul.f32 %v2666, %v3760
        %v3827 = vmul.f32 %v2667, %v3762
        %v3828 = vmul.f32 %v2668, %v3764
        %3829 = vst.msk [vmem:[%s470] sm:$0xff] %vm2733, %v3765
        %3830 = vst.msk [vmem:[%s470 + $0x8] sm:$0xff] %vm2733, %v3766
        %3831 = vst.msk [vmem:[%s470 + $0x10] sm:$0xff] %vm2733, %v3767
        %3832 = vst.msk [vmem:[%s470 + $0x18] sm:$0xff] %vm2733, %v3768
        %3833 = vst.msk [vmem:[%s470 + $0x20] sm:$0xff] %vm2733, %v3769
        %3834 = vst.msk [vmem:[%s470 + $0x28] sm:$0xff] %vm2733, %v3770
        %3835 = vst.msk [vmem:[%s470 + $0x30] sm:$0xff] %vm2733, %v3771
        %3836 = vst.msk [vmem:[%s470 + $0x38] sm:$0xff] %vm2733, %v3772
        %3837 = vst.msk [vmem:[%s470 + $0x40] sm:$0xff] %vm2733, %v3773
        %3838 = vst.msk [vmem:[%s470 + $0x48] sm:$0xff] %vm2733, %v3774
        %3839 = vst.msk [vmem:[%s470 + $0x50] sm:$0xff] %vm2733, %v3775
        %3840 = vst.msk [vmem:[%s470 + $0x58] sm:$0xff] %vm2733, %v3776
        %3841 = vst.msk [vmem:[%s470 + $0x60] sm:$0xff] %vm2733, %v3777
        %3842 = vst.msk [vmem:[%s470 + $0x68] sm:$0xff] %vm2733, %v3778
        %3843 = vst.msk [vmem:[%s470 + $0x70] sm:$0xff] %vm2733, %v3779
        %3844 = vst.msk [vmem:[%s470 + $0x78] sm:$0xff] %vm2733, %v3780
        %3845 = vst.msk [vmem:[%s470 + $0x80] sm:$0xff] %vm2733, %v3781
        %3846 = vst.msk [vmem:[%s470 + $0x88] sm:$0xff] %vm2733, %v3782
        %3847 = vst.msk [vmem:[%s470 + $0x90] sm:$0xff] %vm2733, %v3783
        %3848 = vst.msk [vmem:[%s470 + $0x98] sm:$0xff] %vm2733, %v3784
        %3849 = vst.msk [vmem:[%s470 + $0xa0] sm:$0xff] %vm2733, %v3785
        %3850 = vst.msk [vmem:[%s470 + $0xa8] sm:$0xff] %vm2733, %v3786
        %3851 = vst.msk [vmem:[%s470 + $0xb0] sm:$0xff] %vm2733, %v3787
        %3852 = vst.msk [vmem:[%s470 + $0xb8] sm:$0xff] %vm2733, %v3788
        %3853 = vst.msk [vmem:[%s470 + $0xc0] sm:$0xff] %vm2733, %v3789
        %3854 = vst.msk [vmem:[%s470 + $0xc8] sm:$0xff] %vm2733, %v3790
        %3855 = vst.msk [vmem:[%s470 + $0xd0] sm:$0xff] %vm2733, %v3791
        %3856 = vst.msk [vmem:[%s470 + $0xd8] sm:$0xff] %vm2733, %v3792
        %3857 = vst.msk [vmem:[%s470 + $0xe0] sm:$0xff] %vm2733, %v3793
        %3858 = vst.msk [vmem:[%s470 + $0xe8] sm:$0xff] %vm2733, %v3794
        %3859 = vst.msk [vmem:[%s470 + $0xf0] sm:$0xff] %vm2733, %v3795
        %3860 = vst.msk [vmem:[%s470 + $0xf8] sm:$0xff] %vm2733, %v3796
        %3861 = vst.msk [vmem:[%s470 + $0x100] sm:$0xff] %vm2733, %v3797
        %3862 = vst.msk [vmem:[%s470 + $0x108] sm:$0xff] %vm2733, %v3798
        %3863 = vst.msk [vmem:[%s470 + $0x110] sm:$0xff] %vm2733, %v3799
        %3864 = vst.msk [vmem:[%s470 + $0x118] sm:$0xff] %vm2733, %v3800
        %3865 = vst.msk [vmem:[%s470 + $0x120] sm:$0xff] %vm2733, %v3801
        %3866 = vst.msk [vmem:[%s470 + $0x128] sm:$0xff] %vm2733, %v3802
        %3867 = vst.msk [vmem:[%s470 + $0x130] sm:$0xff] %vm2733, %v3803
        %3868 = vst.msk [vmem:[%s470 + $0x138] sm:$0xff] %vm2733, %v3804
        %3869 = vst.msk [vmem:[%s470 + $0x140] sm:$0xff] %vm2733, %v3805
        %3870 = vst.msk [vmem:[%s470 + $0x148] sm:$0xff] %vm2733, %v3806
        %3871 = vst.msk [vmem:[%s470 + $0x150] sm:$0xff] %vm2733, %v3807
        %3872 = vst.msk [vmem:[%s470 + $0x158] sm:$0xff] %vm2733, %v3808
        %3873 = vst.msk [vmem:[%s470 + $0x160] sm:$0xff] %vm2733, %v3809
        %3874 = vst.msk [vmem:[%s470 + $0x168] sm:$0xff] %vm2733, %v3810
        %3875 = vst.msk [vmem:[%s470 + $0x170] sm:$0xff] %vm2733, %v3811
        %3876 = vst.msk [vmem:[%s470 + $0x178] sm:$0xff] %vm2733, %v3812
        %3877 = vst.msk [vmem:[%s470 + $0x180] sm:$0xff] %vm2733, %v3813
        %3878 = vst.msk [vmem:[%s470 + $0x188] sm:$0xff] %vm2733, %v3814
        %3879 = vst.msk [vmem:[%s470 + $0x190] sm:$0xff] %vm2733, %v3815
        %3880 = vst.msk [vmem:[%s470 + $0x198] sm:$0xff] %vm2733, %v3816
        %3881 = vst.msk [vmem:[%s470 + $0x1a0] sm:$0xff] %vm2733, %v3817
        %3882 = vst.msk [vmem:[%s470 + $0x1a8] sm:$0xff] %vm2733, %v3818
        %3883 = vst.msk [vmem:[%s470 + $0x1b0] sm:$0xff] %vm2733, %v3819
        %3884 = vst.msk [vmem:[%s470 + $0x1b8] sm:$0xff] %vm2733, %v3820
        %3885 = vst.msk [vmem:[%s470 + $0x1c0] sm:$0xff] %vm2733, %v3821
        %3886 = vst.msk [vmem:[%s470 + $0x1c8] sm:$0xff] %vm2733, %v3822
        %3887 = vst.msk [vmem:[%s470 + $0x1d0] sm:$0xff] %vm2733, %v3823
        %3888 = vst.msk [vmem:[%s470 + $0x1d8] sm:$0xff] %vm2733, %v3824
        %3889 = vst.msk [vmem:[%s470 + $0x1e0] sm:$0xff] %vm2733, %v3825
        %3890 = vst.msk [vmem:[%s470 + $0x1e8] sm:$0xff] %vm2733, %v3826
        %3891 = vst.msk [vmem:[%s470 + $0x1f0] sm:$0xff] %vm2733, %v3827
        %3892 = vst.msk [vmem:[%s470 + $0x1f8] sm:$0xff] %vm2733, %v3828
        %v3893 = vmul.f32 %v1576, %v2225
        %v3894 = vmul.f32 %v1582, %v2231
        %v3895 = vmul.f32 %v1588, %v2237
        %v3896 = vmul.f32 %v1594, %v2243
        %v3897 = vmul.f32 %v1600, %v2249
        %v3898 = vmul.f32 %v1606, %v2255
        %v3899 = vmul.f32 %v1612, %v2261
        %v3900 = vmul.f32 %v1618, %v2267
        %v3901 = vmul.f32 %v1624, %v2273
        %v3902 = vmul.f32 %v1630, %v2279
        %v3903 = vmul.f32 %v1636, %v2285
        %v3904 = vmul.f32 %v1642, %v2291
        %v3905 = vmul.f32 %v1648, %v2297
        %v3906 = vmul.f32 %v1654, %v2303
        %v3907 = vmul.f32 %v1660, %v2309
        %v3908 = vmul.f32 %v1666, %v2315
        %v3909 = vmul.f32 %v1672, %v2321
        %v3910 = vmul.f32 %v1678, %v2327
        %v3911 = vmul.f32 %v1684, %v2333
        %v3912 = vmul.f32 %v1690, %v2339
        %v3913 = vmul.f32 %v1696, %v2345
        %v3914 = vmul.f32 %v1702, %v2351
        %v3915 = vmul.f32 %v1708, %v2357
        %v3916 = vmul.f32 %v1714, %v2363
        %v3917 = vmul.f32 %v1720, %v2369
        %v3918 = vmul.f32 %v1726, %v2375
        %v3919 = vmul.f32 %v1732, %v2381
        %v3920 = vmul.f32 %v1738, %v2387
        %v3921 = vmul.f32 %v1744, %v2393
        %v3922 = vmul.f32 %v1750, %v2399
        %v3923 = vmul.f32 %v1756, %v2405
        %v3924 = vmul.f32 %v1762, %v2411
        %v3925 = vmul.f32 %v1768, %v2417
        %v3926 = vmul.f32 %v1774, %v2423
        %v3927 = vmul.f32 %v1780, %v2429
        %v3928 = vmul.f32 %v1786, %v2435
        %v3929 = vmul.f32 %v1792, %v2441
        %v3930 = vmul.f32 %v1798, %v2447
        %v3931 = vmul.f32 %v1804, %v2453
        %v3932 = vmul.f32 %v1810, %v2459
        %v3933 = vmul.f32 %v1816, %v2465
        %v3934 = vmul.f32 %v1822, %v2471
        %v3935 = vmul.f32 %v1828, %v2477
        %v3936 = vmul.f32 %v1834, %v2483
        %v3937 = vmul.f32 %v1840, %v2489
        %v3938 = vmul.f32 %v1846, %v2495
        %v3939 = vmul.f32 %v1852, %v2501
        %v3940 = vmul.f32 %v1858, %v2507
        %v3941 = vmul.f32 %v1864, %v2513
        %v3942 = vmul.f32 %v1870, %v2519
        %v3943 = vmul.f32 %v1876, %v2525
        %v3944 = vmul.f32 %v1882, %v2531
        %v3945 = vmul.f32 %v1888, %v2537
        %v3946 = vmul.f32 %v1894, %v2543
        %v3947 = vmul.f32 %v1900, %v2549
        %v3948 = vmul.f32 %v1906, %v2555
        %v3949 = vmul.f32 %v1912, %v2561
        %v3950 = vmul.f32 %v1918, %v2567
        %v3951 = vmul.f32 %v1924, %v2573
        %v3952 = vmul.f32 %v1930, %v2579
        %v3953 = vmul.f32 %v1936, %v2585
        %v3954 = vmul.f32 %v1942, %v2591
        %v3955 = vmul.f32 %v1948, %v2597
        %v3956 = vmul.f32 %v1954, %v2603
        %4021 = vrot.lane.b32.xlu0 %v3893, 125
        %v4022 = vpop.permute.xlu0 %4021
        %4023 = vrot.lane.b32.xlu0 %v3894, 125
        %v4024 = vpop.permute.xlu0 %4023
        %4025 = vrot.lane.b32.xlu0 %v3895, 125
        %v4026 = vpop.permute.xlu0 %4025
        %4027 = vrot.lane.b32.xlu0 %v3896, 125
        %v4028 = vpop.permute.xlu0 %4027
        %4029 = vrot.lane.b32.xlu0 %v3897, 125
        %v4030 = vpop.permute.xlu0 %4029
        %4031 = vrot.lane.b32.xlu0 %v3898, 125
        %v4032 = vpop.permute.xlu0 %4031
        %4033 = vrot.lane.b32.xlu0 %v3899, 125
        %v4034 = vpop.permute.xlu0 %4033
        %4035 = vrot.lane.b32.xlu0 %v3900, 125
        %v4036 = vpop.permute.xlu0 %4035
        %4037 = vrot.lane.b32.xlu0 %v3901, 125
        %v4038 = vpop.permute.xlu0 %4037
        %4039 = vrot.lane.b32.xlu0 %v3902, 125
        %v4040 = vpop.permute.xlu0 %4039
        %4041 = vrot.lane.b32.xlu0 %v3903, 125
        %v4042 = vpop.permute.xlu0 %4041
        %4043 = vrot.lane.b32.xlu0 %v3904, 125
        %v4044 = vpop.permute.xlu0 %4043
        %4045 = vrot.lane.b32.xlu0 %v3905, 125
        %v4046 = vpop.permute.xlu0 %4045
        %4047 = vrot.lane.b32.xlu0 %v3906, 125
        %v4048 = vpop.permute.xlu0 %4047
        %4049 = vrot.lane.b32.xlu0 %v3907, 125
        %v4050 = vpop.permute.xlu0 %4049
        %4051 = vrot.lane.b32.xlu0 %v3908, 125
        %v4052 = vpop.permute.xlu0 %4051
        %4053 = vrot.lane.b32.xlu0 %v3909, 125
        %v4054 = vpop.permute.xlu0 %4053
        %4055 = vrot.lane.b32.xlu0 %v3910, 125
        %v4056 = vpop.permute.xlu0 %4055
        %4057 = vrot.lane.b32.xlu0 %v3911, 125
        %v4058 = vpop.permute.xlu0 %4057
        %4059 = vrot.lane.b32.xlu0 %v3912, 125
        %v4060 = vpop.permute.xlu0 %4059
        %4061 = vrot.lane.b32.xlu0 %v3913, 125
        %v4062 = vpop.permute.xlu0 %4061
        %4063 = vrot.lane.b32.xlu0 %v3914, 125
        %v4064 = vpop.permute.xlu0 %4063
        %4065 = vrot.lane.b32.xlu0 %v3915, 125
        %v4066 = vpop.permute.xlu0 %4065
        %4067 = vrot.lane.b32.xlu0 %v3916, 125
        %v4068 = vpop.permute.xlu0 %4067
        %4069 = vrot.lane.b32.xlu0 %v3917, 125
        %v4070 = vpop.permute.xlu0 %4069
        %4071 = vrot.lane.b32.xlu0 %v3918, 125
        %v4072 = vpop.permute.xlu0 %4071
        %4073 = vrot.lane.b32.xlu0 %v3919, 125
        %v4074 = vpop.permute.xlu0 %4073
        %4075 = vrot.lane.b32.xlu0 %v3920, 125
        %v4076 = vpop.permute.xlu0 %4075
        %4077 = vrot.lane.b32.xlu0 %v3921, 125
        %v4078 = vpop.permute.xlu0 %4077
        %4079 = vrot.lane.b32.xlu0 %v3922, 125
        %v4080 = vpop.permute.xlu0 %4079
        %4081 = vrot.lane.b32.xlu0 %v3923, 125
        %v4082 = vpop.permute.xlu0 %4081
        %4083 = vrot.lane.b32.xlu0 %v3924, 125
        %v4084 = vpop.permute.xlu0 %4083
        %4085 = vrot.lane.b32.xlu0 %v3925, 125
        %v4086 = vpop.permute.xlu0 %4085
        %4087 = vrot.lane.b32.xlu0 %v3926, 125
        %v4088 = vpop.permute.xlu0 %4087
        %4089 = vrot.lane.b32.xlu0 %v3927, 125
        %v4090 = vpop.permute.xlu0 %4089
        %4091 = vrot.lane.b32.xlu0 %v3928, 125
        %v4092 = vpop.permute.xlu0 %4091
        %4093 = vrot.lane.b32.xlu0 %v3929, 125
        %v4094 = vpop.permute.xlu0 %4093
        %4095 = vrot.lane.b32.xlu0 %v3930, 125
        %v4096 = vpop.permute.xlu0 %4095
        %4097 = vrot.lane.b32.xlu0 %v3931, 125
        %v4098 = vpop.permute.xlu0 %4097
        %4099 = vrot.lane.b32.xlu0 %v3932, 125
        %v4100 = vpop.permute.xlu0 %4099
        %4101 = vrot.lane.b32.xlu0 %v3933, 125
        %v4102 = vpop.permute.xlu0 %4101
        %4103 = vrot.lane.b32.xlu0 %v3934, 125
        %v4104 = vpop.permute.xlu0 %4103
        %4105 = vrot.lane.b32.xlu0 %v3935, 125
        %v4106 = vpop.permute.xlu0 %4105
        %4107 = vrot.lane.b32.xlu0 %v3936, 125
        %v4108 = vpop.permute.xlu0 %4107
        %4109 = vrot.lane.b32.xlu0 %v3937, 125
        %v4110 = vpop.permute.xlu0 %4109
        %4111 = vrot.lane.b32.xlu0 %v3938, 125
        %v4112 = vpop.permute.xlu0 %4111
        %4113 = vrot.lane.b32.xlu0 %v3939, 125
        %v4114 = vpop.permute.xlu0 %4113
        %4115 = vrot.lane.b32.xlu0 %v3940, 125
        %v4116 = vpop.permute.xlu0 %4115
        %4117 = vrot.lane.b32.xlu0 %v3941, 125
        %v4118 = vpop.permute.xlu0 %4117
        %4119 = vrot.lane.b32.xlu0 %v3942, 125
        %v4120 = vpop.permute.xlu0 %4119
        %4121 = vrot.lane.b32.xlu0 %v3943, 125
        %v4122 = vpop.permute.xlu0 %4121
        %4123 = vrot.lane.b32.xlu0 %v3944, 125
        %v4124 = vpop.permute.xlu0 %4123
        %4125 = vrot.lane.b32.xlu0 %v3945, 125
        %v4126 = vpop.permute.xlu0 %4125
        %4127 = vrot.lane.b32.xlu0 %v3946, 125
        %v4128 = vpop.permute.xlu0 %4127
        %4129 = vrot.lane.b32.xlu0 %v3947, 125
        %v4130 = vpop.permute.xlu0 %4129
        %4131 = vrot.lane.b32.xlu0 %v3948, 125
        %v4132 = vpop.permute.xlu0 %4131
        %4133 = vrot.lane.b32.xlu0 %v3949, 125
        %v4134 = vpop.permute.xlu0 %4133
        %4135 = vrot.lane.b32.xlu0 %v3950, 125
        %v4136 = vpop.permute.xlu0 %4135
        %4137 = vrot.lane.b32.xlu0 %v3951, 125
        %v4138 = vpop.permute.xlu0 %4137
        %4139 = vrot.lane.b32.xlu0 %v3952, 125
        %v4140 = vpop.permute.xlu0 %4139
        %4141 = vrot.lane.b32.xlu0 %v3953, 125
        %v4142 = vpop.permute.xlu0 %4141
        %4143 = vrot.lane.b32.xlu0 %v3954, 125
        %v4144 = vpop.permute.xlu0 %4143
        %4145 = vrot.lane.b32.xlu0 %v3955, 125
        %v4146 = vpop.permute.xlu0 %4145
        %4147 = vrot.lane.b32.xlu0 %v3956, 125
        %v4148 = vpop.permute.xlu0 %4147
        %v4213 = vsel %vm2733, %v4022, 0.0
        %4214 = vadd.xlane.f32.xlu0 %v4213
        %v4215 = vpop.xlane.xlu0 %4214
        %v4216 = vsel %vm2733, %v4024, 0.0
        %4217 = vadd.xlane.f32.xlu0 %v4216
        %v4218 = vpop.xlane.xlu0 %4217
        %v4219 = vsel %vm2733, %v4026, 0.0
        %4220 = vadd.xlane.f32.xlu0 %v4219
        %v4221 = vpop.xlane.xlu0 %4220
        %v4222 = vsel %vm2733, %v4028, 0.0
        %4223 = vadd.xlane.f32.xlu0 %v4222
        %v4224 = vpop.xlane.xlu0 %4223
        %v4225 = vsel %vm2733, %v4030, 0.0
        %4226 = vadd.xlane.f32.xlu0 %v4225
        %v4227 = vpop.xlane.xlu0 %4226
        %v4228 = vsel %vm2733, %v4032, 0.0
        %4229 = vadd.xlane.f32.xlu0 %v4228
        %v4230 = vpop.xlane.xlu0 %4229
        %v4231 = vsel %vm2733, %v4034, 0.0
        %4232 = vadd.xlane.f32.xlu0 %v4231
        %v4233 = vpop.xlane.xlu0 %4232
        %v4234 = vsel %vm2733, %v4036, 0.0
        %4235 = vadd.xlane.f32.xlu0 %v4234
        %v4236 = vpop.xlane.xlu0 %4235
        %v4237 = vsel %vm2733, %v4038, 0.0
        %4238 = vadd.xlane.f32.xlu0 %v4237
        %v4239 = vpop.xlane.xlu0 %4238
        %v4240 = vsel %vm2733, %v4040, 0.0
        %4241 = vadd.xlane.f32.xlu0 %v4240
        %v4242 = vpop.xlane.xlu0 %4241
        %v4243 = vsel %vm2733, %v4042, 0.0
        %4244 = vadd.xlane.f32.xlu0 %v4243
        %v4245 = vpop.xlane.xlu0 %4244
        %v4246 = vsel %vm2733, %v4044, 0.0
        %4247 = vadd.xlane.f32.xlu0 %v4246
        %v4248 = vpop.xlane.xlu0 %4247
        %v4249 = vsel %vm2733, %v4046, 0.0
        %4250 = vadd.xlane.f32.xlu0 %v4249
        %v4251 = vpop.xlane.xlu0 %4250
        %v4252 = vsel %vm2733, %v4048, 0.0
        %4253 = vadd.xlane.f32.xlu0 %v4252
        %v4254 = vpop.xlane.xlu0 %4253
        %v4255 = vsel %vm2733, %v4050, 0.0
        %4256 = vadd.xlane.f32.xlu0 %v4255
        %v4257 = vpop.xlane.xlu0 %4256
        %v4258 = vsel %vm2733, %v4052, 0.0
        %4259 = vadd.xlane.f32.xlu0 %v4258
        %v4260 = vpop.xlane.xlu0 %4259
        %v4261 = vsel %vm2733, %v4054, 0.0
        %4262 = vadd.xlane.f32.xlu0 %v4261
        %v4263 = vpop.xlane.xlu0 %4262
        %v4264 = vsel %vm2733, %v4056, 0.0
        %4265 = vadd.xlane.f32.xlu0 %v4264
        %v4266 = vpop.xlane.xlu0 %4265
        %v4267 = vsel %vm2733, %v4058, 0.0
        %4268 = vadd.xlane.f32.xlu0 %v4267
        %v4269 = vpop.xlane.xlu0 %4268
        %v4270 = vsel %vm2733, %v4060, 0.0
        %4271 = vadd.xlane.f32.xlu0 %v4270
        %v4272 = vpop.xlane.xlu0 %4271
        %v4273 = vsel %vm2733, %v4062, 0.0
        %4274 = vadd.xlane.f32.xlu0 %v4273
        %v4275 = vpop.xlane.xlu0 %4274
        %v4276 = vsel %vm2733, %v4064, 0.0
        %4277 = vadd.xlane.f32.xlu0 %v4276
        %v4278 = vpop.xlane.xlu0 %4277
        %v4279 = vsel %vm2733, %v4066, 0.0
        %4280 = vadd.xlane.f32.xlu0 %v4279
        %v4281 = vpop.xlane.xlu0 %4280
        %v4282 = vsel %vm2733, %v4068, 0.0
        %4283 = vadd.xlane.f32.xlu0 %v4282
        %v4284 = vpop.xlane.xlu0 %4283
        %v4285 = vsel %vm2733, %v4070, 0.0
        %4286 = vadd.xlane.f32.xlu0 %v4285
        %v4287 = vpop.xlane.xlu0 %4286
        %v4288 = vsel %vm2733, %v4072, 0.0
        %4289 = vadd.xlane.f32.xlu0 %v4288
        %v4290 = vpop.xlane.xlu0 %4289
        %v4291 = vsel %vm2733, %v4074, 0.0
        %4292 = vadd.xlane.f32.xlu0 %v4291
        %v4293 = vpop.xlane.xlu0 %4292
        %v4294 = vsel %vm2733, %v4076, 0.0
        %4295 = vadd.xlane.f32.xlu0 %v4294
        %v4296 = vpop.xlane.xlu0 %4295
        %v4297 = vsel %vm2733, %v4078, 0.0
        %4298 = vadd.xlane.f32.xlu0 %v4297
        %v4299 = vpop.xlane.xlu0 %4298
        %v4300 = vsel %vm2733, %v4080, 0.0
        %4301 = vadd.xlane.f32.xlu0 %v4300
        %v4302 = vpop.xlane.xlu0 %4301
        %v4303 = vsel %vm2733, %v4082, 0.0
        %4304 = vadd.xlane.f32.xlu0 %v4303
        %v4305 = vpop.xlane.xlu0 %4304
        %v4306 = vsel %vm2733, %v4084, 0.0
        %4307 = vadd.xlane.f32.xlu0 %v4306
        %v4308 = vpop.xlane.xlu0 %4307
        %v4309 = vsel %vm2733, %v4086, 0.0
        %4310 = vadd.xlane.f32.xlu0 %v4309
        %v4311 = vpop.xlane.xlu0 %4310
        %v4312 = vsel %vm2733, %v4088, 0.0
        %4313 = vadd.xlane.f32.xlu0 %v4312
        %v4314 = vpop.xlane.xlu0 %4313
        %v4315 = vsel %vm2733, %v4090, 0.0
        %4316 = vadd.xlane.f32.xlu0 %v4315
        %v4317 = vpop.xlane.xlu0 %4316
        %v4318 = vsel %vm2733, %v4092, 0.0
        %4319 = vadd.xlane.f32.xlu0 %v4318
        %v4320 = vpop.xlane.xlu0 %4319
        %v4321 = vsel %vm2733, %v4094, 0.0
        %4322 = vadd.xlane.f32.xlu0 %v4321
        %v4323 = vpop.xlane.xlu0 %4322
        %v4324 = vsel %vm2733, %v4096, 0.0
        %4325 = vadd.xlane.f32.xlu0 %v4324
        %v4326 = vpop.xlane.xlu0 %4325
        %v4327 = vsel %vm2733, %v4098, 0.0
        %4328 = vadd.xlane.f32.xlu0 %v4327
        %v4329 = vpop.xlane.xlu0 %4328
        %v4330 = vsel %vm2733, %v4100, 0.0
        %4331 = vadd.xlane.f32.xlu0 %v4330
        %v4332 = vpop.xlane.xlu0 %4331
        %v4333 = vsel %vm2733, %v4102, 0.0
        %4334 = vadd.xlane.f32.xlu0 %v4333
        %v4335 = vpop.xlane.xlu0 %4334
        %v4336 = vsel %vm2733, %v4104, 0.0
        %4337 = vadd.xlane.f32.xlu0 %v4336
        %v4338 = vpop.xlane.xlu0 %4337
        %v4339 = vsel %vm2733, %v4106, 0.0
        %4340 = vadd.xlane.f32.xlu0 %v4339
        %v4341 = vpop.xlane.xlu0 %4340
        %v4342 = vsel %vm2733, %v4108, 0.0
        %4343 = vadd.xlane.f32.xlu0 %v4342
        %v4344 = vpop.xlane.xlu0 %4343
        %v4345 = vsel %vm2733, %v4110, 0.0
        %4346 = vadd.xlane.f32.xlu0 %v4345
        %v4347 = vpop.xlane.xlu0 %4346
        %v4348 = vsel %vm2733, %v4112, 0.0
        %4349 = vadd.xlane.f32.xlu0 %v4348
        %v4350 = vpop.xlane.xlu0 %4349
        %v4351 = vsel %vm2733, %v4114, 0.0
        %4352 = vadd.xlane.f32.xlu0 %v4351
        %v4353 = vpop.xlane.xlu0 %4352
        %v4354 = vsel %vm2733, %v4116, 0.0
        %4355 = vadd.xlane.f32.xlu0 %v4354
        %v4356 = vpop.xlane.xlu0 %4355
        %v4357 = vsel %vm2733, %v4118, 0.0
        %4358 = vadd.xlane.f32.xlu0 %v4357
        %v4359 = vpop.xlane.xlu0 %4358
        %v4360 = vsel %vm2733, %v4120, 0.0
        %4361 = vadd.xlane.f32.xlu0 %v4360
        %v4362 = vpop.xlane.xlu0 %4361
        %v4363 = vsel %vm2733, %v4122, 0.0
        %4364 = vadd.xlane.f32.xlu0 %v4363
        %v4365 = vpop.xlane.xlu0 %4364
        %v4366 = vsel %vm2733, %v4124, 0.0
        %4367 = vadd.xlane.f32.xlu0 %v4366
        %v4368 = vpop.xlane.xlu0 %4367
        %v4369 = vsel %vm2733, %v4126, 0.0
        %4370 = vadd.xlane.f32.xlu0 %v4369
        %v4371 = vpop.xlane.xlu0 %4370
        %v4372 = vsel %vm2733, %v4128, 0.0
        %4373 = vadd.xlane.f32.xlu0 %v4372
        %v4374 = vpop.xlane.xlu0 %4373
        %v4375 = vsel %vm2733, %v4130, 0.0
        %4376 = vadd.xlane.f32.xlu0 %v4375
        %v4377 = vpop.xlane.xlu0 %4376
        %v4378 = vsel %vm2733, %v4132, 0.0
        %4379 = vadd.xlane.f32.xlu0 %v4378
        %v4380 = vpop.xlane.xlu0 %4379
        %v4381 = vsel %vm2733, %v4134, 0.0
        %4382 = vadd.xlane.f32.xlu0 %v4381
        %v4383 = vpop.xlane.xlu0 %4382
        %v4384 = vsel %vm2733, %v4136, 0.0
        %4385 = vadd.xlane.f32.xlu0 %v4384
        %v4386 = vpop.xlane.xlu0 %4385
        %v4387 = vsel %vm2733, %v4138, 0.0
        %4388 = vadd.xlane.f32.xlu0 %v4387
        %v4389 = vpop.xlane.xlu0 %4388
        %v4390 = vsel %vm2733, %v4140, 0.0
        %4391 = vadd.xlane.f32.xlu0 %v4390
        %v4392 = vpop.xlane.xlu0 %4391
        %v4393 = vsel %vm2733, %v4142, 0.0
        %4394 = vadd.xlane.f32.xlu0 %v4393
        %v4395 = vpop.xlane.xlu0 %4394
        %v4396 = vsel %vm2733, %v4144, 0.0
        %4397 = vadd.xlane.f32.xlu0 %v4396
        %v4398 = vpop.xlane.xlu0 %4397
        %v4399 = vsel %vm2733, %v4146, 0.0
        %4400 = vadd.xlane.f32.xlu0 %v4399
        %v4401 = vpop.xlane.xlu0 %4400
        %v4402 = vsel %vm2733, %v4148, 0.0
        %4403 = vadd.xlane.f32.xlu0 %v4402
        %v4404 = vpop.xlane.xlu0 %4403
        %4405 = vrot.lane.b32.xlu0 %v3893, 122
        %v4406 = vpop.permute.xlu0 %4405
        %4407 = vrot.lane.b32.xlu0 %v3894, 122
        %v4408 = vpop.permute.xlu0 %4407
        %4409 = vrot.lane.b32.xlu0 %v3895, 122
        %v4410 = vpop.permute.xlu0 %4409
        %4411 = vrot.lane.b32.xlu0 %v3896, 122
        %v4412 = vpop.permute.xlu0 %4411
        %4413 = vrot.lane.b32.xlu0 %v3897, 122
        %v4414 = vpop.permute.xlu0 %4413
        %4415 = vrot.lane.b32.xlu0 %v3898, 122
        %v4416 = vpop.permute.xlu0 %4415
        %4417 = vrot.lane.b32.xlu0 %v3899, 122
        %v4418 = vpop.permute.xlu0 %4417
        %4419 = vrot.lane.b32.xlu0 %v3900, 122
        %v4420 = vpop.permute.xlu0 %4419
        %4421 = vrot.lane.b32.xlu0 %v3901, 122
        %v4422 = vpop.permute.xlu0 %4421
        %4423 = vrot.lane.b32.xlu0 %v3902, 122
        %v4424 = vpop.permute.xlu0 %4423
        %4425 = vrot.lane.b32.xlu0 %v3903, 122
        %v4426 = vpop.permute.xlu0 %4425
        %4427 = vrot.lane.b32.xlu0 %v3904, 122
        %v4428 = vpop.permute.xlu0 %4427
        %4429 = vrot.lane.b32.xlu0 %v3905, 122
        %v4430 = vpop.permute.xlu0 %4429
        %4431 = vrot.lane.b32.xlu0 %v3906, 122
        %v4432 = vpop.permute.xlu0 %4431
        %4433 = vrot.lane.b32.xlu0 %v3907, 122
        %v4434 = vpop.permute.xlu0 %4433
        %4435 = vrot.lane.b32.xlu0 %v3908, 122
        %v4436 = vpop.permute.xlu0 %4435
        %4437 = vrot.lane.b32.xlu0 %v3909, 122
        %v4438 = vpop.permute.xlu0 %4437
        %4439 = vrot.lane.b32.xlu0 %v3910, 122
        %v4440 = vpop.permute.xlu0 %4439
        %4441 = vrot.lane.b32.xlu0 %v3911, 122
        %v4442 = vpop.permute.xlu0 %4441
        %4443 = vrot.lane.b32.xlu0 %v3912, 122
        %v4444 = vpop.permute.xlu0 %4443
        %4445 = vrot.lane.b32.xlu0 %v3913, 122
        %v4446 = vpop.permute.xlu0 %4445
        %4447 = vrot.lane.b32.xlu0 %v3914, 122
        %v4448 = vpop.permute.xlu0 %4447
        %4449 = vrot.lane.b32.xlu0 %v3915, 122
        %v4450 = vpop.permute.xlu0 %4449
        %4451 = vrot.lane.b32.xlu0 %v3916, 122
        %v4452 = vpop.permute.xlu0 %4451
        %4453 = vrot.lane.b32.xlu0 %v3917, 122
        %v4454 = vpop.permute.xlu0 %4453
        %4455 = vrot.lane.b32.xlu0 %v3918, 122
        %v4456 = vpop.permute.xlu0 %4455
        %4457 = vrot.lane.b32.xlu0 %v3919, 122
        %v4458 = vpop.permute.xlu0 %4457
        %4459 = vrot.lane.b32.xlu0 %v3920, 122
        %v4460 = vpop.permute.xlu0 %4459
        %4461 = vrot.lane.b32.xlu0 %v3921, 122
        %v4462 = vpop.permute.xlu0 %4461
        %4463 = vrot.lane.b32.xlu0 %v3922, 122
        %v4464 = vpop.permute.xlu0 %4463
        %4465 = vrot.lane.b32.xlu0 %v3923, 122
        %v4466 = vpop.permute.xlu0 %4465
        %4467 = vrot.lane.b32.xlu0 %v3924, 122
        %v4468 = vpop.permute.xlu0 %4467
        %4469 = vrot.lane.b32.xlu0 %v3925, 122
        %v4470 = vpop.permute.xlu0 %4469
        %4471 = vrot.lane.b32.xlu0 %v3926, 122
        %v4472 = vpop.permute.xlu0 %4471
        %4473 = vrot.lane.b32.xlu0 %v3927, 122
        %v4474 = vpop.permute.xlu0 %4473
        %4475 = vrot.lane.b32.xlu0 %v3928, 122
        %v4476 = vpop.permute.xlu0 %4475
        %4477 = vrot.lane.b32.xlu0 %v3929, 122
        %v4478 = vpop.permute.xlu0 %4477
        %4479 = vrot.lane.b32.xlu0 %v3930, 122
        %v4480 = vpop.permute.xlu0 %4479
        %4481 = vrot.lane.b32.xlu0 %v3931, 122
        %v4482 = vpop.permute.xlu0 %4481
        %4483 = vrot.lane.b32.xlu0 %v3932, 122
        %v4484 = vpop.permute.xlu0 %4483
        %4485 = vrot.lane.b32.xlu0 %v3933, 122
        %v4486 = vpop.permute.xlu0 %4485
        %4487 = vrot.lane.b32.xlu0 %v3934, 122
        %v4488 = vpop.permute.xlu0 %4487
        %4489 = vrot.lane.b32.xlu0 %v3935, 122
        %v4490 = vpop.permute.xlu0 %4489
        %4491 = vrot.lane.b32.xlu0 %v3936, 122
        %v4492 = vpop.permute.xlu0 %4491
        %4493 = vrot.lane.b32.xlu0 %v3937, 122
        %v4494 = vpop.permute.xlu0 %4493
        %4495 = vrot.lane.b32.xlu0 %v3938, 122
        %v4496 = vpop.permute.xlu0 %4495
        %4497 = vrot.lane.b32.xlu0 %v3939, 122
        %v4498 = vpop.permute.xlu0 %4497
        %4499 = vrot.lane.b32.xlu0 %v3940, 122
        %v4500 = vpop.permute.xlu0 %4499
        %4501 = vrot.lane.b32.xlu0 %v3941, 122
        %v4502 = vpop.permute.xlu0 %4501
        %4503 = vrot.lane.b32.xlu0 %v3942, 122
        %v4504 = vpop.permute.xlu0 %4503
        %4505 = vrot.lane.b32.xlu0 %v3943, 122
        %v4506 = vpop.permute.xlu0 %4505
        %4507 = vrot.lane.b32.xlu0 %v3944, 122
        %v4508 = vpop.permute.xlu0 %4507
        %4509 = vrot.lane.b32.xlu0 %v3945, 122
        %v4510 = vpop.permute.xlu0 %4509
        %4511 = vrot.lane.b32.xlu0 %v3946, 122
        %v4512 = vpop.permute.xlu0 %4511
        %4513 = vrot.lane.b32.xlu0 %v3947, 122
        %v4514 = vpop.permute.xlu0 %4513
        %4515 = vrot.lane.b32.xlu0 %v3948, 122
        %v4516 = vpop.permute.xlu0 %4515
        %4517 = vrot.lane.b32.xlu0 %v3949, 122
        %v4518 = vpop.permute.xlu0 %4517
        %4519 = vrot.lane.b32.xlu0 %v3950, 122
        %v4520 = vpop.permute.xlu0 %4519
        %4521 = vrot.lane.b32.xlu0 %v3951, 122
        %v4522 = vpop.permute.xlu0 %4521
        %4523 = vrot.lane.b32.xlu0 %v3952, 122
        %v4524 = vpop.permute.xlu0 %4523
        %4525 = vrot.lane.b32.xlu0 %v3953, 122
        %v4526 = vpop.permute.xlu0 %4525
        %4527 = vrot.lane.b32.xlu0 %v3954, 122
        %v4528 = vpop.permute.xlu0 %4527
        %4529 = vrot.lane.b32.xlu0 %v3955, 122
        %v4530 = vpop.permute.xlu0 %4529
        %4531 = vrot.lane.b32.xlu0 %v3956, 122
        %v4532 = vpop.permute.xlu0 %4531
        %v4597 = vsel %vm2733, %v4406, 0.0
        %4598 = vadd.xlane.f32.xlu0 %v4597
        %v4599 = vpop.xlane.xlu0 %4598
        %v4600 = vsel %vm2733, %v4408, 0.0
        %4601 = vadd.xlane.f32.xlu0 %v4600
        %v4602 = vpop.xlane.xlu0 %4601
        %v4603 = vsel %vm2733, %v4410, 0.0
        %4604 = vadd.xlane.f32.xlu0 %v4603
        %v4605 = vpop.xlane.xlu0 %4604
        %v4606 = vsel %vm2733, %v4412, 0.0
        %4607 = vadd.xlane.f32.xlu0 %v4606
        %v4608 = vpop.xlane.xlu0 %4607
        %v4609 = vsel %vm2733, %v4414, 0.0
        %4610 = vadd.xlane.f32.xlu0 %v4609
        %v4611 = vpop.xlane.xlu0 %4610
        %v4612 = vsel %vm2733, %v4416, 0.0
        %4613 = vadd.xlane.f32.xlu0 %v4612
        %v4614 = vpop.xlane.xlu0 %4613
        %v4615 = vsel %vm2733, %v4418, 0.0
        %4616 = vadd.xlane.f32.xlu0 %v4615
        %v4617 = vpop.xlane.xlu0 %4616
        %v4618 = vsel %vm2733, %v4420, 0.0
        %4619 = vadd.xlane.f32.xlu0 %v4618
        %v4620 = vpop.xlane.xlu0 %4619
        %v4621 = vsel %vm2733, %v4422, 0.0
        %4622 = vadd.xlane.f32.xlu0 %v4621
        %v4623 = vpop.xlane.xlu0 %4622
        %v4624 = vsel %vm2733, %v4424, 0.0
        %4625 = vadd.xlane.f32.xlu0 %v4624
        %v4626 = vpop.xlane.xlu0 %4625
        %v4627 = vsel %vm2733, %v4426, 0.0
        %4628 = vadd.xlane.f32.xlu0 %v4627
        %v4629 = vpop.xlane.xlu0 %4628
        %v4630 = vsel %vm2733, %v4428, 0.0
        %4631 = vadd.xlane.f32.xlu0 %v4630
        %v4632 = vpop.xlane.xlu0 %4631
        %v4633 = vsel %vm2733, %v4430, 0.0
        %4634 = vadd.xlane.f32.xlu0 %v4633
        %v4635 = vpop.xlane.xlu0 %4634
        %v4636 = vsel %vm2733, %v4432, 0.0
        %4637 = vadd.xlane.f32.xlu0 %v4636
        %v4638 = vpop.xlane.xlu0 %4637
        %v4639 = vsel %vm2733, %v4434, 0.0
        %4640 = vadd.xlane.f32.xlu0 %v4639
        %v4641 = vpop.xlane.xlu0 %4640
        %v4642 = vsel %vm2733, %v4436, 0.0
        %4643 = vadd.xlane.f32.xlu0 %v4642
        %v4644 = vpop.xlane.xlu0 %4643
        %v4645 = vsel %vm2733, %v4438, 0.0
        %4646 = vadd.xlane.f32.xlu0 %v4645
        %v4647 = vpop.xlane.xlu0 %4646
        %v4648 = vsel %vm2733, %v4440, 0.0
        %4649 = vadd.xlane.f32.xlu0 %v4648
        %v4650 = vpop.xlane.xlu0 %4649
        %v4651 = vsel %vm2733, %v4442, 0.0
        %4652 = vadd.xlane.f32.xlu0 %v4651
        %v4653 = vpop.xlane.xlu0 %4652
        %v4654 = vsel %vm2733, %v4444, 0.0
        %4655 = vadd.xlane.f32.xlu0 %v4654
        %v4656 = vpop.xlane.xlu0 %4655
        %v4657 = vsel %vm2733, %v4446, 0.0
        %4658 = vadd.xlane.f32.xlu0 %v4657
        %v4659 = vpop.xlane.xlu0 %4658
        %v4660 = vsel %vm2733, %v4448, 0.0
        %4661 = vadd.xlane.f32.xlu0 %v4660
        %v4662 = vpop.xlane.xlu0 %4661
        %v4663 = vsel %vm2733, %v4450, 0.0
        %4664 = vadd.xlane.f32.xlu0 %v4663
        %v4665 = vpop.xlane.xlu0 %4664
        %v4666 = vsel %vm2733, %v4452, 0.0
        %4667 = vadd.xlane.f32.xlu0 %v4666
        %v4668 = vpop.xlane.xlu0 %4667
        %v4669 = vsel %vm2733, %v4454, 0.0
        %4670 = vadd.xlane.f32.xlu0 %v4669
        %v4671 = vpop.xlane.xlu0 %4670
        %v4672 = vsel %vm2733, %v4456, 0.0
        %4673 = vadd.xlane.f32.xlu0 %v4672
        %v4674 = vpop.xlane.xlu0 %4673
        %v4675 = vsel %vm2733, %v4458, 0.0
        %4676 = vadd.xlane.f32.xlu0 %v4675
        %v4677 = vpop.xlane.xlu0 %4676
        %v4678 = vsel %vm2733, %v4460, 0.0
        %4679 = vadd.xlane.f32.xlu0 %v4678
        %v4680 = vpop.xlane.xlu0 %4679
        %v4681 = vsel %vm2733, %v4462, 0.0
        %4682 = vadd.xlane.f32.xlu0 %v4681
        %v4683 = vpop.xlane.xlu0 %4682
        %v4684 = vsel %vm2733, %v4464, 0.0
        %4685 = vadd.xlane.f32.xlu0 %v4684
        %v4686 = vpop.xlane.xlu0 %4685
        %v4687 = vsel %vm2733, %v4466, 0.0
        %4688 = vadd.xlane.f32.xlu0 %v4687
        %v4689 = vpop.xlane.xlu0 %4688
        %v4690 = vsel %vm2733, %v4468, 0.0
        %4691 = vadd.xlane.f32.xlu0 %v4690
        %v4692 = vpop.xlane.xlu0 %4691
        %v4693 = vsel %vm2733, %v4470, 0.0
        %4694 = vadd.xlane.f32.xlu0 %v4693
        %v4695 = vpop.xlane.xlu0 %4694
        %v4696 = vsel %vm2733, %v4472, 0.0
        %4697 = vadd.xlane.f32.xlu0 %v4696
        %v4698 = vpop.xlane.xlu0 %4697
        %v4699 = vsel %vm2733, %v4474, 0.0
        %4700 = vadd.xlane.f32.xlu0 %v4699
        %v4701 = vpop.xlane.xlu0 %4700
        %v4702 = vsel %vm2733, %v4476, 0.0
        %4703 = vadd.xlane.f32.xlu0 %v4702
        %v4704 = vpop.xlane.xlu0 %4703
        %v4705 = vsel %vm2733, %v4478, 0.0
        %4706 = vadd.xlane.f32.xlu0 %v4705
        %v4707 = vpop.xlane.xlu0 %4706
        %v4708 = vsel %vm2733, %v4480, 0.0
        %4709 = vadd.xlane.f32.xlu0 %v4708
        %v4710 = vpop.xlane.xlu0 %4709
        %v4711 = vsel %vm2733, %v4482, 0.0
        %4712 = vadd.xlane.f32.xlu0 %v4711
        %v4713 = vpop.xlane.xlu0 %4712
        %v4714 = vsel %vm2733, %v4484, 0.0
        %4715 = vadd.xlane.f32.xlu0 %v4714
        %v4716 = vpop.xlane.xlu0 %4715
        %v4717 = vsel %vm2733, %v4486, 0.0
        %4718 = vadd.xlane.f32.xlu0 %v4717
        %v4719 = vpop.xlane.xlu0 %4718
        %v4720 = vsel %vm2733, %v4488, 0.0
        %4721 = vadd.xlane.f32.xlu0 %v4720
        %v4722 = vpop.xlane.xlu0 %4721
        %v4723 = vsel %vm2733, %v4490, 0.0
        %4724 = vadd.xlane.f32.xlu0 %v4723
        %v4725 = vpop.xlane.xlu0 %4724
        %v4726 = vsel %vm2733, %v4492, 0.0
        %4727 = vadd.xlane.f32.xlu0 %v4726
        %v4728 = vpop.xlane.xlu0 %4727
        %v4729 = vsel %vm2733, %v4494, 0.0
        %4730 = vadd.xlane.f32.xlu0 %v4729
        %v4731 = vpop.xlane.xlu0 %4730
        %v4732 = vsel %vm2733, %v4496, 0.0
        %4733 = vadd.xlane.f32.xlu0 %v4732
        %v4734 = vpop.xlane.xlu0 %4733
        %v4735 = vsel %vm2733, %v4498, 0.0
        %4736 = vadd.xlane.f32.xlu0 %v4735
        %v4737 = vpop.xlane.xlu0 %4736
        %v4738 = vsel %vm2733, %v4500, 0.0
        %4739 = vadd.xlane.f32.xlu0 %v4738
        %v4740 = vpop.xlane.xlu0 %4739
        %v4741 = vsel %vm2733, %v4502, 0.0
        %4742 = vadd.xlane.f32.xlu0 %v4741
        %v4743 = vpop.xlane.xlu0 %4742
        %v4744 = vsel %vm2733, %v4504, 0.0
        %4745 = vadd.xlane.f32.xlu0 %v4744
        %v4746 = vpop.xlane.xlu0 %4745
        %v4747 = vsel %vm2733, %v4506, 0.0
        %4748 = vadd.xlane.f32.xlu0 %v4747
        %v4749 = vpop.xlane.xlu0 %4748
        %v4750 = vsel %vm2733, %v4508, 0.0
        %4751 = vadd.xlane.f32.xlu0 %v4750
        %v4752 = vpop.xlane.xlu0 %4751
        %v4753 = vsel %vm2733, %v4510, 0.0
        %4754 = vadd.xlane.f32.xlu0 %v4753
        %v4755 = vpop.xlane.xlu0 %4754
        %v4756 = vsel %vm2733, %v4512, 0.0
        %4757 = vadd.xlane.f32.xlu0 %v4756
        %v4758 = vpop.xlane.xlu0 %4757
        %v4759 = vsel %vm2733, %v4514, 0.0
        %4760 = vadd.xlane.f32.xlu0 %v4759
        %v4761 = vpop.xlane.xlu0 %4760
        %v4762 = vsel %vm2733, %v4516, 0.0
        %4763 = vadd.xlane.f32.xlu0 %v4762
        %v4764 = vpop.xlane.xlu0 %4763
        %v4765 = vsel %vm2733, %v4518, 0.0
        %4766 = vadd.xlane.f32.xlu0 %v4765
        %v4767 = vpop.xlane.xlu0 %4766
        %v4768 = vsel %vm2733, %v4520, 0.0
        %4769 = vadd.xlane.f32.xlu0 %v4768
        %v4770 = vpop.xlane.xlu0 %4769
        %v4771 = vsel %vm2733, %v4522, 0.0
        %4772 = vadd.xlane.f32.xlu0 %v4771
        %v4773 = vpop.xlane.xlu0 %4772
        %v4774 = vsel %vm2733, %v4524, 0.0
        %4775 = vadd.xlane.f32.xlu0 %v4774
        %v4776 = vpop.xlane.xlu0 %4775
        %v4777 = vsel %vm2733, %v4526, 0.0
        %4778 = vadd.xlane.f32.xlu0 %v4777
        %v4779 = vpop.xlane.xlu0 %4778
        %v4780 = vsel %vm2733, %v4528, 0.0
        %4781 = vadd.xlane.f32.xlu0 %v4780
        %v4782 = vpop.xlane.xlu0 %4781
        %v4783 = vsel %vm2733, %v4530, 0.0
        %4784 = vadd.xlane.f32.xlu0 %v4783
        %v4785 = vpop.xlane.xlu0 %4784
        %v4786 = vsel %vm2733, %v4532, 0.0
        %4787 = vadd.xlane.f32.xlu0 %v4786
        %v4788 = vpop.xlane.xlu0 %4787
        %4789 = vrot.lane.b32.xlu0 %v3893, 119
        %v4790 = vpop.permute.xlu0 %4789
        %4791 = vrot.lane.b32.xlu0 %v3894, 119
        %v4792 = vpop.permute.xlu0 %4791
        %4793 = vrot.lane.b32.xlu0 %v3895, 119
        %v4794 = vpop.permute.xlu0 %4793
        %4795 = vrot.lane.b32.xlu0 %v3896, 119
        %v4796 = vpop.permute.xlu0 %4795
        %4797 = vrot.lane.b32.xlu0 %v3897, 119
        %v4798 = vpop.permute.xlu0 %4797
        %4799 = vrot.lane.b32.xlu0 %v3898, 119
        %v4800 = vpop.permute.xlu0 %4799
        %4801 = vrot.lane.b32.xlu0 %v3899, 119
        %v4802 = vpop.permute.xlu0 %4801
        %4803 = vrot.lane.b32.xlu0 %v3900, 119
        %v4804 = vpop.permute.xlu0 %4803
        %4805 = vrot.lane.b32.xlu0 %v3901, 119
        %v4806 = vpop.permute.xlu0 %4805
        %4807 = vrot.lane.b32.xlu0 %v3902, 119
        %v4808 = vpop.permute.xlu0 %4807
        %4809 = vrot.lane.b32.xlu0 %v3903, 119
        %v4810 = vpop.permute.xlu0 %4809
        %4811 = vrot.lane.b32.xlu0 %v3904, 119
        %v4812 = vpop.permute.xlu0 %4811
        %4813 = vrot.lane.b32.xlu0 %v3905, 119
        %v4814 = vpop.permute.xlu0 %4813
        %4815 = vrot.lane.b32.xlu0 %v3906, 119
        %v4816 = vpop.permute.xlu0 %4815
        %4817 = vrot.lane.b32.xlu0 %v3907, 119
        %v4818 = vpop.permute.xlu0 %4817
        %4819 = vrot.lane.b32.xlu0 %v3908, 119
        %v4820 = vpop.permute.xlu0 %4819
        %4821 = vrot.lane.b32.xlu0 %v3909, 119
        %v4822 = vpop.permute.xlu0 %4821
        %4823 = vrot.lane.b32.xlu0 %v3910, 119
        %v4824 = vpop.permute.xlu0 %4823
        %4825 = vrot.lane.b32.xlu0 %v3911, 119
        %v4826 = vpop.permute.xlu0 %4825
        %4827 = vrot.lane.b32.xlu0 %v3912, 119
        %v4828 = vpop.permute.xlu0 %4827
        %4829 = vrot.lane.b32.xlu0 %v3913, 119
        %v4830 = vpop.permute.xlu0 %4829
        %4831 = vrot.lane.b32.xlu0 %v3914, 119
        %v4832 = vpop.permute.xlu0 %4831
        %4833 = vrot.lane.b32.xlu0 %v3915, 119
        %v4834 = vpop.permute.xlu0 %4833
        %4835 = vrot.lane.b32.xlu0 %v3916, 119
        %v4836 = vpop.permute.xlu0 %4835
        %4837 = vrot.lane.b32.xlu0 %v3917, 119
        %v4838 = vpop.permute.xlu0 %4837
        %4839 = vrot.lane.b32.xlu0 %v3918, 119
        %v4840 = vpop.permute.xlu0 %4839
        %4841 = vrot.lane.b32.xlu0 %v3919, 119
        %v4842 = vpop.permute.xlu0 %4841
        %4843 = vrot.lane.b32.xlu0 %v3920, 119
        %v4844 = vpop.permute.xlu0 %4843
        %4845 = vrot.lane.b32.xlu0 %v3921, 119
        %v4846 = vpop.permute.xlu0 %4845
        %4847 = vrot.lane.b32.xlu0 %v3922, 119
        %v4848 = vpop.permute.xlu0 %4847
        %4849 = vrot.lane.b32.xlu0 %v3923, 119
        %v4850 = vpop.permute.xlu0 %4849
        %4851 = vrot.lane.b32.xlu0 %v3924, 119
        %v4852 = vpop.permute.xlu0 %4851
        %4853 = vrot.lane.b32.xlu0 %v3925, 119
        %v4854 = vpop.permute.xlu0 %4853
        %4855 = vrot.lane.b32.xlu0 %v3926, 119
        %v4856 = vpop.permute.xlu0 %4855
        %4857 = vrot.lane.b32.xlu0 %v3927, 119
        %v4858 = vpop.permute.xlu0 %4857
        %4859 = vrot.lane.b32.xlu0 %v3928, 119
        %v4860 = vpop.permute.xlu0 %4859
        %4861 = vrot.lane.b32.xlu0 %v3929, 119
        %v4862 = vpop.permute.xlu0 %4861
        %4863 = vrot.lane.b32.xlu0 %v3930, 119
        %v4864 = vpop.permute.xlu0 %4863
        %4865 = vrot.lane.b32.xlu0 %v3931, 119
        %v4866 = vpop.permute.xlu0 %4865
        %4867 = vrot.lane.b32.xlu0 %v3932, 119
        %v4868 = vpop.permute.xlu0 %4867
        %4869 = vrot.lane.b32.xlu0 %v3933, 119
        %v4870 = vpop.permute.xlu0 %4869
        %4871 = vrot.lane.b32.xlu0 %v3934, 119
        %v4872 = vpop.permute.xlu0 %4871
        %4873 = vrot.lane.b32.xlu0 %v3935, 119
        %v4874 = vpop.permute.xlu0 %4873
        %4875 = vrot.lane.b32.xlu0 %v3936, 119
        %v4876 = vpop.permute.xlu0 %4875
        %4877 = vrot.lane.b32.xlu0 %v3937, 119
        %v4878 = vpop.permute.xlu0 %4877
        %4879 = vrot.lane.b32.xlu0 %v3938, 119
        %v4880 = vpop.permute.xlu0 %4879
        %4881 = vrot.lane.b32.xlu0 %v3939, 119
        %v4882 = vpop.permute.xlu0 %4881
        %4883 = vrot.lane.b32.xlu0 %v3940, 119
        %v4884 = vpop.permute.xlu0 %4883
        %4885 = vrot.lane.b32.xlu0 %v3941, 119
        %v4886 = vpop.permute.xlu0 %4885
        %4887 = vrot.lane.b32.xlu0 %v3942, 119
        %v4888 = vpop.permute.xlu0 %4887
        %4889 = vrot.lane.b32.xlu0 %v3943, 119
        %v4890 = vpop.permute.xlu0 %4889
        %4891 = vrot.lane.b32.xlu0 %v3944, 119
        %v4892 = vpop.permute.xlu0 %4891
        %4893 = vrot.lane.b32.xlu0 %v3945, 119
        %v4894 = vpop.permute.xlu0 %4893
        %4895 = vrot.lane.b32.xlu0 %v3946, 119
        %v4896 = vpop.permute.xlu0 %4895
        %4897 = vrot.lane.b32.xlu0 %v3947, 119
        %v4898 = vpop.permute.xlu0 %4897
        %4899 = vrot.lane.b32.xlu0 %v3948, 119
        %v4900 = vpop.permute.xlu0 %4899
        %4901 = vrot.lane.b32.xlu0 %v3949, 119
        %v4902 = vpop.permute.xlu0 %4901
        %4903 = vrot.lane.b32.xlu0 %v3950, 119
        %v4904 = vpop.permute.xlu0 %4903
        %4905 = vrot.lane.b32.xlu0 %v3951, 119
        %v4906 = vpop.permute.xlu0 %4905
        %4907 = vrot.lane.b32.xlu0 %v3952, 119
        %v4908 = vpop.permute.xlu0 %4907
        %4909 = vrot.lane.b32.xlu0 %v3953, 119
        %v4910 = vpop.permute.xlu0 %4909
        %4911 = vrot.lane.b32.xlu0 %v3954, 119
        %v4912 = vpop.permute.xlu0 %4911
        %4913 = vrot.lane.b32.xlu0 %v3955, 119
        %v4914 = vpop.permute.xlu0 %4913
        %4915 = vrot.lane.b32.xlu0 %v3956, 119
        %v4916 = vpop.permute.xlu0 %4915
        %v4981 = vsel %vm2733, %v4790, 0.0
        %4982 = vadd.xlane.f32.xlu0 %v4981
        %v4983 = vpop.xlane.xlu0 %4982
        %v4984 = vsel %vm2733, %v4792, 0.0
        %4985 = vadd.xlane.f32.xlu0 %v4984
        %v4986 = vpop.xlane.xlu0 %4985
        %v4987 = vsel %vm2733, %v4794, 0.0
        %4988 = vadd.xlane.f32.xlu0 %v4987
        %v4989 = vpop.xlane.xlu0 %4988
        %v4990 = vsel %vm2733, %v4796, 0.0
        %4991 = vadd.xlane.f32.xlu0 %v4990
        %v4992 = vpop.xlane.xlu0 %4991
        %v4993 = vsel %vm2733, %v4798, 0.0
        %4994 = vadd.xlane.f32.xlu0 %v4993
        %v4995 = vpop.xlane.xlu0 %4994
        %v4996 = vsel %vm2733, %v4800, 0.0
        %4997 = vadd.xlane.f32.xlu0 %v4996
        %v4998 = vpop.xlane.xlu0 %4997
        %v4999 = vsel %vm2733, %v4802, 0.0
        %5000 = vadd.xlane.f32.xlu0 %v4999
        %v5001 = vpop.xlane.xlu0 %5000
        %v5002 = vsel %vm2733, %v4804, 0.0
        %5003 = vadd.xlane.f32.xlu0 %v5002
        %v5004 = vpop.xlane.xlu0 %5003
        %v5005 = vsel %vm2733, %v4806, 0.0
        %5006 = vadd.xlane.f32.xlu0 %v5005
        %v5007 = vpop.xlane.xlu0 %5006
        %v5008 = vsel %vm2733, %v4808, 0.0
        %5009 = vadd.xlane.f32.xlu0 %v5008
        %v5010 = vpop.xlane.xlu0 %5009
        %v5011 = vsel %vm2733, %v4810, 0.0
        %5012 = vadd.xlane.f32.xlu0 %v5011
        %v5013 = vpop.xlane.xlu0 %5012
        %v5014 = vsel %vm2733, %v4812, 0.0
        %5015 = vadd.xlane.f32.xlu0 %v5014
        %v5016 = vpop.xlane.xlu0 %5015
        %v5017 = vsel %vm2733, %v4814, 0.0
        %5018 = vadd.xlane.f32.xlu0 %v5017
        %v5019 = vpop.xlane.xlu0 %5018
        %v5020 = vsel %vm2733, %v4816, 0.0
        %5021 = vadd.xlane.f32.xlu0 %v5020
        %v5022 = vpop.xlane.xlu0 %5021
        %v5023 = vsel %vm2733, %v4818, 0.0
        %5024 = vadd.xlane.f32.xlu0 %v5023
        %v5025 = vpop.xlane.xlu0 %5024
        %v5026 = vsel %vm2733, %v4820, 0.0
        %5027 = vadd.xlane.f32.xlu0 %v5026
        %v5028 = vpop.xlane.xlu0 %5027
        %v5029 = vsel %vm2733, %v4822, 0.0
        %5030 = vadd.xlane.f32.xlu0 %v5029
        %v5031 = vpop.xlane.xlu0 %5030
        %v5032 = vsel %vm2733, %v4824, 0.0
        %5033 = vadd.xlane.f32.xlu0 %v5032
        %v5034 = vpop.xlane.xlu0 %5033
        %v5035 = vsel %vm2733, %v4826, 0.0
        %5036 = vadd.xlane.f32.xlu0 %v5035
        %v5037 = vpop.xlane.xlu0 %5036
        %v5038 = vsel %vm2733, %v4828, 0.0
        %5039 = vadd.xlane.f32.xlu0 %v5038
        %v5040 = vpop.xlane.xlu0 %5039
        %v5041 = vsel %vm2733, %v4830, 0.0
        %5042 = vadd.xlane.f32.xlu0 %v5041
        %v5043 = vpop.xlane.xlu0 %5042
        %v5044 = vsel %vm2733, %v4832, 0.0
        %5045 = vadd.xlane.f32.xlu0 %v5044
        %v5046 = vpop.xlane.xlu0 %5045
        %v5047 = vsel %vm2733, %v4834, 0.0
        %5048 = vadd.xlane.f32.xlu0 %v5047
        %v5049 = vpop.xlane.xlu0 %5048
        %v5050 = vsel %vm2733, %v4836, 0.0
        %5051 = vadd.xlane.f32.xlu0 %v5050
        %v5052 = vpop.xlane.xlu0 %5051
        %v5053 = vsel %vm2733, %v4838, 0.0
        %5054 = vadd.xlane.f32.xlu0 %v5053
        %v5055 = vpop.xlane.xlu0 %5054
        %v5056 = vsel %vm2733, %v4840, 0.0
        %5057 = vadd.xlane.f32.xlu0 %v5056
        %v5058 = vpop.xlane.xlu0 %5057
        %v5059 = vsel %vm2733, %v4842, 0.0
        %5060 = vadd.xlane.f32.xlu0 %v5059
        %v5061 = vpop.xlane.xlu0 %5060
        %v5062 = vsel %vm2733, %v4844, 0.0
        %5063 = vadd.xlane.f32.xlu0 %v5062
        %v5064 = vpop.xlane.xlu0 %5063
        %v5065 = vsel %vm2733, %v4846, 0.0
        %5066 = vadd.xlane.f32.xlu0 %v5065
        %v5067 = vpop.xlane.xlu0 %5066
        %v5068 = vsel %vm2733, %v4848, 0.0
        %5069 = vadd.xlane.f32.xlu0 %v5068
        %v5070 = vpop.xlane.xlu0 %5069
        %v5071 = vsel %vm2733, %v4850, 0.0
        %5072 = vadd.xlane.f32.xlu0 %v5071
        %v5073 = vpop.xlane.xlu0 %5072
        %v5074 = vsel %vm2733, %v4852, 0.0
        %5075 = vadd.xlane.f32.xlu0 %v5074
        %v5076 = vpop.xlane.xlu0 %5075
        %v5077 = vsel %vm2733, %v4854, 0.0
        %5078 = vadd.xlane.f32.xlu0 %v5077
        %v5079 = vpop.xlane.xlu0 %5078
        %v5080 = vsel %vm2733, %v4856, 0.0
        %5081 = vadd.xlane.f32.xlu0 %v5080
        %v5082 = vpop.xlane.xlu0 %5081
        %v5083 = vsel %vm2733, %v4858, 0.0
        %5084 = vadd.xlane.f32.xlu0 %v5083
        %v5085 = vpop.xlane.xlu0 %5084
        %v5086 = vsel %vm2733, %v4860, 0.0
        %5087 = vadd.xlane.f32.xlu0 %v5086
        %v5088 = vpop.xlane.xlu0 %5087
        %v5089 = vsel %vm2733, %v4862, 0.0
        %5090 = vadd.xlane.f32.xlu0 %v5089
        %v5091 = vpop.xlane.xlu0 %5090
        %v5092 = vsel %vm2733, %v4864, 0.0
        %5093 = vadd.xlane.f32.xlu0 %v5092
        %v5094 = vpop.xlane.xlu0 %5093
        %v5095 = vsel %vm2733, %v4866, 0.0
        %5096 = vadd.xlane.f32.xlu0 %v5095
        %v5097 = vpop.xlane.xlu0 %5096
        %v5098 = vsel %vm2733, %v4868, 0.0
        %5099 = vadd.xlane.f32.xlu0 %v5098
        %v5100 = vpop.xlane.xlu0 %5099
        %v5101 = vsel %vm2733, %v4870, 0.0
        %5102 = vadd.xlane.f32.xlu0 %v5101
        %v5103 = vpop.xlane.xlu0 %5102
        %v5104 = vsel %vm2733, %v4872, 0.0
        %5105 = vadd.xlane.f32.xlu0 %v5104
        %v5106 = vpop.xlane.xlu0 %5105
        %v5107 = vsel %vm2733, %v4874, 0.0
        %5108 = vadd.xlane.f32.xlu0 %v5107
        %v5109 = vpop.xlane.xlu0 %5108
        %v5110 = vsel %vm2733, %v4876, 0.0
        %5111 = vadd.xlane.f32.xlu0 %v5110
        %v5112 = vpop.xlane.xlu0 %5111
        %v5113 = vsel %vm2733, %v4878, 0.0
        %5114 = vadd.xlane.f32.xlu0 %v5113
        %v5115 = vpop.xlane.xlu0 %5114
        %v5116 = vsel %vm2733, %v4880, 0.0
        %5117 = vadd.xlane.f32.xlu0 %v5116
        %v5118 = vpop.xlane.xlu0 %5117
        %v5119 = vsel %vm2733, %v4882, 0.0
        %5120 = vadd.xlane.f32.xlu0 %v5119
        %v5121 = vpop.xlane.xlu0 %5120
        %v5122 = vsel %vm2733, %v4884, 0.0
        %5123 = vadd.xlane.f32.xlu0 %v5122
        %v5124 = vpop.xlane.xlu0 %5123
        %v5125 = vsel %vm2733, %v4886, 0.0
        %5126 = vadd.xlane.f32.xlu0 %v5125
        %v5127 = vpop.xlane.xlu0 %5126
        %v5128 = vsel %vm2733, %v4888, 0.0
        %5129 = vadd.xlane.f32.xlu0 %v5128
        %v5130 = vpop.xlane.xlu0 %5129
        %v5131 = vsel %vm2733, %v4890, 0.0
        %5132 = vadd.xlane.f32.xlu0 %v5131
        %v5133 = vpop.xlane.xlu0 %5132
        %v5134 = vsel %vm2733, %v4892, 0.0
        %5135 = vadd.xlane.f32.xlu0 %v5134
        %v5136 = vpop.xlane.xlu0 %5135
        %v5137 = vsel %vm2733, %v4894, 0.0
        %5138 = vadd.xlane.f32.xlu0 %v5137
        %v5139 = vpop.xlane.xlu0 %5138
        %v5140 = vsel %vm2733, %v4896, 0.0
        %5141 = vadd.xlane.f32.xlu0 %v5140
        %v5142 = vpop.xlane.xlu0 %5141
        %v5143 = vsel %vm2733, %v4898, 0.0
        %5144 = vadd.xlane.f32.xlu0 %v5143
        %v5145 = vpop.xlane.xlu0 %5144
        %v5146 = vsel %vm2733, %v4900, 0.0
        %5147 = vadd.xlane.f32.xlu0 %v5146
        %v5148 = vpop.xlane.xlu0 %5147
        %v5149 = vsel %vm2733, %v4902, 0.0
        %5150 = vadd.xlane.f32.xlu0 %v5149
        %v5151 = vpop.xlane.xlu0 %5150
        %v5152 = vsel %vm2733, %v4904, 0.0
        %5153 = vadd.xlane.f32.xlu0 %v5152
        %v5154 = vpop.xlane.xlu0 %5153
        %v5155 = vsel %vm2733, %v4906, 0.0
        %5156 = vadd.xlane.f32.xlu0 %v5155
        %v5157 = vpop.xlane.xlu0 %5156
        %v5158 = vsel %vm2733, %v4908, 0.0
        %5159 = vadd.xlane.f32.xlu0 %v5158
        %v5160 = vpop.xlane.xlu0 %5159
        %v5161 = vsel %vm2733, %v4910, 0.0
        %5162 = vadd.xlane.f32.xlu0 %v5161
        %v5163 = vpop.xlane.xlu0 %5162
        %v5164 = vsel %vm2733, %v4912, 0.0
        %5165 = vadd.xlane.f32.xlu0 %v5164
        %v5166 = vpop.xlane.xlu0 %5165
        %v5167 = vsel %vm2733, %v4914, 0.0
        %5168 = vadd.xlane.f32.xlu0 %v5167
        %v5169 = vpop.xlane.xlu0 %5168
        %v5170 = vsel %vm2733, %v4916, 0.0
        %5171 = vadd.xlane.f32.xlu0 %v5170
        %v5172 = vpop.xlane.xlu0 %5171
        %vm5173 = vcmask 7168
        %v5174 = vsel %vm5173, %v4215, %v4599
        %v5175 = vsel %vm5173, %v4218, %v4602
        %v5176 = vsel %vm5173, %v4221, %v4605
        %v5177 = vsel %vm5173, %v4224, %v4608
        %v5178 = vsel %vm5173, %v4227, %v4611
        %v5179 = vsel %vm5173, %v4230, %v4614
        %v5180 = vsel %vm5173, %v4233, %v4617
        %v5181 = vsel %vm5173, %v4236, %v4620
        %v5182 = vsel %vm5173, %v4239, %v4623
        %v5183 = vsel %vm5173, %v4242, %v4626
        %v5184 = vsel %vm5173, %v4245, %v4629
        %v5185 = vsel %vm5173, %v4248, %v4632
        %v5186 = vsel %vm5173, %v4251, %v4635
        %v5187 = vsel %vm5173, %v4254, %v4638
        %v5188 = vsel %vm5173, %v4257, %v4641
        %v5189 = vsel %vm5173, %v4260, %v4644
        %v5190 = vsel %vm5173, %v4263, %v4647
        %v5191 = vsel %vm5173, %v4266, %v4650
        %v5192 = vsel %vm5173, %v4269, %v4653
        %v5193 = vsel %vm5173, %v4272, %v4656
        %v5194 = vsel %vm5173, %v4275, %v4659
        %v5195 = vsel %vm5173, %v4278, %v4662
        %v5196 = vsel %vm5173, %v4281, %v4665
        %v5197 = vsel %vm5173, %v4284, %v4668
        %v5198 = vsel %vm5173, %v4287, %v4671
        %v5199 = vsel %vm5173, %v4290, %v4674
        %v5200 = vsel %vm5173, %v4293, %v4677
        %v5201 = vsel %vm5173, %v4296, %v4680
        %v5202 = vsel %vm5173, %v4299, %v4683
        %v5203 = vsel %vm5173, %v4302, %v4686
        %v5204 = vsel %vm5173, %v4305, %v4689
        %v5205 = vsel %vm5173, %v4308, %v4692
        %v5206 = vsel %vm5173, %v4311, %v4695
        %v5207 = vsel %vm5173, %v4314, %v4698
        %v5208 = vsel %vm5173, %v4317, %v4701
        %v5209 = vsel %vm5173, %v4320, %v4704
        %v5210 = vsel %vm5173, %v4323, %v4707
        %v5211 = vsel %vm5173, %v4326, %v4710
        %v5212 = vsel %vm5173, %v4329, %v4713
        %v5213 = vsel %vm5173, %v4332, %v4716
        %v5214 = vsel %vm5173, %v4335, %v4719
        %v5215 = vsel %vm5173, %v4338, %v4722
        %v5216 = vsel %vm5173, %v4341, %v4725
        %v5217 = vsel %vm5173, %v4344, %v4728
        %v5218 = vsel %vm5173, %v4347, %v4731
        %v5219 = vsel %vm5173, %v4350, %v4734
        %v5220 = vsel %vm5173, %v4353, %v4737
        %v5221 = vsel %vm5173, %v4356, %v4740
        %v5222 = vsel %vm5173, %v4359, %v4743
        %v5223 = vsel %vm5173, %v4362, %v4746
        %v5224 = vsel %vm5173, %v4365, %v4749
        %v5225 = vsel %vm5173, %v4368, %v4752
        %v5226 = vsel %vm5173, %v4371, %v4755
        %v5227 = vsel %vm5173, %v4374, %v4758
        %v5228 = vsel %vm5173, %v4377, %v4761
        %v5229 = vsel %vm5173, %v4380, %v4764
        %v5230 = vsel %vm5173, %v4383, %v4767
        %v5231 = vsel %vm5173, %v4386, %v4770
        %v5232 = vsel %vm5173, %v4389, %v4773
        %v5233 = vsel %vm5173, %v4392, %v4776
        %v5234 = vsel %vm5173, %v4395, %v4779
        %v5235 = vsel %vm5173, %v4398, %v4782
        %v5236 = vsel %vm5173, %v4401, %v4785
        %v5237 = vsel %vm5173, %v4404, %v4788
        %vm5238 = vcmask 15360
        %v5239 = vsel %vm5238, %v5174, %v4983
        %v5240 = vsel %vm5238, %v5175, %v4986
        %v5241 = vsel %vm5238, %v5176, %v4989
        %v5242 = vsel %vm5238, %v5177, %v4992
        %v5243 = vsel %vm5238, %v5178, %v4995
        %v5244 = vsel %vm5238, %v5179, %v4998
        %v5245 = vsel %vm5238, %v5180, %v5001
        %v5246 = vsel %vm5238, %v5181, %v5004
        %v5247 = vsel %vm5238, %v5182, %v5007
        %v5248 = vsel %vm5238, %v5183, %v5010
        %v5249 = vsel %vm5238, %v5184, %v5013
        %v5250 = vsel %vm5238, %v5185, %v5016
        %v5251 = vsel %vm5238, %v5186, %v5019
        %v5252 = vsel %vm5238, %v5187, %v5022
        %v5253 = vsel %vm5238, %v5188, %v5025
        %v5254 = vsel %vm5238, %v5189, %v5028
        %v5255 = vsel %vm5238, %v5190, %v5031
        %v5256 = vsel %vm5238, %v5191, %v5034
        %v5257 = vsel %vm5238, %v5192, %v5037
        %v5258 = vsel %vm5238, %v5193, %v5040
        %v5259 = vsel %vm5238, %v5194, %v5043
        %v5260 = vsel %vm5238, %v5195, %v5046
        %v5261 = vsel %vm5238, %v5196, %v5049
        %v5262 = vsel %vm5238, %v5197, %v5052
        %v5263 = vsel %vm5238, %v5198, %v5055
        %v5264 = vsel %vm5238, %v5199, %v5058
        %v5265 = vsel %vm5238, %v5200, %v5061
        %v5266 = vsel %vm5238, %v5201, %v5064
        %v5267 = vsel %vm5238, %v5202, %v5067
        %v5268 = vsel %vm5238, %v5203, %v5070
        %v5269 = vsel %vm5238, %v5204, %v5073
        %v5270 = vsel %vm5238, %v5205, %v5076
        %v5271 = vsel %vm5238, %v5206, %v5079
        %v5272 = vsel %vm5238, %v5207, %v5082
        %v5273 = vsel %vm5238, %v5208, %v5085
        %v5274 = vsel %vm5238, %v5209, %v5088
        %v5275 = vsel %vm5238, %v5210, %v5091
        %v5276 = vsel %vm5238, %v5211, %v5094
        %v5277 = vsel %vm5238, %v5212, %v5097
        %v5278 = vsel %vm5238, %v5213, %v5100
        %v5279 = vsel %vm5238, %v5214, %v5103
        %v5280 = vsel %vm5238, %v5215, %v5106
        %v5281 = vsel %vm5238, %v5216, %v5109
        %v5282 = vsel %vm5238, %v5217, %v5112
        %v5283 = vsel %vm5238, %v5218, %v5115
        %v5284 = vsel %vm5238, %v5219, %v5118
        %v5285 = vsel %vm5238, %v5220, %v5121
        %v5286 = vsel %vm5238, %v5221, %v5124
        %v5287 = vsel %vm5238, %v5222, %v5127
        %v5288 = vsel %vm5238, %v5223, %v5130
        %v5289 = vsel %vm5238, %v5224, %v5133
        %v5290 = vsel %vm5238, %v5225, %v5136
        %v5291 = vsel %vm5238, %v5226, %v5139
        %v5292 = vsel %vm5238, %v5227, %v5142
        %v5293 = vsel %vm5238, %v5228, %v5145
        %v5294 = vsel %vm5238, %v5229, %v5148
        %v5295 = vsel %vm5238, %v5230, %v5151
        %v5296 = vsel %vm5238, %v5231, %v5154
        %v5297 = vsel %vm5238, %v5232, %v5157
        %v5298 = vsel %vm5238, %v5233, %v5160
        %v5299 = vsel %vm5238, %v5234, %v5163
        %v5300 = vsel %vm5238, %v5235, %v5166
        %v5301 = vsel %vm5238, %v5236, %v5169
        %v5302 = vsel %vm5238, %v5237, %v5172
        %v5303 = vld [vmem:[%s461] sm:$0xff]
        %v5304 = vld [vmem:[%s461 + $0x8] sm:$0xff]
        %v5305 = vld [vmem:[%s461 + $0x10] sm:$0xff]
        %v5306 = vld [vmem:[%s461 + $0x18] sm:$0xff]
        %v5307 = vld [vmem:[%s461 + $0x20] sm:$0xff]
        %v5308 = vld [vmem:[%s461 + $0x28] sm:$0xff]
        %v5309 = vld [vmem:[%s461 + $0x30] sm:$0xff]
        %v5310 = vld [vmem:[%s461 + $0x38] sm:$0xff]
        %v5311 = vld [vmem:[%s461 + $0x40] sm:$0xff]
        %v5312 = vld [vmem:[%s461 + $0x48] sm:$0xff]
        %v5313 = vld [vmem:[%s461 + $0x50] sm:$0xff]
        %v5314 = vld [vmem:[%s461 + $0x58] sm:$0xff]
        %v5315 = vld [vmem:[%s461 + $0x60] sm:$0xff]
        %v5316 = vld [vmem:[%s461 + $0x68] sm:$0xff]
        %v5317 = vld [vmem:[%s461 + $0x70] sm:$0xff]
        %v5318 = vld [vmem:[%s461 + $0x78] sm:$0xff]
        %v5319 = vld [vmem:[%s461 + $0x80] sm:$0xff]
        %v5320 = vld [vmem:[%s461 + $0x88] sm:$0xff]
        %v5321 = vld [vmem:[%s461 + $0x90] sm:$0xff]
        %v5322 = vld [vmem:[%s461 + $0x98] sm:$0xff]
        %v5323 = vld [vmem:[%s461 + $0xa0] sm:$0xff]
        %v5324 = vld [vmem:[%s461 + $0xa8] sm:$0xff]
        %v5325 = vld [vmem:[%s461 + $0xb0] sm:$0xff]
        %v5326 = vld [vmem:[%s461 + $0xb8] sm:$0xff]
        %v5327 = vld [vmem:[%s461 + $0xc0] sm:$0xff]
        %v5328 = vld [vmem:[%s461 + $0xc8] sm:$0xff]
        %v5329 = vld [vmem:[%s461 + $0xd0] sm:$0xff]
        %v5330 = vld [vmem:[%s461 + $0xd8] sm:$0xff]
        %v5331 = vld [vmem:[%s461 + $0xe0] sm:$0xff]
        %v5332 = vld [vmem:[%s461 + $0xe8] sm:$0xff]
        %v5333 = vld [vmem:[%s461 + $0xf0] sm:$0xff]
        %v5334 = vld [vmem:[%s461 + $0xf8] sm:$0xff]
        %v5335 = vld [vmem:[%s461 + $0x100] sm:$0xff]
        %v5336 = vld [vmem:[%s461 + $0x108] sm:$0xff]
        %v5337 = vld [vmem:[%s461 + $0x110] sm:$0xff]
        %v5338 = vld [vmem:[%s461 + $0x118] sm:$0xff]
        %v5339 = vld [vmem:[%s461 + $0x120] sm:$0xff]
        %v5340 = vld [vmem:[%s461 + $0x128] sm:$0xff]
        %v5341 = vld [vmem:[%s461 + $0x130] sm:$0xff]
        %v5342 = vld [vmem:[%s461 + $0x138] sm:$0xff]
        %v5343 = vld [vmem:[%s461 + $0x140] sm:$0xff]
        %v5344 = vld [vmem:[%s461 + $0x148] sm:$0xff]
        %v5345 = vld [vmem:[%s461 + $0x150] sm:$0xff]
        %v5346 = vld [vmem:[%s461 + $0x158] sm:$0xff]
        %v5347 = vld [vmem:[%s461 + $0x160] sm:$0xff]
        %v5348 = vld [vmem:[%s461 + $0x168] sm:$0xff]
        %v5349 = vld [vmem:[%s461 + $0x170] sm:$0xff]
        %v5350 = vld [vmem:[%s461 + $0x178] sm:$0xff]
        %v5351 = vld [vmem:[%s461 + $0x180] sm:$0xff]
        %v5352 = vld [vmem:[%s461 + $0x188] sm:$0xff]
        %v5353 = vld [vmem:[%s461 + $0x190] sm:$0xff]
        %v5354 = vld [vmem:[%s461 + $0x198] sm:$0xff]
        %v5355 = vld [vmem:[%s461 + $0x1a0] sm:$0xff]
        %v5356 = vld [vmem:[%s461 + $0x1a8] sm:$0xff]
        %v5357 = vld [vmem:[%s461 + $0x1b0] sm:$0xff]
        %v5358 = vld [vmem:[%s461 + $0x1b8] sm:$0xff]
        %v5359 = vld [vmem:[%s461 + $0x1c0] sm:$0xff]
        %v5360 = vld [vmem:[%s461 + $0x1c8] sm:$0xff]
        %v5361 = vld [vmem:[%s461 + $0x1d0] sm:$0xff]
        %v5362 = vld [vmem:[%s461 + $0x1d8] sm:$0xff]
        %v5363 = vld [vmem:[%s461 + $0x1e0] sm:$0xff]
        %v5364 = vld [vmem:[%s461 + $0x1e8] sm:$0xff]
        %v5365 = vld [vmem:[%s461 + $0x1f0] sm:$0xff]
        %v5366 = vld [vmem:[%s461 + $0x1f8] sm:$0xff]
        %5431 = vrot.lane.b32.xlu0 %v2998, 3
        %v5432 = vpop.permute.xlu0 %5431
        %5433 = vrot.lane.b32.xlu0 %v3000, 3
        %v5434 = vpop.permute.xlu0 %5433
        %5435 = vrot.lane.b32.xlu0 %v3002, 3
        %v5436 = vpop.permute.xlu0 %5435
        %5437 = vrot.lane.b32.xlu0 %v3004, 3
        %v5438 = vpop.permute.xlu0 %5437
        %5439 = vrot.lane.b32.xlu0 %v3006, 3
        %v5440 = vpop.permute.xlu0 %5439
        %5441 = vrot.lane.b32.xlu0 %v3008, 3
        %v5442 = vpop.permute.xlu0 %5441
        %5443 = vrot.lane.b32.xlu0 %v3010, 3
        %v5444 = vpop.permute.xlu0 %5443
        %5445 = vrot.lane.b32.xlu0 %v3012, 3
        %v5446 = vpop.permute.xlu0 %5445
        %5447 = vrot.lane.b32.xlu0 %v3014, 3
        %v5448 = vpop.permute.xlu0 %5447
        %5449 = vrot.lane.b32.xlu0 %v3016, 3
        %v5450 = vpop.permute.xlu0 %5449
        %5451 = vrot.lane.b32.xlu0 %v3018, 3
        %v5452 = vpop.permute.xlu0 %5451
        %5453 = vrot.lane.b32.xlu0 %v3020, 3
        %v5454 = vpop.permute.xlu0 %5453
        %5455 = vrot.lane.b32.xlu0 %v3022, 3
        %v5456 = vpop.permute.xlu0 %5455
        %5457 = vrot.lane.b32.xlu0 %v3024, 3
        %v5458 = vpop.permute.xlu0 %5457
        %5459 = vrot.lane.b32.xlu0 %v3026, 3
        %v5460 = vpop.permute.xlu0 %5459
        %5461 = vrot.lane.b32.xlu0 %v3028, 3
        %v5462 = vpop.permute.xlu0 %5461
        %5463 = vrot.lane.b32.xlu0 %v3030, 3
        %v5464 = vpop.permute.xlu0 %5463
        %5465 = vrot.lane.b32.xlu0 %v3032, 3
        %v5466 = vpop.permute.xlu0 %5465
        %5467 = vrot.lane.b32.xlu0 %v3034, 3
        %v5468 = vpop.permute.xlu0 %5467
        %5469 = vrot.lane.b32.xlu0 %v3036, 3
        %v5470 = vpop.permute.xlu0 %5469
        %5471 = vrot.lane.b32.xlu0 %v3038, 3
        %v5472 = vpop.permute.xlu0 %5471
        %5473 = vrot.lane.b32.xlu0 %v3040, 3
        %v5474 = vpop.permute.xlu0 %5473
        %5475 = vrot.lane.b32.xlu0 %v3042, 3
        %v5476 = vpop.permute.xlu0 %5475
        %5477 = vrot.lane.b32.xlu0 %v3044, 3
        %v5478 = vpop.permute.xlu0 %5477
        %5479 = vrot.lane.b32.xlu0 %v3046, 3
        %v5480 = vpop.permute.xlu0 %5479
        %5481 = vrot.lane.b32.xlu0 %v3048, 3
        %v5482 = vpop.permute.xlu0 %5481
        %5483 = vrot.lane.b32.xlu0 %v3050, 3
        %v5484 = vpop.permute.xlu0 %5483
        %5485 = vrot.lane.b32.xlu0 %v3052, 3
        %v5486 = vpop.permute.xlu0 %5485
        %5487 = vrot.lane.b32.xlu0 %v3054, 3
        %v5488 = vpop.permute.xlu0 %5487
        %5489 = vrot.lane.b32.xlu0 %v3056, 3
        %v5490 = vpop.permute.xlu0 %5489
        %5491 = vrot.lane.b32.xlu0 %v3058, 3
        %v5492 = vpop.permute.xlu0 %5491
        %5493 = vrot.lane.b32.xlu0 %v3060, 3
        %v5494 = vpop.permute.xlu0 %5493
        %5495 = vrot.lane.b32.xlu0 %v3062, 3
        %v5496 = vpop.permute.xlu0 %5495
        %5497 = vrot.lane.b32.xlu0 %v3064, 3
        %v5498 = vpop.permute.xlu0 %5497
        %5499 = vrot.lane.b32.xlu0 %v3066, 3
        %v5500 = vpop.permute.xlu0 %5499
        %5501 = vrot.lane.b32.xlu0 %v3068, 3
        %v5502 = vpop.permute.xlu0 %5501
        %5503 = vrot.lane.b32.xlu0 %v3070, 3
        %v5504 = vpop.permute.xlu0 %5503
        %5505 = vrot.lane.b32.xlu0 %v3072, 3
        %v5506 = vpop.permute.xlu0 %5505
        %5507 = vrot.lane.b32.xlu0 %v3074, 3
        %v5508 = vpop.permute.xlu0 %5507
        %5509 = vrot.lane.b32.xlu0 %v3076, 3
        %v5510 = vpop.permute.xlu0 %5509
        %5511 = vrot.lane.b32.xlu0 %v3078, 3
        %v5512 = vpop.permute.xlu0 %5511
        %5513 = vrot.lane.b32.xlu0 %v3080, 3
        %v5514 = vpop.permute.xlu0 %5513
        %5515 = vrot.lane.b32.xlu0 %v3082, 3
        %v5516 = vpop.permute.xlu0 %5515
        %5517 = vrot.lane.b32.xlu0 %v3084, 3
        %v5518 = vpop.permute.xlu0 %5517
        %5519 = vrot.lane.b32.xlu0 %v3086, 3
        %v5520 = vpop.permute.xlu0 %5519
        %5521 = vrot.lane.b32.xlu0 %v3088, 3
        %v5522 = vpop.permute.xlu0 %5521
        %5523 = vrot.lane.b32.xlu0 %v3090, 3
        %v5524 = vpop.permute.xlu0 %5523
        %5525 = vrot.lane.b32.xlu0 %v3092, 3
        %v5526 = vpop.permute.xlu0 %5525
        %5527 = vrot.lane.b32.xlu0 %v3094, 3
        %v5528 = vpop.permute.xlu0 %5527
        %5529 = vrot.lane.b32.xlu0 %v3096, 3
        %v5530 = vpop.permute.xlu0 %5529
        %5531 = vrot.lane.b32.xlu0 %v3098, 3
        %v5532 = vpop.permute.xlu0 %5531
        %5533 = vrot.lane.b32.xlu0 %v3100, 3
        %v5534 = vpop.permute.xlu0 %5533
        %5535 = vrot.lane.b32.xlu0 %v3102, 3
        %v5536 = vpop.permute.xlu0 %5535
        %5537 = vrot.lane.b32.xlu0 %v3104, 3
        %v5538 = vpop.permute.xlu0 %5537
        %5539 = vrot.lane.b32.xlu0 %v3106, 3
        %v5540 = vpop.permute.xlu0 %5539
        %5541 = vrot.lane.b32.xlu0 %v3108, 3
        %v5542 = vpop.permute.xlu0 %5541
        %5543 = vrot.lane.b32.xlu0 %v3110, 3
        %v5544 = vpop.permute.xlu0 %5543
        %5545 = vrot.lane.b32.xlu0 %v3112, 3
        %v5546 = vpop.permute.xlu0 %5545
        %5547 = vrot.lane.b32.xlu0 %v3114, 3
        %v5548 = vpop.permute.xlu0 %5547
        %5549 = vrot.lane.b32.xlu0 %v3116, 3
        %v5550 = vpop.permute.xlu0 %5549
        %5551 = vrot.lane.b32.xlu0 %v3118, 3
        %v5552 = vpop.permute.xlu0 %5551
        %5553 = vrot.lane.b32.xlu0 %v3120, 3
        %v5554 = vpop.permute.xlu0 %5553
        %5555 = vrot.lane.b32.xlu0 %v3122, 3
        %v5556 = vpop.permute.xlu0 %5555
        %5557 = vrot.lane.b32.xlu0 %v3124, 3
        %v5558 = vpop.permute.xlu0 %5557
        %5687 = vrot.lane.b32.xlu0 %v5303, 18
        %v5688 = vpop.permute.xlu0 %5687
        %5689 = vrot.lane.b32.xlu0 %v5304, 18
        %v5690 = vpop.permute.xlu0 %5689
        %5691 = vrot.lane.b32.xlu0 %v5305, 18
        %v5692 = vpop.permute.xlu0 %5691
        %5693 = vrot.lane.b32.xlu0 %v5306, 18
        %v5694 = vpop.permute.xlu0 %5693
        %5695 = vrot.lane.b32.xlu0 %v5307, 18
        %v5696 = vpop.permute.xlu0 %5695
        %5697 = vrot.lane.b32.xlu0 %v5308, 18
        %v5698 = vpop.permute.xlu0 %5697
        %5699 = vrot.lane.b32.xlu0 %v5309, 18
        %v5700 = vpop.permute.xlu0 %5699
        %5701 = vrot.lane.b32.xlu0 %v5310, 18
        %v5702 = vpop.permute.xlu0 %5701
        %5703 = vrot.lane.b32.xlu0 %v5311, 18
        %v5704 = vpop.permute.xlu0 %5703
        %5705 = vrot.lane.b32.xlu0 %v5312, 18
        %v5706 = vpop.permute.xlu0 %5705
        %5707 = vrot.lane.b32.xlu0 %v5313, 18
        %v5708 = vpop.permute.xlu0 %5707
        %5709 = vrot.lane.b32.xlu0 %v5314, 18
        %v5710 = vpop.permute.xlu0 %5709
        %5711 = vrot.lane.b32.xlu0 %v5315, 18
        %v5712 = vpop.permute.xlu0 %5711
        %5713 = vrot.lane.b32.xlu0 %v5316, 18
        %v5714 = vpop.permute.xlu0 %5713
        %5715 = vrot.lane.b32.xlu0 %v5317, 18
        %v5716 = vpop.permute.xlu0 %5715
        %5717 = vrot.lane.b32.xlu0 %v5318, 18
        %v5718 = vpop.permute.xlu0 %5717
        %5719 = vrot.lane.b32.xlu0 %v5319, 18
        %v5720 = vpop.permute.xlu0 %5719
        %5721 = vrot.lane.b32.xlu0 %v5320, 18
        %v5722 = vpop.permute.xlu0 %5721
        %5723 = vrot.lane.b32.xlu0 %v5321, 18
        %v5724 = vpop.permute.xlu0 %5723
        %5725 = vrot.lane.b32.xlu0 %v5322, 18
        %v5726 = vpop.permute.xlu0 %5725
        %5727 = vrot.lane.b32.xlu0 %v5323, 18
        %v5728 = vpop.permute.xlu0 %5727
        %5729 = vrot.lane.b32.xlu0 %v5324, 18
        %v5730 = vpop.permute.xlu0 %5729
        %5731 = vrot.lane.b32.xlu0 %v5325, 18
        %v5732 = vpop.permute.xlu0 %5731
        %5733 = vrot.lane.b32.xlu0 %v5326, 18
        %v5734 = vpop.permute.xlu0 %5733
        %5735 = vrot.lane.b32.xlu0 %v5327, 18
        %v5736 = vpop.permute.xlu0 %5735
        %5737 = vrot.lane.b32.xlu0 %v5328, 18
        %v5738 = vpop.permute.xlu0 %5737
        %5739 = vrot.lane.b32.xlu0 %v5329, 18
        %v5740 = vpop.permute.xlu0 %5739
        %5741 = vrot.lane.b32.xlu0 %v5330, 18
        %v5742 = vpop.permute.xlu0 %5741
        %5743 = vrot.lane.b32.xlu0 %v5331, 18
        %v5744 = vpop.permute.xlu0 %5743
        %5745 = vrot.lane.b32.xlu0 %v5332, 18
        %v5746 = vpop.permute.xlu0 %5745
        %5747 = vrot.lane.b32.xlu0 %v5333, 18
        %v5748 = vpop.permute.xlu0 %5747
        %5749 = vrot.lane.b32.xlu0 %v5334, 18
        %v5750 = vpop.permute.xlu0 %5749
        %5751 = vrot.lane.b32.xlu0 %v5335, 18
        %v5752 = vpop.permute.xlu0 %5751
        %5753 = vrot.lane.b32.xlu0 %v5336, 18
        %v5754 = vpop.permute.xlu0 %5753
        %5755 = vrot.lane.b32.xlu0 %v5337, 18
        %v5756 = vpop.permute.xlu0 %5755
        %5757 = vrot.lane.b32.xlu0 %v5338, 18
        %v5758 = vpop.permute.xlu0 %5757
        %5759 = vrot.lane.b32.xlu0 %v5339, 18
        %v5760 = vpop.permute.xlu0 %5759
        %5761 = vrot.lane.b32.xlu0 %v5340, 18
        %v5762 = vpop.permute.xlu0 %5761
        %5763 = vrot.lane.b32.xlu0 %v5341, 18
        %v5764 = vpop.permute.xlu0 %5763
        %5765 = vrot.lane.b32.xlu0 %v5342, 18
        %v5766 = vpop.permute.xlu0 %5765
        %5767 = vrot.lane.b32.xlu0 %v5343, 18
        %v5768 = vpop.permute.xlu0 %5767
        %5769 = vrot.lane.b32.xlu0 %v5344, 18
        %v5770 = vpop.permute.xlu0 %5769
        %5771 = vrot.lane.b32.xlu0 %v5345, 18
        %v5772 = vpop.permute.xlu0 %5771
        %5773 = vrot.lane.b32.xlu0 %v5346, 18
        %v5774 = vpop.permute.xlu0 %5773
        %5775 = vrot.lane.b32.xlu0 %v5347, 18
        %v5776 = vpop.permute.xlu0 %5775
        %5777 = vrot.lane.b32.xlu0 %v5348, 18
        %v5778 = vpop.permute.xlu0 %5777
        %5779 = vrot.lane.b32.xlu0 %v5349, 18
        %v5780 = vpop.permute.xlu0 %5779
        %5781 = vrot.lane.b32.xlu0 %v5350, 18
        %v5782 = vpop.permute.xlu0 %5781
        %5783 = vrot.lane.b32.xlu0 %v5351, 18
        %v5784 = vpop.permute.xlu0 %5783
        %5785 = vrot.lane.b32.xlu0 %v5352, 18
        %v5786 = vpop.permute.xlu0 %5785
        %5787 = vrot.lane.b32.xlu0 %v5353, 18
        %v5788 = vpop.permute.xlu0 %5787
        %5789 = vrot.lane.b32.xlu0 %v5354, 18
        %v5790 = vpop.permute.xlu0 %5789
        %5791 = vrot.lane.b32.xlu0 %v5355, 18
        %v5792 = vpop.permute.xlu0 %5791
        %5793 = vrot.lane.b32.xlu0 %v5356, 18
        %v5794 = vpop.permute.xlu0 %5793
        %5795 = vrot.lane.b32.xlu0 %v5357, 18
        %v5796 = vpop.permute.xlu0 %5795
        %5797 = vrot.lane.b32.xlu0 %v5358, 18
        %v5798 = vpop.permute.xlu0 %5797
        %5799 = vrot.lane.b32.xlu0 %v5359, 18
        %v5800 = vpop.permute.xlu0 %5799
        %5801 = vrot.lane.b32.xlu0 %v5360, 18
        %v5802 = vpop.permute.xlu0 %5801
        %5803 = vrot.lane.b32.xlu0 %v5361, 18
        %v5804 = vpop.permute.xlu0 %5803
        %5805 = vrot.lane.b32.xlu0 %v5362, 18
        %v5806 = vpop.permute.xlu0 %5805
        %5807 = vrot.lane.b32.xlu0 %v5363, 18
        %v5808 = vpop.permute.xlu0 %5807
        %5809 = vrot.lane.b32.xlu0 %v5364, 18
        %v5810 = vpop.permute.xlu0 %5809
        %5811 = vrot.lane.b32.xlu0 %v5365, 18
        %v5812 = vpop.permute.xlu0 %5811
        %5813 = vrot.lane.b32.xlu0 %v5366, 18
        %v5814 = vpop.permute.xlu0 %5813
        %v5879 = vsel %vm2733, %v5239, %v5432
        %v5880 = vsel %vm2733, %v5240, %v5434
        %v5881 = vsel %vm2733, %v5241, %v5436
        %v5882 = vsel %vm2733, %v5242, %v5438
        %v5883 = vsel %vm2733, %v5243, %v5440
        %v5884 = vsel %vm2733, %v5244, %v5442
        %v5885 = vsel %vm2733, %v5245, %v5444
        %v5886 = vsel %vm2733, %v5246, %v5446
        %v5887 = vsel %vm2733, %v5247, %v5448
        %v5888 = vsel %vm2733, %v5248, %v5450
        %v5889 = vsel %vm2733, %v5249, %v5452
        %v5890 = vsel %vm2733, %v5250, %v5454
        %v5891 = vsel %vm2733, %v5251, %v5456
        %v5892 = vsel %vm2733, %v5252, %v5458
        %v5893 = vsel %vm2733, %v5253, %v5460
        %v5894 = vsel %vm2733, %v5254, %v5462
        %v5895 = vsel %vm2733, %v5255, %v5464
        %v5896 = vsel %vm2733, %v5256, %v5466
        %v5897 = vsel %vm2733, %v5257, %v5468
        %v5898 = vsel %vm2733, %v5258, %v5470
        %v5899 = vsel %vm2733, %v5259, %v5472
        %v5900 = vsel %vm2733, %v5260, %v5474
        %v5901 = vsel %vm2733, %v5261, %v5476
        %v5902 = vsel %vm2733, %v5262, %v5478
        %v5903 = vsel %vm2733, %v5263, %v5480
        %v5904 = vsel %vm2733, %v5264, %v5482
        %v5905 = vsel %vm2733, %v5265, %v5484
        %v5906 = vsel %vm2733, %v5266, %v5486
        %v5907 = vsel %vm2733, %v5267, %v5488
        %v5908 = vsel %vm2733, %v5268, %v5490
        %v5909 = vsel %vm2733, %v5269, %v5492
        %v5910 = vsel %vm2733, %v5270, %v5494
        %v5911 = vsel %vm2733, %v5271, %v5496
        %v5912 = vsel %vm2733, %v5272, %v5498
        %v5913 = vsel %vm2733, %v5273, %v5500
        %v5914 = vsel %vm2733, %v5274, %v5502
        %v5915 = vsel %vm2733, %v5275, %v5504
        %v5916 = vsel %vm2733, %v5276, %v5506
        %v5917 = vsel %vm2733, %v5277, %v5508
        %v5918 = vsel %vm2733, %v5278, %v5510
        %v5919 = vsel %vm2733, %v5279, %v5512
        %v5920 = vsel %vm2733, %v5280, %v5514
        %v5921 = vsel %vm2733, %v5281, %v5516
        %v5922 = vsel %vm2733, %v5282, %v5518
        %v5923 = vsel %vm2733, %v5283, %v5520
        %v5924 = vsel %vm2733, %v5284, %v5522
        %v5925 = vsel %vm2733, %v5285, %v5524
        %v5926 = vsel %vm2733, %v5286, %v5526
        %v5927 = vsel %vm2733, %v5287, %v5528
        %v5928 = vsel %vm2733, %v5288, %v5530
        %v5929 = vsel %vm2733, %v5289, %v5532
        %v5930 = vsel %vm2733, %v5290, %v5534
        %v5931 = vsel %vm2733, %v5291, %v5536
        %v5932 = vsel %vm2733, %v5292, %v5538
        %v5933 = vsel %vm2733, %v5293, %v5540
        %v5934 = vsel %vm2733, %v5294, %v5542
        %v5935 = vsel %vm2733, %v5295, %v5544
        %v5936 = vsel %vm2733, %v5296, %v5546
        %v5937 = vsel %vm2733, %v5297, %v5548
        %v5938 = vsel %vm2733, %v5298, %v5550
        %v5939 = vsel %vm2733, %v5299, %v5552
        %v5940 = vsel %vm2733, %v5300, %v5554
        %v5941 = vsel %vm2733, %v5301, %v5556
        %v5942 = vsel %vm2733, %v5302, %v5558
        %vm5943 = vcmask 146432
        %v5944 = vsel %vm5943, %v5879, %v5688
        %v5945 = vsel %vm5943, %v5880, %v5690
        %v5946 = vsel %vm5943, %v5881, %v5692
        %v5947 = vsel %vm5943, %v5882, %v5694
        %v5948 = vsel %vm5943, %v5883, %v5696
        %v5949 = vsel %vm5943, %v5884, %v5698
        %v5950 = vsel %vm5943, %v5885, %v5700
        %v5951 = vsel %vm5943, %v5886, %v5702
        %v5952 = vsel %vm5943, %v5887, %v5704
        %v5953 = vsel %vm5943, %v5888, %v5706
        %v5954 = vsel %vm5943, %v5889, %v5708
        %v5955 = vsel %vm5943, %v5890, %v5710
        %v5956 = vsel %vm5943, %v5891, %v5712
        %v5957 = vsel %vm5943, %v5892, %v5714
        %v5958 = vsel %vm5943, %v5893, %v5716
        %v5959 = vsel %vm5943, %v5894, %v5718
        %v5960 = vsel %vm5943, %v5895, %v5720
        %v5961 = vsel %vm5943, %v5896, %v5722
        %v5962 = vsel %vm5943, %v5897, %v5724
        %v5963 = vsel %vm5943, %v5898, %v5726
        %v5964 = vsel %vm5943, %v5899, %v5728
        %v5965 = vsel %vm5943, %v5900, %v5730
        %v5966 = vsel %vm5943, %v5901, %v5732
        %v5967 = vsel %vm5943, %v5902, %v5734
        %v5968 = vsel %vm5943, %v5903, %v5736
        %v5969 = vsel %vm5943, %v5904, %v5738
        %v5970 = vsel %vm5943, %v5905, %v5740
        %v5971 = vsel %vm5943, %v5906, %v5742
        %v5972 = vsel %vm5943, %v5907, %v5744
        %v5973 = vsel %vm5943, %v5908, %v5746
        %v5974 = vsel %vm5943, %v5909, %v5748
        %v5975 = vsel %vm5943, %v5910, %v5750
        %v5976 = vsel %vm5943, %v5911, %v5752
        %v5977 = vsel %vm5943, %v5912, %v5754
        %v5978 = vsel %vm5943, %v5913, %v5756
        %v5979 = vsel %vm5943, %v5914, %v5758
        %v5980 = vsel %vm5943, %v5915, %v5760
        %v5981 = vsel %vm5943, %v5916, %v5762
        %v5982 = vsel %vm5943, %v5917, %v5764
        %v5983 = vsel %vm5943, %v5918, %v5766
        %v5984 = vsel %vm5943, %v5919, %v5768
        %v5985 = vsel %vm5943, %v5920, %v5770
        %v5986 = vsel %vm5943, %v5921, %v5772
        %v5987 = vsel %vm5943, %v5922, %v5774
        %v5988 = vsel %vm5943, %v5923, %v5776
        %v5989 = vsel %vm5943, %v5924, %v5778
        %v5990 = vsel %vm5943, %v5925, %v5780
        %v5991 = vsel %vm5943, %v5926, %v5782
        %v5992 = vsel %vm5943, %v5927, %v5784
        %v5993 = vsel %vm5943, %v5928, %v5786
        %v5994 = vsel %vm5943, %v5929, %v5788
        %v5995 = vsel %vm5943, %v5930, %v5790
        %v5996 = vsel %vm5943, %v5931, %v5792
        %v5997 = vsel %vm5943, %v5932, %v5794
        %v5998 = vsel %vm5943, %v5933, %v5796
        %v5999 = vsel %vm5943, %v5934, %v5798
        %v6000 = vsel %vm5943, %v5935, %v5800
        %v6001 = vsel %vm5943, %v5936, %v5802
        %v6002 = vsel %vm5943, %v5937, %v5804
        %v6003 = vsel %vm5943, %v5938, %v5806
        %v6004 = vsel %vm5943, %v5939, %v5808
        %v6005 = vsel %vm5943, %v5940, %v5810
        %v6006 = vsel %vm5943, %v5941, %v5812
        %v6007 = vsel %vm5943, %v5942, %v5814
        %v6008 = vld [vmem:[%s4] sm:$0xff]
        %v6009 = vld [vmem:[%s4 + $0x8] sm:$0xff]
        %v6010 = vld [vmem:[%s4 + $0x10] sm:$0xff]
        %v6011 = vld [vmem:[%s4 + $0x18] sm:$0xff]
        %v6012 = vld [vmem:[%s4 + $0x20] sm:$0x3f]
        %v6013 = vld [vmem:[%s4 + $0x28] sm:$0x3f]
        %vm6014 = vcmask 179200
        %v6016 = vsel %vm6014, %v5944, 0
        %v6019 = vsel %vm6014, %v5945, 0
        %v6022 = vsel %vm6014, %v5946, 0
        %v6025 = vsel %vm6014, %v5947, 0
        %v6028 = vsel %vm6014, %v5948, 0
        %v6031 = vsel %vm6014, %v5949, 0
        %v6034 = vsel %vm6014, %v5950, 0
        %v6037 = vsel %vm6014, %v5951, 0
        %v6040 = vsel %vm6014, %v5952, 0
        %v6043 = vsel %vm6014, %v5953, 0
        %v6046 = vsel %vm6014, %v5954, 0
        %v6049 = vsel %vm6014, %v5955, 0
        %v6052 = vsel %vm6014, %v5956, 0
        %v6055 = vsel %vm6014, %v5957, 0
        %v6058 = vsel %vm6014, %v5958, 0
        %v6061 = vsel %vm6014, %v5959, 0
        %v6064 = vsel %vm6014, %v5960, 0
        %v6067 = vsel %vm6014, %v5961, 0
        %v6070 = vsel %vm6014, %v5962, 0
        %v6073 = vsel %vm6014, %v5963, 0
        %v6076 = vsel %vm6014, %v5964, 0
        %v6079 = vsel %vm6014, %v5965, 0
        %v6082 = vsel %vm6014, %v5966, 0
        %v6085 = vsel %vm6014, %v5967, 0
        %v6088 = vsel %vm6014, %v5968, 0
        %v6091 = vsel %vm6014, %v5969, 0
        %v6094 = vsel %vm6014, %v5970, 0
        %v6097 = vsel %vm6014, %v5971, 0
        %v6100 = vsel %vm6014, %v5972, 0
        %v6103 = vsel %vm6014, %v5973, 0
        %v6106 = vsel %vm6014, %v5974, 0
        %v6109 = vsel %vm6014, %v5975, 0
        %v6112 = vsel %vm6014, %v5976, 0
        %v6115 = vsel %vm6014, %v5977, 0
        %v6118 = vsel %vm6014, %v5978, 0
        %v6121 = vsel %vm6014, %v5979, 0
        %v6124 = vsel %vm6014, %v5980, 0
        %v6127 = vsel %vm6014, %v5981, 0
        %v6130 = vsel %vm6014, %v5982, 0
        %v6133 = vsel %vm6014, %v5983, 0
        %v6136 = vsel %vm6014, %v5984, 0
        %v6139 = vsel %vm6014, %v5985, 0
        %v6142 = vsel %vm6014, %v5986, 0
        %v6145 = vsel %vm6014, %v5987, 0
        %v6148 = vsel %vm6014, %v5988, 0
        %v6151 = vsel %vm6014, %v5989, 0
        %v6154 = vsel %vm6014, %v5990, 0
        %v6157 = vsel %vm6014, %v5991, 0
        %v6160 = vsel %vm6014, %v5992, 0
        %v6163 = vsel %vm6014, %v5993, 0
        %v6166 = vsel %vm6014, %v5994, 0
        %v6169 = vsel %vm6014, %v5995, 0
        %v6172 = vsel %vm6014, %v5996, 0
        %v6175 = vsel %vm6014, %v5997, 0
        %v6178 = vsel %vm6014, %v5998, 0
        %v6181 = vsel %vm6014, %v5999, 0
        %v6184 = vsel %vm6014, %v6000, 0
        %v6187 = vsel %vm6014, %v6001, 0
        %v6190 = vsel %vm6014, %v6002, 0
        %v6193 = vsel %vm6014, %v6003, 0
        %v6196 = vsel %vm6014, %v6004, 0
        %v6199 = vsel %vm6014, %v6005, 0
        %v6202 = vsel %vm6014, %v6006, 0
        %v6205 = vsel %vm6014, %v6007, 0
        %vm6207 = vcmask 1045504
        %v6209 = vsel %vm6207, %v6012, 0
        %v6212 = vsel %vm6207, %v6013, 0
        %6214 = vmatprep.subr.mxu0 %v6009
        %6215 = vmatpush1.msra.mxu0 %v6008
        %6216 = vmatprep.subr.mxu0 %v6011
        %6217 = vmatpush1.msra.mxu0 %v6010
        %6218 = vmatprep.subr.mxu0 %v6212
        %6219 = vmatpush1.msra.mxu0 %v6209
        %6220 = vmatprep.subr.mxu0 0.0
        %6221 = vmatpush1.msra.mxu0 0.0
        %6222 = vmatprep.subr.mxu0 0.0
        %6223 = vmatpush1.msra.mxu0 0.0
        %6224 = vmatprep.subr.mxu0 0.0
        %6225 = vmatpush1.msra.mxu0 0.0
        %6226 = vmatprep.subr.mxu0 0.0
        %6227 = vmatpush1.msra.mxu0 0.0
        %6228 = vmatprep.subr.mxu0 0.0
        %6229 = vmatpush1.msra.mxu0 0.0
        %6230 = vmatprep.subr.mxu0 0.0
        %6231 = vmatpush1.msra.mxu0 0.0
        %6232 = vmatprep.subr.mxu0 0.0
        %6233 = vmatpush1.msra.mxu0 0.0
        %6234 = vmatprep.subr.mxu0 0.0
        %6235 = vmatpush1.msra.mxu0 0.0
        %6236 = vmatprep.subr.mxu0 0.0
        %6237 = vmatpush1.msra.mxu0 0.0
        %6238 = vmatprep.subr.mxu0 0.0
        %6239 = vmatpush1.msra.mxu0 0.0
        %6240 = vmatprep.subr.mxu0 0.0
        %6241 = vmatpush1.msra.mxu0 0.0
        %6242 = vmatprep.subr.mxu0 0.0
        %6243 = vmatpush1.msra.mxu0 0.0
        %6244 = vmatprep.subr.mxu0 0.0
        %6245 = vmatpush1.msra.mxu0 0.0
        %6246 = vmatprep.subr.mxu0 0.0
        %6247 = vmatpush1.msra.mxu0 0.0
        %6248 = vmatprep.subr.mxu0 0.0
        %6249 = vmatpush1.msra.mxu0 0.0
        %6250 = vmatprep.subr.mxu0 0.0
        %6251 = vmatpush1.msra.mxu0 0.0
        %6252 = vmatprep.subr.mxu0 0.0
        %6253 = vmatpush1.msra.mxu0 0.0
        %6254 = vmatprep.subr.mxu0 0.0
        %6255 = vmatpush1.msra.mxu0 0.0
        %6256 = vmatprep.subr.mxu0 0.0
        %6257 = vmatpush1.msra.mxu0 0.0
        %6258 = vmatprep.subr.mxu0 0.0
        %6259 = vmatpush1.msra.mxu0 0.0
        %6260 = vmatprep.subr.mxu0 0.0
        %6261 = vmatpush1.msra.mxu0 0.0
        %6262 = vmatprep.subr.mxu0 0.0
        %6263 = vmatpush1.msra.mxu0 0.0
        %6264 = vmatprep.subr.mxu0 0.0
        %6265 = vmatpush1.msra.mxu0 0.0
        %6266 = vmatprep.subr.mxu0 0.0
        %6267 = vmatpush1.msra.mxu0 0.0
        %6268 = vmatprep.subr.mxu0 0.0
        %6269 = vmatpush1.msra.mxu0 0.0
        %6270 = vmatprep.subr.mxu0 0.0
        %6271 = vmatpush1.msra.mxu0 0.0
        %6272 = vmatprep.subr.mxu0 0.0
        %6273 = vmatpush1.msra.mxu0 0.0
        %6274 = vmatprep.subr.mxu0 0.0
        %6275 = vmatpush1.msra.mxu0 0.0
        %6276 = vmatprep.subr.mxu0 0.0
        %6277 = vmatpush1.msra.mxu0 0.0
        %6278 = vmatprep.mubr.f32.mxu0 0.0
        %6279 = vmatmul.mubr.f32.gmra.mrb[0].mxu0 %v6016
        %v6280 = vpop.f32.mrb[0].mxu0
        %v6281 = vadd.f32 0.0, %v6280
        %v6282 = vpop.f32.mrb[0].mxu0
        %v6283 = vadd.f32 0.0, %v6282
        %6284 = vmatprep.mubr.f32.mxu0 0.0
        %6285 = vmatmul.mubr.f32.gmra.mrb[0].mxu0 %v6019
        %v6286 = vpop.f32.mrb[0].mxu0
        %v6287 = vadd.f32 0.0, %v6286
        %v6288 = vpop.f32.mrb[0].mxu0
        %v6289 = vadd.f32 0.0, %v6288
        %6290 = vmatprep.mubr.f32.mxu0 0.0
        %6291 = vmatmul.mubr.f32.gmra.mrb[0].mxu0 %v6022
        %v6292 = vpop.f32.mrb[0].mxu0
        %v6293 = vadd.f32 0.0, %v6292
        %v6294 = vpop.f32.mrb[0].mxu0
        %v6295 = vadd.f32 0.0, %v6294
        %6296 = vmatprep.mubr.f32.mxu0 0.0
        %6297 = vmatmul.mubr.f32.gmra.mrb[0].mxu0 %v6025
        %v6298 = vpop.f32.mrb[0].mxu0
        %v6299 = vadd.f32 0.0, %v6298
        %v6300 = vpop.f32.mrb[0].mxu0
        %v6301 = vadd.f32 0.0, %v6300
        %6302 = vmatprep.mubr.f32.mxu0 0.0
        %6303 = vmatmul.mubr.f32.gmra.mrb[0].mxu0 %v6028
        %v6304 = vpop.f32.mrb[0].mxu0
        %v6305 = vadd.f32 0.0, %v6304
        %v6306 = vpop.f32.mrb[0].mxu0
        %v6307 = vadd.f32 0.0, %v6306
        %6308 = vmatprep.mubr.f32.mxu0 0.0
        %6309 = vmatmul.mubr.f32.gmra.mrb[0].mxu0 %v6031
        %v6310 = vpop.f32.mrb[0].mxu0
        %v6311 = vadd.f32 0.0, %v6310
        %v6312 = vpop.f32.mrb[0].mxu0
        %v6313 = vadd.f32 0.0, %v6312
        %6314 = vmatprep.mubr.f32.mxu0 0.0
        %6315 = vmatmul.mubr.f32.gmra.mrb[0].mxu0 %v6034
        %v6316 = vpop.f32.mrb[0].mxu0
        %v6317 = vadd.f32 0.0, %v6316
        %v6318 = vpop.f32.mrb[0].mxu0
        %v6319 = vadd.f32 0.0, %v6318
        %6320 = vmatprep.mubr.f32.mxu0 0.0
        %6321 = vmatmul.mubr.f32.gmra.mrb[0].mxu0 %v6037
        %v6322 = vpop.f32.mrb[0].mxu0
        %v6323 = vadd.f32 0.0, %v6322
        %v6324 = vpop.f32.mrb[0].mxu0
        %v6325 = vadd.f32 0.0, %v6324
        %6326 = vmatprep.mubr.f32.mxu0 0.0
        %6327 = vmatmul.mubr.f32.gmra.mrb[0].mxu0 %v6040
        %v6328 = vpop.f32.mrb[0].mxu0
        %v6329 = vadd.f32 0.0, %v6328
        %v6330 = vpop.f32.mrb[0].mxu0
        %v6331 = vadd.f32 0.0, %v6330
        %6332 = vmatprep.mubr.f32.mxu0 0.0
        %6333 = vmatmul.mubr.f32.gmra.mrb[0].mxu0 %v6043
        %v6334 = vpop.f32.mrb[0].mxu0
        %v6335 = vadd.f32 0.0, %v6334
        %v6336 = vpop.f32.mrb[0].mxu0
        %v6337 = vadd.f32 0.0, %v6336
        %6338 = vmatprep.mubr.f32.mxu0 0.0
        %6339 = vmatmul.mubr.f32.gmra.mrb[0].mxu0 %v6046
        %v6340 = vpop.f32.mrb[0].mxu0
        %v6341 = vadd.f32 0.0, %v6340
        %v6342 = vpop.f32.mrb[0].mxu0
        %v6343 = vadd.f32 0.0, %v6342
        %6344 = vmatprep.mubr.f32.mxu0 0.0
        %6345 = vmatmul.mubr.f32.gmra.mrb[0].mxu0 %v6049
        %v6346 = vpop.f32.mrb[0].mxu0
        %v6347 = vadd.f32 0.0, %v6346
        %v6348 = vpop.f32.mrb[0].mxu0
        %v6349 = vadd.f32 0.0, %v6348
        %6350 = vmatprep.mubr.f32.mxu0 0.0
        %6351 = vmatmul.mubr.f32.gmra.mrb[0].mxu0 %v6052
        %v6352 = vpop.f32.mrb[0].mxu0
        %v6353 = vadd.f32 0.0, %v6352
        %v6354 = vpop.f32.mrb[0].mxu0
        %v6355 = vadd.f32 0.0, %v6354
        %6356 = vmatprep.mubr.f32.mxu0 0.0
        %6357 = vmatmul.mubr.f32.gmra.mrb[0].mxu0 %v6055
        %v6358 = vpop.f32.mrb[0].mxu0
        %v6359 = vadd.f32 0.0, %v6358
        %v6360 = vpop.f32.mrb[0].mxu0
        %v6361 = vadd.f32 0.0, %v6360
        %6362 = vmatprep.mubr.f32.mxu0 0.0
        %6363 = vmatmul.mubr.f32.gmra.mrb[0].mxu0 %v6058
        %v6364 = vpop.f32.mrb[0].mxu0
        %v6365 = vadd.f32 0.0, %v6364
        %v6366 = vpop.f32.mrb[0].mxu0
        %v6367 = vadd.f32 0.0, %v6366
        %6368 = vmatprep.mubr.f32.mxu0 0.0
        %6369 = vmatmul.mubr.f32.gmra.mrb[0].mxu0 %v6061
        %v6370 = vpop.f32.mrb[0].mxu0
        %v6371 = vadd.f32 0.0, %v6370
        %v6372 = vpop.f32.mrb[0].mxu0
        %v6373 = vadd.f32 0.0, %v6372
        %6374 = vmatprep.mubr.f32.mxu0 0.0
        %6375 = vmatmul.mubr.f32.gmra.mrb[0].mxu0 %v6064
        %v6376 = vpop.f32.mrb[0].mxu0
        %v6377 = vadd.f32 0.0, %v6376
        %v6378 = vpop.f32.mrb[0].mxu0
        %v6379 = vadd.f32 0.0, %v6378
        %6380 = vmatprep.mubr.f32.mxu0 0.0
        %6381 = vmatmul.mubr.f32.gmra.mrb[0].mxu0 %v6067
        %v6382 = vpop.f32.mrb[0].mxu0
        %v6383 = vadd.f32 0.0, %v6382
        %v6384 = vpop.f32.mrb[0].mxu0
        %v6385 = vadd.f32 0.0, %v6384
        %6386 = vmatprep.mubr.f32.mxu0 0.0
        %6387 = vmatmul.mubr.f32.gmra.mrb[0].mxu0 %v6070
        %v6388 = vpop.f32.mrb[0].mxu0
        %v6389 = vadd.f32 0.0, %v6388
        %v6390 = vpop.f32.mrb[0].mxu0
        %v6391 = vadd.f32 0.0, %v6390
        %6392 = vmatprep.mubr.f32.mxu0 0.0
        %6393 = vmatmul.mubr.f32.gmra.mrb[0].mxu0 %v6073
        %v6394 = vpop.f32.mrb[0].mxu0
        %v6395 = vadd.f32 0.0, %v6394
        %v6396 = vpop.f32.mrb[0].mxu0
        %v6397 = vadd.f32 0.0, %v6396
        %6398 = vmatprep.mubr.f32.mxu0 0.0
        %6399 = vmatmul.mubr.f32.gmra.mrb[0].mxu0 %v6076
        %v6400 = vpop.f32.mrb[0].mxu0
        %v6401 = vadd.f32 0.0, %v6400
        %v6402 = vpop.f32.mrb[0].mxu0
        %v6403 = vadd.f32 0.0, %v6402
        %6404 = vmatprep.mubr.f32.mxu0 0.0
        %6405 = vmatmul.mubr.f32.gmra.mrb[0].mxu0 %v6079
        %v6406 = vpop.f32.mrb[0].mxu0
        %v6407 = vadd.f32 0.0, %v6406
        %v6408 = vpop.f32.mrb[0].mxu0
        %v6409 = vadd.f32 0.0, %v6408
        %6410 = vmatprep.mubr.f32.mxu0 0.0
        %6411 = vmatmul.mubr.f32.gmra.mrb[0].mxu0 %v6082
        %v6412 = vpop.f32.mrb[0].mxu0
        %v6413 = vadd.f32 0.0, %v6412
        %v6414 = vpop.f32.mrb[0].mxu0
        %v6415 = vadd.f32 0.0, %v6414
        %6416 = vmatprep.mubr.f32.mxu0 0.0
        %6417 = vmatmul.mubr.f32.gmra.mrb[0].mxu0 %v6085
        %v6418 = vpop.f32.mrb[0].mxu0
        %v6419 = vadd.f32 0.0, %v6418
        %v6420 = vpop.f32.mrb[0].mxu0
        %v6421 = vadd.f32 0.0, %v6420
        %6422 = vmatprep.mubr.f32.mxu0 0.0
        %6423 = vmatmul.mubr.f32.gmra.mrb[0].mxu0 %v6088
        %v6424 = vpop.f32.mrb[0].mxu0
        %v6425 = vadd.f32 0.0, %v6424
        %v6426 = vpop.f32.mrb[0].mxu0
        %v6427 = vadd.f32 0.0, %v6426
        %6428 = vmatprep.mubr.f32.mxu0 0.0
        %6429 = vmatmul.mubr.f32.gmra.mrb[0].mxu0 %v6091
        %v6430 = vpop.f32.mrb[0].mxu0
        %v6431 = vadd.f32 0.0, %v6430
        %v6432 = vpop.f32.mrb[0].mxu0
        %v6433 = vadd.f32 0.0, %v6432
        %6434 = vmatprep.mubr.f32.mxu0 0.0
        %6435 = vmatmul.mubr.f32.gmra.mrb[0].mxu0 %v6094
        %v6436 = vpop.f32.mrb[0].mxu0
        %v6437 = vadd.f32 0.0, %v6436
        %v6438 = vpop.f32.mrb[0].mxu0
        %v6439 = vadd.f32 0.0, %v6438
        %6440 = vmatprep.mubr.f32.mxu0 0.0
        %6441 = vmatmul.mubr.f32.gmra.mrb[0].mxu0 %v6097
        %v6442 = vpop.f32.mrb[0].mxu0
        %v6443 = vadd.f32 0.0, %v6442
        %v6444 = vpop.f32.mrb[0].mxu0
        %v6445 = vadd.f32 0.0, %v6444
        %6446 = vmatprep.mubr.f32.mxu0 0.0
        %6447 = vmatmul.mubr.f32.gmra.mrb[0].mxu0 %v6100
        %v6448 = vpop.f32.mrb[0].mxu0
        %v6449 = vadd.f32 0.0, %v6448
        %v6450 = vpop.f32.mrb[0].mxu0
        %v6451 = vadd.f32 0.0, %v6450
        %6452 = vmatprep.mubr.f32.mxu0 0.0
        %6453 = vmatmul.mubr.f32.gmra.mrb[0].mxu0 %v6103
        %v6454 = vpop.f32.mrb[0].mxu0
        %v6455 = vadd.f32 0.0, %v6454
        %v6456 = vpop.f32.mrb[0].mxu0
        %v6457 = vadd.f32 0.0, %v6456
        %6458 = vmatprep.mubr.f32.mxu0 0.0
        %6459 = vmatmul.mubr.f32.gmra.mrb[0].mxu0 %v6106
        %v6460 = vpop.f32.mrb[0].mxu0
        %v6461 = vadd.f32 0.0, %v6460
        %v6462 = vpop.f32.mrb[0].mxu0
        %v6463 = vadd.f32 0.0, %v6462
        %6464 = vmatprep.mubr.f32.mxu0 0.0
        %6465 = vmatmul.mubr.f32.gmra.mrb[0].mxu0 %v6109
        %v6466 = vpop.f32.mrb[0].mxu0
        %v6467 = vadd.f32 0.0, %v6466
        %v6468 = vpop.f32.mrb[0].mxu0
        %v6469 = vadd.f32 0.0, %v6468
        %6470 = vmatprep.mubr.f32.mxu0 0.0
        %6471 = vmatmul.mubr.f32.gmra.mrb[0].mxu0 %v6112
        %v6472 = vpop.f32.mrb[0].mxu0
        %v6473 = vadd.f32 0.0, %v6472
        %v6474 = vpop.f32.mrb[0].mxu0
        %v6475 = vadd.f32 0.0, %v6474
        %6476 = vmatprep.mubr.f32.mxu0 0.0
        %6477 = vmatmul.mubr.f32.gmra.mrb[0].mxu0 %v6115
        %v6478 = vpop.f32.mrb[0].mxu0
        %v6479 = vadd.f32 0.0, %v6478
        %v6480 = vpop.f32.mrb[0].mxu0
        %v6481 = vadd.f32 0.0, %v6480
        %6482 = vmatprep.mubr.f32.mxu0 0.0
        %6483 = vmatmul.mubr.f32.gmra.mrb[0].mxu0 %v6118
        %v6484 = vpop.f32.mrb[0].mxu0
        %v6485 = vadd.f32 0.0, %v6484
        %v6486 = vpop.f32.mrb[0].mxu0
        %v6487 = vadd.f32 0.0, %v6486
        %6488 = vmatprep.mubr.f32.mxu0 0.0
        %6489 = vmatmul.mubr.f32.gmra.mrb[0].mxu0 %v6121
        %v6490 = vpop.f32.mrb[0].mxu0
        %v6491 = vadd.f32 0.0, %v6490
        %v6492 = vpop.f32.mrb[0].mxu0
        %v6493 = vadd.f32 0.0, %v6492
        %6494 = vmatprep.mubr.f32.mxu0 0.0
        %6495 = vmatmul.mubr.f32.gmra.mrb[0].mxu0 %v6124
        %v6496 = vpop.f32.mrb[0].mxu0
        %v6497 = vadd.f32 0.0, %v6496
        %v6498 = vpop.f32.mrb[0].mxu0
        %v6499 = vadd.f32 0.0, %v6498
        %6500 = vmatprep.mubr.f32.mxu0 0.0
        %6501 = vmatmul.mubr.f32.gmra.mrb[0].mxu0 %v6127
        %v6502 = vpop.f32.mrb[0].mxu0
        %v6503 = vadd.f32 0.0, %v6502
        %v6504 = vpop.f32.mrb[0].mxu0
        %v6505 = vadd.f32 0.0, %v6504
        %6506 = vmatprep.mubr.f32.mxu0 0.0
        %6507 = vmatmul.mubr.f32.gmra.mrb[0].mxu0 %v6130
        %v6508 = vpop.f32.mrb[0].mxu0
        %v6509 = vadd.f32 0.0, %v6508
        %v6510 = vpop.f32.mrb[0].mxu0
        %v6511 = vadd.f32 0.0, %v6510
        %6512 = vmatprep.mubr.f32.mxu0 0.0
        %6513 = vmatmul.mubr.f32.gmra.mrb[0].mxu0 %v6133
        %v6514 = vpop.f32.mrb[0].mxu0
        %v6515 = vadd.f32 0.0, %v6514
        %v6516 = vpop.f32.mrb[0].mxu0
        %v6517 = vadd.f32 0.0, %v6516
        %6518 = vmatprep.mubr.f32.mxu0 0.0
        %6519 = vmatmul.mubr.f32.gmra.mrb[0].mxu0 %v6136
        %v6520 = vpop.f32.mrb[0].mxu0
        %v6521 = vadd.f32 0.0, %v6520
        %v6522 = vpop.f32.mrb[0].mxu0
        %v6523 = vadd.f32 0.0, %v6522
        %6524 = vmatprep.mubr.f32.mxu0 0.0
        %6525 = vmatmul.mubr.f32.gmra.mrb[0].mxu0 %v6139
        %v6526 = vpop.f32.mrb[0].mxu0
        %v6527 = vadd.f32 0.0, %v6526
        %v6528 = vpop.f32.mrb[0].mxu0
        %v6529 = vadd.f32 0.0, %v6528
        %6530 = vmatprep.mubr.f32.mxu0 0.0
        %6531 = vmatmul.mubr.f32.gmra.mrb[0].mxu0 %v6142
        %v6532 = vpop.f32.mrb[0].mxu0
        %v6533 = vadd.f32 0.0, %v6532
        %v6534 = vpop.f32.mrb[0].mxu0
        %v6535 = vadd.f32 0.0, %v6534
        %6536 = vmatprep.mubr.f32.mxu0 0.0
        %6537 = vmatmul.mubr.f32.gmra.mrb[0].mxu0 %v6145
        %v6538 = vpop.f32.mrb[0].mxu0
        %v6539 = vadd.f32 0.0, %v6538
        %v6540 = vpop.f32.mrb[0].mxu0
        %v6541 = vadd.f32 0.0, %v6540
        %6542 = vmatprep.mubr.f32.mxu0 0.0
        %6543 = vmatmul.mubr.f32.gmra.mrb[0].mxu0 %v6148
        %v6544 = vpop.f32.mrb[0].mxu0
        %v6545 = vadd.f32 0.0, %v6544
        %v6546 = vpop.f32.mrb[0].mxu0
        %v6547 = vadd.f32 0.0, %v6546
        %6548 = vmatprep.mubr.f32.mxu0 0.0
        %6549 = vmatmul.mubr.f32.gmra.mrb[0].mxu0 %v6151
        %v6550 = vpop.f32.mrb[0].mxu0
        %v6551 = vadd.f32 0.0, %v6550
        %v6552 = vpop.f32.mrb[0].mxu0
        %v6553 = vadd.f32 0.0, %v6552
        %6554 = vmatprep.mubr.f32.mxu0 0.0
        %6555 = vmatmul.mubr.f32.gmra.mrb[0].mxu0 %v6154
        %v6556 = vpop.f32.mrb[0].mxu0
        %v6557 = vadd.f32 0.0, %v6556
        %v6558 = vpop.f32.mrb[0].mxu0
        %v6559 = vadd.f32 0.0, %v6558
        %6560 = vmatprep.mubr.f32.mxu0 0.0
        %6561 = vmatmul.mubr.f32.gmra.mrb[0].mxu0 %v6157
        %v6562 = vpop.f32.mrb[0].mxu0
        %v6563 = vadd.f32 0.0, %v6562
        %v6564 = vpop.f32.mrb[0].mxu0
        %v6565 = vadd.f32 0.0, %v6564
        %6566 = vmatprep.mubr.f32.mxu0 0.0
        %6567 = vmatmul.mubr.f32.gmra.mrb[0].mxu0 %v6160
        %v6568 = vpop.f32.mrb[0].mxu0
        %v6569 = vadd.f32 0.0, %v6568
        %v6570 = vpop.f32.mrb[0].mxu0
        %v6571 = vadd.f32 0.0, %v6570
        %6572 = vmatprep.mubr.f32.mxu0 0.0
        %6573 = vmatmul.mubr.f32.gmra.mrb[0].mxu0 %v6163
        %v6574 = vpop.f32.mrb[0].mxu0
        %v6575 = vadd.f32 0.0, %v6574
        %v6576 = vpop.f32.mrb[0].mxu0
        %v6577 = vadd.f32 0.0, %v6576
        %6578 = vmatprep.mubr.f32.mxu0 0.0
        %6579 = vmatmul.mubr.f32.gmra.mrb[0].mxu0 %v6166
        %v6580 = vpop.f32.mrb[0].mxu0
        %v6581 = vadd.f32 0.0, %v6580
        %v6582 = vpop.f32.mrb[0].mxu0
        %v6583 = vadd.f32 0.0, %v6582
        %6584 = vmatprep.mubr.f32.mxu0 0.0
        %6585 = vmatmul.mubr.f32.gmra.mrb[0].mxu0 %v6169
        %v6586 = vpop.f32.mrb[0].mxu0
        %v6587 = vadd.f32 0.0, %v6586
        %v6588 = vpop.f32.mrb[0].mxu0
        %v6589 = vadd.f32 0.0, %v6588
        %6590 = vmatprep.mubr.f32.mxu0 0.0
        %6591 = vmatmul.mubr.f32.gmra.mrb[0].mxu0 %v6172
        %v6592 = vpop.f32.mrb[0].mxu0
        %v6593 = vadd.f32 0.0, %v6592
        %v6594 = vpop.f32.mrb[0].mxu0
        %v6595 = vadd.f32 0.0, %v6594
        %6596 = vmatprep.mubr.f32.mxu0 0.0
        %6597 = vmatmul.mubr.f32.gmra.mrb[0].mxu0 %v6175
        %v6598 = vpop.f32.mrb[0].mxu0
        %v6599 = vadd.f32 0.0, %v6598
        %v6600 = vpop.f32.mrb[0].mxu0
        %v6601 = vadd.f32 0.0, %v6600
        %6602 = vmatprep.mubr.f32.mxu0 0.0
        %6603 = vmatmul.mubr.f32.gmra.mrb[0].mxu0 %v6178
        %v6604 = vpop.f32.mrb[0].mxu0
        %v6605 = vadd.f32 0.0, %v6604
        %v6606 = vpop.f32.mrb[0].mxu0
        %v6607 = vadd.f32 0.0, %v6606
        %6608 = vmatprep.mubr.f32.mxu0 0.0
        %6609 = vmatmul.mubr.f32.gmra.mrb[0].mxu0 %v6181
        %v6610 = vpop.f32.mrb[0].mxu0
        %v6611 = vadd.f32 0.0, %v6610
        %v6612 = vpop.f32.mrb[0].mxu0
        %v6613 = vadd.f32 0.0, %v6612
        %6614 = vmatprep.mubr.f32.mxu0 0.0
        %6615 = vmatmul.mubr.f32.gmra.mrb[0].mxu0 %v6184
        %v6616 = vpop.f32.mrb[0].mxu0
        %v6617 = vadd.f32 0.0, %v6616
        %v6618 = vpop.f32.mrb[0].mxu0
        %v6619 = vadd.f32 0.0, %v6618
        %6620 = vmatprep.mubr.f32.mxu0 0.0
        %6621 = vmatmul.mubr.f32.gmra.mrb[0].mxu0 %v6187
        %v6622 = vpop.f32.mrb[0].mxu0
        %v6623 = vadd.f32 0.0, %v6622
        %v6624 = vpop.f32.mrb[0].mxu0
        %v6625 = vadd.f32 0.0, %v6624
        %6626 = vmatprep.mubr.f32.mxu0 0.0
        %6627 = vmatmul.mubr.f32.gmra.mrb[0].mxu0 %v6190
        %v6628 = vpop.f32.mrb[0].mxu0
        %v6629 = vadd.f32 0.0, %v6628
        %v6630 = vpop.f32.mrb[0].mxu0
        %v6631 = vadd.f32 0.0, %v6630
        %6632 = vmatprep.mubr.f32.mxu0 0.0
        %6633 = vmatmul.mubr.f32.gmra.mrb[0].mxu0 %v6193
        %v6634 = vpop.f32.mrb[0].mxu0
        %v6635 = vadd.f32 0.0, %v6634
        %v6636 = vpop.f32.mrb[0].mxu0
        %v6637 = vadd.f32 0.0, %v6636
        %6638 = vmatprep.mubr.f32.mxu0 0.0
        %6639 = vmatmul.mubr.f32.gmra.mrb[0].mxu0 %v6196
        %v6640 = vpop.f32.mrb[0].mxu0
        %v6641 = vadd.f32 0.0, %v6640
        %v6642 = vpop.f32.mrb[0].mxu0
        %v6643 = vadd.f32 0.0, %v6642
        %6644 = vmatprep.mubr.f32.mxu0 0.0
        %6645 = vmatmul.mubr.f32.gmra.mrb[0].mxu0 %v6199
        %v6646 = vpop.f32.mrb[0].mxu0
        %v6647 = vadd.f32 0.0, %v6646
        %v6648 = vpop.f32.mrb[0].mxu0
        %v6649 = vadd.f32 0.0, %v6648
        %6650 = vmatprep.mubr.f32.mxu0 0.0
        %6651 = vmatmul.mubr.f32.gmra.mrb[0].mxu0 %v6202
        %v6652 = vpop.f32.mrb[0].mxu0
        %v6653 = vadd.f32 0.0, %v6652
        %v6654 = vpop.f32.mrb[0].mxu0
        %v6655 = vadd.f32 0.0, %v6654
        %6656 = vmatprep.mubr.f32.mxu0 0.0
        %6657 = vmatmul.mubr.f32.gmra.mrb[0].mxu0 %v6205
        %v6658 = vpop.f32.mrb[0].mxu0
        %v6659 = vadd.f32 0.0, %v6658
        %v6660 = vpop.f32.mrb[0].mxu0
        %v6661 = vadd.f32 0.0, %v6660
        %6662 = vdwg.mxu0
        %v6663 = vld [vmem:[%s6] sm:$0x1]
        %v6664 = vld [vmem:[%s6 + $0x1] sm:$0x1]
        %v6665 = vld [vmem:[%s6 + $0x2] sm:$0x1]
        %v6666 = vld [vmem:[%s6 + $0x3] sm:$0x1]
        %v6667 = vld [vmem:[%s6 + $0x4] sm:$0x1]
        %v6668 = vld [vmem:[%s6 + $0x5] sm:$0x1]
        %v6669 = vld [vmem:[%s6 + $0x6] sm:$0x1]
        %v6670 = vadd.f32 %v1574, %v2223
        %v6671 = vadd.f32 %v1580, %v2229
        %v6672 = vadd.f32 %v1586, %v2235
        %v6673 = vadd.f32 %v1592, %v2241
        %v6674 = vadd.f32 %v1598, %v2247
        %v6675 = vadd.f32 %v1604, %v2253
        %v6676 = vadd.f32 %v1610, %v2259
        %v6677 = vadd.f32 %v1616, %v2265
        %v6678 = vadd.f32 %v1622, %v2271
        %v6679 = vadd.f32 %v1628, %v2277
        %v6680 = vadd.f32 %v1634, %v2283
        %v6681 = vadd.f32 %v1640, %v2289
        %v6682 = vadd.f32 %v1646, %v2295
        %v6683 = vadd.f32 %v1652, %v2301
        %v6684 = vadd.f32 %v1658, %v2307
        %v6685 = vadd.f32 %v1664, %v2313
        %v6686 = vadd.f32 %v1670, %v2319
        %v6687 = vadd.f32 %v1676, %v2325
        %v6688 = vadd.f32 %v1682, %v2331
        %v6689 = vadd.f32 %v1688, %v2337
        %v6690 = vadd.f32 %v1694, %v2343
        %v6691 = vadd.f32 %v1700, %v2349
        %v6692 = vadd.f32 %v1706, %v2355
        %v6693 = vadd.f32 %v1712, %v2361
        %v6694 = vadd.f32 %v1718, %v2367
        %v6695 = vadd.f32 %v1724, %v2373
        %v6696 = vadd.f32 %v1730, %v2379
        %v6697 = vadd.f32 %v1736, %v2385
        %v6698 = vadd.f32 %v1742, %v2391
        %v6699 = vadd.f32 %v1748, %v2397
        %v6700 = vadd.f32 %v1754, %v2403
        %v6701 = vadd.f32 %v1760, %v2409
        %v6702 = vadd.f32 %v1766, %v2415
        %v6703 = vadd.f32 %v1772, %v2421
        %v6704 = vadd.f32 %v1778, %v2427
        %v6705 = vadd.f32 %v1784, %v2433
        %v6706 = vadd.f32 %v1790, %v2439
        %v6707 = vadd.f32 %v1796, %v2445
        %v6708 = vadd.f32 %v1802, %v2451
        %v6709 = vadd.f32 %v1808, %v2457
        %v6710 = vadd.f32 %v1814, %v2463
        %v6711 = vadd.f32 %v1820, %v2469
        %v6712 = vadd.f32 %v1826, %v2475
        %v6713 = vadd.f32 %v1832, %v2481
        %v6714 = vadd.f32 %v1838, %v2487
        %v6715 = vadd.f32 %v1844, %v2493
        %v6716 = vadd.f32 %v1850, %v2499
        %v6717 = vadd.f32 %v1856, %v2505
        %v6718 = vadd.f32 %v1862, %v2511
        %v6719 = vadd.f32 %v1868, %v2517
        %v6720 = vadd.f32 %v1874, %v2523
        %v6721 = vadd.f32 %v1880, %v2529
        %v6722 = vadd.f32 %v1886, %v2535
        %v6723 = vadd.f32 %v1892, %v2541
        %v6724 = vadd.f32 %v1898, %v2547
        %v6725 = vadd.f32 %v1904, %v2553
        %v6726 = vadd.f32 %v1910, %v2559
        %v6727 = vadd.f32 %v1916, %v2565
        %v6728 = vadd.f32 %v1922, %v2571
        %v6729 = vadd.f32 %v1928, %v2577
        %v6730 = vadd.f32 %v1934, %v2583
        %v6731 = vadd.f32 %v1940, %v2589
        %v6732 = vadd.f32 %v1946, %v2595
        %v6733 = vadd.f32 %v1952, %v2601
        %v6734 = vadd.f32 %v6670, %v6283
        %v6735 = vadd.f32 %v6671, %v6289
        %v6736 = vadd.f32 %v6672, %v6295
        %v6737 = vadd.f32 %v6673, %v6301
        %v6738 = vadd.f32 %v6674, %v6307
        %v6739 = vadd.f32 %v6675, %v6313
        %v6740 = vadd.f32 %v6676, %v6319
        %v6741 = vadd.f32 %v6677, %v6325
        %v6742 = vadd.f32 %v6678, %v6331
        %v6743 = vadd.f32 %v6679, %v6337
        %v6744 = vadd.f32 %v6680, %v6343
        %v6745 = vadd.f32 %v6681, %v6349
        %v6746 = vadd.f32 %v6682, %v6355
        %v6747 = vadd.f32 %v6683, %v6361
        %v6748 = vadd.f32 %v6684, %v6367
        %v6749 = vadd.f32 %v6685, %v6373
        %v6750 = vadd.f32 %v6686, %v6379
        %v6751 = vadd.f32 %v6687, %v6385
        %v6752 = vadd.f32 %v6688, %v6391
        %v6753 = vadd.f32 %v6689, %v6397
        %v6754 = vadd.f32 %v6690, %v6403
        %v6755 = vadd.f32 %v6691, %v6409
        %v6756 = vadd.f32 %v6692, %v6415
        %v6757 = vadd.f32 %v6693, %v6421
        %v6758 = vadd.f32 %v6694, %v6427
        %v6759 = vadd.f32 %v6695, %v6433
        %v6760 = vadd.f32 %v6696, %v6439
        %v6761 = vadd.f32 %v6697, %v6445
        %v6762 = vadd.f32 %v6698, %v6451
        %v6763 = vadd.f32 %v6699, %v6457
        %v6764 = vadd.f32 %v6700, %v6463
        %v6765 = vadd.f32 %v6701, %v6469
        %v6766 = vadd.f32 %v6702, %v6475
        %v6767 = vadd.f32 %v6703, %v6481
        %v6768 = vadd.f32 %v6704, %v6487
        %v6769 = vadd.f32 %v6705, %v6493
        %v6770 = vadd.f32 %v6706, %v6499
        %v6771 = vadd.f32 %v6707, %v6505
        %v6772 = vadd.f32 %v6708, %v6511
        %v6773 = vadd.f32 %v6709, %v6517
        %v6774 = vadd.f32 %v6710, %v6523
        %v6775 = vadd.f32 %v6711, %v6529
        %v6776 = vadd.f32 %v6712, %v6535
        %v6777 = vadd.f32 %v6713, %v6541
        %v6778 = vadd.f32 %v6714, %v6547
        %v6779 = vadd.f32 %v6715, %v6553
        %v6780 = vadd.f32 %v6716, %v6559
        %v6781 = vadd.f32 %v6717, %v6565
        %v6782 = vadd.f32 %v6718, %v6571
        %v6783 = vadd.f32 %v6719, %v6577
        %v6784 = vadd.f32 %v6720, %v6583
        %v6785 = vadd.f32 %v6721, %v6589
        %v6786 = vadd.f32 %v6722, %v6595
        %v6787 = vadd.f32 %v6723, %v6601
        %v6788 = vadd.f32 %v6724, %v6607
        %v6789 = vadd.f32 %v6725, %v6613
        %v6790 = vadd.f32 %v6726, %v6619
        %v6791 = vadd.f32 %v6727, %v6625
        %v6792 = vadd.f32 %v6728, %v6631
        %v6793 = vadd.f32 %v6729, %v6637
        %v6794 = vadd.f32 %v6730, %v6643
        %v6795 = vadd.f32 %v6731, %v6649
        %v6796 = vadd.f32 %v6732, %v6655
        %v6797 = vadd.f32 %v6733, %v6661
        %v6798 = vlaneseq
        %v6799 = vshrl.u32 %v6798, 7
        %v6800 = vsub.s32 0, %v6799
        %v6801 = vrot.slane %v6663, %v6800
        %v6802 = vadd.f32 %v6734, %v6801
        %v6803 = vadd.f32 %v6735, %v6801
        %v6804 = vadd.f32 %v6736, %v6801
        %v6805 = vadd.f32 %v6737, %v6801
        %v6806 = vadd.f32 %v6738, %v6801
        %v6807 = vadd.f32 %v6739, %v6801
        %v6808 = vadd.f32 %v6740, %v6801
        %v6809 = vadd.f32 %v6741, %v6801
        %v6810 = vadd.f32 %v6742, %v6801
        %v6811 = vadd.f32 %v6743, %v6801
        %v6812 = vadd.f32 %v6744, %v6801
        %v6813 = vadd.f32 %v6745, %v6801
        %v6814 = vadd.f32 %v6746, %v6801
        %v6815 = vadd.f32 %v6747, %v6801
        %v6816 = vadd.f32 %v6748, %v6801
        %v6817 = vadd.f32 %v6749, %v6801
        %v6818 = vadd.f32 %v6750, %v6801
        %v6819 = vadd.f32 %v6751, %v6801
        %v6820 = vadd.f32 %v6752, %v6801
        %v6821 = vadd.f32 %v6753, %v6801
        %v6822 = vadd.f32 %v6754, %v6801
        %v6823 = vadd.f32 %v6755, %v6801
        %v6824 = vadd.f32 %v6756, %v6801
        %v6825 = vadd.f32 %v6757, %v6801
        %v6826 = vadd.f32 %v6758, %v6801
        %v6827 = vadd.f32 %v6759, %v6801
        %v6828 = vadd.f32 %v6760, %v6801
        %v6829 = vadd.f32 %v6761, %v6801
        %v6830 = vadd.f32 %v6762, %v6801
        %v6831 = vadd.f32 %v6763, %v6801
        %v6832 = vadd.f32 %v6764, %v6801
        %v6833 = vadd.f32 %v6765, %v6801
        %v6834 = vadd.f32 %v6766, %v6801
        %v6835 = vadd.f32 %v6767, %v6801
        %v6836 = vadd.f32 %v6768, %v6801
        %v6837 = vadd.f32 %v6769, %v6801
        %v6838 = vadd.f32 %v6770, %v6801
        %v6839 = vadd.f32 %v6771, %v6801
        %v6840 = vadd.f32 %v6772, %v6801
        %v6841 = vadd.f32 %v6773, %v6801
        %v6842 = vadd.f32 %v6774, %v6801
        %v6843 = vadd.f32 %v6775, %v6801
        %v6844 = vadd.f32 %v6776, %v6801
        %v6845 = vadd.f32 %v6777, %v6801
        %v6846 = vadd.f32 %v6778, %v6801
        %v6847 = vadd.f32 %v6779, %v6801
        %v6848 = vadd.f32 %v6780, %v6801
        %v6849 = vadd.f32 %v6781, %v6801
        %v6850 = vadd.f32 %v6782, %v6801
        %v6851 = vadd.f32 %v6783, %v6801
        %v6852 = vadd.f32 %v6784, %v6801
        %v6853 = vadd.f32 %v6785, %v6801
        %v6854 = vadd.f32 %v6786, %v6801
        %v6855 = vadd.f32 %v6787, %v6801
        %v6856 = vadd.f32 %v6788, %v6801
        %v6857 = vadd.f32 %v6789, %v6801
        %v6858 = vadd.f32 %v6790, %v6801
        %v6859 = vadd.f32 %v6791, %v6801
        %v6860 = vadd.f32 %v6792, %v6801
        %v6861 = vadd.f32 %v6793, %v6801
        %v6862 = vadd.f32 %v6794, %v6801
        %v6863 = vadd.f32 %v6795, %v6801
        %v6864 = vadd.f32 %v6796, %v6801
        %v6865 = vadd.f32 %v6797, %v6801
        %v6866 = vxor.u32 %v6802, 2147483648
        %v6867 = vxor.u32 %v6803, 2147483648
        %v6868 = vxor.u32 %v6804, 2147483648
        %v6869 = vxor.u32 %v6805, 2147483648
        %v6870 = vxor.u32 %v6806, 2147483648
        %v6871 = vxor.u32 %v6807, 2147483648
        %v6872 = vxor.u32 %v6808, 2147483648
        %v6873 = vxor.u32 %v6809, 2147483648
        %v6874 = vxor.u32 %v6810, 2147483648
        %v6875 = vxor.u32 %v6811, 2147483648
        %v6876 = vxor.u32 %v6812, 2147483648
        %v6877 = vxor.u32 %v6813, 2147483648
        %v6878 = vxor.u32 %v6814, 2147483648
        %v6879 = vxor.u32 %v6815, 2147483648
        %v6880 = vxor.u32 %v6816, 2147483648
        %v6881 = vxor.u32 %v6817, 2147483648
        %v6882 = vxor.u32 %v6818, 2147483648
        %v6883 = vxor.u32 %v6819, 2147483648
        %v6884 = vxor.u32 %v6820, 2147483648
        %v6885 = vxor.u32 %v6821, 2147483648
        %v6886 = vxor.u32 %v6822, 2147483648
        %v6887 = vxor.u32 %v6823, 2147483648
        %v6888 = vxor.u32 %v6824, 2147483648
        %v6889 = vxor.u32 %v6825, 2147483648
        %v6890 = vxor.u32 %v6826, 2147483648
        %v6891 = vxor.u32 %v6827, 2147483648
        %v6892 = vxor.u32 %v6828, 2147483648
        %v6893 = vxor.u32 %v6829, 2147483648
        %v6894 = vxor.u32 %v6830, 2147483648
        %v6895 = vxor.u32 %v6831, 2147483648
        %v6896 = vxor.u32 %v6832, 2147483648
        %v6897 = vxor.u32 %v6833, 2147483648
        %v6898 = vxor.u32 %v6834, 2147483648
        %v6899 = vxor.u32 %v6835, 2147483648
        %v6900 = vxor.u32 %v6836, 2147483648
        %v6901 = vxor.u32 %v6837, 2147483648
        %v6902 = vxor.u32 %v6838, 2147483648
        %v6903 = vxor.u32 %v6839, 2147483648
        %v6904 = vxor.u32 %v6840, 2147483648
        %v6905 = vxor.u32 %v6841, 2147483648
        %v6906 = vxor.u32 %v6842, 2147483648
        %v6907 = vxor.u32 %v6843, 2147483648
        %v6908 = vxor.u32 %v6844, 2147483648
        %v6909 = vxor.u32 %v6845, 2147483648
        %v6910 = vxor.u32 %v6846, 2147483648
        %v6911 = vxor.u32 %v6847, 2147483648
        %v6912 = vxor.u32 %v6848, 2147483648
        %v6913 = vxor.u32 %v6849, 2147483648
        %v6914 = vxor.u32 %v6850, 2147483648
        %v6915 = vxor.u32 %v6851, 2147483648
        %v6916 = vxor.u32 %v6852, 2147483648
        %v6917 = vxor.u32 %v6853, 2147483648
        %v6918 = vxor.u32 %v6854, 2147483648
        %v6919 = vxor.u32 %v6855, 2147483648
        %v6920 = vxor.u32 %v6856, 2147483648
        %v6921 = vxor.u32 %v6857, 2147483648
        %v6922 = vxor.u32 %v6858, 2147483648
        %v6923 = vxor.u32 %v6859, 2147483648
        %v6924 = vxor.u32 %v6860, 2147483648
        %v6925 = vxor.u32 %v6861, 2147483648
        %v6926 = vxor.u32 %v6862, 2147483648
        %v6927 = vxor.u32 %v6863, 2147483648
        %v6928 = vxor.u32 %v6864, 2147483648
        %v6929 = vxor.u32 %v6865, 2147483648
        %v6930 = vmul.f32 %v6866, 1.442695
        %v6931 = vpow.pop %v6930
        %v6932 = vmul.f32 %v6867, 1.442695
        %v6933 = vpow.pop %v6932
        %v6934 = vmul.f32 %v6868, 1.442695
        %v6935 = vpow.pop %v6934
        %v6936 = vmul.f32 %v6869, 1.442695
        %v6937 = vpow.pop %v6936
        %v6938 = vmul.f32 %v6870, 1.442695
        %v6939 = vpow.pop %v6938
        %v6940 = vmul.f32 %v6871, 1.442695
        %v6941 = vpow.pop %v6940
        %v6942 = vmul.f32 %v6872, 1.442695
        %v6943 = vpow.pop %v6942
        %v6944 = vmul.f32 %v6873, 1.442695
        %v6945 = vpow.pop %v6944
        %v6946 = vmul.f32 %v6874, 1.442695
        %v6947 = vpow.pop %v6946
        %v6948 = vmul.f32 %v6875, 1.442695
        %v6949 = vpow.pop %v6948
        %v6950 = vmul.f32 %v6876, 1.442695
        %v6951 = vpow.pop %v6950
        %v6952 = vmul.f32 %v6877, 1.442695
        %v6953 = vpow.pop %v6952
        %v6954 = vmul.f32 %v6878, 1.442695
        %v6955 = vpow.pop %v6954
        %v6956 = vmul.f32 %v6879, 1.442695
        %v6957 = vpow.pop %v6956
        %v6958 = vmul.f32 %v6880, 1.442695
        %v6959 = vpow.pop %v6958
        %v6960 = vmul.f32 %v6881, 1.442695
        %v6961 = vpow.pop %v6960
        %v6962 = vmul.f32 %v6882, 1.442695
        %v6963 = vpow.pop %v6962
        %v6964 = vmul.f32 %v6883, 1.442695
        %v6965 = vpow.pop %v6964
        %v6966 = vmul.f32 %v6884, 1.442695
        %v6967 = vpow.pop %v6966
        %v6968 = vmul.f32 %v6885, 1.442695
        %v6969 = vpow.pop %v6968
        %v6970 = vmul.f32 %v6886, 1.442695
        %v6971 = vpow.pop %v6970
        %v6972 = vmul.f32 %v6887, 1.442695
        %v6973 = vpow.pop %v6972
        %v6974 = vmul.f32 %v6888, 1.442695
        %v6975 = vpow.pop %v6974
        %v6976 = vmul.f32 %v6889, 1.442695
        %v6977 = vpow.pop %v6976
        %v6978 = vmul.f32 %v6890, 1.442695
        %v6979 = vpow.pop %v6978
        %v6980 = vmul.f32 %v6891, 1.442695
        %v6981 = vpow.pop %v6980
        %v6982 = vmul.f32 %v6892, 1.442695
        %v6983 = vpow.pop %v6982
        %v6984 = vmul.f32 %v6893, 1.442695
        %v6985 = vpow.pop %v6984
        %v6986 = vmul.f32 %v6894, 1.442695
        %v6987 = vpow.pop %v6986
        %v6988 = vmul.f32 %v6895, 1.442695
        %v6989 = vpow.pop %v6988
        %v6990 = vmul.f32 %v6896, 1.442695
        %v6991 = vpow.pop %v6990
        %v6992 = vmul.f32 %v6897, 1.442695
        %v6993 = vpow.pop %v6992
        %v6994 = vmul.f32 %v6898, 1.442695
        %v6995 = vpow.pop %v6994
        %v6996 = vmul.f32 %v6899, 1.442695
        %v6997 = vpow.pop %v6996
        %v6998 = vmul.f32 %v6900, 1.442695
        %v6999 = vpow.pop %v6998
        %v7000 = vmul.f32 %v6901, 1.442695
        %v7001 = vpow.pop %v7000
        %v7002 = vmul.f32 %v6902, 1.442695
        %v7003 = vpow.pop %v7002
        %v7004 = vmul.f32 %v6903, 1.442695
        %v7005 = vpow.pop %v7004
        %v7006 = vmul.f32 %v6904, 1.442695
        %v7007 = vpow.pop %v7006
        %v7008 = vmul.f32 %v6905, 1.442695
        %v7009 = vpow.pop %v7008
        %v7010 = vmul.f32 %v6906, 1.442695
        %v7011 = vpow.pop %v7010
        %v7012 = vmul.f32 %v6907, 1.442695
        %v7013 = vpow.pop %v7012
        %v7014 = vmul.f32 %v6908, 1.442695
        %v7015 = vpow.pop %v7014
        %v7016 = vmul.f32 %v6909, 1.442695
        %v7017 = vpow.pop %v7016
        %v7018 = vmul.f32 %v6910, 1.442695
        %v7019 = vpow.pop %v7018
        %v7020 = vmul.f32 %v6911, 1.442695
        %v7021 = vpow.pop %v7020
        %v7022 = vmul.f32 %v6912, 1.442695
        %v7023 = vpow.pop %v7022
        %v7024 = vmul.f32 %v6913, 1.442695
        %v7025 = vpow.pop %v7024
        %v7026 = vmul.f32 %v6914, 1.442695
        %v7027 = vpow.pop %v7026
        %v7028 = vmul.f32 %v6915, 1.442695
        %v7029 = vpow.pop %v7028
        %v7030 = vmul.f32 %v6916, 1.442695
        %v7031 = vpow.pop %v7030
        %v7032 = vmul.f32 %v6917, 1.442695
        %v7033 = vpow.pop %v7032
        %v7034 = vmul.f32 %v6918, 1.442695
        %v7035 = vpow.pop %v7034
        %v7036 = vmul.f32 %v6919, 1.442695
        %v7037 = vpow.pop %v7036
        %v7038 = vmul.f32 %v6920, 1.442695
        %v7039 = vpow.pop %v7038
        %v7040 = vmul.f32 %v6921, 1.442695
        %v7041 = vpow.pop %v7040
        %v7042 = vmul.f32 %v6922, 1.442695
        %v7043 = vpow.pop %v7042
        %v7044 = vmul.f32 %v6923, 1.442695
        %v7045 = vpow.pop %v7044
        %v7046 = vmul.f32 %v6924, 1.442695
        %v7047 = vpow.pop %v7046
        %v7048 = vmul.f32 %v6925, 1.442695
        %v7049 = vpow.pop %v7048
        %v7050 = vmul.f32 %v6926, 1.442695
        %v7051 = vpow.pop %v7050
        %v7052 = vmul.f32 %v6927, 1.442695
        %v7053 = vpow.pop %v7052
        %v7054 = vmul.f32 %v6928, 1.442695
        %v7055 = vpow.pop %v7054
        %v7056 = vmul.f32 %v6929, 1.442695
        %v7057 = vpow.pop %v7056
        %v7058 = vadd.f32 %v6931, 1.0
        %v7059 = vadd.f32 %v6933, 1.0
        %v7060 = vadd.f32 %v6935, 1.0
        %v7061 = vadd.f32 %v6937, 1.0
        %v7062 = vadd.f32 %v6939, 1.0
        %v7063 = vadd.f32 %v6941, 1.0
        %v7064 = vadd.f32 %v6943, 1.0
        %v7065 = vadd.f32 %v6945, 1.0
        %v7066 = vadd.f32 %v6947, 1.0
        %v7067 = vadd.f32 %v6949, 1.0
        %v7068 = vadd.f32 %v6951, 1.0
        %v7069 = vadd.f32 %v6953, 1.0
        %v7070 = vadd.f32 %v6955, 1.0
        %v7071 = vadd.f32 %v6957, 1.0
        %v7072 = vadd.f32 %v6959, 1.0
        %v7073 = vadd.f32 %v6961, 1.0
        %v7074 = vadd.f32 %v6963, 1.0
        %v7075 = vadd.f32 %v6965, 1.0
        %v7076 = vadd.f32 %v6967, 1.0
        %v7077 = vadd.f32 %v6969, 1.0
        %v7078 = vadd.f32 %v6971, 1.0
        %v7079 = vadd.f32 %v6973, 1.0
        %v7080 = vadd.f32 %v6975, 1.0
        %v7081 = vadd.f32 %v6977, 1.0
        %v7082 = vadd.f32 %v6979, 1.0
        %v7083 = vadd.f32 %v6981, 1.0
        %v7084 = vadd.f32 %v6983, 1.0
        %v7085 = vadd.f32 %v6985, 1.0
        %v7086 = vadd.f32 %v6987, 1.0
        %v7087 = vadd.f32 %v6989, 1.0
        %v7088 = vadd.f32 %v6991, 1.0
        %v7089 = vadd.f32 %v6993, 1.0
        %v7090 = vadd.f32 %v6995, 1.0
        %v7091 = vadd.f32 %v6997, 1.0
        %v7092 = vadd.f32 %v6999, 1.0
        %v7093 = vadd.f32 %v7001, 1.0
        %v7094 = vadd.f32 %v7003, 1.0
        %v7095 = vadd.f32 %v7005, 1.0
        %v7096 = vadd.f32 %v7007, 1.0
        %v7097 = vadd.f32 %v7009, 1.0
        %v7098 = vadd.f32 %v7011, 1.0
        %v7099 = vadd.f32 %v7013, 1.0
        %v7100 = vadd.f32 %v7015, 1.0
        %v7101 = vadd.f32 %v7017, 1.0
        %v7102 = vadd.f32 %v7019, 1.0
        %v7103 = vadd.f32 %v7021, 1.0
        %v7104 = vadd.f32 %v7023, 1.0
        %v7105 = vadd.f32 %v7025, 1.0
        %v7106 = vadd.f32 %v7027, 1.0
        %v7107 = vadd.f32 %v7029, 1.0
        %v7108 = vadd.f32 %v7031, 1.0
        %v7109 = vadd.f32 %v7033, 1.0
        %v7110 = vadd.f32 %v7035, 1.0
        %v7111 = vadd.f32 %v7037, 1.0
        %v7112 = vadd.f32 %v7039, 1.0
        %v7113 = vadd.f32 %v7041, 1.0
        %v7114 = vadd.f32 %v7043, 1.0
        %v7115 = vadd.f32 %v7045, 1.0
        %v7116 = vadd.f32 %v7047, 1.0
        %v7117 = vadd.f32 %v7049, 1.0
        %v7118 = vadd.f32 %v7051, 1.0
        %v7119 = vadd.f32 %v7053, 1.0
        %v7120 = vadd.f32 %v7055, 1.0
        %v7121 = vadd.f32 %v7057, 1.0
        %v7122 = vrcp.pop %v7058
        %v7123 = vmul.f32 1.0, %v7122
        %v7124 = vrcp.pop %v7059
        %v7125 = vmul.f32 1.0, %v7124
        %v7126 = vrcp.pop %v7060
        %v7127 = vmul.f32 1.0, %v7126
        %v7128 = vrcp.pop %v7061
        %v7129 = vmul.f32 1.0, %v7128
        %v7130 = vrcp.pop %v7062
        %v7131 = vmul.f32 1.0, %v7130
        %v7132 = vrcp.pop %v7063
        %v7133 = vmul.f32 1.0, %v7132
        %v7134 = vrcp.pop %v7064
        %v7135 = vmul.f32 1.0, %v7134
        %v7136 = vrcp.pop %v7065
        %v7137 = vmul.f32 1.0, %v7136
        %v7138 = vrcp.pop %v7066
        %v7139 = vmul.f32 1.0, %v7138
        %v7140 = vrcp.pop %v7067
        %v7141 = vmul.f32 1.0, %v7140
        %v7142 = vrcp.pop %v7068
        %v7143 = vmul.f32 1.0, %v7142
        %v7144 = vrcp.pop %v7069
        %v7145 = vmul.f32 1.0, %v7144
        %v7146 = vrcp.pop %v7070
        %v7147 = vmul.f32 1.0, %v7146
        %v7148 = vrcp.pop %v7071
        %v7149 = vmul.f32 1.0, %v7148
        %v7150 = vrcp.pop %v7072
        %v7151 = vmul.f32 1.0, %v7150
        %v7152 = vrcp.pop %v7073
        %v7153 = vmul.f32 1.0, %v7152
        %v7154 = vrcp.pop %v7074
        %v7155 = vmul.f32 1.0, %v7154
        %v7156 = vrcp.pop %v7075
        %v7157 = vmul.f32 1.0, %v7156
        %v7158 = vrcp.pop %v7076
        %v7159 = vmul.f32 1.0, %v7158
        %v7160 = vrcp.pop %v7077
        %v7161 = vmul.f32 1.0, %v7160
        %v7162 = vrcp.pop %v7078
        %v7163 = vmul.f32 1.0, %v7162
        %v7164 = vrcp.pop %v7079
        %v7165 = vmul.f32 1.0, %v7164
        %v7166 = vrcp.pop %v7080
        %v7167 = vmul.f32 1.0, %v7166
        %v7168 = vrcp.pop %v7081
        %v7169 = vmul.f32 1.0, %v7168
        %v7170 = vrcp.pop %v7082
        %v7171 = vmul.f32 1.0, %v7170
        %v7172 = vrcp.pop %v7083
        %v7173 = vmul.f32 1.0, %v7172
        %v7174 = vrcp.pop %v7084
        %v7175 = vmul.f32 1.0, %v7174
        %v7176 = vrcp.pop %v7085
        %v7177 = vmul.f32 1.0, %v7176
        %v7178 = vrcp.pop %v7086
        %v7179 = vmul.f32 1.0, %v7178
        %v7180 = vrcp.pop %v7087
        %v7181 = vmul.f32 1.0, %v7180
        %v7182 = vrcp.pop %v7088
        %v7183 = vmul.f32 1.0, %v7182
        %v7184 = vrcp.pop %v7089
        %v7185 = vmul.f32 1.0, %v7184
        %v7186 = vrcp.pop %v7090
        %v7187 = vmul.f32 1.0, %v7186
        %v7188 = vrcp.pop %v7091
        %v7189 = vmul.f32 1.0, %v7188
        %v7190 = vrcp.pop %v7092
        %v7191 = vmul.f32 1.0, %v7190
        %v7192 = vrcp.pop %v7093
        %v7193 = vmul.f32 1.0, %v7192
        %v7194 = vrcp.pop %v7094
        %v7195 = vmul.f32 1.0, %v7194
        %v7196 = vrcp.pop %v7095
        %v7197 = vmul.f32 1.0, %v7196
        %v7198 = vrcp.pop %v7096
        %v7199 = vmul.f32 1.0, %v7198
        %v7200 = vrcp.pop %v7097
        %v7201 = vmul.f32 1.0, %v7200
        %v7202 = vrcp.pop %v7098
        %v7203 = vmul.f32 1.0, %v7202
        %v7204 = vrcp.pop %v7099
        %v7205 = vmul.f32 1.0, %v7204
        %v7206 = vrcp.pop %v7100
        %v7207 = vmul.f32 1.0, %v7206
        %v7208 = vrcp.pop %v7101
        %v7209 = vmul.f32 1.0, %v7208
        %v7210 = vrcp.pop %v7102
        %v7211 = vmul.f32 1.0, %v7210
        %v7212 = vrcp.pop %v7103
        %v7213 = vmul.f32 1.0, %v7212
        %v7214 = vrcp.pop %v7104
        %v7215 = vmul.f32 1.0, %v7214
        %v7216 = vrcp.pop %v7105
        %v7217 = vmul.f32 1.0, %v7216
        %v7218 = vrcp.pop %v7106
        %v7219 = vmul.f32 1.0, %v7218
        %v7220 = vrcp.pop %v7107
        %v7221 = vmul.f32 1.0, %v7220
        %v7222 = vrcp.pop %v7108
        %v7223 = vmul.f32 1.0, %v7222
        %v7224 = vrcp.pop %v7109
        %v7225 = vmul.f32 1.0, %v7224
        %v7226 = vrcp.pop %v7110
        %v7227 = vmul.f32 1.0, %v7226
        %v7228 = vrcp.pop %v7111
        %v7229 = vmul.f32 1.0, %v7228
        %v7230 = vrcp.pop %v7112
        %v7231 = vmul.f32 1.0, %v7230
        %v7232 = vrcp.pop %v7113
        %v7233 = vmul.f32 1.0, %v7232
        %v7234 = vrcp.pop %v7114
        %v7235 = vmul.f32 1.0, %v7234
        %v7236 = vrcp.pop %v7115
        %v7237 = vmul.f32 1.0, %v7236
        %v7238 = vrcp.pop %v7116
        %v7239 = vmul.f32 1.0, %v7238
        %v7240 = vrcp.pop %v7117
        %v7241 = vmul.f32 1.0, %v7240
        %v7242 = vrcp.pop %v7118
        %v7243 = vmul.f32 1.0, %v7242
        %v7244 = vrcp.pop %v7119
        %v7245 = vmul.f32 1.0, %v7244
        %v7246 = vrcp.pop %v7120
        %v7247 = vmul.f32 1.0, %v7246
        %v7248 = vrcp.pop %v7121
        %v7249 = vmul.f32 1.0, %v7248
        %v7250 = vmul.f32 %v6802, %v7123
        %v7251 = vmul.f32 %v6803, %v7125
        %v7252 = vmul.f32 %v6804, %v7127
        %v7253 = vmul.f32 %v6805, %v7129
        %v7254 = vmul.f32 %v6806, %v7131
        %v7255 = vmul.f32 %v6807, %v7133
        %v7256 = vmul.f32 %v6808, %v7135
        %v7257 = vmul.f32 %v6809, %v7137
        %v7258 = vmul.f32 %v6810, %v7139
        %v7259 = vmul.f32 %v6811, %v7141
        %v7260 = vmul.f32 %v6812, %v7143
        %v7261 = vmul.f32 %v6813, %v7145
        %v7262 = vmul.f32 %v6814, %v7147
        %v7263 = vmul.f32 %v6815, %v7149
        %v7264 = vmul.f32 %v6816, %v7151
        %v7265 = vmul.f32 %v6817, %v7153
        %v7266 = vmul.f32 %v6818, %v7155
        %v7267 = vmul.f32 %v6819, %v7157
        %v7268 = vmul.f32 %v6820, %v7159
        %v7269 = vmul.f32 %v6821, %v7161
        %v7270 = vmul.f32 %v6822, %v7163
        %v7271 = vmul.f32 %v6823, %v7165
        %v7272 = vmul.f32 %v6824, %v7167
        %v7273 = vmul.f32 %v6825, %v7169
        %v7274 = vmul.f32 %v6826, %v7171
        %v7275 = vmul.f32 %v6827, %v7173
        %v7276 = vmul.f32 %v6828, %v7175
        %v7277 = vmul.f32 %v6829, %v7177
        %v7278 = vmul.f32 %v6830, %v7179
        %v7279 = vmul.f32 %v6831, %v7181
        %v7280 = vmul.f32 %v6832, %v7183
        %v7281 = vmul.f32 %v6833, %v7185
        %v7282 = vmul.f32 %v6834, %v7187
        %v7283 = vmul.f32 %v6835, %v7189
        %v7284 = vmul.f32 %v6836, %v7191
        %v7285 = vmul.f32 %v6837, %v7193
        %v7286 = vmul.f32 %v6838, %v7195
        %v7287 = vmul.f32 %v6839, %v7197
        %v7288 = vmul.f32 %v6840, %v7199
        %v7289 = vmul.f32 %v6841, %v7201
        %v7290 = vmul.f32 %v6842, %v7203
        %v7291 = vmul.f32 %v6843, %v7205
        %v7292 = vmul.f32 %v6844, %v7207
        %v7293 = vmul.f32 %v6845, %v7209
        %v7294 = vmul.f32 %v6846, %v7211
        %v7295 = vmul.f32 %v6847, %v7213
        %v7296 = vmul.f32 %v6848, %v7215
        %v7297 = vmul.f32 %v6849, %v7217
        %v7298 = vmul.f32 %v6850, %v7219
        %v7299 = vmul.f32 %v6851, %v7221
        %v7300 = vmul.f32 %v6852, %v7223
        %v7301 = vmul.f32 %v6853, %v7225
        %v7302 = vmul.f32 %v6854, %v7227
        %v7303 = vmul.f32 %v6855, %v7229
        %v7304 = vmul.f32 %v6856, %v7231
        %v7305 = vmul.f32 %v6857, %v7233
        %v7306 = vmul.f32 %v6858, %v7235
        %v7307 = vmul.f32 %v6859, %v7237
        %v7308 = vmul.f32 %v6860, %v7239
        %v7309 = vmul.f32 %v6861, %v7241
        %v7310 = vmul.f32 %v6862, %v7243
        %v7311 = vmul.f32 %v6863, %v7245
        %v7312 = vmul.f32 %v6864, %v7247
        %v7313 = vmul.f32 %v6865, %v7249
        %v7314 = vld [vmem:[%s5] sm:$0xff]
        %v7315 = vld [vmem:[%s5 + $0x8] sm:$0xff]
        %v7316 = vld [vmem:[%s5 + $0x10] sm:$0xff]
        %v7317 = vld [vmem:[%s5 + $0x18] sm:$0xff]
        %v7318 = vld [vmem:[%s5 + $0x20] sm:$0xff]
        %v7319 = vld [vmem:[%s5 + $0x28] sm:$0xff]
        %v7320 = vld [vmem:[%s5 + $0x30] sm:$0xff]
        %v7321 = vld [vmem:[%s5 + $0x38] sm:$0xff]
        %v7322 = vld [vmem:[%s5 + $0x40] sm:$0xff]
        %v7323 = vld [vmem:[%s5 + $0x48] sm:$0xff]
        %v7324 = vld [vmem:[%s5 + $0x50] sm:$0xff]
        %v7325 = vld [vmem:[%s5 + $0x58] sm:$0xff]
        %v7326 = vld [vmem:[%s5 + $0x60] sm:$0xff]
        %v7327 = vld [vmem:[%s5 + $0x68] sm:$0xff]
        %v7328 = vld [vmem:[%s5 + $0x70] sm:$0xff]
        %v7329 = vld [vmem:[%s5 + $0x78] sm:$0xff]
        %v7330 = vlaneseq
        %v7331 = vshrl.u32 %v7330, 7
        %v7332 = vsub.s32 0, %v7331
        %v7333 = vrot.slane %v6664, %v7332
        %7334 = vmatprep.subr.mxu0 0.0
        %7335 = vmatpush1.msra.mxu0 %v7314
        %7336 = vmatprep.subr.mxu0 0.0
        %7337 = vmatpush1.msra.mxu0 %v7315
        %7338 = vmatprep.subr.mxu0 0.0
        %7339 = vmatpush1.msra.mxu0 %v7316
        %7340 = vmatprep.subr.mxu0 0.0
        %7341 = vmatpush1.msra.mxu0 %v7317
        %7342 = vmatprep.subr.mxu0 0.0
        %7343 = vmatpush1.msra.mxu0 %v7318
        %7344 = vmatprep.subr.mxu0 0.0
        %7345 = vmatpush1.msra.mxu0 %v7319
        %7346 = vmatprep.subr.mxu0 0.0
        %7347 = vmatpush1.msra.mxu0 %v7320
        %7348 = vmatprep.subr.mxu0 0.0
        %7349 = vmatpush1.msra.mxu0 %v7321
        %7350 = vmatprep.subr.mxu0 0.0
        %7351 = vmatpush1.msra.mxu0 %v7322
        %7352 = vmatprep.subr.mxu0 0.0
        %7353 = vmatpush1.msra.mxu0 %v7323
        %7354 = vmatprep.subr.mxu0 0.0
        %7355 = vmatpush1.msra.mxu0 %v7324
        %7356 = vmatprep.subr.mxu0 0.0
        %7357 = vmatpush1.msra.mxu0 %v7325
        %7358 = vmatprep.subr.mxu0 0.0
        %7359 = vmatpush1.msra.mxu0 %v7326
        %7360 = vmatprep.subr.mxu0 0.0
        %7361 = vmatpush1.msra.mxu0 %v7327
        %7362 = vmatprep.subr.mxu0 0.0
        %7363 = vmatpush1.msra.mxu0 %v7328
        %7364 = vmatprep.subr.mxu0 0.0
        %7365 = vmatpush1.msra.mxu0 %v7329
        %7366 = vmatprep.subr.mxu0 0.0
        %7367 = vmatpush1.msra.mxu0 0.0
        %7368 = vmatprep.subr.mxu0 0.0
        %7369 = vmatpush1.msra.mxu0 0.0
        %7370 = vmatprep.subr.mxu0 0.0
        %7371 = vmatpush1.msra.mxu0 0.0
        %7372 = vmatprep.subr.mxu0 0.0
        %7373 = vmatpush1.msra.mxu0 0.0
        %7374 = vmatprep.subr.mxu0 0.0
        %7375 = vmatpush1.msra.mxu0 0.0
        %7376 = vmatprep.subr.mxu0 0.0
        %7377 = vmatpush1.msra.mxu0 0.0
        %7378 = vmatprep.subr.mxu0 0.0
        %7379 = vmatpush1.msra.mxu0 0.0
        %7380 = vmatprep.subr.mxu0 0.0
        %7381 = vmatpush1.msra.mxu0 0.0
        %7382 = vmatprep.subr.mxu0 0.0
        %7383 = vmatpush1.msra.mxu0 0.0
        %7384 = vmatprep.subr.mxu0 0.0
        %7385 = vmatpush1.msra.mxu0 0.0
        %7386 = vmatprep.subr.mxu0 0.0
        %7387 = vmatpush1.msra.mxu0 0.0
        %7388 = vmatprep.subr.mxu0 0.0
        %7389 = vmatpush1.msra.mxu0 0.0
        %7390 = vmatprep.subr.mxu0 0.0
        %7391 = vmatpush1.msra.mxu0 0.0
        %7392 = vmatprep.subr.mxu0 0.0
        %7393 = vmatpush1.msra.mxu0 0.0
        %7394 = vmatprep.subr.mxu0 0.0
        %7395 = vmatpush1.msra.mxu0 0.0
        %7396 = vmatprep.subr.mxu0 0.0
        %7397 = vmatpush1.msra.mxu0 0.0
        %7398 = vmatprep.mubr.f32.mxu0 0.0
        %7399 = vmatmul.mubr.f32.gmra.mrb[0].mxu0 %v7250
        %v7400 = vpop.f32.mrb[0].mxu0
        %v7401 = vadd.f32 %v7333, %v7400
        %v7402 = vpop.f32.mrb[0].mxu0
        %7403 = vmatprep.mubr.f32.mxu0 0.0
        %7404 = vmatmul.mubr.f32.gmra.mrb[0].mxu0 %v7251
        %v7405 = vpop.f32.mrb[0].mxu0
        %v7406 = vadd.f32 %v7333, %v7405
        %v7407 = vpop.f32.mrb[0].mxu0
        %7408 = vmatprep.mubr.f32.mxu0 0.0
        %7409 = vmatmul.mubr.f32.gmra.mrb[0].mxu0 %v7252
        %v7410 = vpop.f32.mrb[0].mxu0
        %v7411 = vadd.f32 %v7333, %v7410
        %v7412 = vpop.f32.mrb[0].mxu0
        %7413 = vmatprep.mubr.f32.mxu0 0.0
        %7414 = vmatmul.mubr.f32.gmra.mrb[0].mxu0 %v7253
        %v7415 = vpop.f32.mrb[0].mxu0
        %v7416 = vadd.f32 %v7333, %v7415
        %v7417 = vpop.f32.mrb[0].mxu0
        %7418 = vmatprep.mubr.f32.mxu0 0.0
        %7419 = vmatmul.mubr.f32.gmra.mrb[0].mxu0 %v7254
        %v7420 = vpop.f32.mrb[0].mxu0
        %v7421 = vadd.f32 %v7333, %v7420
        %v7422 = vpop.f32.mrb[0].mxu0
        %7423 = vmatprep.mubr.f32.mxu0 0.0
        %7424 = vmatmul.mubr.f32.gmra.mrb[0].mxu0 %v7255
        %v7425 = vpop.f32.mrb[0].mxu0
        %v7426 = vadd.f32 %v7333, %v7425
        %v7427 = vpop.f32.mrb[0].mxu0
        %7428 = vmatprep.mubr.f32.mxu0 0.0
        %7429 = vmatmul.mubr.f32.gmra.mrb[0].mxu0 %v7256
        %v7430 = vpop.f32.mrb[0].mxu0
        %v7431 = vadd.f32 %v7333, %v7430
        %v7432 = vpop.f32.mrb[0].mxu0
        %7433 = vmatprep.mubr.f32.mxu0 0.0
        %7434 = vmatmul.mubr.f32.gmra.mrb[0].mxu0 %v7257
        %v7435 = vpop.f32.mrb[0].mxu0
        %v7436 = vadd.f32 %v7333, %v7435
        %v7437 = vpop.f32.mrb[0].mxu0
        %7438 = vmatprep.mubr.f32.mxu0 0.0
        %7439 = vmatmul.mubr.f32.gmra.mrb[0].mxu0 %v7258
        %v7440 = vpop.f32.mrb[0].mxu0
        %v7441 = vadd.f32 %v7333, %v7440
        %v7442 = vpop.f32.mrb[0].mxu0
        %7443 = vmatprep.mubr.f32.mxu0 0.0
        %7444 = vmatmul.mubr.f32.gmra.mrb[0].mxu0 %v7259
        %v7445 = vpop.f32.mrb[0].mxu0
        %v7446 = vadd.f32 %v7333, %v7445
        %v7447 = vpop.f32.mrb[0].mxu0
        %7448 = vmatprep.mubr.f32.mxu0 0.0
        %7449 = vmatmul.mubr.f32.gmra.mrb[0].mxu0 %v7260
        %v7450 = vpop.f32.mrb[0].mxu0
        %v7451 = vadd.f32 %v7333, %v7450
        %v7452 = vpop.f32.mrb[0].mxu0
        %7453 = vmatprep.mubr.f32.mxu0 0.0
        %7454 = vmatmul.mubr.f32.gmra.mrb[0].mxu0 %v7261
        %v7455 = vpop.f32.mrb[0].mxu0
        %v7456 = vadd.f32 %v7333, %v7455
        %v7457 = vpop.f32.mrb[0].mxu0
        %7458 = vmatprep.mubr.f32.mxu0 0.0
        %7459 = vmatmul.mubr.f32.gmra.mrb[0].mxu0 %v7262
        %v7460 = vpop.f32.mrb[0].mxu0
        %v7461 = vadd.f32 %v7333, %v7460
        %v7462 = vpop.f32.mrb[0].mxu0
        %7463 = vmatprep.mubr.f32.mxu0 0.0
        %7464 = vmatmul.mubr.f32.gmra.mrb[0].mxu0 %v7263
        %v7465 = vpop.f32.mrb[0].mxu0
        %v7466 = vadd.f32 %v7333, %v7465
        %v7467 = vpop.f32.mrb[0].mxu0
        %7468 = vmatprep.mubr.f32.mxu0 0.0
        %7469 = vmatmul.mubr.f32.gmra.mrb[0].mxu0 %v7264
        %v7470 = vpop.f32.mrb[0].mxu0
        %v7471 = vadd.f32 %v7333, %v7470
        %v7472 = vpop.f32.mrb[0].mxu0
        %7473 = vmatprep.mubr.f32.mxu0 0.0
        %7474 = vmatmul.mubr.f32.gmra.mrb[0].mxu0 %v7265
        %v7475 = vpop.f32.mrb[0].mxu0
        %v7476 = vadd.f32 %v7333, %v7475
        %v7477 = vpop.f32.mrb[0].mxu0
        %7478 = vmatprep.mubr.f32.mxu0 0.0
        %7479 = vmatmul.mubr.f32.gmra.mrb[0].mxu0 %v7266
        %v7480 = vpop.f32.mrb[0].mxu0
        %v7481 = vadd.f32 %v7333, %v7480
        %v7482 = vpop.f32.mrb[0].mxu0
        %7483 = vmatprep.mubr.f32.mxu0 0.0
        %7484 = vmatmul.mubr.f32.gmra.mrb[0].mxu0 %v7267
        %v7485 = vpop.f32.mrb[0].mxu0
        %v7486 = vadd.f32 %v7333, %v7485
        %v7487 = vpop.f32.mrb[0].mxu0
        %7488 = vmatprep.mubr.f32.mxu0 0.0
        %7489 = vmatmul.mubr.f32.gmra.mrb[0].mxu0 %v7268
        %v7490 = vpop.f32.mrb[0].mxu0
        %v7491 = vadd.f32 %v7333, %v7490
        %v7492 = vpop.f32.mrb[0].mxu0
        %7493 = vmatprep.mubr.f32.mxu0 0.0
        %7494 = vmatmul.mubr.f32.gmra.mrb[0].mxu0 %v7269
        %v7495 = vpop.f32.mrb[0].mxu0
        %v7496 = vadd.f32 %v7333, %v7495
        %v7497 = vpop.f32.mrb[0].mxu0
        %7498 = vmatprep.mubr.f32.mxu0 0.0
        %7499 = vmatmul.mubr.f32.gmra.mrb[0].mxu0 %v7270
        %v7500 = vpop.f32.mrb[0].mxu0
        %v7501 = vadd.f32 %v7333, %v7500
        %v7502 = vpop.f32.mrb[0].mxu0
        %7503 = vmatprep.mubr.f32.mxu0 0.0
        %7504 = vmatmul.mubr.f32.gmra.mrb[0].mxu0 %v7271
        %v7505 = vpop.f32.mrb[0].mxu0
        %v7506 = vadd.f32 %v7333, %v7505
        %v7507 = vpop.f32.mrb[0].mxu0
        %7508 = vmatprep.mubr.f32.mxu0 0.0
        %7509 = vmatmul.mubr.f32.gmra.mrb[0].mxu0 %v7272
        %v7510 = vpop.f32.mrb[0].mxu0
        %v7511 = vadd.f32 %v7333, %v7510
        %v7512 = vpop.f32.mrb[0].mxu0
        %7513 = vmatprep.mubr.f32.mxu0 0.0
        %7514 = vmatmul.mubr.f32.gmra.mrb[0].mxu0 %v7273
        %v7515 = vpop.f32.mrb[0].mxu0
        %v7516 = vadd.f32 %v7333, %v7515
        %v7517 = vpop.f32.mrb[0].mxu0
        %7518 = vmatprep.mubr.f32.mxu0 0.0
        %7519 = vmatmul.mubr.f32.gmra.mrb[0].mxu0 %v7274
        %v7520 = vpop.f32.mrb[0].mxu0
        %v7521 = vadd.f32 %v7333, %v7520
        %v7522 = vpop.f32.mrb[0].mxu0
        %7523 = vmatprep.mubr.f32.mxu0 0.0
        %7524 = vmatmul.mubr.f32.gmra.mrb[0].mxu0 %v7275
        %v7525 = vpop.f32.mrb[0].mxu0
        %v7526 = vadd.f32 %v7333, %v7525
        %v7527 = vpop.f32.mrb[0].mxu0
        %7528 = vmatprep.mubr.f32.mxu0 0.0
        %7529 = vmatmul.mubr.f32.gmra.mrb[0].mxu0 %v7276
        %v7530 = vpop.f32.mrb[0].mxu0
        %v7531 = vadd.f32 %v7333, %v7530
        %v7532 = vpop.f32.mrb[0].mxu0
        %7533 = vmatprep.mubr.f32.mxu0 0.0
        %7534 = vmatmul.mubr.f32.gmra.mrb[0].mxu0 %v7277
        %v7535 = vpop.f32.mrb[0].mxu0
        %v7536 = vadd.f32 %v7333, %v7535
        %v7537 = vpop.f32.mrb[0].mxu0
        %7538 = vmatprep.mubr.f32.mxu0 0.0
        %7539 = vmatmul.mubr.f32.gmra.mrb[0].mxu0 %v7278
        %v7540 = vpop.f32.mrb[0].mxu0
        %v7541 = vadd.f32 %v7333, %v7540
        %v7542 = vpop.f32.mrb[0].mxu0
        %7543 = vmatprep.mubr.f32.mxu0 0.0
        %7544 = vmatmul.mubr.f32.gmra.mrb[0].mxu0 %v7279
        %v7545 = vpop.f32.mrb[0].mxu0
        %v7546 = vadd.f32 %v7333, %v7545
        %v7547 = vpop.f32.mrb[0].mxu0
        %7548 = vmatprep.mubr.f32.mxu0 0.0
        %7549 = vmatmul.mubr.f32.gmra.mrb[0].mxu0 %v7280
        %v7550 = vpop.f32.mrb[0].mxu0
        %v7551 = vadd.f32 %v7333, %v7550
        %v7552 = vpop.f32.mrb[0].mxu0
        %7553 = vmatprep.mubr.f32.mxu0 0.0
        %7554 = vmatmul.mubr.f32.gmra.mrb[0].mxu0 %v7281
        %v7555 = vpop.f32.mrb[0].mxu0
        %v7556 = vadd.f32 %v7333, %v7555
        %v7557 = vpop.f32.mrb[0].mxu0
        %7558 = vmatprep.mubr.f32.mxu0 0.0
        %7559 = vmatmul.mubr.f32.gmra.mrb[0].mxu0 %v7282
        %v7560 = vpop.f32.mrb[0].mxu0
        %v7561 = vadd.f32 %v7333, %v7560
        %v7562 = vpop.f32.mrb[0].mxu0
        %7563 = vmatprep.mubr.f32.mxu0 0.0
        %7564 = vmatmul.mubr.f32.gmra.mrb[0].mxu0 %v7283
        %v7565 = vpop.f32.mrb[0].mxu0
        %v7566 = vadd.f32 %v7333, %v7565
        %v7567 = vpop.f32.mrb[0].mxu0
        %7568 = vmatprep.mubr.f32.mxu0 0.0
        %7569 = vmatmul.mubr.f32.gmra.mrb[0].mxu0 %v7284
        %v7570 = vpop.f32.mrb[0].mxu0
        %v7571 = vadd.f32 %v7333, %v7570
        %v7572 = vpop.f32.mrb[0].mxu0
        %7573 = vmatprep.mubr.f32.mxu0 0.0
        %7574 = vmatmul.mubr.f32.gmra.mrb[0].mxu0 %v7285
        %v7575 = vpop.f32.mrb[0].mxu0
        %v7576 = vadd.f32 %v7333, %v7575
        %v7577 = vpop.f32.mrb[0].mxu0
        %7578 = vmatprep.mubr.f32.mxu0 0.0
        %7579 = vmatmul.mubr.f32.gmra.mrb[0].mxu0 %v7286
        %v7580 = vpop.f32.mrb[0].mxu0
        %v7581 = vadd.f32 %v7333, %v7580
        %v7582 = vpop.f32.mrb[0].mxu0
        %7583 = vmatprep.mubr.f32.mxu0 0.0
        %7584 = vmatmul.mubr.f32.gmra.mrb[0].mxu0 %v7287
        %v7585 = vpop.f32.mrb[0].mxu0
        %v7586 = vadd.f32 %v7333, %v7585
        %v7587 = vpop.f32.mrb[0].mxu0
        %7588 = vmatprep.mubr.f32.mxu0 0.0
        %7589 = vmatmul.mubr.f32.gmra.mrb[0].mxu0 %v7288
        %v7590 = vpop.f32.mrb[0].mxu0
        %v7591 = vadd.f32 %v7333, %v7590
        %v7592 = vpop.f32.mrb[0].mxu0
        %7593 = vmatprep.mubr.f32.mxu0 0.0
        %7594 = vmatmul.mubr.f32.gmra.mrb[0].mxu0 %v7289
        %v7595 = vpop.f32.mrb[0].mxu0
        %v7596 = vadd.f32 %v7333, %v7595
        %v7597 = vpop.f32.mrb[0].mxu0
        %7598 = vmatprep.mubr.f32.mxu0 0.0
        %7599 = vmatmul.mubr.f32.gmra.mrb[0].mxu0 %v7290
        %v7600 = vpop.f32.mrb[0].mxu0
        %v7601 = vadd.f32 %v7333, %v7600
        %v7602 = vpop.f32.mrb[0].mxu0
        %7603 = vmatprep.mubr.f32.mxu0 0.0
        %7604 = vmatmul.mubr.f32.gmra.mrb[0].mxu0 %v7291
        %v7605 = vpop.f32.mrb[0].mxu0
        %v7606 = vadd.f32 %v7333, %v7605
        %v7607 = vpop.f32.mrb[0].mxu0
        %7608 = vmatprep.mubr.f32.mxu0 0.0
        %7609 = vmatmul.mubr.f32.gmra.mrb[0].mxu0 %v7292
        %v7610 = vpop.f32.mrb[0].mxu0
        %v7611 = vadd.f32 %v7333, %v7610
        %v7612 = vpop.f32.mrb[0].mxu0
        %7613 = vmatprep.mubr.f32.mxu0 0.0
        %7614 = vmatmul.mubr.f32.gmra.mrb[0].mxu0 %v7293
        %v7615 = vpop.f32.mrb[0].mxu0
        %v7616 = vadd.f32 %v7333, %v7615
        %v7617 = vpop.f32.mrb[0].mxu0
        %7618 = vmatprep.mubr.f32.mxu0 0.0
        %7619 = vmatmul.mubr.f32.gmra.mrb[0].mxu0 %v7294
        %v7620 = vpop.f32.mrb[0].mxu0
        %v7621 = vadd.f32 %v7333, %v7620
        %v7622 = vpop.f32.mrb[0].mxu0
        %7623 = vmatprep.mubr.f32.mxu0 0.0
        %7624 = vmatmul.mubr.f32.gmra.mrb[0].mxu0 %v7295
        %v7625 = vpop.f32.mrb[0].mxu0
        %v7626 = vadd.f32 %v7333, %v7625
        %v7627 = vpop.f32.mrb[0].mxu0
        %7628 = vmatprep.mubr.f32.mxu0 0.0
        %7629 = vmatmul.mubr.f32.gmra.mrb[0].mxu0 %v7296
        %v7630 = vpop.f32.mrb[0].mxu0
        %v7631 = vadd.f32 %v7333, %v7630
        %v7632 = vpop.f32.mrb[0].mxu0
        %7633 = vmatprep.mubr.f32.mxu0 0.0
        %7634 = vmatmul.mubr.f32.gmra.mrb[0].mxu0 %v7297
        %v7635 = vpop.f32.mrb[0].mxu0
        %v7636 = vadd.f32 %v7333, %v7635
        %v7637 = vpop.f32.mrb[0].mxu0
        %7638 = vmatprep.mubr.f32.mxu0 0.0
        %7639 = vmatmul.mubr.f32.gmra.mrb[0].mxu0 %v7298
        %v7640 = vpop.f32.mrb[0].mxu0
        %v7641 = vadd.f32 %v7333, %v7640
        %v7642 = vpop.f32.mrb[0].mxu0
        %7643 = vmatprep.mubr.f32.mxu0 0.0
        %7644 = vmatmul.mubr.f32.gmra.mrb[0].mxu0 %v7299
        %v7645 = vpop.f32.mrb[0].mxu0
        %v7646 = vadd.f32 %v7333, %v7645
        %v7647 = vpop.f32.mrb[0].mxu0
        %7648 = vmatprep.mubr.f32.mxu0 0.0
        %7649 = vmatmul.mubr.f32.gmra.mrb[0].mxu0 %v7300
        %v7650 = vpop.f32.mrb[0].mxu0
        %v7651 = vadd.f32 %v7333, %v7650
        %v7652 = vpop.f32.mrb[0].mxu0
        %7653 = vmatprep.mubr.f32.mxu0 0.0
        %7654 = vmatmul.mubr.f32.gmra.mrb[0].mxu0 %v7301
        %v7655 = vpop.f32.mrb[0].mxu0
        %v7656 = vadd.f32 %v7333, %v7655
        %v7657 = vpop.f32.mrb[0].mxu0
        %7658 = vmatprep.mubr.f32.mxu0 0.0
        %7659 = vmatmul.mubr.f32.gmra.mrb[0].mxu0 %v7302
        %v7660 = vpop.f32.mrb[0].mxu0
        %v7661 = vadd.f32 %v7333, %v7660
        %v7662 = vpop.f32.mrb[0].mxu0
        %7663 = vmatprep.mubr.f32.mxu0 0.0
        %7664 = vmatmul.mubr.f32.gmra.mrb[0].mxu0 %v7303
        %v7665 = vpop.f32.mrb[0].mxu0
        %v7666 = vadd.f32 %v7333, %v7665
        %v7667 = vpop.f32.mrb[0].mxu0
        %7668 = vmatprep.mubr.f32.mxu0 0.0
        %7669 = vmatmul.mubr.f32.gmra.mrb[0].mxu0 %v7304
        %v7670 = vpop.f32.mrb[0].mxu0
        %v7671 = vadd.f32 %v7333, %v7670
        %v7672 = vpop.f32.mrb[0].mxu0
        %7673 = vmatprep.mubr.f32.mxu0 0.0
        %7674 = vmatmul.mubr.f32.gmra.mrb[0].mxu0 %v7305
        %v7675 = vpop.f32.mrb[0].mxu0
        %v7676 = vadd.f32 %v7333, %v7675
        %v7677 = vpop.f32.mrb[0].mxu0
        %7678 = vmatprep.mubr.f32.mxu0 0.0
        %7679 = vmatmul.mubr.f32.gmra.mrb[0].mxu0 %v7306
        %v7680 = vpop.f32.mrb[0].mxu0
        %v7681 = vadd.f32 %v7333, %v7680
        %v7682 = vpop.f32.mrb[0].mxu0
        %7683 = vmatprep.mubr.f32.mxu0 0.0
        %7684 = vmatmul.mubr.f32.gmra.mrb[0].mxu0 %v7307
        %v7685 = vpop.f32.mrb[0].mxu0
        %v7686 = vadd.f32 %v7333, %v7685
        %v7687 = vpop.f32.mrb[0].mxu0
        %7688 = vmatprep.mubr.f32.mxu0 0.0
        %7689 = vmatmul.mubr.f32.gmra.mrb[0].mxu0 %v7308
        %v7690 = vpop.f32.mrb[0].mxu0
        %v7691 = vadd.f32 %v7333, %v7690
        %v7692 = vpop.f32.mrb[0].mxu0
        %7693 = vmatprep.mubr.f32.mxu0 0.0
        %7694 = vmatmul.mubr.f32.gmra.mrb[0].mxu0 %v7309
        %v7695 = vpop.f32.mrb[0].mxu0
        %v7696 = vadd.f32 %v7333, %v7695
        %v7697 = vpop.f32.mrb[0].mxu0
        %7698 = vmatprep.mubr.f32.mxu0 0.0
        %7699 = vmatmul.mubr.f32.gmra.mrb[0].mxu0 %v7310
        %v7700 = vpop.f32.mrb[0].mxu0
        %v7701 = vadd.f32 %v7333, %v7700
        %v7702 = vpop.f32.mrb[0].mxu0
        %7703 = vmatprep.mubr.f32.mxu0 0.0
        %7704 = vmatmul.mubr.f32.gmra.mrb[0].mxu0 %v7311
        %v7705 = vpop.f32.mrb[0].mxu0
        %v7706 = vadd.f32 %v7333, %v7705
        %v7707 = vpop.f32.mrb[0].mxu0
        %7708 = vmatprep.mubr.f32.mxu0 0.0
        %7709 = vmatmul.mubr.f32.gmra.mrb[0].mxu0 %v7312
        %v7710 = vpop.f32.mrb[0].mxu0
        %v7711 = vadd.f32 %v7333, %v7710
        %v7712 = vpop.f32.mrb[0].mxu0
        %7713 = vmatprep.mubr.f32.mxu0 0.0
        %7714 = vmatmul.mubr.f32.gmra.mrb[0].mxu0 %v7313
        %v7715 = vpop.f32.mrb[0].mxu0
        %v7716 = vadd.f32 %v7333, %v7715
        %v7717 = vpop.f32.mrb[0].mxu0
        %7718 = vdwg.mxu0
        %v7719 = vlaneseq
        %v7720 = vshrl.u32 %v7719, 7
        %v7721 = vsub.s32 0, %v7720
        %v7722 = vrot.slane %v6665, %v7721
        %v7723 = vadd.f32 %v6281, %v7722
        %v7724 = vadd.f32 %v6287, %v7722
        %v7725 = vadd.f32 %v6293, %v7722
        %v7726 = vadd.f32 %v6299, %v7722
        %v7727 = vadd.f32 %v6305, %v7722
        %v7728 = vadd.f32 %v6311, %v7722
        %v7729 = vadd.f32 %v6317, %v7722
        %v7730 = vadd.f32 %v6323, %v7722
        %v7731 = vadd.f32 %v6329, %v7722
        %v7732 = vadd.f32 %v6335, %v7722
        %v7733 = vadd.f32 %v6341, %v7722
        %v7734 = vadd.f32 %v6347, %v7722
        %v7735 = vadd.f32 %v6353, %v7722
        %v7736 = vadd.f32 %v6359, %v7722
        %v7737 = vadd.f32 %v6365, %v7722
        %v7738 = vadd.f32 %v6371, %v7722
        %v7739 = vadd.f32 %v6377, %v7722
        %v7740 = vadd.f32 %v6383, %v7722
        %v7741 = vadd.f32 %v6389, %v7722
        %v7742 = vadd.f32 %v6395, %v7722
        %v7743 = vadd.f32 %v6401, %v7722
        %v7744 = vadd.f32 %v6407, %v7722
        %v7745 = vadd.f32 %v6413, %v7722
        %v7746 = vadd.f32 %v6419, %v7722
        %v7747 = vadd.f32 %v6425, %v7722
        %v7748 = vadd.f32 %v6431, %v7722
        %v7749 = vadd.f32 %v6437, %v7722
        %v7750 = vadd.f32 %v6443, %v7722
        %v7751 = vadd.f32 %v6449, %v7722
        %v7752 = vadd.f32 %v6455, %v7722
        %v7753 = vadd.f32 %v6461, %v7722
        %v7754 = vadd.f32 %v6467, %v7722
        %v7755 = vadd.f32 %v6473, %v7722
        %v7756 = vadd.f32 %v6479, %v7722
        %v7757 = vadd.f32 %v6485, %v7722
        %v7758 = vadd.f32 %v6491, %v7722
        %v7759 = vadd.f32 %v6497, %v7722
        %v7760 = vadd.f32 %v6503, %v7722
        %v7761 = vadd.f32 %v6509, %v7722
        %v7762 = vadd.f32 %v6515, %v7722
        %v7763 = vadd.f32 %v6521, %v7722
        %v7764 = vadd.f32 %v6527, %v7722
        %v7765 = vadd.f32 %v6533, %v7722
        %v7766 = vadd.f32 %v6539, %v7722
        %v7767 = vadd.f32 %v6545, %v7722
        %v7768 = vadd.f32 %v6551, %v7722
        %v7769 = vadd.f32 %v6557, %v7722
        %v7770 = vadd.f32 %v6563, %v7722
        %v7771 = vadd.f32 %v6569, %v7722
        %v7772 = vadd.f32 %v6575, %v7722
        %v7773 = vadd.f32 %v6581, %v7722
        %v7774 = vadd.f32 %v6587, %v7722
        %v7775 = vadd.f32 %v6593, %v7722
        %v7776 = vadd.f32 %v6599, %v7722
        %v7777 = vadd.f32 %v6605, %v7722
        %v7778 = vadd.f32 %v6611, %v7722
        %v7779 = vadd.f32 %v6617, %v7722
        %v7780 = vadd.f32 %v6623, %v7722
        %v7781 = vadd.f32 %v6629, %v7722
        %v7782 = vadd.f32 %v6635, %v7722
        %v7783 = vadd.f32 %v6641, %v7722
        %v7784 = vadd.f32 %v6647, %v7722
        %v7785 = vadd.f32 %v6653, %v7722
        %v7786 = vadd.f32 %v6659, %v7722
        %v7787 = vxor.u32 %v7723, 2147483648
        %v7788 = vxor.u32 %v7724, 2147483648
        %v7789 = vxor.u32 %v7725, 2147483648
        %v7790 = vxor.u32 %v7726, 2147483648
        %v7791 = vxor.u32 %v7727, 2147483648
        %v7792 = vxor.u32 %v7728, 2147483648
        %v7793 = vxor.u32 %v7729, 2147483648
        %v7794 = vxor.u32 %v7730, 2147483648
        %v7795 = vxor.u32 %v7731, 2147483648
        %v7796 = vxor.u32 %v7732, 2147483648
        %v7797 = vxor.u32 %v7733, 2147483648
        %v7798 = vxor.u32 %v7734, 2147483648
        %v7799 = vxor.u32 %v7735, 2147483648
        %v7800 = vxor.u32 %v7736, 2147483648
        %v7801 = vxor.u32 %v7737, 2147483648
        %v7802 = vxor.u32 %v7738, 2147483648
        %v7803 = vxor.u32 %v7739, 2147483648
        %v7804 = vxor.u32 %v7740, 2147483648
        %v7805 = vxor.u32 %v7741, 2147483648
        %v7806 = vxor.u32 %v7742, 2147483648
        %v7807 = vxor.u32 %v7743, 2147483648
        %v7808 = vxor.u32 %v7744, 2147483648
        %v7809 = vxor.u32 %v7745, 2147483648
        %v7810 = vxor.u32 %v7746, 2147483648
        %v7811 = vxor.u32 %v7747, 2147483648
        %v7812 = vxor.u32 %v7748, 2147483648
        %v7813 = vxor.u32 %v7749, 2147483648
        %v7814 = vxor.u32 %v7750, 2147483648
        %v7815 = vxor.u32 %v7751, 2147483648
        %v7816 = vxor.u32 %v7752, 2147483648
        %v7817 = vxor.u32 %v7753, 2147483648
        %v7818 = vxor.u32 %v7754, 2147483648
        %v7819 = vxor.u32 %v7755, 2147483648
        %v7820 = vxor.u32 %v7756, 2147483648
        %v7821 = vxor.u32 %v7757, 2147483648
        %v7822 = vxor.u32 %v7758, 2147483648
        %v7823 = vxor.u32 %v7759, 2147483648
        %v7824 = vxor.u32 %v7760, 2147483648
        %v7825 = vxor.u32 %v7761, 2147483648
        %v7826 = vxor.u32 %v7762, 2147483648
        %v7827 = vxor.u32 %v7763, 2147483648
        %v7828 = vxor.u32 %v7764, 2147483648
        %v7829 = vxor.u32 %v7765, 2147483648
        %v7830 = vxor.u32 %v7766, 2147483648
        %v7831 = vxor.u32 %v7767, 2147483648
        %v7832 = vxor.u32 %v7768, 2147483648
        %v7833 = vxor.u32 %v7769, 2147483648
        %v7834 = vxor.u32 %v7770, 2147483648
        %v7835 = vxor.u32 %v7771, 2147483648
        %v7836 = vxor.u32 %v7772, 2147483648
        %v7837 = vxor.u32 %v7773, 2147483648
        %v7838 = vxor.u32 %v7774, 2147483648
        %v7839 = vxor.u32 %v7775, 2147483648
        %v7840 = vxor.u32 %v7776, 2147483648
        %v7841 = vxor.u32 %v7777, 2147483648
        %v7842 = vxor.u32 %v7778, 2147483648
        %v7843 = vxor.u32 %v7779, 2147483648
        %v7844 = vxor.u32 %v7780, 2147483648
        %v7845 = vxor.u32 %v7781, 2147483648
        %v7846 = vxor.u32 %v7782, 2147483648
        %v7847 = vxor.u32 %v7783, 2147483648
        %v7848 = vxor.u32 %v7784, 2147483648
        %v7849 = vxor.u32 %v7785, 2147483648
        %v7850 = vxor.u32 %v7786, 2147483648
        %v7851 = vmul.f32 %v7787, 1.442695
        %v7852 = vpow.pop %v7851
        %v7853 = vmul.f32 %v7788, 1.442695
        %v7854 = vpow.pop %v7853
        %v7855 = vmul.f32 %v7789, 1.442695
        %v7856 = vpow.pop %v7855
        %v7857 = vmul.f32 %v7790, 1.442695
        %v7858 = vpow.pop %v7857
        %v7859 = vmul.f32 %v7791, 1.442695
        %v7860 = vpow.pop %v7859
        %v7861 = vmul.f32 %v7792, 1.442695
        %v7862 = vpow.pop %v7861
        %v7863 = vmul.f32 %v7793, 1.442695
        %v7864 = vpow.pop %v7863
        %v7865 = vmul.f32 %v7794, 1.442695
        %v7866 = vpow.pop %v7865
        %v7867 = vmul.f32 %v7795, 1.442695
        %v7868 = vpow.pop %v7867
        %v7869 = vmul.f32 %v7796, 1.442695
        %v7870 = vpow.pop %v7869
        %v7871 = vmul.f32 %v7797, 1.442695
        %v7872 = vpow.pop %v7871
        %v7873 = vmul.f32 %v7798, 1.442695
        %v7874 = vpow.pop %v7873
        %v7875 = vmul.f32 %v7799, 1.442695
        %v7876 = vpow.pop %v7875
        %v7877 = vmul.f32 %v7800, 1.442695
        %v7878 = vpow.pop %v7877
        %v7879 = vmul.f32 %v7801, 1.442695
        %v7880 = vpow.pop %v7879
        %v7881 = vmul.f32 %v7802, 1.442695
        %v7882 = vpow.pop %v7881
        %v7883 = vmul.f32 %v7803, 1.442695
        %v7884 = vpow.pop %v7883
        %v7885 = vmul.f32 %v7804, 1.442695
        %v7886 = vpow.pop %v7885
        %v7887 = vmul.f32 %v7805, 1.442695
        %v7888 = vpow.pop %v7887
        %v7889 = vmul.f32 %v7806, 1.442695
        %v7890 = vpow.pop %v7889
        %v7891 = vmul.f32 %v7807, 1.442695
        %v7892 = vpow.pop %v7891
        %v7893 = vmul.f32 %v7808, 1.442695
        %v7894 = vpow.pop %v7893
        %v7895 = vmul.f32 %v7809, 1.442695
        %v7896 = vpow.pop %v7895
        %v7897 = vmul.f32 %v7810, 1.442695
        %v7898 = vpow.pop %v7897
        %v7899 = vmul.f32 %v7811, 1.442695
        %v7900 = vpow.pop %v7899
        %v7901 = vmul.f32 %v7812, 1.442695
        %v7902 = vpow.pop %v7901
        %v7903 = vmul.f32 %v7813, 1.442695
        %v7904 = vpow.pop %v7903
        %v7905 = vmul.f32 %v7814, 1.442695
        %v7906 = vpow.pop %v7905
        %v7907 = vmul.f32 %v7815, 1.442695
        %v7908 = vpow.pop %v7907
        %v7909 = vmul.f32 %v7816, 1.442695
        %v7910 = vpow.pop %v7909
        %v7911 = vmul.f32 %v7817, 1.442695
        %v7912 = vpow.pop %v7911
        %v7913 = vmul.f32 %v7818, 1.442695
        %v7914 = vpow.pop %v7913
        %v7915 = vmul.f32 %v7819, 1.442695
        %v7916 = vpow.pop %v7915
        %v7917 = vmul.f32 %v7820, 1.442695
        %v7918 = vpow.pop %v7917
        %v7919 = vmul.f32 %v7821, 1.442695
        %v7920 = vpow.pop %v7919
        %v7921 = vmul.f32 %v7822, 1.442695
        %v7922 = vpow.pop %v7921
        %v7923 = vmul.f32 %v7823, 1.442695
        %v7924 = vpow.pop %v7923
        %v7925 = vmul.f32 %v7824, 1.442695
        %v7926 = vpow.pop %v7925
        %v7927 = vmul.f32 %v7825, 1.442695
        %v7928 = vpow.pop %v7927
        %v7929 = vmul.f32 %v7826, 1.442695
        %v7930 = vpow.pop %v7929
        %v7931 = vmul.f32 %v7827, 1.442695
        %v7932 = vpow.pop %v7931
        %v7933 = vmul.f32 %v7828, 1.442695
        %v7934 = vpow.pop %v7933
        %v7935 = vmul.f32 %v7829, 1.442695
        %v7936 = vpow.pop %v7935
        %v7937 = vmul.f32 %v7830, 1.442695
        %v7938 = vpow.pop %v7937
        %v7939 = vmul.f32 %v7831, 1.442695
        %v7940 = vpow.pop %v7939
        %v7941 = vmul.f32 %v7832, 1.442695
        %v7942 = vpow.pop %v7941
        %v7943 = vmul.f32 %v7833, 1.442695
        %v7944 = vpow.pop %v7943
        %v7945 = vmul.f32 %v7834, 1.442695
        %v7946 = vpow.pop %v7945
        %v7947 = vmul.f32 %v7835, 1.442695
        %v7948 = vpow.pop %v7947
        %v7949 = vmul.f32 %v7836, 1.442695
        %v7950 = vpow.pop %v7949
        %v7951 = vmul.f32 %v7837, 1.442695
        %v7952 = vpow.pop %v7951
        %v7953 = vmul.f32 %v7838, 1.442695
        %v7954 = vpow.pop %v7953
        %v7955 = vmul.f32 %v7839, 1.442695
        %v7956 = vpow.pop %v7955
        %v7957 = vmul.f32 %v7840, 1.442695
        %v7958 = vpow.pop %v7957
        %v7959 = vmul.f32 %v7841, 1.442695
        %v7960 = vpow.pop %v7959
        %v7961 = vmul.f32 %v7842, 1.442695
        %v7962 = vpow.pop %v7961
        %v7963 = vmul.f32 %v7843, 1.442695
        %v7964 = vpow.pop %v7963
        %v7965 = vmul.f32 %v7844, 1.442695
        %v7966 = vpow.pop %v7965
        %v7967 = vmul.f32 %v7845, 1.442695
        %v7968 = vpow.pop %v7967
        %v7969 = vmul.f32 %v7846, 1.442695
        %v7970 = vpow.pop %v7969
        %v7971 = vmul.f32 %v7847, 1.442695
        %v7972 = vpow.pop %v7971
        %v7973 = vmul.f32 %v7848, 1.442695
        %v7974 = vpow.pop %v7973
        %v7975 = vmul.f32 %v7849, 1.442695
        %v7976 = vpow.pop %v7975
        %v7977 = vmul.f32 %v7850, 1.442695
        %v7978 = vpow.pop %v7977
        %v7979 = vadd.f32 %v7852, 1.0
        %v7980 = vadd.f32 %v7854, 1.0
        %v7981 = vadd.f32 %v7856, 1.0
        %v7982 = vadd.f32 %v7858, 1.0
        %v7983 = vadd.f32 %v7860, 1.0
        %v7984 = vadd.f32 %v7862, 1.0
        %v7985 = vadd.f32 %v7864, 1.0
        %v7986 = vadd.f32 %v7866, 1.0
        %v7987 = vadd.f32 %v7868, 1.0
        %v7988 = vadd.f32 %v7870, 1.0
        %v7989 = vadd.f32 %v7872, 1.0
        %v7990 = vadd.f32 %v7874, 1.0
        %v7991 = vadd.f32 %v7876, 1.0
        %v7992 = vadd.f32 %v7878, 1.0
        %v7993 = vadd.f32 %v7880, 1.0
        %v7994 = vadd.f32 %v7882, 1.0
        %v7995 = vadd.f32 %v7884, 1.0
        %v7996 = vadd.f32 %v7886, 1.0
        %v7997 = vadd.f32 %v7888, 1.0
        %v7998 = vadd.f32 %v7890, 1.0
        %v7999 = vadd.f32 %v7892, 1.0
        %v8000 = vadd.f32 %v7894, 1.0
        %v8001 = vadd.f32 %v7896, 1.0
        %v8002 = vadd.f32 %v7898, 1.0
        %v8003 = vadd.f32 %v7900, 1.0
        %v8004 = vadd.f32 %v7902, 1.0
        %v8005 = vadd.f32 %v7904, 1.0
        %v8006 = vadd.f32 %v7906, 1.0
        %v8007 = vadd.f32 %v7908, 1.0
        %v8008 = vadd.f32 %v7910, 1.0
        %v8009 = vadd.f32 %v7912, 1.0
        %v8010 = vadd.f32 %v7914, 1.0
        %v8011 = vadd.f32 %v7916, 1.0
        %v8012 = vadd.f32 %v7918, 1.0
        %v8013 = vadd.f32 %v7920, 1.0
        %v8014 = vadd.f32 %v7922, 1.0
        %v8015 = vadd.f32 %v7924, 1.0
        %v8016 = vadd.f32 %v7926, 1.0
        %v8017 = vadd.f32 %v7928, 1.0
        %v8018 = vadd.f32 %v7930, 1.0
        %v8019 = vadd.f32 %v7932, 1.0
        %v8020 = vadd.f32 %v7934, 1.0
        %v8021 = vadd.f32 %v7936, 1.0
        %v8022 = vadd.f32 %v7938, 1.0
        %v8023 = vadd.f32 %v7940, 1.0
        %v8024 = vadd.f32 %v7942, 1.0
        %v8025 = vadd.f32 %v7944, 1.0
        %v8026 = vadd.f32 %v7946, 1.0
        %v8027 = vadd.f32 %v7948, 1.0
        %v8028 = vadd.f32 %v7950, 1.0
        %v8029 = vadd.f32 %v7952, 1.0
        %v8030 = vadd.f32 %v7954, 1.0
        %v8031 = vadd.f32 %v7956, 1.0
        %v8032 = vadd.f32 %v7958, 1.0
        %v8033 = vadd.f32 %v7960, 1.0
        %v8034 = vadd.f32 %v7962, 1.0
        %v8035 = vadd.f32 %v7964, 1.0
        %v8036 = vadd.f32 %v7966, 1.0
        %v8037 = vadd.f32 %v7968, 1.0
        %v8038 = vadd.f32 %v7970, 1.0
        %v8039 = vadd.f32 %v7972, 1.0
        %v8040 = vadd.f32 %v7974, 1.0
        %v8041 = vadd.f32 %v7976, 1.0
        %v8042 = vadd.f32 %v7978, 1.0
        %v8043 = vrcp.pop %v7979
        %v8044 = vmul.f32 1.0, %v8043
        %v8045 = vrcp.pop %v7980
        %v8046 = vmul.f32 1.0, %v8045
        %v8047 = vrcp.pop %v7981
        %v8048 = vmul.f32 1.0, %v8047
        %v8049 = vrcp.pop %v7982
        %v8050 = vmul.f32 1.0, %v8049
        %v8051 = vrcp.pop %v7983
        %v8052 = vmul.f32 1.0, %v8051
        %v8053 = vrcp.pop %v7984
        %v8054 = vmul.f32 1.0, %v8053
        %v8055 = vrcp.pop %v7985
        %v8056 = vmul.f32 1.0, %v8055
        %v8057 = vrcp.pop %v7986
        %v8058 = vmul.f32 1.0, %v8057
        %v8059 = vrcp.pop %v7987
        %v8060 = vmul.f32 1.0, %v8059
        %v8061 = vrcp.pop %v7988
        %v8062 = vmul.f32 1.0, %v8061
        %v8063 = vrcp.pop %v7989
        %v8064 = vmul.f32 1.0, %v8063
        %v8065 = vrcp.pop %v7990
        %v8066 = vmul.f32 1.0, %v8065
        %v8067 = vrcp.pop %v7991
        %v8068 = vmul.f32 1.0, %v8067
        %v8069 = vrcp.pop %v7992
        %v8070 = vmul.f32 1.0, %v8069
        %v8071 = vrcp.pop %v7993
        %v8072 = vmul.f32 1.0, %v8071
        %v8073 = vrcp.pop %v7994
        %v8074 = vmul.f32 1.0, %v8073
        %v8075 = vrcp.pop %v7995
        %v8076 = vmul.f32 1.0, %v8075
        %v8077 = vrcp.pop %v7996
        %v8078 = vmul.f32 1.0, %v8077
        %v8079 = vrcp.pop %v7997
        %v8080 = vmul.f32 1.0, %v8079
        %v8081 = vrcp.pop %v7998
        %v8082 = vmul.f32 1.0, %v8081
        %v8083 = vrcp.pop %v7999
        %v8084 = vmul.f32 1.0, %v8083
        %v8085 = vrcp.pop %v8000
        %v8086 = vmul.f32 1.0, %v8085
        %v8087 = vrcp.pop %v8001
        %v8088 = vmul.f32 1.0, %v8087
        %v8089 = vrcp.pop %v8002
        %v8090 = vmul.f32 1.0, %v8089
        %v8091 = vrcp.pop %v8003
        %v8092 = vmul.f32 1.0, %v8091
        %v8093 = vrcp.pop %v8004
        %v8094 = vmul.f32 1.0, %v8093
        %v8095 = vrcp.pop %v8005
        %v8096 = vmul.f32 1.0, %v8095
        %v8097 = vrcp.pop %v8006
        %v8098 = vmul.f32 1.0, %v8097
        %v8099 = vrcp.pop %v8007
        %v8100 = vmul.f32 1.0, %v8099
        %v8101 = vrcp.pop %v8008
        %v8102 = vmul.f32 1.0, %v8101
        %v8103 = vrcp.pop %v8009
        %v8104 = vmul.f32 1.0, %v8103
        %v8105 = vrcp.pop %v8010
        %v8106 = vmul.f32 1.0, %v8105
        %v8107 = vrcp.pop %v8011
        %v8108 = vmul.f32 1.0, %v8107
        %v8109 = vrcp.pop %v8012
        %v8110 = vmul.f32 1.0, %v8109
        %v8111 = vrcp.pop %v8013
        %v8112 = vmul.f32 1.0, %v8111
        %v8113 = vrcp.pop %v8014
        %v8114 = vmul.f32 1.0, %v8113
        %v8115 = vrcp.pop %v8015
        %v8116 = vmul.f32 1.0, %v8115
        %v8117 = vrcp.pop %v8016
        %v8118 = vmul.f32 1.0, %v8117
        %v8119 = vrcp.pop %v8017
        %v8120 = vmul.f32 1.0, %v8119
        %v8121 = vrcp.pop %v8018
        %v8122 = vmul.f32 1.0, %v8121
        %v8123 = vrcp.pop %v8019
        %v8124 = vmul.f32 1.0, %v8123
        %v8125 = vrcp.pop %v8020
        %v8126 = vmul.f32 1.0, %v8125
        %v8127 = vrcp.pop %v8021
        %v8128 = vmul.f32 1.0, %v8127
        %v8129 = vrcp.pop %v8022
        %v8130 = vmul.f32 1.0, %v8129
        %v8131 = vrcp.pop %v8023
        %v8132 = vmul.f32 1.0, %v8131
        %v8133 = vrcp.pop %v8024
        %v8134 = vmul.f32 1.0, %v8133
        %v8135 = vrcp.pop %v8025
        %v8136 = vmul.f32 1.0, %v8135
        %v8137 = vrcp.pop %v8026
        %v8138 = vmul.f32 1.0, %v8137
        %v8139 = vrcp.pop %v8027
        %v8140 = vmul.f32 1.0, %v8139
        %v8141 = vrcp.pop %v8028
        %v8142 = vmul.f32 1.0, %v8141
        %v8143 = vrcp.pop %v8029
        %v8144 = vmul.f32 1.0, %v8143
        %v8145 = vrcp.pop %v8030
        %v8146 = vmul.f32 1.0, %v8145
        %v8147 = vrcp.pop %v8031
        %v8148 = vmul.f32 1.0, %v8147
        %v8149 = vrcp.pop %v8032
        %v8150 = vmul.f32 1.0, %v8149
        %v8151 = vrcp.pop %v8033
        %v8152 = vmul.f32 1.0, %v8151
        %v8153 = vrcp.pop %v8034
        %v8154 = vmul.f32 1.0, %v8153
        %v8155 = vrcp.pop %v8035
        %v8156 = vmul.f32 1.0, %v8155
        %v8157 = vrcp.pop %v8036
        %v8158 = vmul.f32 1.0, %v8157
        %v8159 = vrcp.pop %v8037
        %v8160 = vmul.f32 1.0, %v8159
        %v8161 = vrcp.pop %v8038
        %v8162 = vmul.f32 1.0, %v8161
        %v8163 = vrcp.pop %v8039
        %v8164 = vmul.f32 1.0, %v8163
        %v8165 = vrcp.pop %v8040
        %v8166 = vmul.f32 1.0, %v8165
        %v8167 = vrcp.pop %v8041
        %v8168 = vmul.f32 1.0, %v8167
        %v8169 = vrcp.pop %v8042
        %v8170 = vmul.f32 1.0, %v8169
        %v8171 = vmul.f32 %v7723, %v8044
        %v8172 = vmul.f32 %v7724, %v8046
        %v8173 = vmul.f32 %v7725, %v8048
        %v8174 = vmul.f32 %v7726, %v8050
        %v8175 = vmul.f32 %v7727, %v8052
        %v8176 = vmul.f32 %v7728, %v8054
        %v8177 = vmul.f32 %v7729, %v8056
        %v8178 = vmul.f32 %v7730, %v8058
        %v8179 = vmul.f32 %v7731, %v8060
        %v8180 = vmul.f32 %v7732, %v8062
        %v8181 = vmul.f32 %v7733, %v8064
        %v8182 = vmul.f32 %v7734, %v8066
        %v8183 = vmul.f32 %v7735, %v8068
        %v8184 = vmul.f32 %v7736, %v8070
        %v8185 = vmul.f32 %v7737, %v8072
        %v8186 = vmul.f32 %v7738, %v8074
        %v8187 = vmul.f32 %v7739, %v8076
        %v8188 = vmul.f32 %v7740, %v8078
        %v8189 = vmul.f32 %v7741, %v8080
        %v8190 = vmul.f32 %v7742, %v8082
        %v8191 = vmul.f32 %v7743, %v8084
        %v8192 = vmul.f32 %v7744, %v8086
        %v8193 = vmul.f32 %v7745, %v8088
        %v8194 = vmul.f32 %v7746, %v8090
        %v8195 = vmul.f32 %v7747, %v8092
        %v8196 = vmul.f32 %v7748, %v8094
        %v8197 = vmul.f32 %v7749, %v8096
        %v8198 = vmul.f32 %v7750, %v8098
        %v8199 = vmul.f32 %v7751, %v8100
        %v8200 = vmul.f32 %v7752, %v8102
        %v8201 = vmul.f32 %v7753, %v8104
        %v8202 = vmul.f32 %v7754, %v8106
        %v8203 = vmul.f32 %v7755, %v8108
        %v8204 = vmul.f32 %v7756, %v8110
        %v8205 = vmul.f32 %v7757, %v8112
        %v8206 = vmul.f32 %v7758, %v8114
        %v8207 = vmul.f32 %v7759, %v8116
        %v8208 = vmul.f32 %v7760, %v8118
        %v8209 = vmul.f32 %v7761, %v8120
        %v8210 = vmul.f32 %v7762, %v8122
        %v8211 = vmul.f32 %v7763, %v8124
        %v8212 = vmul.f32 %v7764, %v8126
        %v8213 = vmul.f32 %v7765, %v8128
        %v8214 = vmul.f32 %v7766, %v8130
        %v8215 = vmul.f32 %v7767, %v8132
        %v8216 = vmul.f32 %v7768, %v8134
        %v8217 = vmul.f32 %v7769, %v8136
        %v8218 = vmul.f32 %v7770, %v8138
        %v8219 = vmul.f32 %v7771, %v8140
        %v8220 = vmul.f32 %v7772, %v8142
        %v8221 = vmul.f32 %v7773, %v8144
        %v8222 = vmul.f32 %v7774, %v8146
        %v8223 = vmul.f32 %v7775, %v8148
        %v8224 = vmul.f32 %v7776, %v8150
        %v8225 = vmul.f32 %v7777, %v8152
        %v8226 = vmul.f32 %v7778, %v8154
        %v8227 = vmul.f32 %v7779, %v8156
        %v8228 = vmul.f32 %v7780, %v8158
        %v8229 = vmul.f32 %v7781, %v8160
        %v8230 = vmul.f32 %v7782, %v8162
        %v8231 = vmul.f32 %v7783, %v8164
        %v8232 = vmul.f32 %v7784, %v8166
        %v8233 = vmul.f32 %v7785, %v8168
        %v8234 = vmul.f32 %v7786, %v8170
        %s8235 = scalar_lea.vmem %s5, 128
        %v8236 = vld [vmem:[%s8235] sm:$0xff]
        %v8237 = vld [vmem:[%s8235 + $0x8] sm:$0xff]
        %v8238 = vld [vmem:[%s8235 + $0x10] sm:$0xff]
        %v8239 = vld [vmem:[%s8235 + $0x18] sm:$0xff]
        %v8240 = vld [vmem:[%s8235 + $0x20] sm:$0xff]
        %v8241 = vld [vmem:[%s8235 + $0x28] sm:$0xff]
        %v8242 = vld [vmem:[%s8235 + $0x30] sm:$0xff]
        %v8243 = vld [vmem:[%s8235 + $0x38] sm:$0xff]
        %v8244 = vld [vmem:[%s8235 + $0x40] sm:$0xff]
        %v8245 = vld [vmem:[%s8235 + $0x48] sm:$0xff]
        %v8246 = vld [vmem:[%s8235 + $0x50] sm:$0xff]
        %v8247 = vld [vmem:[%s8235 + $0x58] sm:$0xff]
        %v8248 = vld [vmem:[%s8235 + $0x60] sm:$0xff]
        %v8249 = vld [vmem:[%s8235 + $0x68] sm:$0xff]
        %v8250 = vld [vmem:[%s8235 + $0x70] sm:$0xff]
        %v8251 = vld [vmem:[%s8235 + $0x78] sm:$0xff]
        %v8252 = vlaneseq
        %v8253 = vshrl.u32 %v8252, 7
        %v8254 = vsub.s32 0, %v8253
        %v8255 = vrot.slane %v6666, %v8254
        %8256 = vmatprep.subr.mxu0 0.0
        %8257 = vmatpush1.msra.mxu0 %v8236
        %8258 = vmatprep.subr.mxu0 0.0
        %8259 = vmatpush1.msra.mxu0 %v8237
        %8260 = vmatprep.subr.mxu0 0.0
        %8261 = vmatpush1.msra.mxu0 %v8238
        %8262 = vmatprep.subr.mxu0 0.0
        %8263 = vmatpush1.msra.mxu0 %v8239
        %8264 = vmatprep.subr.mxu0 0.0
        %8265 = vmatpush1.msra.mxu0 %v8240
        %8266 = vmatprep.subr.mxu0 0.0
        %8267 = vmatpush1.msra.mxu0 %v8241
        %8268 = vmatprep.subr.mxu0 0.0
        %8269 = vmatpush1.msra.mxu0 %v8242
        %8270 = vmatprep.subr.mxu0 0.0
        %8271 = vmatpush1.msra.mxu0 %v8243
        %8272 = vmatprep.subr.mxu0 0.0
        %8273 = vmatpush1.msra.mxu0 %v8244
        %8274 = vmatprep.subr.mxu0 0.0
        %8275 = vmatpush1.msra.mxu0 %v8245
        %8276 = vmatprep.subr.mxu0 0.0
        %8277 = vmatpush1.msra.mxu0 %v8246
        %8278 = vmatprep.subr.mxu0 0.0
        %8279 = vmatpush1.msra.mxu0 %v8247
        %8280 = vmatprep.subr.mxu0 0.0
        %8281 = vmatpush1.msra.mxu0 %v8248
        %8282 = vmatprep.subr.mxu0 0.0
        %8283 = vmatpush1.msra.mxu0 %v8249
        %8284 = vmatprep.subr.mxu0 0.0
        %8285 = vmatpush1.msra.mxu0 %v8250
        %8286 = vmatprep.subr.mxu0 0.0
        %8287 = vmatpush1.msra.mxu0 %v8251
        %8288 = vmatprep.subr.mxu0 0.0
        %8289 = vmatpush1.msra.mxu0 0.0
        %8290 = vmatprep.subr.mxu0 0.0
        %8291 = vmatpush1.msra.mxu0 0.0
        %8292 = vmatprep.subr.mxu0 0.0
        %8293 = vmatpush1.msra.mxu0 0.0
        %8294 = vmatprep.subr.mxu0 0.0
        %8295 = vmatpush1.msra.mxu0 0.0
        %8296 = vmatprep.subr.mxu0 0.0
        %8297 = vmatpush1.msra.mxu0 0.0
        %8298 = vmatprep.subr.mxu0 0.0
        %8299 = vmatpush1.msra.mxu0 0.0
        %8300 = vmatprep.subr.mxu0 0.0
        %8301 = vmatpush1.msra.mxu0 0.0
        %8302 = vmatprep.subr.mxu0 0.0
        %8303 = vmatpush1.msra.mxu0 0.0
        %8304 = vmatprep.subr.mxu0 0.0
        %8305 = vmatpush1.msra.mxu0 0.0
        %8306 = vmatprep.subr.mxu0 0.0
        %8307 = vmatpush1.msra.mxu0 0.0
        %8308 = vmatprep.subr.mxu0 0.0
        %8309 = vmatpush1.msra.mxu0 0.0
        %8310 = vmatprep.subr.mxu0 0.0
        %8311 = vmatpush1.msra.mxu0 0.0
        %8312 = vmatprep.subr.mxu0 0.0
        %8313 = vmatpush1.msra.mxu0 0.0
        %8314 = vmatprep.subr.mxu0 0.0
        %8315 = vmatpush1.msra.mxu0 0.0
        %8316 = vmatprep.subr.mxu0 0.0
        %8317 = vmatpush1.msra.mxu0 0.0
        %8318 = vmatprep.subr.mxu0 0.0
        %8319 = vmatpush1.msra.mxu0 0.0
        %8320 = vmatprep.mubr.f32.mxu0 0.0
        %8321 = vmatmul.mubr.f32.gmra.mrb[0].mxu0 %v8171
        %v8322 = vpop.f32.mrb[0].mxu0
        %v8323 = vadd.f32 %v8255, %v8322
        %v8324 = vpop.f32.mrb[0].mxu0
        %8325 = vmatprep.mubr.f32.mxu0 0.0
        %8326 = vmatmul.mubr.f32.gmra.mrb[0].mxu0 %v8172
        %v8327 = vpop.f32.mrb[0].mxu0
        %v8328 = vadd.f32 %v8255, %v8327
        %v8329 = vpop.f32.mrb[0].mxu0
        %8330 = vmatprep.mubr.f32.mxu0 0.0
        %8331 = vmatmul.mubr.f32.gmra.mrb[0].mxu0 %v8173
        %v8332 = vpop.f32.mrb[0].mxu0
        %v8333 = vadd.f32 %v8255, %v8332
        %v8334 = vpop.f32.mrb[0].mxu0
        %8335 = vmatprep.mubr.f32.mxu0 0.0
        %8336 = vmatmul.mubr.f32.gmra.mrb[0].mxu0 %v8174
        %v8337 = vpop.f32.mrb[0].mxu0
        %v8338 = vadd.f32 %v8255, %v8337
        %v8339 = vpop.f32.mrb[0].mxu0
        %8340 = vmatprep.mubr.f32.mxu0 0.0
        %8341 = vmatmul.mubr.f32.gmra.mrb[0].mxu0 %v8175
        %v8342 = vpop.f32.mrb[0].mxu0
        %v8343 = vadd.f32 %v8255, %v8342
        %v8344 = vpop.f32.mrb[0].mxu0
        %8345 = vmatprep.mubr.f32.mxu0 0.0
        %8346 = vmatmul.mubr.f32.gmra.mrb[0].mxu0 %v8176
        %v8347 = vpop.f32.mrb[0].mxu0
        %v8348 = vadd.f32 %v8255, %v8347
        %v8349 = vpop.f32.mrb[0].mxu0
        %8350 = vmatprep.mubr.f32.mxu0 0.0
        %8351 = vmatmul.mubr.f32.gmra.mrb[0].mxu0 %v8177
        %v8352 = vpop.f32.mrb[0].mxu0
        %v8353 = vadd.f32 %v8255, %v8352
        %v8354 = vpop.f32.mrb[0].mxu0
        %8355 = vmatprep.mubr.f32.mxu0 0.0
        %8356 = vmatmul.mubr.f32.gmra.mrb[0].mxu0 %v8178
        %v8357 = vpop.f32.mrb[0].mxu0
        %v8358 = vadd.f32 %v8255, %v8357
        %v8359 = vpop.f32.mrb[0].mxu0
        %8360 = vmatprep.mubr.f32.mxu0 0.0
        %8361 = vmatmul.mubr.f32.gmra.mrb[0].mxu0 %v8179
        %v8362 = vpop.f32.mrb[0].mxu0
        %v8363 = vadd.f32 %v8255, %v8362
        %v8364 = vpop.f32.mrb[0].mxu0
        %8365 = vmatprep.mubr.f32.mxu0 0.0
        %8366 = vmatmul.mubr.f32.gmra.mrb[0].mxu0 %v8180
        %v8367 = vpop.f32.mrb[0].mxu0
        %v8368 = vadd.f32 %v8255, %v8367
        %v8369 = vpop.f32.mrb[0].mxu0
        %8370 = vmatprep.mubr.f32.mxu0 0.0
        %8371 = vmatmul.mubr.f32.gmra.mrb[0].mxu0 %v8181
        %v8372 = vpop.f32.mrb[0].mxu0
        %v8373 = vadd.f32 %v8255, %v8372
        %v8374 = vpop.f32.mrb[0].mxu0
        %8375 = vmatprep.mubr.f32.mxu0 0.0
        %8376 = vmatmul.mubr.f32.gmra.mrb[0].mxu0 %v8182
        %v8377 = vpop.f32.mrb[0].mxu0
        %v8378 = vadd.f32 %v8255, %v8377
        %v8379 = vpop.f32.mrb[0].mxu0
        %8380 = vmatprep.mubr.f32.mxu0 0.0
        %8381 = vmatmul.mubr.f32.gmra.mrb[0].mxu0 %v8183
        %v8382 = vpop.f32.mrb[0].mxu0
        %v8383 = vadd.f32 %v8255, %v8382
        %v8384 = vpop.f32.mrb[0].mxu0
        %8385 = vmatprep.mubr.f32.mxu0 0.0
        %8386 = vmatmul.mubr.f32.gmra.mrb[0].mxu0 %v8184
        %v8387 = vpop.f32.mrb[0].mxu0
        %v8388 = vadd.f32 %v8255, %v8387
        %v8389 = vpop.f32.mrb[0].mxu0
        %8390 = vmatprep.mubr.f32.mxu0 0.0
        %8391 = vmatmul.mubr.f32.gmra.mrb[0].mxu0 %v8185
        %v8392 = vpop.f32.mrb[0].mxu0
        %v8393 = vadd.f32 %v8255, %v8392
        %v8394 = vpop.f32.mrb[0].mxu0
        %8395 = vmatprep.mubr.f32.mxu0 0.0
        %8396 = vmatmul.mubr.f32.gmra.mrb[0].mxu0 %v8186
        %v8397 = vpop.f32.mrb[0].mxu0
        %v8398 = vadd.f32 %v8255, %v8397
        %v8399 = vpop.f32.mrb[0].mxu0
        %8400 = vmatprep.mubr.f32.mxu0 0.0
        %8401 = vmatmul.mubr.f32.gmra.mrb[0].mxu0 %v8187
        %v8402 = vpop.f32.mrb[0].mxu0
        %v8403 = vadd.f32 %v8255, %v8402
        %v8404 = vpop.f32.mrb[0].mxu0
        %8405 = vmatprep.mubr.f32.mxu0 0.0
        %8406 = vmatmul.mubr.f32.gmra.mrb[0].mxu0 %v8188
        %v8407 = vpop.f32.mrb[0].mxu0
        %v8408 = vadd.f32 %v8255, %v8407
        %v8409 = vpop.f32.mrb[0].mxu0
        %8410 = vmatprep.mubr.f32.mxu0 0.0
        %8411 = vmatmul.mubr.f32.gmra.mrb[0].mxu0 %v8189
        %v8412 = vpop.f32.mrb[0].mxu0
        %v8413 = vadd.f32 %v8255, %v8412
        %v8414 = vpop.f32.mrb[0].mxu0
        %8415 = vmatprep.mubr.f32.mxu0 0.0
        %8416 = vmatmul.mubr.f32.gmra.mrb[0].mxu0 %v8190
        %v8417 = vpop.f32.mrb[0].mxu0
        %v8418 = vadd.f32 %v8255, %v8417
        %v8419 = vpop.f32.mrb[0].mxu0
        %8420 = vmatprep.mubr.f32.mxu0 0.0
        %8421 = vmatmul.mubr.f32.gmra.mrb[0].mxu0 %v8191
        %v8422 = vpop.f32.mrb[0].mxu0
        %v8423 = vadd.f32 %v8255, %v8422
        %v8424 = vpop.f32.mrb[0].mxu0
        %8425 = vmatprep.mubr.f32.mxu0 0.0
        %8426 = vmatmul.mubr.f32.gmra.mrb[0].mxu0 %v8192
        %v8427 = vpop.f32.mrb[0].mxu0
        %v8428 = vadd.f32 %v8255, %v8427
        %v8429 = vpop.f32.mrb[0].mxu0
        %8430 = vmatprep.mubr.f32.mxu0 0.0
        %8431 = vmatmul.mubr.f32.gmra.mrb[0].mxu0 %v8193
        %v8432 = vpop.f32.mrb[0].mxu0
        %v8433 = vadd.f32 %v8255, %v8432
        %v8434 = vpop.f32.mrb[0].mxu0
        %8435 = vmatprep.mubr.f32.mxu0 0.0
        %8436 = vmatmul.mubr.f32.gmra.mrb[0].mxu0 %v8194
        %v8437 = vpop.f32.mrb[0].mxu0
        %v8438 = vadd.f32 %v8255, %v8437
        %v8439 = vpop.f32.mrb[0].mxu0
        %8440 = vmatprep.mubr.f32.mxu0 0.0
        %8441 = vmatmul.mubr.f32.gmra.mrb[0].mxu0 %v8195
        %v8442 = vpop.f32.mrb[0].mxu0
        %v8443 = vadd.f32 %v8255, %v8442
        %v8444 = vpop.f32.mrb[0].mxu0
        %8445 = vmatprep.mubr.f32.mxu0 0.0
        %8446 = vmatmul.mubr.f32.gmra.mrb[0].mxu0 %v8196
        %v8447 = vpop.f32.mrb[0].mxu0
        %v8448 = vadd.f32 %v8255, %v8447
        %v8449 = vpop.f32.mrb[0].mxu0
        %8450 = vmatprep.mubr.f32.mxu0 0.0
        %8451 = vmatmul.mubr.f32.gmra.mrb[0].mxu0 %v8197
        %v8452 = vpop.f32.mrb[0].mxu0
        %v8453 = vadd.f32 %v8255, %v8452
        %v8454 = vpop.f32.mrb[0].mxu0
        %8455 = vmatprep.mubr.f32.mxu0 0.0
        %8456 = vmatmul.mubr.f32.gmra.mrb[0].mxu0 %v8198
        %v8457 = vpop.f32.mrb[0].mxu0
        %v8458 = vadd.f32 %v8255, %v8457
        %v8459 = vpop.f32.mrb[0].mxu0
        %8460 = vmatprep.mubr.f32.mxu0 0.0
        %8461 = vmatmul.mubr.f32.gmra.mrb[0].mxu0 %v8199
        %v8462 = vpop.f32.mrb[0].mxu0
        %v8463 = vadd.f32 %v8255, %v8462
        %v8464 = vpop.f32.mrb[0].mxu0
        %8465 = vmatprep.mubr.f32.mxu0 0.0
        %8466 = vmatmul.mubr.f32.gmra.mrb[0].mxu0 %v8200
        %v8467 = vpop.f32.mrb[0].mxu0
        %v8468 = vadd.f32 %v8255, %v8467
        %v8469 = vpop.f32.mrb[0].mxu0
        %8470 = vmatprep.mubr.f32.mxu0 0.0
        %8471 = vmatmul.mubr.f32.gmra.mrb[0].mxu0 %v8201
        %v8472 = vpop.f32.mrb[0].mxu0
        %v8473 = vadd.f32 %v8255, %v8472
        %v8474 = vpop.f32.mrb[0].mxu0
        %8475 = vmatprep.mubr.f32.mxu0 0.0
        %8476 = vmatmul.mubr.f32.gmra.mrb[0].mxu0 %v8202
        %v8477 = vpop.f32.mrb[0].mxu0
        %v8478 = vadd.f32 %v8255, %v8477
        %v8479 = vpop.f32.mrb[0].mxu0
        %8480 = vmatprep.mubr.f32.mxu0 0.0
        %8481 = vmatmul.mubr.f32.gmra.mrb[0].mxu0 %v8203
        %v8482 = vpop.f32.mrb[0].mxu0
        %v8483 = vadd.f32 %v8255, %v8482
        %v8484 = vpop.f32.mrb[0].mxu0
        %8485 = vmatprep.mubr.f32.mxu0 0.0
        %8486 = vmatmul.mubr.f32.gmra.mrb[0].mxu0 %v8204
        %v8487 = vpop.f32.mrb[0].mxu0
        %v8488 = vadd.f32 %v8255, %v8487
        %v8489 = vpop.f32.mrb[0].mxu0
        %8490 = vmatprep.mubr.f32.mxu0 0.0
        %8491 = vmatmul.mubr.f32.gmra.mrb[0].mxu0 %v8205
        %v8492 = vpop.f32.mrb[0].mxu0
        %v8493 = vadd.f32 %v8255, %v8492
        %v8494 = vpop.f32.mrb[0].mxu0
        %8495 = vmatprep.mubr.f32.mxu0 0.0
        %8496 = vmatmul.mubr.f32.gmra.mrb[0].mxu0 %v8206
        %v8497 = vpop.f32.mrb[0].mxu0
        %v8498 = vadd.f32 %v8255, %v8497
        %v8499 = vpop.f32.mrb[0].mxu0
        %8500 = vmatprep.mubr.f32.mxu0 0.0
        %8501 = vmatmul.mubr.f32.gmra.mrb[0].mxu0 %v8207
        %v8502 = vpop.f32.mrb[0].mxu0
        %v8503 = vadd.f32 %v8255, %v8502
        %v8504 = vpop.f32.mrb[0].mxu0
        %8505 = vmatprep.mubr.f32.mxu0 0.0
        %8506 = vmatmul.mubr.f32.gmra.mrb[0].mxu0 %v8208
        %v8507 = vpop.f32.mrb[0].mxu0
        %v8508 = vadd.f32 %v8255, %v8507
        %v8509 = vpop.f32.mrb[0].mxu0
        %8510 = vmatprep.mubr.f32.mxu0 0.0
        %8511 = vmatmul.mubr.f32.gmra.mrb[0].mxu0 %v8209
        %v8512 = vpop.f32.mrb[0].mxu0
        %v8513 = vadd.f32 %v8255, %v8512
        %v8514 = vpop.f32.mrb[0].mxu0
        %8515 = vmatprep.mubr.f32.mxu0 0.0
        %8516 = vmatmul.mubr.f32.gmra.mrb[0].mxu0 %v8210
        %v8517 = vpop.f32.mrb[0].mxu0
        %v8518 = vadd.f32 %v8255, %v8517
        %v8519 = vpop.f32.mrb[0].mxu0
        %8520 = vmatprep.mubr.f32.mxu0 0.0
        %8521 = vmatmul.mubr.f32.gmra.mrb[0].mxu0 %v8211
        %v8522 = vpop.f32.mrb[0].mxu0
        %v8523 = vadd.f32 %v8255, %v8522
        %v8524 = vpop.f32.mrb[0].mxu0
        %8525 = vmatprep.mubr.f32.mxu0 0.0
        %8526 = vmatmul.mubr.f32.gmra.mrb[0].mxu0 %v8212
        %v8527 = vpop.f32.mrb[0].mxu0
        %v8528 = vadd.f32 %v8255, %v8527
        %v8529 = vpop.f32.mrb[0].mxu0
        %8530 = vmatprep.mubr.f32.mxu0 0.0
        %8531 = vmatmul.mubr.f32.gmra.mrb[0].mxu0 %v8213
        %v8532 = vpop.f32.mrb[0].mxu0
        %v8533 = vadd.f32 %v8255, %v8532
        %v8534 = vpop.f32.mrb[0].mxu0
        %8535 = vmatprep.mubr.f32.mxu0 0.0
        %8536 = vmatmul.mubr.f32.gmra.mrb[0].mxu0 %v8214
        %v8537 = vpop.f32.mrb[0].mxu0
        %v8538 = vadd.f32 %v8255, %v8537
        %v8539 = vpop.f32.mrb[0].mxu0
        %8540 = vmatprep.mubr.f32.mxu0 0.0
        %8541 = vmatmul.mubr.f32.gmra.mrb[0].mxu0 %v8215
        %v8542 = vpop.f32.mrb[0].mxu0
        %v8543 = vadd.f32 %v8255, %v8542
        %v8544 = vpop.f32.mrb[0].mxu0
        %8545 = vmatprep.mubr.f32.mxu0 0.0
        %8546 = vmatmul.mubr.f32.gmra.mrb[0].mxu0 %v8216
        %v8547 = vpop.f32.mrb[0].mxu0
        %v8548 = vadd.f32 %v8255, %v8547
        %v8549 = vpop.f32.mrb[0].mxu0
        %8550 = vmatprep.mubr.f32.mxu0 0.0
        %8551 = vmatmul.mubr.f32.gmra.mrb[0].mxu0 %v8217
        %v8552 = vpop.f32.mrb[0].mxu0
        %v8553 = vadd.f32 %v8255, %v8552
        %v8554 = vpop.f32.mrb[0].mxu0
        %8555 = vmatprep.mubr.f32.mxu0 0.0
        %8556 = vmatmul.mubr.f32.gmra.mrb[0].mxu0 %v8218
        %v8557 = vpop.f32.mrb[0].mxu0
        %v8558 = vadd.f32 %v8255, %v8557
        %v8559 = vpop.f32.mrb[0].mxu0
        %8560 = vmatprep.mubr.f32.mxu0 0.0
        %8561 = vmatmul.mubr.f32.gmra.mrb[0].mxu0 %v8219
        %v8562 = vpop.f32.mrb[0].mxu0
        %v8563 = vadd.f32 %v8255, %v8562
        %v8564 = vpop.f32.mrb[0].mxu0
        %8565 = vmatprep.mubr.f32.mxu0 0.0
        %8566 = vmatmul.mubr.f32.gmra.mrb[0].mxu0 %v8220
        %v8567 = vpop.f32.mrb[0].mxu0
        %v8568 = vadd.f32 %v8255, %v8567
        %v8569 = vpop.f32.mrb[0].mxu0
        %8570 = vmatprep.mubr.f32.mxu0 0.0
        %8571 = vmatmul.mubr.f32.gmra.mrb[0].mxu0 %v8221
        %v8572 = vpop.f32.mrb[0].mxu0
        %v8573 = vadd.f32 %v8255, %v8572
        %v8574 = vpop.f32.mrb[0].mxu0
        %8575 = vmatprep.mubr.f32.mxu0 0.0
        %8576 = vmatmul.mubr.f32.gmra.mrb[0].mxu0 %v8222
        %v8577 = vpop.f32.mrb[0].mxu0
        %v8578 = vadd.f32 %v8255, %v8577
        %v8579 = vpop.f32.mrb[0].mxu0
        %8580 = vmatprep.mubr.f32.mxu0 0.0
        %8581 = vmatmul.mubr.f32.gmra.mrb[0].mxu0 %v8223
        %v8582 = vpop.f32.mrb[0].mxu0
        %v8583 = vadd.f32 %v8255, %v8582
        %v8584 = vpop.f32.mrb[0].mxu0
        %8585 = vmatprep.mubr.f32.mxu0 0.0
        %8586 = vmatmul.mubr.f32.gmra.mrb[0].mxu0 %v8224
        %v8587 = vpop.f32.mrb[0].mxu0
        %v8588 = vadd.f32 %v8255, %v8587
        %v8589 = vpop.f32.mrb[0].mxu0
        %8590 = vmatprep.mubr.f32.mxu0 0.0
        %8591 = vmatmul.mubr.f32.gmra.mrb[0].mxu0 %v8225
        %v8592 = vpop.f32.mrb[0].mxu0
        %v8593 = vadd.f32 %v8255, %v8592
        %v8594 = vpop.f32.mrb[0].mxu0
        %8595 = vmatprep.mubr.f32.mxu0 0.0
        %8596 = vmatmul.mubr.f32.gmra.mrb[0].mxu0 %v8226
        %v8597 = vpop.f32.mrb[0].mxu0
        %v8598 = vadd.f32 %v8255, %v8597
        %v8599 = vpop.f32.mrb[0].mxu0
        %8600 = vmatprep.mubr.f32.mxu0 0.0
        %8601 = vmatmul.mubr.f32.gmra.mrb[0].mxu0 %v8227
        %v8602 = vpop.f32.mrb[0].mxu0
        %v8603 = vadd.f32 %v8255, %v8602
        %v8604 = vpop.f32.mrb[0].mxu0
        %8605 = vmatprep.mubr.f32.mxu0 0.0
        %8606 = vmatmul.mubr.f32.gmra.mrb[0].mxu0 %v8228
        %v8607 = vpop.f32.mrb[0].mxu0
        %v8608 = vadd.f32 %v8255, %v8607
        %v8609 = vpop.f32.mrb[0].mxu0
        %8610 = vmatprep.mubr.f32.mxu0 0.0
        %8611 = vmatmul.mubr.f32.gmra.mrb[0].mxu0 %v8229
        %v8612 = vpop.f32.mrb[0].mxu0
        %v8613 = vadd.f32 %v8255, %v8612
        %v8614 = vpop.f32.mrb[0].mxu0
        %8615 = vmatprep.mubr.f32.mxu0 0.0
        %8616 = vmatmul.mubr.f32.gmra.mrb[0].mxu0 %v8230
        %v8617 = vpop.f32.mrb[0].mxu0
        %v8618 = vadd.f32 %v8255, %v8617
        %v8619 = vpop.f32.mrb[0].mxu0
        %8620 = vmatprep.mubr.f32.mxu0 0.0
        %8621 = vmatmul.mubr.f32.gmra.mrb[0].mxu0 %v8231
        %v8622 = vpop.f32.mrb[0].mxu0
        %v8623 = vadd.f32 %v8255, %v8622
        %v8624 = vpop.f32.mrb[0].mxu0
        %8625 = vmatprep.mubr.f32.mxu0 0.0
        %8626 = vmatmul.mubr.f32.gmra.mrb[0].mxu0 %v8232
        %v8627 = vpop.f32.mrb[0].mxu0
        %v8628 = vadd.f32 %v8255, %v8627
        %v8629 = vpop.f32.mrb[0].mxu0
        %8630 = vmatprep.mubr.f32.mxu0 0.0
        %8631 = vmatmul.mubr.f32.gmra.mrb[0].mxu0 %v8233
        %v8632 = vpop.f32.mrb[0].mxu0
        %v8633 = vadd.f32 %v8255, %v8632
        %v8634 = vpop.f32.mrb[0].mxu0
        %8635 = vmatprep.mubr.f32.mxu0 0.0
        %8636 = vmatmul.mubr.f32.gmra.mrb[0].mxu0 %v8234
        %v8637 = vpop.f32.mrb[0].mxu0
        %v8638 = vadd.f32 %v8255, %v8637
        %v8639 = vpop.f32.mrb[0].mxu0
        %8640 = vdwg.mxu0
        %s8641 = scalar_lea.vmem %s5, 256
        %v8642 = vld [vmem:[%s8641] sm:$0xff]
        %v8643 = vld [vmem:[%s8641 + $0x8] sm:$0xff]
        %v8644 = vld [vmem:[%s8641 + $0x10] sm:$0xff]
        %v8645 = vld [vmem:[%s8641 + $0x18] sm:$0xff]
        %v8646 = vld [vmem:[%s8641 + $0x20] sm:$0xff]
        %v8647 = vld [vmem:[%s8641 + $0x28] sm:$0xff]
        %v8648 = vld [vmem:[%s8641 + $0x30] sm:$0xff]
        %v8649 = vld [vmem:[%s8641 + $0x38] sm:$0xff]
        %v8650 = vld [vmem:[%s8641 + $0x40] sm:$0xff]
        %v8651 = vld [vmem:[%s8641 + $0x48] sm:$0xff]
        %v8652 = vld [vmem:[%s8641 + $0x50] sm:$0xff]
        %v8653 = vld [vmem:[%s8641 + $0x58] sm:$0xff]
        %v8654 = vld [vmem:[%s8641 + $0x60] sm:$0xff]
        %v8655 = vld [vmem:[%s8641 + $0x68] sm:$0xff]
        %v8656 = vld [vmem:[%s8641 + $0x70] sm:$0xff]
        %v8657 = vld [vmem:[%s8641 + $0x78] sm:$0xff]
        %v8658 = vlaneseq
        %v8659 = vshrl.u32 %v8658, 7
        %v8660 = vsub.s32 0, %v8659
        %v8661 = vrot.slane %v6667, %v8660
        %8662 = vmatprep.subr.mxu0 0.0
        %8663 = vmatpush1.msra.mxu0 %v8642
        %8664 = vmatprep.subr.mxu0 0.0
        %8665 = vmatpush1.msra.mxu0 %v8643
        %8666 = vmatprep.subr.mxu0 0.0
        %8667 = vmatpush1.msra.mxu0 %v8644
        %8668 = vmatprep.subr.mxu0 0.0
        %8669 = vmatpush1.msra.mxu0 %v8645
        %8670 = vmatprep.subr.mxu0 0.0
        %8671 = vmatpush1.msra.mxu0 %v8646
        %8672 = vmatprep.subr.mxu0 0.0
        %8673 = vmatpush1.msra.mxu0 %v8647
        %8674 = vmatprep.subr.mxu0 0.0
        %8675 = vmatpush1.msra.mxu0 %v8648
        %8676 = vmatprep.subr.mxu0 0.0
        %8677 = vmatpush1.msra.mxu0 %v8649
        %8678 = vmatprep.subr.mxu0 0.0
        %8679 = vmatpush1.msra.mxu0 %v8650
        %8680 = vmatprep.subr.mxu0 0.0
        %8681 = vmatpush1.msra.mxu0 %v8651
        %8682 = vmatprep.subr.mxu0 0.0
        %8683 = vmatpush1.msra.mxu0 %v8652
        %8684 = vmatprep.subr.mxu0 0.0
        %8685 = vmatpush1.msra.mxu0 %v8653
        %8686 = vmatprep.subr.mxu0 0.0
        %8687 = vmatpush1.msra.mxu0 %v8654
        %8688 = vmatprep.subr.mxu0 0.0
        %8689 = vmatpush1.msra.mxu0 %v8655
        %8690 = vmatprep.subr.mxu0 0.0
        %8691 = vmatpush1.msra.mxu0 %v8656
        %8692 = vmatprep.subr.mxu0 0.0
        %8693 = vmatpush1.msra.mxu0 %v8657
        %8694 = vmatprep.subr.mxu0 0.0
        %8695 = vmatpush1.msra.mxu0 0.0
        %8696 = vmatprep.subr.mxu0 0.0
        %8697 = vmatpush1.msra.mxu0 0.0
        %8698 = vmatprep.subr.mxu0 0.0
        %8699 = vmatpush1.msra.mxu0 0.0
        %8700 = vmatprep.subr.mxu0 0.0
        %8701 = vmatpush1.msra.mxu0 0.0
        %8702 = vmatprep.subr.mxu0 0.0
        %8703 = vmatpush1.msra.mxu0 0.0
        %8704 = vmatprep.subr.mxu0 0.0
        %8705 = vmatpush1.msra.mxu0 0.0
        %8706 = vmatprep.subr.mxu0 0.0
        %8707 = vmatpush1.msra.mxu0 0.0
        %8708 = vmatprep.subr.mxu0 0.0
        %8709 = vmatpush1.msra.mxu0 0.0
        %8710 = vmatprep.subr.mxu0 0.0
        %8711 = vmatpush1.msra.mxu0 0.0
        %8712 = vmatprep.subr.mxu0 0.0
        %8713 = vmatpush1.msra.mxu0 0.0
        %8714 = vmatprep.subr.mxu0 0.0
        %8715 = vmatpush1.msra.mxu0 0.0
        %8716 = vmatprep.subr.mxu0 0.0
        %8717 = vmatpush1.msra.mxu0 0.0
        %8718 = vmatprep.subr.mxu0 0.0
        %8719 = vmatpush1.msra.mxu0 0.0
        %8720 = vmatprep.subr.mxu0 0.0
        %8721 = vmatpush1.msra.mxu0 0.0
        %8722 = vmatprep.subr.mxu0 0.0
        %8723 = vmatpush1.msra.mxu0 0.0
        %8724 = vmatprep.subr.mxu0 0.0
        %8725 = vmatpush1.msra.mxu0 0.0
        %8726 = vmatprep.mubr.f32.mxu0 0.0
        %8727 = vmatmul.mubr.f32.gmra.mrb[0].mxu0 %v7401
        %v8728 = vpop.f32.mrb[0].mxu0
        %v8729 = vadd.f32 %v8661, %v8728
        %v8730 = vpop.f32.mrb[0].mxu0
        %8731 = vmatprep.mubr.f32.mxu0 0.0
        %8732 = vmatmul.mubr.f32.gmra.mrb[0].mxu0 %v7406
        %v8733 = vpop.f32.mrb[0].mxu0
        %v8734 = vadd.f32 %v8661, %v8733
        %v8735 = vpop.f32.mrb[0].mxu0
        %8736 = vmatprep.mubr.f32.mxu0 0.0
        %8737 = vmatmul.mubr.f32.gmra.mrb[0].mxu0 %v7411
        %v8738 = vpop.f32.mrb[0].mxu0
        %v8739 = vadd.f32 %v8661, %v8738
        %v8740 = vpop.f32.mrb[0].mxu0
        %8741 = vmatprep.mubr.f32.mxu0 0.0
        %8742 = vmatmul.mubr.f32.gmra.mrb[0].mxu0 %v7416
        %v8743 = vpop.f32.mrb[0].mxu0
        %v8744 = vadd.f32 %v8661, %v8743
        %v8745 = vpop.f32.mrb[0].mxu0
        %8746 = vmatprep.mubr.f32.mxu0 0.0
        %8747 = vmatmul.mubr.f32.gmra.mrb[0].mxu0 %v7421
        %v8748 = vpop.f32.mrb[0].mxu0
        %v8749 = vadd.f32 %v8661, %v8748
        %v8750 = vpop.f32.mrb[0].mxu0
        %8751 = vmatprep.mubr.f32.mxu0 0.0
        %8752 = vmatmul.mubr.f32.gmra.mrb[0].mxu0 %v7426
        %v8753 = vpop.f32.mrb[0].mxu0
        %v8754 = vadd.f32 %v8661, %v8753
        %v8755 = vpop.f32.mrb[0].mxu0
        %8756 = vmatprep.mubr.f32.mxu0 0.0
        %8757 = vmatmul.mubr.f32.gmra.mrb[0].mxu0 %v7431
        %v8758 = vpop.f32.mrb[0].mxu0
        %v8759 = vadd.f32 %v8661, %v8758
        %v8760 = vpop.f32.mrb[0].mxu0
        %8761 = vmatprep.mubr.f32.mxu0 0.0
        %8762 = vmatmul.mubr.f32.gmra.mrb[0].mxu0 %v7436
        %v8763 = vpop.f32.mrb[0].mxu0
        %v8764 = vadd.f32 %v8661, %v8763
        %v8765 = vpop.f32.mrb[0].mxu0
        %8766 = vmatprep.mubr.f32.mxu0 0.0
        %8767 = vmatmul.mubr.f32.gmra.mrb[0].mxu0 %v7441
        %v8768 = vpop.f32.mrb[0].mxu0
        %v8769 = vadd.f32 %v8661, %v8768
        %v8770 = vpop.f32.mrb[0].mxu0
        %8771 = vmatprep.mubr.f32.mxu0 0.0
        %8772 = vmatmul.mubr.f32.gmra.mrb[0].mxu0 %v7446
        %v8773 = vpop.f32.mrb[0].mxu0
        %v8774 = vadd.f32 %v8661, %v8773
        %v8775 = vpop.f32.mrb[0].mxu0
        %8776 = vmatprep.mubr.f32.mxu0 0.0
        %8777 = vmatmul.mubr.f32.gmra.mrb[0].mxu0 %v7451
        %v8778 = vpop.f32.mrb[0].mxu0
        %v8779 = vadd.f32 %v8661, %v8778
        %v8780 = vpop.f32.mrb[0].mxu0
        %8781 = vmatprep.mubr.f32.mxu0 0.0
        %8782 = vmatmul.mubr.f32.gmra.mrb[0].mxu0 %v7456
        %v8783 = vpop.f32.mrb[0].mxu0
        %v8784 = vadd.f32 %v8661, %v8783
        %v8785 = vpop.f32.mrb[0].mxu0
        %8786 = vmatprep.mubr.f32.mxu0 0.0
        %8787 = vmatmul.mubr.f32.gmra.mrb[0].mxu0 %v7461
        %v8788 = vpop.f32.mrb[0].mxu0
        %v8789 = vadd.f32 %v8661, %v8788
        %v8790 = vpop.f32.mrb[0].mxu0
        %8791 = vmatprep.mubr.f32.mxu0 0.0
        %8792 = vmatmul.mubr.f32.gmra.mrb[0].mxu0 %v7466
        %v8793 = vpop.f32.mrb[0].mxu0
        %v8794 = vadd.f32 %v8661, %v8793
        %v8795 = vpop.f32.mrb[0].mxu0
        %8796 = vmatprep.mubr.f32.mxu0 0.0
        %8797 = vmatmul.mubr.f32.gmra.mrb[0].mxu0 %v7471
        %v8798 = vpop.f32.mrb[0].mxu0
        %v8799 = vadd.f32 %v8661, %v8798
        %v8800 = vpop.f32.mrb[0].mxu0
        %8801 = vmatprep.mubr.f32.mxu0 0.0
        %8802 = vmatmul.mubr.f32.gmra.mrb[0].mxu0 %v7476
        %v8803 = vpop.f32.mrb[0].mxu0
        %v8804 = vadd.f32 %v8661, %v8803
        %v8805 = vpop.f32.mrb[0].mxu0
        %8806 = vmatprep.mubr.f32.mxu0 0.0
        %8807 = vmatmul.mubr.f32.gmra.mrb[0].mxu0 %v7481
        %v8808 = vpop.f32.mrb[0].mxu0
        %v8809 = vadd.f32 %v8661, %v8808
        %v8810 = vpop.f32.mrb[0].mxu0
        %8811 = vmatprep.mubr.f32.mxu0 0.0
        %8812 = vmatmul.mubr.f32.gmra.mrb[0].mxu0 %v7486
        %v8813 = vpop.f32.mrb[0].mxu0
        %v8814 = vadd.f32 %v8661, %v8813
        %v8815 = vpop.f32.mrb[0].mxu0
        %8816 = vmatprep.mubr.f32.mxu0 0.0
        %8817 = vmatmul.mubr.f32.gmra.mrb[0].mxu0 %v7491
        %v8818 = vpop.f32.mrb[0].mxu0
        %v8819 = vadd.f32 %v8661, %v8818
        %v8820 = vpop.f32.mrb[0].mxu0
        %8821 = vmatprep.mubr.f32.mxu0 0.0
        %8822 = vmatmul.mubr.f32.gmra.mrb[0].mxu0 %v7496
        %v8823 = vpop.f32.mrb[0].mxu0
        %v8824 = vadd.f32 %v8661, %v8823
        %v8825 = vpop.f32.mrb[0].mxu0
        %8826 = vmatprep.mubr.f32.mxu0 0.0
        %8827 = vmatmul.mubr.f32.gmra.mrb[0].mxu0 %v7501
        %v8828 = vpop.f32.mrb[0].mxu0
        %v8829 = vadd.f32 %v8661, %v8828
        %v8830 = vpop.f32.mrb[0].mxu0
        %8831 = vmatprep.mubr.f32.mxu0 0.0
        %8832 = vmatmul.mubr.f32.gmra.mrb[0].mxu0 %v7506
        %v8833 = vpop.f32.mrb[0].mxu0
        %v8834 = vadd.f32 %v8661, %v8833
        %v8835 = vpop.f32.mrb[0].mxu0
        %8836 = vmatprep.mubr.f32.mxu0 0.0
        %8837 = vmatmul.mubr.f32.gmra.mrb[0].mxu0 %v7511
        %v8838 = vpop.f32.mrb[0].mxu0
        %v8839 = vadd.f32 %v8661, %v8838
        %v8840 = vpop.f32.mrb[0].mxu0
        %8841 = vmatprep.mubr.f32.mxu0 0.0
        %8842 = vmatmul.mubr.f32.gmra.mrb[0].mxu0 %v7516
        %v8843 = vpop.f32.mrb[0].mxu0
        %v8844 = vadd.f32 %v8661, %v8843
        %v8845 = vpop.f32.mrb[0].mxu0
        %8846 = vmatprep.mubr.f32.mxu0 0.0
        %8847 = vmatmul.mubr.f32.gmra.mrb[0].mxu0 %v7521
        %v8848 = vpop.f32.mrb[0].mxu0
        %v8849 = vadd.f32 %v8661, %v8848
        %v8850 = vpop.f32.mrb[0].mxu0
        %8851 = vmatprep.mubr.f32.mxu0 0.0
        %8852 = vmatmul.mubr.f32.gmra.mrb[0].mxu0 %v7526
        %v8853 = vpop.f32.mrb[0].mxu0
        %v8854 = vadd.f32 %v8661, %v8853
        %v8855 = vpop.f32.mrb[0].mxu0
        %8856 = vmatprep.mubr.f32.mxu0 0.0
        %8857 = vmatmul.mubr.f32.gmra.mrb[0].mxu0 %v7531
        %v8858 = vpop.f32.mrb[0].mxu0
        %v8859 = vadd.f32 %v8661, %v8858
        %v8860 = vpop.f32.mrb[0].mxu0
        %8861 = vmatprep.mubr.f32.mxu0 0.0
        %8862 = vmatmul.mubr.f32.gmra.mrb[0].mxu0 %v7536
        %v8863 = vpop.f32.mrb[0].mxu0
        %v8864 = vadd.f32 %v8661, %v8863
        %v8865 = vpop.f32.mrb[0].mxu0
        %8866 = vmatprep.mubr.f32.mxu0 0.0
        %8867 = vmatmul.mubr.f32.gmra.mrb[0].mxu0 %v7541
        %v8868 = vpop.f32.mrb[0].mxu0
        %v8869 = vadd.f32 %v8661, %v8868
        %v8870 = vpop.f32.mrb[0].mxu0
        %8871 = vmatprep.mubr.f32.mxu0 0.0
        %8872 = vmatmul.mubr.f32.gmra.mrb[0].mxu0 %v7546
        %v8873 = vpop.f32.mrb[0].mxu0
        %v8874 = vadd.f32 %v8661, %v8873
        %v8875 = vpop.f32.mrb[0].mxu0
        %8876 = vmatprep.mubr.f32.mxu0 0.0
        %8877 = vmatmul.mubr.f32.gmra.mrb[0].mxu0 %v7551
        %v8878 = vpop.f32.mrb[0].mxu0
        %v8879 = vadd.f32 %v8661, %v8878
        %v8880 = vpop.f32.mrb[0].mxu0
        %8881 = vmatprep.mubr.f32.mxu0 0.0
        %8882 = vmatmul.mubr.f32.gmra.mrb[0].mxu0 %v7556
        %v8883 = vpop.f32.mrb[0].mxu0
        %v8884 = vadd.f32 %v8661, %v8883
        %v8885 = vpop.f32.mrb[0].mxu0
        %8886 = vmatprep.mubr.f32.mxu0 0.0
        %8887 = vmatmul.mubr.f32.gmra.mrb[0].mxu0 %v7561
        %v8888 = vpop.f32.mrb[0].mxu0
        %v8889 = vadd.f32 %v8661, %v8888
        %v8890 = vpop.f32.mrb[0].mxu0
        %8891 = vmatprep.mubr.f32.mxu0 0.0
        %8892 = vmatmul.mubr.f32.gmra.mrb[0].mxu0 %v7566
        %v8893 = vpop.f32.mrb[0].mxu0
        %v8894 = vadd.f32 %v8661, %v8893
        %v8895 = vpop.f32.mrb[0].mxu0
        %8896 = vmatprep.mubr.f32.mxu0 0.0
        %8897 = vmatmul.mubr.f32.gmra.mrb[0].mxu0 %v7571
        %v8898 = vpop.f32.mrb[0].mxu0
        %v8899 = vadd.f32 %v8661, %v8898
        %v8900 = vpop.f32.mrb[0].mxu0
        %8901 = vmatprep.mubr.f32.mxu0 0.0
        %8902 = vmatmul.mubr.f32.gmra.mrb[0].mxu0 %v7576
        %v8903 = vpop.f32.mrb[0].mxu0
        %v8904 = vadd.f32 %v8661, %v8903
        %v8905 = vpop.f32.mrb[0].mxu0
        %8906 = vmatprep.mubr.f32.mxu0 0.0
        %8907 = vmatmul.mubr.f32.gmra.mrb[0].mxu0 %v7581
        %v8908 = vpop.f32.mrb[0].mxu0
        %v8909 = vadd.f32 %v8661, %v8908
        %v8910 = vpop.f32.mrb[0].mxu0
        %8911 = vmatprep.mubr.f32.mxu0 0.0
        %8912 = vmatmul.mubr.f32.gmra.mrb[0].mxu0 %v7586
        %v8913 = vpop.f32.mrb[0].mxu0
        %v8914 = vadd.f32 %v8661, %v8913
        %v8915 = vpop.f32.mrb[0].mxu0
        %8916 = vmatprep.mubr.f32.mxu0 0.0
        %8917 = vmatmul.mubr.f32.gmra.mrb[0].mxu0 %v7591
        %v8918 = vpop.f32.mrb[0].mxu0
        %v8919 = vadd.f32 %v8661, %v8918
        %v8920 = vpop.f32.mrb[0].mxu0
        %8921 = vmatprep.mubr.f32.mxu0 0.0
        %8922 = vmatmul.mubr.f32.gmra.mrb[0].mxu0 %v7596
        %v8923 = vpop.f32.mrb[0].mxu0
        %v8924 = vadd.f32 %v8661, %v8923
        %v8925 = vpop.f32.mrb[0].mxu0
        %8926 = vmatprep.mubr.f32.mxu0 0.0
        %8927 = vmatmul.mubr.f32.gmra.mrb[0].mxu0 %v7601
        %v8928 = vpop.f32.mrb[0].mxu0
        %v8929 = vadd.f32 %v8661, %v8928
        %v8930 = vpop.f32.mrb[0].mxu0
        %8931 = vmatprep.mubr.f32.mxu0 0.0
        %8932 = vmatmul.mubr.f32.gmra.mrb[0].mxu0 %v7606
        %v8933 = vpop.f32.mrb[0].mxu0
        %v8934 = vadd.f32 %v8661, %v8933
        %v8935 = vpop.f32.mrb[0].mxu0
        %8936 = vmatprep.mubr.f32.mxu0 0.0
        %8937 = vmatmul.mubr.f32.gmra.mrb[0].mxu0 %v7611
        %v8938 = vpop.f32.mrb[0].mxu0
        %v8939 = vadd.f32 %v8661, %v8938
        %v8940 = vpop.f32.mrb[0].mxu0
        %8941 = vmatprep.mubr.f32.mxu0 0.0
        %8942 = vmatmul.mubr.f32.gmra.mrb[0].mxu0 %v7616
        %v8943 = vpop.f32.mrb[0].mxu0
        %v8944 = vadd.f32 %v8661, %v8943
        %v8945 = vpop.f32.mrb[0].mxu0
        %8946 = vmatprep.mubr.f32.mxu0 0.0
        %8947 = vmatmul.mubr.f32.gmra.mrb[0].mxu0 %v7621
        %v8948 = vpop.f32.mrb[0].mxu0
        %v8949 = vadd.f32 %v8661, %v8948
        %v8950 = vpop.f32.mrb[0].mxu0
        %8951 = vmatprep.mubr.f32.mxu0 0.0
        %8952 = vmatmul.mubr.f32.gmra.mrb[0].mxu0 %v7626
        %v8953 = vpop.f32.mrb[0].mxu0
        %v8954 = vadd.f32 %v8661, %v8953
        %v8955 = vpop.f32.mrb[0].mxu0
        %8956 = vmatprep.mubr.f32.mxu0 0.0
        %8957 = vmatmul.mubr.f32.gmra.mrb[0].mxu0 %v7631
        %v8958 = vpop.f32.mrb[0].mxu0
        %v8959 = vadd.f32 %v8661, %v8958
        %v8960 = vpop.f32.mrb[0].mxu0
        %8961 = vmatprep.mubr.f32.mxu0 0.0
        %8962 = vmatmul.mubr.f32.gmra.mrb[0].mxu0 %v7636
        %v8963 = vpop.f32.mrb[0].mxu0
        %v8964 = vadd.f32 %v8661, %v8963
        %v8965 = vpop.f32.mrb[0].mxu0
        %8966 = vmatprep.mubr.f32.mxu0 0.0
        %8967 = vmatmul.mubr.f32.gmra.mrb[0].mxu0 %v7641
        %v8968 = vpop.f32.mrb[0].mxu0
        %v8969 = vadd.f32 %v8661, %v8968
        %v8970 = vpop.f32.mrb[0].mxu0
        %8971 = vmatprep.mubr.f32.mxu0 0.0
        %8972 = vmatmul.mubr.f32.gmra.mrb[0].mxu0 %v7646
        %v8973 = vpop.f32.mrb[0].mxu0
        %v8974 = vadd.f32 %v8661, %v8973
        %v8975 = vpop.f32.mrb[0].mxu0
        %8976 = vmatprep.mubr.f32.mxu0 0.0
        %8977 = vmatmul.mubr.f32.gmra.mrb[0].mxu0 %v7651
        %v8978 = vpop.f32.mrb[0].mxu0
        %v8979 = vadd.f32 %v8661, %v8978
        %v8980 = vpop.f32.mrb[0].mxu0
        %8981 = vmatprep.mubr.f32.mxu0 0.0
        %8982 = vmatmul.mubr.f32.gmra.mrb[0].mxu0 %v7656
        %v8983 = vpop.f32.mrb[0].mxu0
        %v8984 = vadd.f32 %v8661, %v8983
        %v8985 = vpop.f32.mrb[0].mxu0
        %8986 = vmatprep.mubr.f32.mxu0 0.0
        %8987 = vmatmul.mubr.f32.gmra.mrb[0].mxu0 %v7661
        %v8988 = vpop.f32.mrb[0].mxu0
        %v8989 = vadd.f32 %v8661, %v8988
        %v8990 = vpop.f32.mrb[0].mxu0
        %8991 = vmatprep.mubr.f32.mxu0 0.0
        %8992 = vmatmul.mubr.f32.gmra.mrb[0].mxu0 %v7666
        %v8993 = vpop.f32.mrb[0].mxu0
        %v8994 = vadd.f32 %v8661, %v8993
        %v8995 = vpop.f32.mrb[0].mxu0
        %8996 = vmatprep.mubr.f32.mxu0 0.0
        %8997 = vmatmul.mubr.f32.gmra.mrb[0].mxu0 %v7671
        %v8998 = vpop.f32.mrb[0].mxu0
        %v8999 = vadd.f32 %v8661, %v8998
        %v9000 = vpop.f32.mrb[0].mxu0
        %9001 = vmatprep.mubr.f32.mxu0 0.0
        %9002 = vmatmul.mubr.f32.gmra.mrb[0].mxu0 %v7676
        %v9003 = vpop.f32.mrb[0].mxu0
        %v9004 = vadd.f32 %v8661, %v9003
        %v9005 = vpop.f32.mrb[0].mxu0
        %9006 = vmatprep.mubr.f32.mxu0 0.0
        %9007 = vmatmul.mubr.f32.gmra.mrb[0].mxu0 %v7681
        %v9008 = vpop.f32.mrb[0].mxu0
        %v9009 = vadd.f32 %v8661, %v9008
        %v9010 = vpop.f32.mrb[0].mxu0
        %9011 = vmatprep.mubr.f32.mxu0 0.0
        %9012 = vmatmul.mubr.f32.gmra.mrb[0].mxu0 %v7686
        %v9013 = vpop.f32.mrb[0].mxu0
        %v9014 = vadd.f32 %v8661, %v9013
        %v9015 = vpop.f32.mrb[0].mxu0
        %9016 = vmatprep.mubr.f32.mxu0 0.0
        %9017 = vmatmul.mubr.f32.gmra.mrb[0].mxu0 %v7691
        %v9018 = vpop.f32.mrb[0].mxu0
        %v9019 = vadd.f32 %v8661, %v9018
        %v9020 = vpop.f32.mrb[0].mxu0
        %9021 = vmatprep.mubr.f32.mxu0 0.0
        %9022 = vmatmul.mubr.f32.gmra.mrb[0].mxu0 %v7696
        %v9023 = vpop.f32.mrb[0].mxu0
        %v9024 = vadd.f32 %v8661, %v9023
        %v9025 = vpop.f32.mrb[0].mxu0
        %9026 = vmatprep.mubr.f32.mxu0 0.0
        %9027 = vmatmul.mubr.f32.gmra.mrb[0].mxu0 %v7701
        %v9028 = vpop.f32.mrb[0].mxu0
        %v9029 = vadd.f32 %v8661, %v9028
        %v9030 = vpop.f32.mrb[0].mxu0
        %9031 = vmatprep.mubr.f32.mxu0 0.0
        %9032 = vmatmul.mubr.f32.gmra.mrb[0].mxu0 %v7706
        %v9033 = vpop.f32.mrb[0].mxu0
        %v9034 = vadd.f32 %v8661, %v9033
        %v9035 = vpop.f32.mrb[0].mxu0
        %9036 = vmatprep.mubr.f32.mxu0 0.0
        %9037 = vmatmul.mubr.f32.gmra.mrb[0].mxu0 %v7711
        %v9038 = vpop.f32.mrb[0].mxu0
        %v9039 = vadd.f32 %v8661, %v9038
        %v9040 = vpop.f32.mrb[0].mxu0
        %9041 = vmatprep.mubr.f32.mxu0 0.0
        %9042 = vmatmul.mubr.f32.gmra.mrb[0].mxu0 %v7716
        %v9043 = vpop.f32.mrb[0].mxu0
        %v9044 = vadd.f32 %v8661, %v9043
        %v9045 = vpop.f32.mrb[0].mxu0
        %9046 = vdwg.mxu0
        %v9047 = vxor.u32 %v8729, 2147483648
        %v9048 = vxor.u32 %v8734, 2147483648
        %v9049 = vxor.u32 %v8739, 2147483648
        %v9050 = vxor.u32 %v8744, 2147483648
        %v9051 = vxor.u32 %v8749, 2147483648
        %v9052 = vxor.u32 %v8754, 2147483648
        %v9053 = vxor.u32 %v8759, 2147483648
        %v9054 = vxor.u32 %v8764, 2147483648
        %v9055 = vxor.u32 %v8769, 2147483648
        %v9056 = vxor.u32 %v8774, 2147483648
        %v9057 = vxor.u32 %v8779, 2147483648
        %v9058 = vxor.u32 %v8784, 2147483648
        %v9059 = vxor.u32 %v8789, 2147483648
        %v9060 = vxor.u32 %v8794, 2147483648
        %v9061 = vxor.u32 %v8799, 2147483648
        %v9062 = vxor.u32 %v8804, 2147483648
        %v9063 = vxor.u32 %v8809, 2147483648
        %v9064 = vxor.u32 %v8814, 2147483648
        %v9065 = vxor.u32 %v8819, 2147483648
        %v9066 = vxor.u32 %v8824, 2147483648
        %v9067 = vxor.u32 %v8829, 2147483648
        %v9068 = vxor.u32 %v8834, 2147483648
        %v9069 = vxor.u32 %v8839, 2147483648
        %v9070 = vxor.u32 %v8844, 2147483648
        %v9071 = vxor.u32 %v8849, 2147483648
        %v9072 = vxor.u32 %v8854, 2147483648
        %v9073 = vxor.u32 %v8859, 2147483648
        %v9074 = vxor.u32 %v8864, 2147483648
        %v9075 = vxor.u32 %v8869, 2147483648
        %v9076 = vxor.u32 %v8874, 2147483648
        %v9077 = vxor.u32 %v8879, 2147483648
        %v9078 = vxor.u32 %v8884, 2147483648
        %v9079 = vxor.u32 %v8889, 2147483648
        %v9080 = vxor.u32 %v8894, 2147483648
        %v9081 = vxor.u32 %v8899, 2147483648
        %v9082 = vxor.u32 %v8904, 2147483648
        %v9083 = vxor.u32 %v8909, 2147483648
        %v9084 = vxor.u32 %v8914, 2147483648
        %v9085 = vxor.u32 %v8919, 2147483648
        %v9086 = vxor.u32 %v8924, 2147483648
        %v9087 = vxor.u32 %v8929, 2147483648
        %v9088 = vxor.u32 %v8934, 2147483648
        %v9089 = vxor.u32 %v8939, 2147483648
        %v9090 = vxor.u32 %v8944, 2147483648
        %v9091 = vxor.u32 %v8949, 2147483648
        %v9092 = vxor.u32 %v8954, 2147483648
        %v9093 = vxor.u32 %v8959, 2147483648
        %v9094 = vxor.u32 %v8964, 2147483648
        %v9095 = vxor.u32 %v8969, 2147483648
        %v9096 = vxor.u32 %v8974, 2147483648
        %v9097 = vxor.u32 %v8979, 2147483648
        %v9098 = vxor.u32 %v8984, 2147483648
        %v9099 = vxor.u32 %v8989, 2147483648
        %v9100 = vxor.u32 %v8994, 2147483648
        %v9101 = vxor.u32 %v8999, 2147483648
        %v9102 = vxor.u32 %v9004, 2147483648
        %v9103 = vxor.u32 %v9009, 2147483648
        %v9104 = vxor.u32 %v9014, 2147483648
        %v9105 = vxor.u32 %v9019, 2147483648
        %v9106 = vxor.u32 %v9024, 2147483648
        %v9107 = vxor.u32 %v9029, 2147483648
        %v9108 = vxor.u32 %v9034, 2147483648
        %v9109 = vxor.u32 %v9039, 2147483648
        %v9110 = vxor.u32 %v9044, 2147483648
        %v9111 = vmul.f32 %v9047, 1.442695
        %v9112 = vpow.pop %v9111
        %v9113 = vmul.f32 %v9048, 1.442695
        %v9114 = vpow.pop %v9113
        %v9115 = vmul.f32 %v9049, 1.442695
        %v9116 = vpow.pop %v9115
        %v9117 = vmul.f32 %v9050, 1.442695
        %v9118 = vpow.pop %v9117
        %v9119 = vmul.f32 %v9051, 1.442695
        %v9120 = vpow.pop %v9119
        %v9121 = vmul.f32 %v9052, 1.442695
        %v9122 = vpow.pop %v9121
        %v9123 = vmul.f32 %v9053, 1.442695
        %v9124 = vpow.pop %v9123
        %v9125 = vmul.f32 %v9054, 1.442695
        %v9126 = vpow.pop %v9125
        %v9127 = vmul.f32 %v9055, 1.442695
        %v9128 = vpow.pop %v9127
        %v9129 = vmul.f32 %v9056, 1.442695
        %v9130 = vpow.pop %v9129
        %v9131 = vmul.f32 %v9057, 1.442695
        %v9132 = vpow.pop %v9131
        %v9133 = vmul.f32 %v9058, 1.442695
        %v9134 = vpow.pop %v9133
        %v9135 = vmul.f32 %v9059, 1.442695
        %v9136 = vpow.pop %v9135
        %v9137 = vmul.f32 %v9060, 1.442695
        %v9138 = vpow.pop %v9137
        %v9139 = vmul.f32 %v9061, 1.442695
        %v9140 = vpow.pop %v9139
        %v9141 = vmul.f32 %v9062, 1.442695
        %v9142 = vpow.pop %v9141
        %v9143 = vmul.f32 %v9063, 1.442695
        %v9144 = vpow.pop %v9143
        %v9145 = vmul.f32 %v9064, 1.442695
        %v9146 = vpow.pop %v9145
        %v9147 = vmul.f32 %v9065, 1.442695
        %v9148 = vpow.pop %v9147
        %v9149 = vmul.f32 %v9066, 1.442695
        %v9150 = vpow.pop %v9149
        %v9151 = vmul.f32 %v9067, 1.442695
        %v9152 = vpow.pop %v9151
        %v9153 = vmul.f32 %v9068, 1.442695
        %v9154 = vpow.pop %v9153
        %v9155 = vmul.f32 %v9069, 1.442695
        %v9156 = vpow.pop %v9155
        %v9157 = vmul.f32 %v9070, 1.442695
        %v9158 = vpow.pop %v9157
        %v9159 = vmul.f32 %v9071, 1.442695
        %v9160 = vpow.pop %v9159
        %v9161 = vmul.f32 %v9072, 1.442695
        %v9162 = vpow.pop %v9161
        %v9163 = vmul.f32 %v9073, 1.442695
        %v9164 = vpow.pop %v9163
        %v9165 = vmul.f32 %v9074, 1.442695
        %v9166 = vpow.pop %v9165
        %v9167 = vmul.f32 %v9075, 1.442695
        %v9168 = vpow.pop %v9167
        %v9169 = vmul.f32 %v9076, 1.442695
        %v9170 = vpow.pop %v9169
        %v9171 = vmul.f32 %v9077, 1.442695
        %v9172 = vpow.pop %v9171
        %v9173 = vmul.f32 %v9078, 1.442695
        %v9174 = vpow.pop %v9173
        %v9175 = vmul.f32 %v9079, 1.442695
        %v9176 = vpow.pop %v9175
        %v9177 = vmul.f32 %v9080, 1.442695
        %v9178 = vpow.pop %v9177
        %v9179 = vmul.f32 %v9081, 1.442695
        %v9180 = vpow.pop %v9179
        %v9181 = vmul.f32 %v9082, 1.442695
        %v9182 = vpow.pop %v9181
        %v9183 = vmul.f32 %v9083, 1.442695
        %v9184 = vpow.pop %v9183
        %v9185 = vmul.f32 %v9084, 1.442695
        %v9186 = vpow.pop %v9185
        %v9187 = vmul.f32 %v9085, 1.442695
        %v9188 = vpow.pop %v9187
        %v9189 = vmul.f32 %v9086, 1.442695
        %v9190 = vpow.pop %v9189
        %v9191 = vmul.f32 %v9087, 1.442695
        %v9192 = vpow.pop %v9191
        %v9193 = vmul.f32 %v9088, 1.442695
        %v9194 = vpow.pop %v9193
        %v9195 = vmul.f32 %v9089, 1.442695
        %v9196 = vpow.pop %v9195
        %v9197 = vmul.f32 %v9090, 1.442695
        %v9198 = vpow.pop %v9197
        %v9199 = vmul.f32 %v9091, 1.442695
        %v9200 = vpow.pop %v9199
        %v9201 = vmul.f32 %v9092, 1.442695
        %v9202 = vpow.pop %v9201
        %v9203 = vmul.f32 %v9093, 1.442695
        %v9204 = vpow.pop %v9203
        %v9205 = vmul.f32 %v9094, 1.442695
        %v9206 = vpow.pop %v9205
        %v9207 = vmul.f32 %v9095, 1.442695
        %v9208 = vpow.pop %v9207
        %v9209 = vmul.f32 %v9096, 1.442695
        %v9210 = vpow.pop %v9209
        %v9211 = vmul.f32 %v9097, 1.442695
        %v9212 = vpow.pop %v9211
        %v9213 = vmul.f32 %v9098, 1.442695
        %v9214 = vpow.pop %v9213
        %v9215 = vmul.f32 %v9099, 1.442695
        %v9216 = vpow.pop %v9215
        %v9217 = vmul.f32 %v9100, 1.442695
        %v9218 = vpow.pop %v9217
        %v9219 = vmul.f32 %v9101, 1.442695
        %v9220 = vpow.pop %v9219
        %v9221 = vmul.f32 %v9102, 1.442695
        %v9222 = vpow.pop %v9221
        %v9223 = vmul.f32 %v9103, 1.442695
        %v9224 = vpow.pop %v9223
        %v9225 = vmul.f32 %v9104, 1.442695
        %v9226 = vpow.pop %v9225
        %v9227 = vmul.f32 %v9105, 1.442695
        %v9228 = vpow.pop %v9227
        %v9229 = vmul.f32 %v9106, 1.442695
        %v9230 = vpow.pop %v9229
        %v9231 = vmul.f32 %v9107, 1.442695
        %v9232 = vpow.pop %v9231
        %v9233 = vmul.f32 %v9108, 1.442695
        %v9234 = vpow.pop %v9233
        %v9235 = vmul.f32 %v9109, 1.442695
        %v9236 = vpow.pop %v9235
        %v9237 = vmul.f32 %v9110, 1.442695
        %v9238 = vpow.pop %v9237
        %v9239 = vadd.f32 %v9112, 1.0
        %v9240 = vadd.f32 %v9114, 1.0
        %v9241 = vadd.f32 %v9116, 1.0
        %v9242 = vadd.f32 %v9118, 1.0
        %v9243 = vadd.f32 %v9120, 1.0
        %v9244 = vadd.f32 %v9122, 1.0
        %v9245 = vadd.f32 %v9124, 1.0
        %v9246 = vadd.f32 %v9126, 1.0
        %v9247 = vadd.f32 %v9128, 1.0
        %v9248 = vadd.f32 %v9130, 1.0
        %v9249 = vadd.f32 %v9132, 1.0
        %v9250 = vadd.f32 %v9134, 1.0
        %v9251 = vadd.f32 %v9136, 1.0
        %v9252 = vadd.f32 %v9138, 1.0
        %v9253 = vadd.f32 %v9140, 1.0
        %v9254 = vadd.f32 %v9142, 1.0
        %v9255 = vadd.f32 %v9144, 1.0
        %v9256 = vadd.f32 %v9146, 1.0
        %v9257 = vadd.f32 %v9148, 1.0
        %v9258 = vadd.f32 %v9150, 1.0
        %v9259 = vadd.f32 %v9152, 1.0
        %v9260 = vadd.f32 %v9154, 1.0
        %v9261 = vadd.f32 %v9156, 1.0
        %v9262 = vadd.f32 %v9158, 1.0
        %v9263 = vadd.f32 %v9160, 1.0
        %v9264 = vadd.f32 %v9162, 1.0
        %v9265 = vadd.f32 %v9164, 1.0
        %v9266 = vadd.f32 %v9166, 1.0
        %v9267 = vadd.f32 %v9168, 1.0
        %v9268 = vadd.f32 %v9170, 1.0
        %v9269 = vadd.f32 %v9172, 1.0
        %v9270 = vadd.f32 %v9174, 1.0
        %v9271 = vadd.f32 %v9176, 1.0
        %v9272 = vadd.f32 %v9178, 1.0
        %v9273 = vadd.f32 %v9180, 1.0
        %v9274 = vadd.f32 %v9182, 1.0
        %v9275 = vadd.f32 %v9184, 1.0
        %v9276 = vadd.f32 %v9186, 1.0
        %v9277 = vadd.f32 %v9188, 1.0
        %v9278 = vadd.f32 %v9190, 1.0
        %v9279 = vadd.f32 %v9192, 1.0
        %v9280 = vadd.f32 %v9194, 1.0
        %v9281 = vadd.f32 %v9196, 1.0
        %v9282 = vadd.f32 %v9198, 1.0
        %v9283 = vadd.f32 %v9200, 1.0
        %v9284 = vadd.f32 %v9202, 1.0
        %v9285 = vadd.f32 %v9204, 1.0
        %v9286 = vadd.f32 %v9206, 1.0
        %v9287 = vadd.f32 %v9208, 1.0
        %v9288 = vadd.f32 %v9210, 1.0
        %v9289 = vadd.f32 %v9212, 1.0
        %v9290 = vadd.f32 %v9214, 1.0
        %v9291 = vadd.f32 %v9216, 1.0
        %v9292 = vadd.f32 %v9218, 1.0
        %v9293 = vadd.f32 %v9220, 1.0
        %v9294 = vadd.f32 %v9222, 1.0
        %v9295 = vadd.f32 %v9224, 1.0
        %v9296 = vadd.f32 %v9226, 1.0
        %v9297 = vadd.f32 %v9228, 1.0
        %v9298 = vadd.f32 %v9230, 1.0
        %v9299 = vadd.f32 %v9232, 1.0
        %v9300 = vadd.f32 %v9234, 1.0
        %v9301 = vadd.f32 %v9236, 1.0
        %v9302 = vadd.f32 %v9238, 1.0
        %v9303 = vrcp.pop %v9239
        %v9304 = vmul.f32 1.0, %v9303
        %v9305 = vrcp.pop %v9240
        %v9306 = vmul.f32 1.0, %v9305
        %v9307 = vrcp.pop %v9241
        %v9308 = vmul.f32 1.0, %v9307
        %v9309 = vrcp.pop %v9242
        %v9310 = vmul.f32 1.0, %v9309
        %v9311 = vrcp.pop %v9243
        %v9312 = vmul.f32 1.0, %v9311
        %v9313 = vrcp.pop %v9244
        %v9314 = vmul.f32 1.0, %v9313
        %v9315 = vrcp.pop %v9245
        %v9316 = vmul.f32 1.0, %v9315
        %v9317 = vrcp.pop %v9246
        %v9318 = vmul.f32 1.0, %v9317
        %v9319 = vrcp.pop %v9247
        %v9320 = vmul.f32 1.0, %v9319
        %v9321 = vrcp.pop %v9248
        %v9322 = vmul.f32 1.0, %v9321
        %v9323 = vrcp.pop %v9249
        %v9324 = vmul.f32 1.0, %v9323
        %v9325 = vrcp.pop %v9250
        %v9326 = vmul.f32 1.0, %v9325
        %v9327 = vrcp.pop %v9251
        %v9328 = vmul.f32 1.0, %v9327
        %v9329 = vrcp.pop %v9252
        %v9330 = vmul.f32 1.0, %v9329
        %v9331 = vrcp.pop %v9253
        %v9332 = vmul.f32 1.0, %v9331
        %v9333 = vrcp.pop %v9254
        %v9334 = vmul.f32 1.0, %v9333
        %v9335 = vrcp.pop %v9255
        %v9336 = vmul.f32 1.0, %v9335
        %v9337 = vrcp.pop %v9256
        %v9338 = vmul.f32 1.0, %v9337
        %v9339 = vrcp.pop %v9257
        %v9340 = vmul.f32 1.0, %v9339
        %v9341 = vrcp.pop %v9258
        %v9342 = vmul.f32 1.0, %v9341
        %v9343 = vrcp.pop %v9259
        %v9344 = vmul.f32 1.0, %v9343
        %v9345 = vrcp.pop %v9260
        %v9346 = vmul.f32 1.0, %v9345
        %v9347 = vrcp.pop %v9261
        %v9348 = vmul.f32 1.0, %v9347
        %v9349 = vrcp.pop %v9262
        %v9350 = vmul.f32 1.0, %v9349
        %v9351 = vrcp.pop %v9263
        %v9352 = vmul.f32 1.0, %v9351
        %v9353 = vrcp.pop %v9264
        %v9354 = vmul.f32 1.0, %v9353
        %v9355 = vrcp.pop %v9265
        %v9356 = vmul.f32 1.0, %v9355
        %v9357 = vrcp.pop %v9266
        %v9358 = vmul.f32 1.0, %v9357
        %v9359 = vrcp.pop %v9267
        %v9360 = vmul.f32 1.0, %v9359
        %v9361 = vrcp.pop %v9268
        %v9362 = vmul.f32 1.0, %v9361
        %v9363 = vrcp.pop %v9269
        %v9364 = vmul.f32 1.0, %v9363
        %v9365 = vrcp.pop %v9270
        %v9366 = vmul.f32 1.0, %v9365
        %v9367 = vrcp.pop %v9271
        %v9368 = vmul.f32 1.0, %v9367
        %v9369 = vrcp.pop %v9272
        %v9370 = vmul.f32 1.0, %v9369
        %v9371 = vrcp.pop %v9273
        %v9372 = vmul.f32 1.0, %v9371
        %v9373 = vrcp.pop %v9274
        %v9374 = vmul.f32 1.0, %v9373
        %v9375 = vrcp.pop %v9275
        %v9376 = vmul.f32 1.0, %v9375
        %v9377 = vrcp.pop %v9276
        %v9378 = vmul.f32 1.0, %v9377
        %v9379 = vrcp.pop %v9277
        %v9380 = vmul.f32 1.0, %v9379
        %v9381 = vrcp.pop %v9278
        %v9382 = vmul.f32 1.0, %v9381
        %v9383 = vrcp.pop %v9279
        %v9384 = vmul.f32 1.0, %v9383
        %v9385 = vrcp.pop %v9280
        %v9386 = vmul.f32 1.0, %v9385
        %v9387 = vrcp.pop %v9281
        %v9388 = vmul.f32 1.0, %v9387
        %v9389 = vrcp.pop %v9282
        %v9390 = vmul.f32 1.0, %v9389
        %v9391 = vrcp.pop %v9283
        %v9392 = vmul.f32 1.0, %v9391
        %v9393 = vrcp.pop %v9284
        %v9394 = vmul.f32 1.0, %v9393
        %v9395 = vrcp.pop %v9285
        %v9396 = vmul.f32 1.0, %v9395
        %v9397 = vrcp.pop %v9286
        %v9398 = vmul.f32 1.0, %v9397
        %v9399 = vrcp.pop %v9287
        %v9400 = vmul.f32 1.0, %v9399
        %v9401 = vrcp.pop %v9288
        %v9402 = vmul.f32 1.0, %v9401
        %v9403 = vrcp.pop %v9289
        %v9404 = vmul.f32 1.0, %v9403
        %v9405 = vrcp.pop %v9290
        %v9406 = vmul.f32 1.0, %v9405
        %v9407 = vrcp.pop %v9291
        %v9408 = vmul.f32 1.0, %v9407
        %v9409 = vrcp.pop %v9292
        %v9410 = vmul.f32 1.0, %v9409
        %v9411 = vrcp.pop %v9293
        %v9412 = vmul.f32 1.0, %v9411
        %v9413 = vrcp.pop %v9294
        %v9414 = vmul.f32 1.0, %v9413
        %v9415 = vrcp.pop %v9295
        %v9416 = vmul.f32 1.0, %v9415
        %v9417 = vrcp.pop %v9296
        %v9418 = vmul.f32 1.0, %v9417
        %v9419 = vrcp.pop %v9297
        %v9420 = vmul.f32 1.0, %v9419
        %v9421 = vrcp.pop %v9298
        %v9422 = vmul.f32 1.0, %v9421
        %v9423 = vrcp.pop %v9299
        %v9424 = vmul.f32 1.0, %v9423
        %v9425 = vrcp.pop %v9300
        %v9426 = vmul.f32 1.0, %v9425
        %v9427 = vrcp.pop %v9301
        %v9428 = vmul.f32 1.0, %v9427
        %v9429 = vrcp.pop %v9302
        %v9430 = vmul.f32 1.0, %v9429
        %v9431 = vmul.f32 %v8729, %v9304
        %v9432 = vmul.f32 %v8734, %v9306
        %v9433 = vmul.f32 %v8739, %v9308
        %v9434 = vmul.f32 %v8744, %v9310
        %v9435 = vmul.f32 %v8749, %v9312
        %v9436 = vmul.f32 %v8754, %v9314
        %v9437 = vmul.f32 %v8759, %v9316
        %v9438 = vmul.f32 %v8764, %v9318
        %v9439 = vmul.f32 %v8769, %v9320
        %v9440 = vmul.f32 %v8774, %v9322
        %v9441 = vmul.f32 %v8779, %v9324
        %v9442 = vmul.f32 %v8784, %v9326
        %v9443 = vmul.f32 %v8789, %v9328
        %v9444 = vmul.f32 %v8794, %v9330
        %v9445 = vmul.f32 %v8799, %v9332
        %v9446 = vmul.f32 %v8804, %v9334
        %v9447 = vmul.f32 %v8809, %v9336
        %v9448 = vmul.f32 %v8814, %v9338
        %v9449 = vmul.f32 %v8819, %v9340
        %v9450 = vmul.f32 %v8824, %v9342
        %v9451 = vmul.f32 %v8829, %v9344
        %v9452 = vmul.f32 %v8834, %v9346
        %v9453 = vmul.f32 %v8839, %v9348
        %v9454 = vmul.f32 %v8844, %v9350
        %v9455 = vmul.f32 %v8849, %v9352
        %v9456 = vmul.f32 %v8854, %v9354
        %v9457 = vmul.f32 %v8859, %v9356
        %v9458 = vmul.f32 %v8864, %v9358
        %v9459 = vmul.f32 %v8869, %v9360
        %v9460 = vmul.f32 %v8874, %v9362
        %v9461 = vmul.f32 %v8879, %v9364
        %v9462 = vmul.f32 %v8884, %v9366
        %v9463 = vmul.f32 %v8889, %v9368
        %v9464 = vmul.f32 %v8894, %v9370
        %v9465 = vmul.f32 %v8899, %v9372
        %v9466 = vmul.f32 %v8904, %v9374
        %v9467 = vmul.f32 %v8909, %v9376
        %v9468 = vmul.f32 %v8914, %v9378
        %v9469 = vmul.f32 %v8919, %v9380
        %v9470 = vmul.f32 %v8924, %v9382
        %v9471 = vmul.f32 %v8929, %v9384
        %v9472 = vmul.f32 %v8934, %v9386
        %v9473 = vmul.f32 %v8939, %v9388
        %v9474 = vmul.f32 %v8944, %v9390
        %v9475 = vmul.f32 %v8949, %v9392
        %v9476 = vmul.f32 %v8954, %v9394
        %v9477 = vmul.f32 %v8959, %v9396
        %v9478 = vmul.f32 %v8964, %v9398
        %v9479 = vmul.f32 %v8969, %v9400
        %v9480 = vmul.f32 %v8974, %v9402
        %v9481 = vmul.f32 %v8979, %v9404
        %v9482 = vmul.f32 %v8984, %v9406
        %v9483 = vmul.f32 %v8989, %v9408
        %v9484 = vmul.f32 %v8994, %v9410
        %v9485 = vmul.f32 %v8999, %v9412
        %v9486 = vmul.f32 %v9004, %v9414
        %v9487 = vmul.f32 %v9009, %v9416
        %v9488 = vmul.f32 %v9014, %v9418
        %v9489 = vmul.f32 %v9019, %v9420
        %v9490 = vmul.f32 %v9024, %v9422
        %v9491 = vmul.f32 %v9029, %v9424
        %v9492 = vmul.f32 %v9034, %v9426
        %v9493 = vmul.f32 %v9039, %v9428
        %v9494 = vmul.f32 %v9044, %v9430
        %s9495 = scalar_lea.vmem %s5, 384
        %v9496 = vld [vmem:[%s9495] sm:$0xff]
        %v9497 = vld [vmem:[%s9495 + $0x8] sm:$0xff]
        %v9498 = vld [vmem:[%s9495 + $0x10] sm:$0xff]
        %v9499 = vld [vmem:[%s9495 + $0x18] sm:$0xff]
        %v9500 = vld [vmem:[%s9495 + $0x20] sm:$0xff]
        %v9501 = vld [vmem:[%s9495 + $0x28] sm:$0xff]
        %v9502 = vld [vmem:[%s9495 + $0x30] sm:$0xff]
        %v9503 = vld [vmem:[%s9495 + $0x38] sm:$0xff]
        %v9504 = vld [vmem:[%s9495 + $0x40] sm:$0xff]
        %v9505 = vld [vmem:[%s9495 + $0x48] sm:$0xff]
        %v9506 = vld [vmem:[%s9495 + $0x50] sm:$0xff]
        %v9507 = vld [vmem:[%s9495 + $0x58] sm:$0xff]
        %v9508 = vld [vmem:[%s9495 + $0x60] sm:$0xff]
        %v9509 = vld [vmem:[%s9495 + $0x68] sm:$0xff]
        %v9510 = vld [vmem:[%s9495 + $0x70] sm:$0xff]
        %v9511 = vld [vmem:[%s9495 + $0x78] sm:$0xff]
        %v9512 = vlaneseq
        %v9513 = vshrl.u32 %v9512, 7
        %v9514 = vsub.s32 0, %v9513
        %v9515 = vrot.slane %v6668, %v9514
        %9516 = vmatprep.subr.mxu0 0.0
        %9517 = vmatpush1.msra.mxu0 %v9496
        %9518 = vmatprep.subr.mxu0 0.0
        %9519 = vmatpush1.msra.mxu0 %v9497
        %9520 = vmatprep.subr.mxu0 0.0
        %9521 = vmatpush1.msra.mxu0 %v9498
        %9522 = vmatprep.subr.mxu0 0.0
        %9523 = vmatpush1.msra.mxu0 %v9499
        %9524 = vmatprep.subr.mxu0 0.0
        %9525 = vmatpush1.msra.mxu0 %v9500
        %9526 = vmatprep.subr.mxu0 0.0
        %9527 = vmatpush1.msra.mxu0 %v9501
        %9528 = vmatprep.subr.mxu0 0.0
        %9529 = vmatpush1.msra.mxu0 %v9502
        %9530 = vmatprep.subr.mxu0 0.0
        %9531 = vmatpush1.msra.mxu0 %v9503
        %9532 = vmatprep.subr.mxu0 0.0
        %9533 = vmatpush1.msra.mxu0 %v9504
        %9534 = vmatprep.subr.mxu0 0.0
        %9535 = vmatpush1.msra.mxu0 %v9505
        %9536 = vmatprep.subr.mxu0 0.0
        %9537 = vmatpush1.msra.mxu0 %v9506
        %9538 = vmatprep.subr.mxu0 0.0
        %9539 = vmatpush1.msra.mxu0 %v9507
        %9540 = vmatprep.subr.mxu0 0.0
        %9541 = vmatpush1.msra.mxu0 %v9508
        %9542 = vmatprep.subr.mxu0 0.0
        %9543 = vmatpush1.msra.mxu0 %v9509
        %9544 = vmatprep.subr.mxu0 0.0
        %9545 = vmatpush1.msra.mxu0 %v9510
        %9546 = vmatprep.subr.mxu0 0.0
        %9547 = vmatpush1.msra.mxu0 %v9511
        %9548 = vmatprep.subr.mxu0 0.0
        %9549 = vmatpush1.msra.mxu0 0.0
        %9550 = vmatprep.subr.mxu0 0.0
        %9551 = vmatpush1.msra.mxu0 0.0
        %9552 = vmatprep.subr.mxu0 0.0
        %9553 = vmatpush1.msra.mxu0 0.0
        %9554 = vmatprep.subr.mxu0 0.0
        %9555 = vmatpush1.msra.mxu0 0.0
        %9556 = vmatprep.subr.mxu0 0.0
        %9557 = vmatpush1.msra.mxu0 0.0
        %9558 = vmatprep.subr.mxu0 0.0
        %9559 = vmatpush1.msra.mxu0 0.0
        %9560 = vmatprep.subr.mxu0 0.0
        %9561 = vmatpush1.msra.mxu0 0.0
        %9562 = vmatprep.subr.mxu0 0.0
        %9563 = vmatpush1.msra.mxu0 0.0
        %9564 = vmatprep.subr.mxu0 0.0
        %9565 = vmatpush1.msra.mxu0 0.0
        %9566 = vmatprep.subr.mxu0 0.0
        %9567 = vmatpush1.msra.mxu0 0.0
        %9568 = vmatprep.subr.mxu0 0.0
        %9569 = vmatpush1.msra.mxu0 0.0
        %9570 = vmatprep.subr.mxu0 0.0
        %9571 = vmatpush1.msra.mxu0 0.0
        %9572 = vmatprep.subr.mxu0 0.0
        %9573 = vmatpush1.msra.mxu0 0.0
        %9574 = vmatprep.subr.mxu0 0.0
        %9575 = vmatpush1.msra.mxu0 0.0
        %9576 = vmatprep.subr.mxu0 0.0
        %9577 = vmatpush1.msra.mxu0 0.0
        %9578 = vmatprep.subr.mxu0 0.0
        %9579 = vmatpush1.msra.mxu0 0.0
        %9580 = vmatprep.mubr.f32.mxu0 0.0
        %9581 = vmatmul.mubr.f32.gmra.mrb[0].mxu0 %v9431
        %v9582 = vpop.f32.mrb[0].mxu0
        %v9583 = vadd.f32 %v9515, %v9582
        %v9584 = vpop.f32.mrb[0].mxu0
        %9585 = vmatprep.mubr.f32.mxu0 0.0
        %9586 = vmatmul.mubr.f32.gmra.mrb[0].mxu0 %v9432
        %v9587 = vpop.f32.mrb[0].mxu0
        %v9588 = vadd.f32 %v9515, %v9587
        %v9589 = vpop.f32.mrb[0].mxu0
        %9590 = vmatprep.mubr.f32.mxu0 0.0
        %9591 = vmatmul.mubr.f32.gmra.mrb[0].mxu0 %v9433
        %v9592 = vpop.f32.mrb[0].mxu0
        %v9593 = vadd.f32 %v9515, %v9592
        %v9594 = vpop.f32.mrb[0].mxu0
        %9595 = vmatprep.mubr.f32.mxu0 0.0
        %9596 = vmatmul.mubr.f32.gmra.mrb[0].mxu0 %v9434
        %v9597 = vpop.f32.mrb[0].mxu0
        %v9598 = vadd.f32 %v9515, %v9597
        %v9599 = vpop.f32.mrb[0].mxu0
        %9600 = vmatprep.mubr.f32.mxu0 0.0
        %9601 = vmatmul.mubr.f32.gmra.mrb[0].mxu0 %v9435
        %v9602 = vpop.f32.mrb[0].mxu0
        %v9603 = vadd.f32 %v9515, %v9602
        %v9604 = vpop.f32.mrb[0].mxu0
        %9605 = vmatprep.mubr.f32.mxu0 0.0
        %9606 = vmatmul.mubr.f32.gmra.mrb[0].mxu0 %v9436
        %v9607 = vpop.f32.mrb[0].mxu0
        %v9608 = vadd.f32 %v9515, %v9607
        %v9609 = vpop.f32.mrb[0].mxu0
        %9610 = vmatprep.mubr.f32.mxu0 0.0
        %9611 = vmatmul.mubr.f32.gmra.mrb[0].mxu0 %v9437
        %v9612 = vpop.f32.mrb[0].mxu0
        %v9613 = vadd.f32 %v9515, %v9612
        %v9614 = vpop.f32.mrb[0].mxu0
        %9615 = vmatprep.mubr.f32.mxu0 0.0
        %9616 = vmatmul.mubr.f32.gmra.mrb[0].mxu0 %v9438
        %v9617 = vpop.f32.mrb[0].mxu0
        %v9618 = vadd.f32 %v9515, %v9617
        %v9619 = vpop.f32.mrb[0].mxu0
        %9620 = vmatprep.mubr.f32.mxu0 0.0
        %9621 = vmatmul.mubr.f32.gmra.mrb[0].mxu0 %v9439
        %v9622 = vpop.f32.mrb[0].mxu0
        %v9623 = vadd.f32 %v9515, %v9622
        %v9624 = vpop.f32.mrb[0].mxu0
        %9625 = vmatprep.mubr.f32.mxu0 0.0
        %9626 = vmatmul.mubr.f32.gmra.mrb[0].mxu0 %v9440
        %v9627 = vpop.f32.mrb[0].mxu0
        %v9628 = vadd.f32 %v9515, %v9627
        %v9629 = vpop.f32.mrb[0].mxu0
        %9630 = vmatprep.mubr.f32.mxu0 0.0
        %9631 = vmatmul.mubr.f32.gmra.mrb[0].mxu0 %v9441
        %v9632 = vpop.f32.mrb[0].mxu0
        %v9633 = vadd.f32 %v9515, %v9632
        %v9634 = vpop.f32.mrb[0].mxu0
        %9635 = vmatprep.mubr.f32.mxu0 0.0
        %9636 = vmatmul.mubr.f32.gmra.mrb[0].mxu0 %v9442
        %v9637 = vpop.f32.mrb[0].mxu0
        %v9638 = vadd.f32 %v9515, %v9637
        %v9639 = vpop.f32.mrb[0].mxu0
        %9640 = vmatprep.mubr.f32.mxu0 0.0
        %9641 = vmatmul.mubr.f32.gmra.mrb[0].mxu0 %v9443
        %v9642 = vpop.f32.mrb[0].mxu0
        %v9643 = vadd.f32 %v9515, %v9642
        %v9644 = vpop.f32.mrb[0].mxu0
        %9645 = vmatprep.mubr.f32.mxu0 0.0
        %9646 = vmatmul.mubr.f32.gmra.mrb[0].mxu0 %v9444
        %v9647 = vpop.f32.mrb[0].mxu0
        %v9648 = vadd.f32 %v9515, %v9647
        %v9649 = vpop.f32.mrb[0].mxu0
        %9650 = vmatprep.mubr.f32.mxu0 0.0
        %9651 = vmatmul.mubr.f32.gmra.mrb[0].mxu0 %v9445
        %v9652 = vpop.f32.mrb[0].mxu0
        %v9653 = vadd.f32 %v9515, %v9652
        %v9654 = vpop.f32.mrb[0].mxu0
        %9655 = vmatprep.mubr.f32.mxu0 0.0
        %9656 = vmatmul.mubr.f32.gmra.mrb[0].mxu0 %v9446
        %v9657 = vpop.f32.mrb[0].mxu0
        %v9658 = vadd.f32 %v9515, %v9657
        %v9659 = vpop.f32.mrb[0].mxu0
        %9660 = vmatprep.mubr.f32.mxu0 0.0
        %9661 = vmatmul.mubr.f32.gmra.mrb[0].mxu0 %v9447
        %v9662 = vpop.f32.mrb[0].mxu0
        %v9663 = vadd.f32 %v9515, %v9662
        %v9664 = vpop.f32.mrb[0].mxu0
        %9665 = vmatprep.mubr.f32.mxu0 0.0
        %9666 = vmatmul.mubr.f32.gmra.mrb[0].mxu0 %v9448
        %v9667 = vpop.f32.mrb[0].mxu0
        %v9668 = vadd.f32 %v9515, %v9667
        %v9669 = vpop.f32.mrb[0].mxu0
        %9670 = vmatprep.mubr.f32.mxu0 0.0
        %9671 = vmatmul.mubr.f32.gmra.mrb[0].mxu0 %v9449
        %v9672 = vpop.f32.mrb[0].mxu0
        %v9673 = vadd.f32 %v9515, %v9672
        %v9674 = vpop.f32.mrb[0].mxu0
        %9675 = vmatprep.mubr.f32.mxu0 0.0
        %9676 = vmatmul.mubr.f32.gmra.mrb[0].mxu0 %v9450
        %v9677 = vpop.f32.mrb[0].mxu0
        %v9678 = vadd.f32 %v9515, %v9677
        %v9679 = vpop.f32.mrb[0].mxu0
        %9680 = vmatprep.mubr.f32.mxu0 0.0
        %9681 = vmatmul.mubr.f32.gmra.mrb[0].mxu0 %v9451
        %v9682 = vpop.f32.mrb[0].mxu0
        %v9683 = vadd.f32 %v9515, %v9682
        %v9684 = vpop.f32.mrb[0].mxu0
        %9685 = vmatprep.mubr.f32.mxu0 0.0
        %9686 = vmatmul.mubr.f32.gmra.mrb[0].mxu0 %v9452
        %v9687 = vpop.f32.mrb[0].mxu0
        %v9688 = vadd.f32 %v9515, %v9687
        %v9689 = vpop.f32.mrb[0].mxu0
        %9690 = vmatprep.mubr.f32.mxu0 0.0
        %9691 = vmatmul.mubr.f32.gmra.mrb[0].mxu0 %v9453
        %v9692 = vpop.f32.mrb[0].mxu0
        %v9693 = vadd.f32 %v9515, %v9692
        %v9694 = vpop.f32.mrb[0].mxu0
        %9695 = vmatprep.mubr.f32.mxu0 0.0
        %9696 = vmatmul.mubr.f32.gmra.mrb[0].mxu0 %v9454
        %v9697 = vpop.f32.mrb[0].mxu0
        %v9698 = vadd.f32 %v9515, %v9697
        %v9699 = vpop.f32.mrb[0].mxu0
        %9700 = vmatprep.mubr.f32.mxu0 0.0
        %9701 = vmatmul.mubr.f32.gmra.mrb[0].mxu0 %v9455
        %v9702 = vpop.f32.mrb[0].mxu0
        %v9703 = vadd.f32 %v9515, %v9702
        %v9704 = vpop.f32.mrb[0].mxu0
        %9705 = vmatprep.mubr.f32.mxu0 0.0
        %9706 = vmatmul.mubr.f32.gmra.mrb[0].mxu0 %v9456
        %v9707 = vpop.f32.mrb[0].mxu0
        %v9708 = vadd.f32 %v9515, %v9707
        %v9709 = vpop.f32.mrb[0].mxu0
        %9710 = vmatprep.mubr.f32.mxu0 0.0
        %9711 = vmatmul.mubr.f32.gmra.mrb[0].mxu0 %v9457
        %v9712 = vpop.f32.mrb[0].mxu0
        %v9713 = vadd.f32 %v9515, %v9712
        %v9714 = vpop.f32.mrb[0].mxu0
        %9715 = vmatprep.mubr.f32.mxu0 0.0
        %9716 = vmatmul.mubr.f32.gmra.mrb[0].mxu0 %v9458
        %v9717 = vpop.f32.mrb[0].mxu0
        %v9718 = vadd.f32 %v9515, %v9717
        %v9719 = vpop.f32.mrb[0].mxu0
        %9720 = vmatprep.mubr.f32.mxu0 0.0
        %9721 = vmatmul.mubr.f32.gmra.mrb[0].mxu0 %v9459
        %v9722 = vpop.f32.mrb[0].mxu0
        %v9723 = vadd.f32 %v9515, %v9722
        %v9724 = vpop.f32.mrb[0].mxu0
        %9725 = vmatprep.mubr.f32.mxu0 0.0
        %9726 = vmatmul.mubr.f32.gmra.mrb[0].mxu0 %v9460
        %v9727 = vpop.f32.mrb[0].mxu0
        %v9728 = vadd.f32 %v9515, %v9727
        %v9729 = vpop.f32.mrb[0].mxu0
        %9730 = vmatprep.mubr.f32.mxu0 0.0
        %9731 = vmatmul.mubr.f32.gmra.mrb[0].mxu0 %v9461
        %v9732 = vpop.f32.mrb[0].mxu0
        %v9733 = vadd.f32 %v9515, %v9732
        %v9734 = vpop.f32.mrb[0].mxu0
        %9735 = vmatprep.mubr.f32.mxu0 0.0
        %9736 = vmatmul.mubr.f32.gmra.mrb[0].mxu0 %v9462
        %v9737 = vpop.f32.mrb[0].mxu0
        %v9738 = vadd.f32 %v9515, %v9737
        %v9739 = vpop.f32.mrb[0].mxu0
        %9740 = vmatprep.mubr.f32.mxu0 0.0
        %9741 = vmatmul.mubr.f32.gmra.mrb[0].mxu0 %v9463
        %v9742 = vpop.f32.mrb[0].mxu0
        %v9743 = vadd.f32 %v9515, %v9742
        %v9744 = vpop.f32.mrb[0].mxu0
        %9745 = vmatprep.mubr.f32.mxu0 0.0
        %9746 = vmatmul.mubr.f32.gmra.mrb[0].mxu0 %v9464
        %v9747 = vpop.f32.mrb[0].mxu0
        %v9748 = vadd.f32 %v9515, %v9747
        %v9749 = vpop.f32.mrb[0].mxu0
        %9750 = vmatprep.mubr.f32.mxu0 0.0
        %9751 = vmatmul.mubr.f32.gmra.mrb[0].mxu0 %v9465
        %v9752 = vpop.f32.mrb[0].mxu0
        %v9753 = vadd.f32 %v9515, %v9752
        %v9754 = vpop.f32.mrb[0].mxu0
        %9755 = vmatprep.mubr.f32.mxu0 0.0
        %9756 = vmatmul.mubr.f32.gmra.mrb[0].mxu0 %v9466
        %v9757 = vpop.f32.mrb[0].mxu0
        %v9758 = vadd.f32 %v9515, %v9757
        %v9759 = vpop.f32.mrb[0].mxu0
        %9760 = vmatprep.mubr.f32.mxu0 0.0
        %9761 = vmatmul.mubr.f32.gmra.mrb[0].mxu0 %v9467
        %v9762 = vpop.f32.mrb[0].mxu0
        %v9763 = vadd.f32 %v9515, %v9762
        %v9764 = vpop.f32.mrb[0].mxu0
        %9765 = vmatprep.mubr.f32.mxu0 0.0
        %9766 = vmatmul.mubr.f32.gmra.mrb[0].mxu0 %v9468
        %v9767 = vpop.f32.mrb[0].mxu0
        %v9768 = vadd.f32 %v9515, %v9767
        %v9769 = vpop.f32.mrb[0].mxu0
        %9770 = vmatprep.mubr.f32.mxu0 0.0
        %9771 = vmatmul.mubr.f32.gmra.mrb[0].mxu0 %v9469
        %v9772 = vpop.f32.mrb[0].mxu0
        %v9773 = vadd.f32 %v9515, %v9772
        %v9774 = vpop.f32.mrb[0].mxu0
        %9775 = vmatprep.mubr.f32.mxu0 0.0
        %9776 = vmatmul.mubr.f32.gmra.mrb[0].mxu0 %v9470
        %v9777 = vpop.f32.mrb[0].mxu0
        %v9778 = vadd.f32 %v9515, %v9777
        %v9779 = vpop.f32.mrb[0].mxu0
        %9780 = vmatprep.mubr.f32.mxu0 0.0
        %9781 = vmatmul.mubr.f32.gmra.mrb[0].mxu0 %v9471
        %v9782 = vpop.f32.mrb[0].mxu0
        %v9783 = vadd.f32 %v9515, %v9782
        %v9784 = vpop.f32.mrb[0].mxu0
        %9785 = vmatprep.mubr.f32.mxu0 0.0
        %9786 = vmatmul.mubr.f32.gmra.mrb[0].mxu0 %v9472
        %v9787 = vpop.f32.mrb[0].mxu0
        %v9788 = vadd.f32 %v9515, %v9787
        %v9789 = vpop.f32.mrb[0].mxu0
        %9790 = vmatprep.mubr.f32.mxu0 0.0
        %9791 = vmatmul.mubr.f32.gmra.mrb[0].mxu0 %v9473
        %v9792 = vpop.f32.mrb[0].mxu0
        %v9793 = vadd.f32 %v9515, %v9792
        %v9794 = vpop.f32.mrb[0].mxu0
        %9795 = vmatprep.mubr.f32.mxu0 0.0
        %9796 = vmatmul.mubr.f32.gmra.mrb[0].mxu0 %v9474
        %v9797 = vpop.f32.mrb[0].mxu0
        %v9798 = vadd.f32 %v9515, %v9797
        %v9799 = vpop.f32.mrb[0].mxu0
        %9800 = vmatprep.mubr.f32.mxu0 0.0
        %9801 = vmatmul.mubr.f32.gmra.mrb[0].mxu0 %v9475
        %v9802 = vpop.f32.mrb[0].mxu0
        %v9803 = vadd.f32 %v9515, %v9802
        %v9804 = vpop.f32.mrb[0].mxu0
        %9805 = vmatprep.mubr.f32.mxu0 0.0
        %9806 = vmatmul.mubr.f32.gmra.mrb[0].mxu0 %v9476
        %v9807 = vpop.f32.mrb[0].mxu0
        %v9808 = vadd.f32 %v9515, %v9807
        %v9809 = vpop.f32.mrb[0].mxu0
        %9810 = vmatprep.mubr.f32.mxu0 0.0
        %9811 = vmatmul.mubr.f32.gmra.mrb[0].mxu0 %v9477
        %v9812 = vpop.f32.mrb[0].mxu0
        %v9813 = vadd.f32 %v9515, %v9812
        %v9814 = vpop.f32.mrb[0].mxu0
        %9815 = vmatprep.mubr.f32.mxu0 0.0
        %9816 = vmatmul.mubr.f32.gmra.mrb[0].mxu0 %v9478
        %v9817 = vpop.f32.mrb[0].mxu0
        %v9818 = vadd.f32 %v9515, %v9817
        %v9819 = vpop.f32.mrb[0].mxu0
        %9820 = vmatprep.mubr.f32.mxu0 0.0
        %9821 = vmatmul.mubr.f32.gmra.mrb[0].mxu0 %v9479
        %v9822 = vpop.f32.mrb[0].mxu0
        %v9823 = vadd.f32 %v9515, %v9822
        %v9824 = vpop.f32.mrb[0].mxu0
        %9825 = vmatprep.mubr.f32.mxu0 0.0
        %9826 = vmatmul.mubr.f32.gmra.mrb[0].mxu0 %v9480
        %v9827 = vpop.f32.mrb[0].mxu0
        %v9828 = vadd.f32 %v9515, %v9827
        %v9829 = vpop.f32.mrb[0].mxu0
        %9830 = vmatprep.mubr.f32.mxu0 0.0
        %9831 = vmatmul.mubr.f32.gmra.mrb[0].mxu0 %v9481
        %v9832 = vpop.f32.mrb[0].mxu0
        %v9833 = vadd.f32 %v9515, %v9832
        %v9834 = vpop.f32.mrb[0].mxu0
        %9835 = vmatprep.mubr.f32.mxu0 0.0
        %9836 = vmatmul.mubr.f32.gmra.mrb[0].mxu0 %v9482
        %v9837 = vpop.f32.mrb[0].mxu0
        %v9838 = vadd.f32 %v9515, %v9837
        %v9839 = vpop.f32.mrb[0].mxu0
        %9840 = vmatprep.mubr.f32.mxu0 0.0
        %9841 = vmatmul.mubr.f32.gmra.mrb[0].mxu0 %v9483
        %v9842 = vpop.f32.mrb[0].mxu0
        %v9843 = vadd.f32 %v9515, %v9842
        %v9844 = vpop.f32.mrb[0].mxu0
        %9845 = vmatprep.mubr.f32.mxu0 0.0
        %9846 = vmatmul.mubr.f32.gmra.mrb[0].mxu0 %v9484
        %v9847 = vpop.f32.mrb[0].mxu0
        %v9848 = vadd.f32 %v9515, %v9847
        %v9849 = vpop.f32.mrb[0].mxu0
        %9850 = vmatprep.mubr.f32.mxu0 0.0
        %9851 = vmatmul.mubr.f32.gmra.mrb[0].mxu0 %v9485
        %v9852 = vpop.f32.mrb[0].mxu0
        %v9853 = vadd.f32 %v9515, %v9852
        %v9854 = vpop.f32.mrb[0].mxu0
        %9855 = vmatprep.mubr.f32.mxu0 0.0
        %9856 = vmatmul.mubr.f32.gmra.mrb[0].mxu0 %v9486
        %v9857 = vpop.f32.mrb[0].mxu0
        %v9858 = vadd.f32 %v9515, %v9857
        %v9859 = vpop.f32.mrb[0].mxu0
        %9860 = vmatprep.mubr.f32.mxu0 0.0
        %9861 = vmatmul.mubr.f32.gmra.mrb[0].mxu0 %v9487
        %v9862 = vpop.f32.mrb[0].mxu0
        %v9863 = vadd.f32 %v9515, %v9862
        %v9864 = vpop.f32.mrb[0].mxu0
        %9865 = vmatprep.mubr.f32.mxu0 0.0
        %9866 = vmatmul.mubr.f32.gmra.mrb[0].mxu0 %v9488
        %v9867 = vpop.f32.mrb[0].mxu0
        %v9868 = vadd.f32 %v9515, %v9867
        %v9869 = vpop.f32.mrb[0].mxu0
        %9870 = vmatprep.mubr.f32.mxu0 0.0
        %9871 = vmatmul.mubr.f32.gmra.mrb[0].mxu0 %v9489
        %v9872 = vpop.f32.mrb[0].mxu0
        %v9873 = vadd.f32 %v9515, %v9872
        %v9874 = vpop.f32.mrb[0].mxu0
        %9875 = vmatprep.mubr.f32.mxu0 0.0
        %9876 = vmatmul.mubr.f32.gmra.mrb[0].mxu0 %v9490
        %v9877 = vpop.f32.mrb[0].mxu0
        %v9878 = vadd.f32 %v9515, %v9877
        %v9879 = vpop.f32.mrb[0].mxu0
        %9880 = vmatprep.mubr.f32.mxu0 0.0
        %9881 = vmatmul.mubr.f32.gmra.mrb[0].mxu0 %v9491
        %v9882 = vpop.f32.mrb[0].mxu0
        %v9883 = vadd.f32 %v9515, %v9882
        %v9884 = vpop.f32.mrb[0].mxu0
        %9885 = vmatprep.mubr.f32.mxu0 0.0
        %9886 = vmatmul.mubr.f32.gmra.mrb[0].mxu0 %v9492
        %v9887 = vpop.f32.mrb[0].mxu0
        %v9888 = vadd.f32 %v9515, %v9887
        %v9889 = vpop.f32.mrb[0].mxu0
        %9890 = vmatprep.mubr.f32.mxu0 0.0
        %9891 = vmatmul.mubr.f32.gmra.mrb[0].mxu0 %v9493
        %v9892 = vpop.f32.mrb[0].mxu0
        %v9893 = vadd.f32 %v9515, %v9892
        %v9894 = vpop.f32.mrb[0].mxu0
        %9895 = vmatprep.mubr.f32.mxu0 0.0
        %9896 = vmatmul.mubr.f32.gmra.mrb[0].mxu0 %v9494
        %v9897 = vpop.f32.mrb[0].mxu0
        %v9898 = vadd.f32 %v9515, %v9897
        %v9899 = vpop.f32.mrb[0].mxu0
        %9900 = vdwg.mxu0
        %v9901 = vmul.f32 %v9583, %v8323
        %v9902 = vmul.f32 %v9588, %v8328
        %v9903 = vmul.f32 %v9593, %v8333
        %v9904 = vmul.f32 %v9598, %v8338
        %v9905 = vmul.f32 %v9603, %v8343
        %v9906 = vmul.f32 %v9608, %v8348
        %v9907 = vmul.f32 %v9613, %v8353
        %v9908 = vmul.f32 %v9618, %v8358
        %v9909 = vmul.f32 %v9623, %v8363
        %v9910 = vmul.f32 %v9628, %v8368
        %v9911 = vmul.f32 %v9633, %v8373
        %v9912 = vmul.f32 %v9638, %v8378
        %v9913 = vmul.f32 %v9643, %v8383
        %v9914 = vmul.f32 %v9648, %v8388
        %v9915 = vmul.f32 %v9653, %v8393
        %v9916 = vmul.f32 %v9658, %v8398
        %v9917 = vmul.f32 %v9663, %v8403
        %v9918 = vmul.f32 %v9668, %v8408
        %v9919 = vmul.f32 %v9673, %v8413
        %v9920 = vmul.f32 %v9678, %v8418
        %v9921 = vmul.f32 %v9683, %v8423
        %v9922 = vmul.f32 %v9688, %v8428
        %v9923 = vmul.f32 %v9693, %v8433
        %v9924 = vmul.f32 %v9698, %v8438
        %v9925 = vmul.f32 %v9703, %v8443
        %v9926 = vmul.f32 %v9708, %v8448
        %v9927 = vmul.f32 %v9713, %v8453
        %v9928 = vmul.f32 %v9718, %v8458
        %v9929 = vmul.f32 %v9723, %v8463
        %v9930 = vmul.f32 %v9728, %v8468
        %v9931 = vmul.f32 %v9733, %v8473
        %v9932 = vmul.f32 %v9738, %v8478
        %v9933 = vmul.f32 %v9743, %v8483
        %v9934 = vmul.f32 %v9748, %v8488
        %v9935 = vmul.f32 %v9753, %v8493
        %v9936 = vmul.f32 %v9758, %v8498
        %v9937 = vmul.f32 %v9763, %v8503
        %v9938 = vmul.f32 %v9768, %v8508
        %v9939 = vmul.f32 %v9773, %v8513
        %v9940 = vmul.f32 %v9778, %v8518
        %v9941 = vmul.f32 %v9783, %v8523
        %v9942 = vmul.f32 %v9788, %v8528
        %v9943 = vmul.f32 %v9793, %v8533
        %v9944 = vmul.f32 %v9798, %v8538
        %v9945 = vmul.f32 %v9803, %v8543
        %v9946 = vmul.f32 %v9808, %v8548
        %v9947 = vmul.f32 %v9813, %v8553
        %v9948 = vmul.f32 %v9818, %v8558
        %v9949 = vmul.f32 %v9823, %v8563
        %v9950 = vmul.f32 %v9828, %v8568
        %v9951 = vmul.f32 %v9833, %v8573
        %v9952 = vmul.f32 %v9838, %v8578
        %v9953 = vmul.f32 %v9843, %v8583
        %v9954 = vmul.f32 %v9848, %v8588
        %v9955 = vmul.f32 %v9853, %v8593
        %v9956 = vmul.f32 %v9858, %v8598
        %v9957 = vmul.f32 %v9863, %v8603
        %v9958 = vmul.f32 %v9868, %v8608
        %v9959 = vmul.f32 %v9873, %v8613
        %v9960 = vmul.f32 %v9878, %v8618
        %v9961 = vmul.f32 %v9883, %v8623
        %v9962 = vmul.f32 %v9888, %v8628
        %v9963 = vmul.f32 %v9893, %v8633
        %v9964 = vmul.f32 %v9898, %v8638
        %v9965 = vlaneseq
        %v9966 = vshrl.u32 %v9965, 7
        %v9967 = vsub.s32 0, %v9966
        %v9968 = vrot.slane %v6669, %v9967
        %v9969 = vmul.f32 %v9901, %v9968
        %v9970 = vmul.f32 %v9902, %v9968
        %v9971 = vmul.f32 %v9903, %v9968
        %v9972 = vmul.f32 %v9904, %v9968
        %v9973 = vmul.f32 %v9905, %v9968
        %v9974 = vmul.f32 %v9906, %v9968
        %v9975 = vmul.f32 %v9907, %v9968
        %v9976 = vmul.f32 %v9908, %v9968
        %v9977 = vmul.f32 %v9909, %v9968
        %v9978 = vmul.f32 %v9910, %v9968
        %v9979 = vmul.f32 %v9911, %v9968
        %v9980 = vmul.f32 %v9912, %v9968
        %v9981 = vmul.f32 %v9913, %v9968
        %v9982 = vmul.f32 %v9914, %v9968
        %v9983 = vmul.f32 %v9915, %v9968
        %v9984 = vmul.f32 %v9916, %v9968
        %v9985 = vmul.f32 %v9917, %v9968
        %v9986 = vmul.f32 %v9918, %v9968
        %v9987 = vmul.f32 %v9919, %v9968
        %v9988 = vmul.f32 %v9920, %v9968
        %v9989 = vmul.f32 %v9921, %v9968
        %v9990 = vmul.f32 %v9922, %v9968
        %v9991 = vmul.f32 %v9923, %v9968
        %v9992 = vmul.f32 %v9924, %v9968
        %v9993 = vmul.f32 %v9925, %v9968
        %v9994 = vmul.f32 %v9926, %v9968
        %v9995 = vmul.f32 %v9927, %v9968
        %v9996 = vmul.f32 %v9928, %v9968
        %v9997 = vmul.f32 %v9929, %v9968
        %v9998 = vmul.f32 %v9930, %v9968
        %v9999 = vmul.f32 %v9931, %v9968
        %v10000 = vmul.f32 %v9932, %v9968
        %v10001 = vmul.f32 %v9933, %v9968
        %v10002 = vmul.f32 %v9934, %v9968
        %v10003 = vmul.f32 %v9935, %v9968
        %v10004 = vmul.f32 %v9936, %v9968
        %v10005 = vmul.f32 %v9937, %v9968
        %v10006 = vmul.f32 %v9938, %v9968
        %v10007 = vmul.f32 %v9939, %v9968
        %v10008 = vmul.f32 %v9940, %v9968
        %v10009 = vmul.f32 %v9941, %v9968
        %v10010 = vmul.f32 %v9942, %v9968
        %v10011 = vmul.f32 %v9943, %v9968
        %v10012 = vmul.f32 %v9944, %v9968
        %v10013 = vmul.f32 %v9945, %v9968
        %v10014 = vmul.f32 %v9946, %v9968
        %v10015 = vmul.f32 %v9947, %v9968
        %v10016 = vmul.f32 %v9948, %v9968
        %v10017 = vmul.f32 %v9949, %v9968
        %v10018 = vmul.f32 %v9950, %v9968
        %v10019 = vmul.f32 %v9951, %v9968
        %v10020 = vmul.f32 %v9952, %v9968
        %v10021 = vmul.f32 %v9953, %v9968
        %v10022 = vmul.f32 %v9954, %v9968
        %v10023 = vmul.f32 %v9955, %v9968
        %v10024 = vmul.f32 %v9956, %v9968
        %v10025 = vmul.f32 %v9957, %v9968
        %v10026 = vmul.f32 %v9958, %v9968
        %v10027 = vmul.f32 %v9959, %v9968
        %v10028 = vmul.f32 %v9960, %v9968
        %v10029 = vmul.f32 %v9961, %v9968
        %v10030 = vmul.f32 %v9962, %v9968
        %v10031 = vmul.f32 %v9963, %v9968
        %v10032 = vmul.f32 %v9964, %v9968
        %10033 = vadd.xlane.f32.xlu0 %v9969
        %v10034 = vpop.xlane.xlu0 %10033
        %10035 = vadd.xlane.f32.xlu0 %v9970
        %v10036 = vpop.xlane.xlu0 %10035
        %10037 = vadd.xlane.f32.xlu0 %v9971
        %v10038 = vpop.xlane.xlu0 %10037
        %10039 = vadd.xlane.f32.xlu0 %v9972
        %v10040 = vpop.xlane.xlu0 %10039
        %10041 = vadd.xlane.f32.xlu0 %v9973
        %v10042 = vpop.xlane.xlu0 %10041
        %10043 = vadd.xlane.f32.xlu0 %v9974
        %v10044 = vpop.xlane.xlu0 %10043
        %10045 = vadd.xlane.f32.xlu0 %v9975
        %v10046 = vpop.xlane.xlu0 %10045
        %10047 = vadd.xlane.f32.xlu0 %v9976
        %v10048 = vpop.xlane.xlu0 %10047
        %10049 = vadd.xlane.f32.xlu0 %v9977
        %v10050 = vpop.xlane.xlu0 %10049
        %10051 = vadd.xlane.f32.xlu0 %v9978
        %v10052 = vpop.xlane.xlu0 %10051
        %10053 = vadd.xlane.f32.xlu0 %v9979
        %v10054 = vpop.xlane.xlu0 %10053
        %10055 = vadd.xlane.f32.xlu0 %v9980
        %v10056 = vpop.xlane.xlu0 %10055
        %10057 = vadd.xlane.f32.xlu0 %v9981
        %v10058 = vpop.xlane.xlu0 %10057
        %10059 = vadd.xlane.f32.xlu0 %v9982
        %v10060 = vpop.xlane.xlu0 %10059
        %10061 = vadd.xlane.f32.xlu0 %v9983
        %v10062 = vpop.xlane.xlu0 %10061
        %10063 = vadd.xlane.f32.xlu0 %v9984
        %v10064 = vpop.xlane.xlu0 %10063
        %10065 = vadd.xlane.f32.xlu0 %v9985
        %v10066 = vpop.xlane.xlu0 %10065
        %10067 = vadd.xlane.f32.xlu0 %v9986
        %v10068 = vpop.xlane.xlu0 %10067
        %10069 = vadd.xlane.f32.xlu0 %v9987
        %v10070 = vpop.xlane.xlu0 %10069
        %10071 = vadd.xlane.f32.xlu0 %v9988
        %v10072 = vpop.xlane.xlu0 %10071
        %10073 = vadd.xlane.f32.xlu0 %v9989
        %v10074 = vpop.xlane.xlu0 %10073
        %10075 = vadd.xlane.f32.xlu0 %v9990
        %v10076 = vpop.xlane.xlu0 %10075
        %10077 = vadd.xlane.f32.xlu0 %v9991
        %v10078 = vpop.xlane.xlu0 %10077
        %10079 = vadd.xlane.f32.xlu0 %v9992
        %v10080 = vpop.xlane.xlu0 %10079
        %10081 = vadd.xlane.f32.xlu0 %v9993
        %v10082 = vpop.xlane.xlu0 %10081
        %10083 = vadd.xlane.f32.xlu0 %v9994
        %v10084 = vpop.xlane.xlu0 %10083
        %10085 = vadd.xlane.f32.xlu0 %v9995
        %v10086 = vpop.xlane.xlu0 %10085
        %10087 = vadd.xlane.f32.xlu0 %v9996
        %v10088 = vpop.xlane.xlu0 %10087
        %10089 = vadd.xlane.f32.xlu0 %v9997
        %v10090 = vpop.xlane.xlu0 %10089
        %10091 = vadd.xlane.f32.xlu0 %v9998
        %v10092 = vpop.xlane.xlu0 %10091
        %10093 = vadd.xlane.f32.xlu0 %v9999
        %v10094 = vpop.xlane.xlu0 %10093
        %10095 = vadd.xlane.f32.xlu0 %v10000
        %v10096 = vpop.xlane.xlu0 %10095
        %10097 = vadd.xlane.f32.xlu0 %v10001
        %v10098 = vpop.xlane.xlu0 %10097
        %10099 = vadd.xlane.f32.xlu0 %v10002
        %v10100 = vpop.xlane.xlu0 %10099
        %10101 = vadd.xlane.f32.xlu0 %v10003
        %v10102 = vpop.xlane.xlu0 %10101
        %10103 = vadd.xlane.f32.xlu0 %v10004
        %v10104 = vpop.xlane.xlu0 %10103
        %10105 = vadd.xlane.f32.xlu0 %v10005
        %v10106 = vpop.xlane.xlu0 %10105
        %10107 = vadd.xlane.f32.xlu0 %v10006
        %v10108 = vpop.xlane.xlu0 %10107
        %10109 = vadd.xlane.f32.xlu0 %v10007
        %v10110 = vpop.xlane.xlu0 %10109
        %10111 = vadd.xlane.f32.xlu0 %v10008
        %v10112 = vpop.xlane.xlu0 %10111
        %10113 = vadd.xlane.f32.xlu0 %v10009
        %v10114 = vpop.xlane.xlu0 %10113
        %10115 = vadd.xlane.f32.xlu0 %v10010
        %v10116 = vpop.xlane.xlu0 %10115
        %10117 = vadd.xlane.f32.xlu0 %v10011
        %v10118 = vpop.xlane.xlu0 %10117
        %10119 = vadd.xlane.f32.xlu0 %v10012
        %v10120 = vpop.xlane.xlu0 %10119
        %10121 = vadd.xlane.f32.xlu0 %v10013
        %v10122 = vpop.xlane.xlu0 %10121
        %10123 = vadd.xlane.f32.xlu0 %v10014
        %v10124 = vpop.xlane.xlu0 %10123
        %10125 = vadd.xlane.f32.xlu0 %v10015
        %v10126 = vpop.xlane.xlu0 %10125
        %10127 = vadd.xlane.f32.xlu0 %v10016
        %v10128 = vpop.xlane.xlu0 %10127
        %10129 = vadd.xlane.f32.xlu0 %v10017
        %v10130 = vpop.xlane.xlu0 %10129
        %10131 = vadd.xlane.f32.xlu0 %v10018
        %v10132 = vpop.xlane.xlu0 %10131
        %10133 = vadd.xlane.f32.xlu0 %v10019
        %v10134 = vpop.xlane.xlu0 %10133
        %10135 = vadd.xlane.f32.xlu0 %v10020
        %v10136 = vpop.xlane.xlu0 %10135
        %10137 = vadd.xlane.f32.xlu0 %v10021
        %v10138 = vpop.xlane.xlu0 %10137
        %10139 = vadd.xlane.f32.xlu0 %v10022
        %v10140 = vpop.xlane.xlu0 %10139
        %10141 = vadd.xlane.f32.xlu0 %v10023
        %v10142 = vpop.xlane.xlu0 %10141
        %10143 = vadd.xlane.f32.xlu0 %v10024
        %v10144 = vpop.xlane.xlu0 %10143
        %10145 = vadd.xlane.f32.xlu0 %v10025
        %v10146 = vpop.xlane.xlu0 %10145
        %10147 = vadd.xlane.f32.xlu0 %v10026
        %v10148 = vpop.xlane.xlu0 %10147
        %10149 = vadd.xlane.f32.xlu0 %v10027
        %v10150 = vpop.xlane.xlu0 %10149
        %10151 = vadd.xlane.f32.xlu0 %v10028
        %v10152 = vpop.xlane.xlu0 %10151
        %10153 = vadd.xlane.f32.xlu0 %v10029
        %v10154 = vpop.xlane.xlu0 %10153
        %10155 = vadd.xlane.f32.xlu0 %v10030
        %v10156 = vpop.xlane.xlu0 %10155
        %10157 = vadd.xlane.f32.xlu0 %v10031
        %v10158 = vpop.xlane.xlu0 %10157
        %10159 = vadd.xlane.f32.xlu0 %v10032
        %v10160 = vpop.xlane.xlu0 %10159
        %v10161 = vld [vmem:[#allocation2] sm:$0x1]
        %v10163 = vlaneseq
        %v10164 = vshrl.u32 %v10163, 7
        %v10165 = vsub.s32 0, %v10164
        %v10166 = vrot.slane %v10161, %v10165
        %v10168 = vadd.f32 %v10034, %v10166
        %v10169 = vadd.f32 %v10036, %v10166
        %v10170 = vadd.f32 %v10038, %v10166
        %v10171 = vadd.f32 %v10040, %v10166
        %v10172 = vadd.f32 %v10042, %v10166
        %v10173 = vadd.f32 %v10044, %v10166
        %v10174 = vadd.f32 %v10046, %v10166
        %v10175 = vadd.f32 %v10048, %v10166
        %v10176 = vadd.f32 %v10050, %v10166
        %v10177 = vadd.f32 %v10052, %v10166
        %v10178 = vadd.f32 %v10054, %v10166
        %v10179 = vadd.f32 %v10056, %v10166
        %v10180 = vadd.f32 %v10058, %v10166
        %v10181 = vadd.f32 %v10060, %v10166
        %v10182 = vadd.f32 %v10062, %v10166
        %v10183 = vadd.f32 %v10064, %v10166
        %v10184 = vadd.f32 %v10066, %v10166
        %v10185 = vadd.f32 %v10068, %v10166
        %v10186 = vadd.f32 %v10070, %v10166
        %v10187 = vadd.f32 %v10072, %v10166
        %v10188 = vadd.f32 %v10074, %v10166
        %v10189 = vadd.f32 %v10076, %v10166
        %v10190 = vadd.f32 %v10078, %v10166
        %v10191 = vadd.f32 %v10080, %v10166
        %v10192 = vadd.f32 %v10082, %v10166
        %v10193 = vadd.f32 %v10084, %v10166
        %v10194 = vadd.f32 %v10086, %v10166
        %v10195 = vadd.f32 %v10088, %v10166
        %v10196 = vadd.f32 %v10090, %v10166
        %v10197 = vadd.f32 %v10092, %v10166
        %v10198 = vadd.f32 %v10094, %v10166
        %v10199 = vadd.f32 %v10096, %v10166
        %v10200 = vadd.f32 %v10098, %v10166
        %v10201 = vadd.f32 %v10100, %v10166
        %v10202 = vadd.f32 %v10102, %v10166
        %v10203 = vadd.f32 %v10104, %v10166
        %v10204 = vadd.f32 %v10106, %v10166
        %v10205 = vadd.f32 %v10108, %v10166
        %v10206 = vadd.f32 %v10110, %v10166
        %v10207 = vadd.f32 %v10112, %v10166
        %v10208 = vadd.f32 %v10114, %v10166
        %v10209 = vadd.f32 %v10116, %v10166
        %v10210 = vadd.f32 %v10118, %v10166
        %v10211 = vadd.f32 %v10120, %v10166
        %v10212 = vadd.f32 %v10122, %v10166
        %v10213 = vadd.f32 %v10124, %v10166
        %v10214 = vadd.f32 %v10126, %v10166
        %v10215 = vadd.f32 %v10128, %v10166
        %v10216 = vadd.f32 %v10130, %v10166
        %v10217 = vadd.f32 %v10132, %v10166
        %v10218 = vadd.f32 %v10134, %v10166
        %v10219 = vadd.f32 %v10136, %v10166
        %v10220 = vadd.f32 %v10138, %v10166
        %v10221 = vadd.f32 %v10140, %v10166
        %v10222 = vadd.f32 %v10142, %v10166
        %v10223 = vadd.f32 %v10144, %v10166
        %v10224 = vadd.f32 %v10146, %v10166
        %v10225 = vadd.f32 %v10148, %v10166
        %v10226 = vadd.f32 %v10150, %v10166
        %v10227 = vadd.f32 %v10152, %v10166
        %v10228 = vadd.f32 %v10154, %v10166
        %v10229 = vadd.f32 %v10156, %v10166
        %v10230 = vadd.f32 %v10158, %v10166
        %v10231 = vadd.f32 %v10160, %v10166
        %v10232 = vxor.u32 %v10168, 2147483648
        %v10233 = vxor.u32 %v10169, 2147483648
        %v10234 = vxor.u32 %v10170, 2147483648
        %v10235 = vxor.u32 %v10171, 2147483648
        %v10236 = vxor.u32 %v10172, 2147483648
        %v10237 = vxor.u32 %v10173, 2147483648
        %v10238 = vxor.u32 %v10174, 2147483648
        %v10239 = vxor.u32 %v10175, 2147483648
        %v10240 = vxor.u32 %v10176, 2147483648
        %v10241 = vxor.u32 %v10177, 2147483648
        %v10242 = vxor.u32 %v10178, 2147483648
        %v10243 = vxor.u32 %v10179, 2147483648
        %v10244 = vxor.u32 %v10180, 2147483648
        %v10245 = vxor.u32 %v10181, 2147483648
        %v10246 = vxor.u32 %v10182, 2147483648
        %v10247 = vxor.u32 %v10183, 2147483648
        %v10248 = vxor.u32 %v10184, 2147483648
        %v10249 = vxor.u32 %v10185, 2147483648
        %v10250 = vxor.u32 %v10186, 2147483648
        %v10251 = vxor.u32 %v10187, 2147483648
        %v10252 = vxor.u32 %v10188, 2147483648
        %v10253 = vxor.u32 %v10189, 2147483648
        %v10254 = vxor.u32 %v10190, 2147483648
        %v10255 = vxor.u32 %v10191, 2147483648
        %v10256 = vxor.u32 %v10192, 2147483648
        %v10257 = vxor.u32 %v10193, 2147483648
        %v10258 = vxor.u32 %v10194, 2147483648
        %v10259 = vxor.u32 %v10195, 2147483648
        %v10260 = vxor.u32 %v10196, 2147483648
        %v10261 = vxor.u32 %v10197, 2147483648
        %v10262 = vxor.u32 %v10198, 2147483648
        %v10263 = vxor.u32 %v10199, 2147483648
        %v10264 = vxor.u32 %v10200, 2147483648
        %v10265 = vxor.u32 %v10201, 2147483648
        %v10266 = vxor.u32 %v10202, 2147483648
        %v10267 = vxor.u32 %v10203, 2147483648
        %v10268 = vxor.u32 %v10204, 2147483648
        %v10269 = vxor.u32 %v10205, 2147483648
        %v10270 = vxor.u32 %v10206, 2147483648
        %v10271 = vxor.u32 %v10207, 2147483648
        %v10272 = vxor.u32 %v10208, 2147483648
        %v10273 = vxor.u32 %v10209, 2147483648
        %v10274 = vxor.u32 %v10210, 2147483648
        %v10275 = vxor.u32 %v10211, 2147483648
        %v10276 = vxor.u32 %v10212, 2147483648
        %v10277 = vxor.u32 %v10213, 2147483648
        %v10278 = vxor.u32 %v10214, 2147483648
        %v10279 = vxor.u32 %v10215, 2147483648
        %v10280 = vxor.u32 %v10216, 2147483648
        %v10281 = vxor.u32 %v10217, 2147483648
        %v10282 = vxor.u32 %v10218, 2147483648
        %v10283 = vxor.u32 %v10219, 2147483648
        %v10284 = vxor.u32 %v10220, 2147483648
        %v10285 = vxor.u32 %v10221, 2147483648
        %v10286 = vxor.u32 %v10222, 2147483648
        %v10287 = vxor.u32 %v10223, 2147483648
        %v10288 = vxor.u32 %v10224, 2147483648
        %v10289 = vxor.u32 %v10225, 2147483648
        %v10290 = vxor.u32 %v10226, 2147483648
        %v10291 = vxor.u32 %v10227, 2147483648
        %v10292 = vxor.u32 %v10228, 2147483648
        %v10293 = vxor.u32 %v10229, 2147483648
        %v10294 = vxor.u32 %v10230, 2147483648
        %v10295 = vxor.u32 %v10231, 2147483648
        %v10296 = vmul.f32 %v10232, 1.442695
        %v10297 = vpow.pop %v10296
        %v10298 = vmul.f32 %v10233, 1.442695
        %v10299 = vpow.pop %v10298
        %v10300 = vmul.f32 %v10234, 1.442695
        %v10301 = vpow.pop %v10300
        %v10302 = vmul.f32 %v10235, 1.442695
        %v10303 = vpow.pop %v10302
        %v10304 = vmul.f32 %v10236, 1.442695
        %v10305 = vpow.pop %v10304
        %v10306 = vmul.f32 %v10237, 1.442695
        %v10307 = vpow.pop %v10306
        %v10308 = vmul.f32 %v10238, 1.442695
        %v10309 = vpow.pop %v10308
        %v10310 = vmul.f32 %v10239, 1.442695
        %v10311 = vpow.pop %v10310
        %v10312 = vmul.f32 %v10240, 1.442695
        %v10313 = vpow.pop %v10312
        %v10314 = vmul.f32 %v10241, 1.442695
        %v10315 = vpow.pop %v10314
        %v10316 = vmul.f32 %v10242, 1.442695
        %v10317 = vpow.pop %v10316
        %v10318 = vmul.f32 %v10243, 1.442695
        %v10319 = vpow.pop %v10318
        %v10320 = vmul.f32 %v10244, 1.442695
        %v10321 = vpow.pop %v10320
        %v10322 = vmul.f32 %v10245, 1.442695
        %v10323 = vpow.pop %v10322
        %v10324 = vmul.f32 %v10246, 1.442695
        %v10325 = vpow.pop %v10324
        %v10326 = vmul.f32 %v10247, 1.442695
        %v10327 = vpow.pop %v10326
        %v10328 = vmul.f32 %v10248, 1.442695
        %v10329 = vpow.pop %v10328
        %v10330 = vmul.f32 %v10249, 1.442695
        %v10331 = vpow.pop %v10330
        %v10332 = vmul.f32 %v10250, 1.442695
        %v10333 = vpow.pop %v10332
        %v10334 = vmul.f32 %v10251, 1.442695
        %v10335 = vpow.pop %v10334
        %v10336 = vmul.f32 %v10252, 1.442695
        %v10337 = vpow.pop %v10336
        %v10338 = vmul.f32 %v10253, 1.442695
        %v10339 = vpow.pop %v10338
        %v10340 = vmul.f32 %v10254, 1.442695
        %v10341 = vpow.pop %v10340
        %v10342 = vmul.f32 %v10255, 1.442695
        %v10343 = vpow.pop %v10342
        %v10344 = vmul.f32 %v10256, 1.442695
        %v10345 = vpow.pop %v10344
        %v10346 = vmul.f32 %v10257, 1.442695
        %v10347 = vpow.pop %v10346
        %v10348 = vmul.f32 %v10258, 1.442695
        %v10349 = vpow.pop %v10348
        %v10350 = vmul.f32 %v10259, 1.442695
        %v10351 = vpow.pop %v10350
        %v10352 = vmul.f32 %v10260, 1.442695
        %v10353 = vpow.pop %v10352
        %v10354 = vmul.f32 %v10261, 1.442695
        %v10355 = vpow.pop %v10354
        %v10356 = vmul.f32 %v10262, 1.442695
        %v10357 = vpow.pop %v10356
        %v10358 = vmul.f32 %v10263, 1.442695
        %v10359 = vpow.pop %v10358
        %v10360 = vmul.f32 %v10264, 1.442695
        %v10361 = vpow.pop %v10360
        %v10362 = vmul.f32 %v10265, 1.442695
        %v10363 = vpow.pop %v10362
        %v10364 = vmul.f32 %v10266, 1.442695
        %v10365 = vpow.pop %v10364
        %v10366 = vmul.f32 %v10267, 1.442695
        %v10367 = vpow.pop %v10366
        %v10368 = vmul.f32 %v10268, 1.442695
        %v10369 = vpow.pop %v10368
        %v10370 = vmul.f32 %v10269, 1.442695
        %v10371 = vpow.pop %v10370
        %v10372 = vmul.f32 %v10270, 1.442695
        %v10373 = vpow.pop %v10372
        %v10374 = vmul.f32 %v10271, 1.442695
        %v10375 = vpow.pop %v10374
        %v10376 = vmul.f32 %v10272, 1.442695
        %v10377 = vpow.pop %v10376
        %v10378 = vmul.f32 %v10273, 1.442695
        %v10379 = vpow.pop %v10378
        %v10380 = vmul.f32 %v10274, 1.442695
        %v10381 = vpow.pop %v10380
        %v10382 = vmul.f32 %v10275, 1.442695
        %v10383 = vpow.pop %v10382
        %v10384 = vmul.f32 %v10276, 1.442695
        %v10385 = vpow.pop %v10384
        %v10386 = vmul.f32 %v10277, 1.442695
        %v10387 = vpow.pop %v10386
        %v10388 = vmul.f32 %v10278, 1.442695
        %v10389 = vpow.pop %v10388
        %v10390 = vmul.f32 %v10279, 1.442695
        %v10391 = vpow.pop %v10390
        %v10392 = vmul.f32 %v10280, 1.442695
        %v10393 = vpow.pop %v10392
        %v10394 = vmul.f32 %v10281, 1.442695
        %v10395 = vpow.pop %v10394
        %v10396 = vmul.f32 %v10282, 1.442695
        %v10397 = vpow.pop %v10396
        %v10398 = vmul.f32 %v10283, 1.442695
        %v10399 = vpow.pop %v10398
        %v10400 = vmul.f32 %v10284, 1.442695
        %v10401 = vpow.pop %v10400
        %v10402 = vmul.f32 %v10285, 1.442695
        %v10403 = vpow.pop %v10402
        %v10404 = vmul.f32 %v10286, 1.442695
        %v10405 = vpow.pop %v10404
        %v10406 = vmul.f32 %v10287, 1.442695
        %v10407 = vpow.pop %v10406
        %v10408 = vmul.f32 %v10288, 1.442695
        %v10409 = vpow.pop %v10408
        %v10410 = vmul.f32 %v10289, 1.442695
        %v10411 = vpow.pop %v10410
        %v10412 = vmul.f32 %v10290, 1.442695
        %v10413 = vpow.pop %v10412
        %v10414 = vmul.f32 %v10291, 1.442695
        %v10415 = vpow.pop %v10414
        %v10416 = vmul.f32 %v10292, 1.442695
        %v10417 = vpow.pop %v10416
        %v10418 = vmul.f32 %v10293, 1.442695
        %v10419 = vpow.pop %v10418
        %v10420 = vmul.f32 %v10294, 1.442695
        %v10421 = vpow.pop %v10420
        %v10422 = vmul.f32 %v10295, 1.442695
        %v10423 = vpow.pop %v10422
        %v10424 = vadd.f32 %v10297, 1.0
        %v10425 = vadd.f32 %v10299, 1.0
        %v10426 = vadd.f32 %v10301, 1.0
        %v10427 = vadd.f32 %v10303, 1.0
        %v10428 = vadd.f32 %v10305, 1.0
        %v10429 = vadd.f32 %v10307, 1.0
        %v10430 = vadd.f32 %v10309, 1.0
        %v10431 = vadd.f32 %v10311, 1.0
        %v10432 = vadd.f32 %v10313, 1.0
        %v10433 = vadd.f32 %v10315, 1.0
        %v10434 = vadd.f32 %v10317, 1.0
        %v10435 = vadd.f32 %v10319, 1.0
        %v10436 = vadd.f32 %v10321, 1.0
        %v10437 = vadd.f32 %v10323, 1.0
        %v10438 = vadd.f32 %v10325, 1.0
        %v10439 = vadd.f32 %v10327, 1.0
        %v10440 = vadd.f32 %v10329, 1.0
        %v10441 = vadd.f32 %v10331, 1.0
        %v10442 = vadd.f32 %v10333, 1.0
        %v10443 = vadd.f32 %v10335, 1.0
        %v10444 = vadd.f32 %v10337, 1.0
        %v10445 = vadd.f32 %v10339, 1.0
        %v10446 = vadd.f32 %v10341, 1.0
        %v10447 = vadd.f32 %v10343, 1.0
        %v10448 = vadd.f32 %v10345, 1.0
        %v10449 = vadd.f32 %v10347, 1.0
        %v10450 = vadd.f32 %v10349, 1.0
        %v10451 = vadd.f32 %v10351, 1.0
        %v10452 = vadd.f32 %v10353, 1.0
        %v10453 = vadd.f32 %v10355, 1.0
        %v10454 = vadd.f32 %v10357, 1.0
        %v10455 = vadd.f32 %v10359, 1.0
        %v10456 = vadd.f32 %v10361, 1.0
        %v10457 = vadd.f32 %v10363, 1.0
        %v10458 = vadd.f32 %v10365, 1.0
        %v10459 = vadd.f32 %v10367, 1.0
        %v10460 = vadd.f32 %v10369, 1.0
        %v10461 = vadd.f32 %v10371, 1.0
        %v10462 = vadd.f32 %v10373, 1.0
        %v10463 = vadd.f32 %v10375, 1.0
        %v10464 = vadd.f32 %v10377, 1.0
        %v10465 = vadd.f32 %v10379, 1.0
        %v10466 = vadd.f32 %v10381, 1.0
        %v10467 = vadd.f32 %v10383, 1.0
        %v10468 = vadd.f32 %v10385, 1.0
        %v10469 = vadd.f32 %v10387, 1.0
        %v10470 = vadd.f32 %v10389, 1.0
        %v10471 = vadd.f32 %v10391, 1.0
        %v10472 = vadd.f32 %v10393, 1.0
        %v10473 = vadd.f32 %v10395, 1.0
        %v10474 = vadd.f32 %v10397, 1.0
        %v10475 = vadd.f32 %v10399, 1.0
        %v10476 = vadd.f32 %v10401, 1.0
        %v10477 = vadd.f32 %v10403, 1.0
        %v10478 = vadd.f32 %v10405, 1.0
        %v10479 = vadd.f32 %v10407, 1.0
        %v10480 = vadd.f32 %v10409, 1.0
        %v10481 = vadd.f32 %v10411, 1.0
        %v10482 = vadd.f32 %v10413, 1.0
        %v10483 = vadd.f32 %v10415, 1.0
        %v10484 = vadd.f32 %v10417, 1.0
        %v10485 = vadd.f32 %v10419, 1.0
        %v10486 = vadd.f32 %v10421, 1.0
        %v10487 = vadd.f32 %v10423, 1.0
        %v10488 = vrcp.pop %v10424
        %v10489 = vmul.f32 1.0, %v10488
        %v10490 = vrcp.pop %v10425
        %v10491 = vmul.f32 1.0, %v10490
        %v10492 = vrcp.pop %v10426
        %v10493 = vmul.f32 1.0, %v10492
        %v10494 = vrcp.pop %v10427
        %v10495 = vmul.f32 1.0, %v10494
        %v10496 = vrcp.pop %v10428
        %v10497 = vmul.f32 1.0, %v10496
        %v10498 = vrcp.pop %v10429
        %v10499 = vmul.f32 1.0, %v10498
        %v10500 = vrcp.pop %v10430
        %v10501 = vmul.f32 1.0, %v10500
        %v10502 = vrcp.pop %v10431
        %v10503 = vmul.f32 1.0, %v10502
        %v10504 = vrcp.pop %v10432
        %v10505 = vmul.f32 1.0, %v10504
        %v10506 = vrcp.pop %v10433
        %v10507 = vmul.f32 1.0, %v10506
        %v10508 = vrcp.pop %v10434
        %v10509 = vmul.f32 1.0, %v10508
        %v10510 = vrcp.pop %v10435
        %v10511 = vmul.f32 1.0, %v10510
        %v10512 = vrcp.pop %v10436
        %v10513 = vmul.f32 1.0, %v10512
        %v10514 = vrcp.pop %v10437
        %v10515 = vmul.f32 1.0, %v10514
        %v10516 = vrcp.pop %v10438
        %v10517 = vmul.f32 1.0, %v10516
        %v10518 = vrcp.pop %v10439
        %v10519 = vmul.f32 1.0, %v10518
        %v10520 = vrcp.pop %v10440
        %v10521 = vmul.f32 1.0, %v10520
        %v10522 = vrcp.pop %v10441
        %v10523 = vmul.f32 1.0, %v10522
        %v10524 = vrcp.pop %v10442
        %v10525 = vmul.f32 1.0, %v10524
        %v10526 = vrcp.pop %v10443
        %v10527 = vmul.f32 1.0, %v10526
        %v10528 = vrcp.pop %v10444
        %v10529 = vmul.f32 1.0, %v10528
        %v10530 = vrcp.pop %v10445
        %v10531 = vmul.f32 1.0, %v10530
        %v10532 = vrcp.pop %v10446
        %v10533 = vmul.f32 1.0, %v10532
        %v10534 = vrcp.pop %v10447
        %v10535 = vmul.f32 1.0, %v10534
        %v10536 = vrcp.pop %v10448
        %v10537 = vmul.f32 1.0, %v10536
        %v10538 = vrcp.pop %v10449
        %v10539 = vmul.f32 1.0, %v10538
        %v10540 = vrcp.pop %v10450
        %v10541 = vmul.f32 1.0, %v10540
        %v10542 = vrcp.pop %v10451
        %v10543 = vmul.f32 1.0, %v10542
        %v10544 = vrcp.pop %v10452
        %v10545 = vmul.f32 1.0, %v10544
        %v10546 = vrcp.pop %v10453
        %v10547 = vmul.f32 1.0, %v10546
        %v10548 = vrcp.pop %v10454
        %v10549 = vmul.f32 1.0, %v10548
        %v10550 = vrcp.pop %v10455
        %v10551 = vmul.f32 1.0, %v10550
        %v10552 = vrcp.pop %v10456
        %v10553 = vmul.f32 1.0, %v10552
        %v10554 = vrcp.pop %v10457
        %v10555 = vmul.f32 1.0, %v10554
        %v10556 = vrcp.pop %v10458
        %v10557 = vmul.f32 1.0, %v10556
        %v10558 = vrcp.pop %v10459
        %v10559 = vmul.f32 1.0, %v10558
        %v10560 = vrcp.pop %v10460
        %v10561 = vmul.f32 1.0, %v10560
        %v10562 = vrcp.pop %v10461
        %v10563 = vmul.f32 1.0, %v10562
        %v10564 = vrcp.pop %v10462
        %v10565 = vmul.f32 1.0, %v10564
        %v10566 = vrcp.pop %v10463
        %v10567 = vmul.f32 1.0, %v10566
        %v10568 = vrcp.pop %v10464
        %v10569 = vmul.f32 1.0, %v10568
        %v10570 = vrcp.pop %v10465
        %v10571 = vmul.f32 1.0, %v10570
        %v10572 = vrcp.pop %v10466
        %v10573 = vmul.f32 1.0, %v10572
        %v10574 = vrcp.pop %v10467
        %v10575 = vmul.f32 1.0, %v10574
        %v10576 = vrcp.pop %v10468
        %v10577 = vmul.f32 1.0, %v10576
        %v10578 = vrcp.pop %v10469
        %v10579 = vmul.f32 1.0, %v10578
        %v10580 = vrcp.pop %v10470
        %v10581 = vmul.f32 1.0, %v10580
        %v10582 = vrcp.pop %v10471
        %v10583 = vmul.f32 1.0, %v10582
        %v10584 = vrcp.pop %v10472
        %v10585 = vmul.f32 1.0, %v10584
        %v10586 = vrcp.pop %v10473
        %v10587 = vmul.f32 1.0, %v10586
        %v10588 = vrcp.pop %v10474
        %v10589 = vmul.f32 1.0, %v10588
        %v10590 = vrcp.pop %v10475
        %v10591 = vmul.f32 1.0, %v10590
        %v10592 = vrcp.pop %v10476
        %v10593 = vmul.f32 1.0, %v10592
        %v10594 = vrcp.pop %v10477
        %v10595 = vmul.f32 1.0, %v10594
        %v10596 = vrcp.pop %v10478
        %v10597 = vmul.f32 1.0, %v10596
        %v10598 = vrcp.pop %v10479
        %v10599 = vmul.f32 1.0, %v10598
        %v10600 = vrcp.pop %v10480
        %v10601 = vmul.f32 1.0, %v10600
        %v10602 = vrcp.pop %v10481
        %v10603 = vmul.f32 1.0, %v10602
        %v10604 = vrcp.pop %v10482
        %v10605 = vmul.f32 1.0, %v10604
        %v10606 = vrcp.pop %v10483
        %v10607 = vmul.f32 1.0, %v10606
        %v10608 = vrcp.pop %v10484
        %v10609 = vmul.f32 1.0, %v10608
        %v10610 = vrcp.pop %v10485
        %v10611 = vmul.f32 1.0, %v10610
        %v10612 = vrcp.pop %v10486
        %v10613 = vmul.f32 1.0, %v10612
        %v10614 = vrcp.pop %v10487
        %v10615 = vmul.f32 1.0, %v10614
        %10617 = vset.pattern.permute.xlu0 0
        %10618 = vperm.xlu0 %10617, %v10489
        %v10619 = vpop.permute.xlu0 %10618
        %10622 = vset.pattern.permute.xlu0 0
        %10623 = vperm.xlu0 %10622, %v10491
        %v10624 = vpop.permute.xlu0 %10623
        %10627 = vset.pattern.permute.xlu0 0
        %10628 = vperm.xlu0 %10627, %v10493
        %v10629 = vpop.permute.xlu0 %10628
        %10632 = vset.pattern.permute.xlu0 0
        %10633 = vperm.xlu0 %10632, %v10495
        %v10634 = vpop.permute.xlu0 %10633
        %10637 = vset.pattern.permute.xlu0 0
        %10638 = vperm.xlu0 %10637, %v10497
        %v10639 = vpop.permute.xlu0 %10638
        %10642 = vset.pattern.permute.xlu0 0
        %10643 = vperm.xlu0 %10642, %v10499
        %v10644 = vpop.permute.xlu0 %10643
        %10647 = vset.pattern.permute.xlu0 0
        %10648 = vperm.xlu0 %10647, %v10501
        %v10649 = vpop.permute.xlu0 %10648
        %10652 = vset.pattern.permute.xlu0 0
        %10653 = vperm.xlu0 %10652, %v10503
        %v10654 = vpop.permute.xlu0 %10653
        %10657 = vset.pattern.permute.xlu0 0
        %10658 = vperm.xlu0 %10657, %v10505
        %v10659 = vpop.permute.xlu0 %10658
        %10662 = vset.pattern.permute.xlu0 0
        %10663 = vperm.xlu0 %10662, %v10507
        %v10664 = vpop.permute.xlu0 %10663
        %10667 = vset.pattern.permute.xlu0 0
        %10668 = vperm.xlu0 %10667, %v10509
        %v10669 = vpop.permute.xlu0 %10668
        %10672 = vset.pattern.permute.xlu0 0
        %10673 = vperm.xlu0 %10672, %v10511
        %v10674 = vpop.permute.xlu0 %10673
        %10677 = vset.pattern.permute.xlu0 0
        %10678 = vperm.xlu0 %10677, %v10513
        %v10679 = vpop.permute.xlu0 %10678
        %10682 = vset.pattern.permute.xlu0 0
        %10683 = vperm.xlu0 %10682, %v10515
        %v10684 = vpop.permute.xlu0 %10683
        %10687 = vset.pattern.permute.xlu0 0
        %10688 = vperm.xlu0 %10687, %v10517
        %v10689 = vpop.permute.xlu0 %10688
        %10692 = vset.pattern.permute.xlu0 0
        %10693 = vperm.xlu0 %10692, %v10519
        %v10694 = vpop.permute.xlu0 %10693
        %10697 = vset.pattern.permute.xlu0 0
        %10698 = vperm.xlu0 %10697, %v10521
        %v10699 = vpop.permute.xlu0 %10698
        %10702 = vset.pattern.permute.xlu0 0
        %10703 = vperm.xlu0 %10702, %v10523
        %v10704 = vpop.permute.xlu0 %10703
        %10707 = vset.pattern.permute.xlu0 0
        %10708 = vperm.xlu0 %10707, %v10525
        %v10709 = vpop.permute.xlu0 %10708
        %10712 = vset.pattern.permute.xlu0 0
        %10713 = vperm.xlu0 %10712, %v10527
        %v10714 = vpop.permute.xlu0 %10713
        %10717 = vset.pattern.permute.xlu0 0
        %10718 = vperm.xlu0 %10717, %v10529
        %v10719 = vpop.permute.xlu0 %10718
        %10722 = vset.pattern.permute.xlu0 0
        %10723 = vperm.xlu0 %10722, %v10531
        %v10724 = vpop.permute.xlu0 %10723
        %10727 = vset.pattern.permute.xlu0 0
        %10728 = vperm.xlu0 %10727, %v10533
        %v10729 = vpop.permute.xlu0 %10728
        %10732 = vset.pattern.permute.xlu0 0
        %10733 = vperm.xlu0 %10732, %v10535
        %v10734 = vpop.permute.xlu0 %10733
        %10737 = vset.pattern.permute.xlu0 0
        %10738 = vperm.xlu0 %10737, %v10537
        %v10739 = vpop.permute.xlu0 %10738
        %10742 = vset.pattern.permute.xlu0 0
        %10743 = vperm.xlu0 %10742, %v10539
        %v10744 = vpop.permute.xlu0 %10743
        %10747 = vset.pattern.permute.xlu0 0
        %10748 = vperm.xlu0 %10747, %v10541
        %v10749 = vpop.permute.xlu0 %10748
        %10752 = vset.pattern.permute.xlu0 0
        %10753 = vperm.xlu0 %10752, %v10543
        %v10754 = vpop.permute.xlu0 %10753
        %10757 = vset.pattern.permute.xlu0 0
        %10758 = vperm.xlu0 %10757, %v10545
        %v10759 = vpop.permute.xlu0 %10758
        %10762 = vset.pattern.permute.xlu0 0
        %10763 = vperm.xlu0 %10762, %v10547
        %v10764 = vpop.permute.xlu0 %10763
        %10767 = vset.pattern.permute.xlu0 0
        %10768 = vperm.xlu0 %10767, %v10549
        %v10769 = vpop.permute.xlu0 %10768
        %10772 = vset.pattern.permute.xlu0 0
        %10773 = vperm.xlu0 %10772, %v10551
        %v10774 = vpop.permute.xlu0 %10773
        %10777 = vset.pattern.permute.xlu0 0
        %10778 = vperm.xlu0 %10777, %v10553
        %v10779 = vpop.permute.xlu0 %10778
        %10782 = vset.pattern.permute.xlu0 0
        %10783 = vperm.xlu0 %10782, %v10555
        %v10784 = vpop.permute.xlu0 %10783
        %10787 = vset.pattern.permute.xlu0 0
        %10788 = vperm.xlu0 %10787, %v10557
        %v10789 = vpop.permute.xlu0 %10788
        %10792 = vset.pattern.permute.xlu0 0
        %10793 = vperm.xlu0 %10792, %v10559
        %v10794 = vpop.permute.xlu0 %10793
        %10797 = vset.pattern.permute.xlu0 0
        %10798 = vperm.xlu0 %10797, %v10561
        %v10799 = vpop.permute.xlu0 %10798
        %10802 = vset.pattern.permute.xlu0 0
        %10803 = vperm.xlu0 %10802, %v10563
        %v10804 = vpop.permute.xlu0 %10803
        %10807 = vset.pattern.permute.xlu0 0
        %10808 = vperm.xlu0 %10807, %v10565
        %v10809 = vpop.permute.xlu0 %10808
        %10812 = vset.pattern.permute.xlu0 0
        %10813 = vperm.xlu0 %10812, %v10567
        %v10814 = vpop.permute.xlu0 %10813
        %10817 = vset.pattern.permute.xlu0 0
        %10818 = vperm.xlu0 %10817, %v10569
        %v10819 = vpop.permute.xlu0 %10818
        %10822 = vset.pattern.permute.xlu0 0
        %10823 = vperm.xlu0 %10822, %v10571
        %v10824 = vpop.permute.xlu0 %10823
        %10827 = vset.pattern.permute.xlu0 0
        %10828 = vperm.xlu0 %10827, %v10573
        %v10829 = vpop.permute.xlu0 %10828
        %10832 = vset.pattern.permute.xlu0 0
        %10833 = vperm.xlu0 %10832, %v10575
        %v10834 = vpop.permute.xlu0 %10833
        %10837 = vset.pattern.permute.xlu0 0
        %10838 = vperm.xlu0 %10837, %v10577
        %v10839 = vpop.permute.xlu0 %10838
        %10842 = vset.pattern.permute.xlu0 0
        %10843 = vperm.xlu0 %10842, %v10579
        %v10844 = vpop.permute.xlu0 %10843
        %10847 = vset.pattern.permute.xlu0 0
        %10848 = vperm.xlu0 %10847, %v10581
        %v10849 = vpop.permute.xlu0 %10848
        %10852 = vset.pattern.permute.xlu0 0
        %10853 = vperm.xlu0 %10852, %v10583
        %v10854 = vpop.permute.xlu0 %10853
        %10857 = vset.pattern.permute.xlu0 0
        %10858 = vperm.xlu0 %10857, %v10585
        %v10859 = vpop.permute.xlu0 %10858
        %10862 = vset.pattern.permute.xlu0 0
        %10863 = vperm.xlu0 %10862, %v10587
        %v10864 = vpop.permute.xlu0 %10863
        %10867 = vset.pattern.permute.xlu0 0
        %10868 = vperm.xlu0 %10867, %v10589
        %v10869 = vpop.permute.xlu0 %10868
        %10872 = vset.pattern.permute.xlu0 0
        %10873 = vperm.xlu0 %10872, %v10591
        %v10874 = vpop.permute.xlu0 %10873
        %10877 = vset.pattern.permute.xlu0 0
        %10878 = vperm.xlu0 %10877, %v10593
        %v10879 = vpop.permute.xlu0 %10878
        %10882 = vset.pattern.permute.xlu0 0
        %10883 = vperm.xlu0 %10882, %v10595
        %v10884 = vpop.permute.xlu0 %10883
        %10887 = vset.pattern.permute.xlu0 0
        %10888 = vperm.xlu0 %10887, %v10597
        %v10889 = vpop.permute.xlu0 %10888
        %10892 = vset.pattern.permute.xlu0 0
        %10893 = vperm.xlu0 %10892, %v10599
        %v10894 = vpop.permute.xlu0 %10893
        %10897 = vset.pattern.permute.xlu0 0
        %10898 = vperm.xlu0 %10897, %v10601
        %v10899 = vpop.permute.xlu0 %10898
        %10902 = vset.pattern.permute.xlu0 0
        %10903 = vperm.xlu0 %10902, %v10603
        %v10904 = vpop.permute.xlu0 %10903
        %10907 = vset.pattern.permute.xlu0 0
        %10908 = vperm.xlu0 %10907, %v10605
        %v10909 = vpop.permute.xlu0 %10908
        %10912 = vset.pattern.permute.xlu0 0
        %10913 = vperm.xlu0 %10912, %v10607
        %v10914 = vpop.permute.xlu0 %10913
        %10917 = vset.pattern.permute.xlu0 0
        %10918 = vperm.xlu0 %10917, %v10609
        %v10919 = vpop.permute.xlu0 %10918
        %10922 = vset.pattern.permute.xlu0 0
        %10923 = vperm.xlu0 %10922, %v10611
        %v10924 = vpop.permute.xlu0 %10923
        %10927 = vset.pattern.permute.xlu0 0
        %10928 = vperm.xlu0 %10927, %v10613
        %v10929 = vpop.permute.xlu0 %10928
        %10932 = vset.pattern.permute.xlu0 0
        %10933 = vperm.xlu0 %10932, %v10615
        %v10934 = vpop.permute.xlu0 %10933
        %v10936 = vmul.f32 %v9901, %v10619
        %v10937 = vmul.f32 %v9902, %v10624
        %v10938 = vmul.f32 %v9903, %v10629
        %v10939 = vmul.f32 %v9904, %v10634
        %v10940 = vmul.f32 %v9905, %v10639
        %v10941 = vmul.f32 %v9906, %v10644
        %v10942 = vmul.f32 %v9907, %v10649
        %v10943 = vmul.f32 %v9908, %v10654
        %v10944 = vmul.f32 %v9909, %v10659
        %v10945 = vmul.f32 %v9910, %v10664
        %v10946 = vmul.f32 %v9911, %v10669
        %v10947 = vmul.f32 %v9912, %v10674
        %v10948 = vmul.f32 %v9913, %v10679
        %v10949 = vmul.f32 %v9914, %v10684
        %v10950 = vmul.f32 %v9915, %v10689
        %v10951 = vmul.f32 %v9916, %v10694
        %v10952 = vmul.f32 %v9917, %v10699
        %v10953 = vmul.f32 %v9918, %v10704
        %v10954 = vmul.f32 %v9919, %v10709
        %v10955 = vmul.f32 %v9920, %v10714
        %v10956 = vmul.f32 %v9921, %v10719
        %v10957 = vmul.f32 %v9922, %v10724
        %v10958 = vmul.f32 %v9923, %v10729
        %v10959 = vmul.f32 %v9924, %v10734
        %v10960 = vmul.f32 %v9925, %v10739
        %v10961 = vmul.f32 %v9926, %v10744
        %v10962 = vmul.f32 %v9927, %v10749
        %v10963 = vmul.f32 %v9928, %v10754
        %v10964 = vmul.f32 %v9929, %v10759
        %v10965 = vmul.f32 %v9930, %v10764
        %v10966 = vmul.f32 %v9931, %v10769
        %v10967 = vmul.f32 %v9932, %v10774
        %v10968 = vmul.f32 %v9933, %v10779
        %v10969 = vmul.f32 %v9934, %v10784
        %v10970 = vmul.f32 %v9935, %v10789
        %v10971 = vmul.f32 %v9936, %v10794
        %v10972 = vmul.f32 %v9937, %v10799
        %v10973 = vmul.f32 %v9938, %v10804
        %v10974 = vmul.f32 %v9939, %v10809
        %v10975 = vmul.f32 %v9940, %v10814
        %v10976 = vmul.f32 %v9941, %v10819
        %v10977 = vmul.f32 %v9942, %v10824
        %v10978 = vmul.f32 %v9943, %v10829
        %v10979 = vmul.f32 %v9944, %v10834
        %v10980 = vmul.f32 %v9945, %v10839
        %v10981 = vmul.f32 %v9946, %v10844
        %v10982 = vmul.f32 %v9947, %v10849
        %v10983 = vmul.f32 %v9948, %v10854
        %v10984 = vmul.f32 %v9949, %v10859
        %v10985 = vmul.f32 %v9950, %v10864
        %v10986 = vmul.f32 %v9951, %v10869
        %v10987 = vmul.f32 %v9952, %v10874
        %v10988 = vmul.f32 %v9953, %v10879
        %v10989 = vmul.f32 %v9954, %v10884
        %v10990 = vmul.f32 %v9955, %v10889
        %v10991 = vmul.f32 %v9956, %v10894
        %v10992 = vmul.f32 %v9957, %v10899
        %v10993 = vmul.f32 %v9958, %v10904
        %v10994 = vmul.f32 %v9959, %v10909
        %v10995 = vmul.f32 %v9960, %v10914
        %v10996 = vmul.f32 %v9961, %v10919
        %v10997 = vmul.f32 %v9962, %v10924
        %v10998 = vmul.f32 %v9963, %v10929
        %v10999 = vmul.f32 %v9964, %v10934
        %11000 = vst [vmem:[%s429] sm:$0xff] %v10936
        %11001 = vst [vmem:[%s429 + $0x8] sm:$0xff] %v10937
        %11002 = vst [vmem:[%s429 + $0x10] sm:$0xff] %v10938
        %11003 = vst [vmem:[%s429 + $0x18] sm:$0xff] %v10939
        %11004 = vst [vmem:[%s429 + $0x20] sm:$0xff] %v10940
        %11005 = vst [vmem:[%s429 + $0x28] sm:$0xff] %v10941
        %11006 = vst [vmem:[%s429 + $0x30] sm:$0xff] %v10942
        %11007 = vst [vmem:[%s429 + $0x38] sm:$0xff] %v10943
        %11008 = vst [vmem:[%s429 + $0x40] sm:$0xff] %v10944
        %11009 = vst [vmem:[%s429 + $0x48] sm:$0xff] %v10945
        %11010 = vst [vmem:[%s429 + $0x50] sm:$0xff] %v10946
        %11011 = vst [vmem:[%s429 + $0x58] sm:$0xff] %v10947
        %11012 = vst [vmem:[%s429 + $0x60] sm:$0xff] %v10948
        %11013 = vst [vmem:[%s429 + $0x68] sm:$0xff] %v10949
        %11014 = vst [vmem:[%s429 + $0x70] sm:$0xff] %v10950
        %11015 = vst [vmem:[%s429 + $0x78] sm:$0xff] %v10951
        %11016 = vst [vmem:[%s429 + $0x80] sm:$0xff] %v10952
        %11017 = vst [vmem:[%s429 + $0x88] sm:$0xff] %v10953
        %11018 = vst [vmem:[%s429 + $0x90] sm:$0xff] %v10954
        %11019 = vst [vmem:[%s429 + $0x98] sm:$0xff] %v10955
        %11020 = vst [vmem:[%s429 + $0xa0] sm:$0xff] %v10956
        %11021 = vst [vmem:[%s429 + $0xa8] sm:$0xff] %v10957
        %11022 = vst [vmem:[%s429 + $0xb0] sm:$0xff] %v10958
        %11023 = vst [vmem:[%s429 + $0xb8] sm:$0xff] %v10959
        %11024 = vst [vmem:[%s429 + $0xc0] sm:$0xff] %v10960
        %11025 = vst [vmem:[%s429 + $0xc8] sm:$0xff] %v10961
        %11026 = vst [vmem:[%s429 + $0xd0] sm:$0xff] %v10962
        %11027 = vst [vmem:[%s429 + $0xd8] sm:$0xff] %v10963
        %11028 = vst [vmem:[%s429 + $0xe0] sm:$0xff] %v10964
        %11029 = vst [vmem:[%s429 + $0xe8] sm:$0xff] %v10965
        %11030 = vst [vmem:[%s429 + $0xf0] sm:$0xff] %v10966
        %11031 = vst [vmem:[%s429 + $0xf8] sm:$0xff] %v10967
        %11032 = vst [vmem:[%s429 + $0x100] sm:$0xff] %v10968
        %11033 = vst [vmem:[%s429 + $0x108] sm:$0xff] %v10969
        %11034 = vst [vmem:[%s429 + $0x110] sm:$0xff] %v10970
        %11035 = vst [vmem:[%s429 + $0x118] sm:$0xff] %v10971
        %11036 = vst [vmem:[%s429 + $0x120] sm:$0xff] %v10972
        %11037 = vst [vmem:[%s429 + $0x128] sm:$0xff] %v10973
        %11038 = vst [vmem:[%s429 + $0x130] sm:$0xff] %v10974
        %11039 = vst [vmem:[%s429 + $0x138] sm:$0xff] %v10975
        %11040 = vst [vmem:[%s429 + $0x140] sm:$0xff] %v10976
        %11041 = vst [vmem:[%s429 + $0x148] sm:$0xff] %v10977
        %11042 = vst [vmem:[%s429 + $0x150] sm:$0xff] %v10978
        %11043 = vst [vmem:[%s429 + $0x158] sm:$0xff] %v10979
        %11044 = vst [vmem:[%s429 + $0x160] sm:$0xff] %v10980
        %11045 = vst [vmem:[%s429 + $0x168] sm:$0xff] %v10981
        %11046 = vst [vmem:[%s429 + $0x170] sm:$0xff] %v10982
        %11047 = vst [vmem:[%s429 + $0x178] sm:$0xff] %v10983
        %11048 = vst [vmem:[%s429 + $0x180] sm:$0xff] %v10984
        %11049 = vst [vmem:[%s429 + $0x188] sm:$0xff] %v10985
        %11050 = vst [vmem:[%s429 + $0x190] sm:$0xff] %v10986
        %11051 = vst [vmem:[%s429 + $0x198] sm:$0xff] %v10987
        %11052 = vst [vmem:[%s429 + $0x1a0] sm:$0xff] %v10988
        %11053 = vst [vmem:[%s429 + $0x1a8] sm:$0xff] %v10989
        %11054 = vst [vmem:[%s429 + $0x1b0] sm:$0xff] %v10990
        %11055 = vst [vmem:[%s429 + $0x1b8] sm:$0xff] %v10991
        %11056 = vst [vmem:[%s429 + $0x1c0] sm:$0xff] %v10992
        %11057 = vst [vmem:[%s429 + $0x1c8] sm:$0xff] %v10993
        %11058 = vst [vmem:[%s429 + $0x1d0] sm:$0xff] %v10994
        %11059 = vst [vmem:[%s429 + $0x1d8] sm:$0xff] %v10995
        %11060 = vst [vmem:[%s429 + $0x1e0] sm:$0xff] %v10996
        %11061 = vst [vmem:[%s429 + $0x1e8] sm:$0xff] %v10997
        %11062 = vst [vmem:[%s429 + $0x1f0] sm:$0xff] %v10998
        %11063 = vst [vmem:[%s429 + $0x1f8] sm:$0xff] %v10999
        %11064 = vst [vmem:[%s436] sm:$0xff] %v7401
        %11065 = vst [vmem:[%s436 + $0x8] sm:$0xff] %v7406
        %11066 = vst [vmem:[%s436 + $0x10] sm:$0xff] %v7411
        %11067 = vst [vmem:[%s436 + $0x18] sm:$0xff] %v7416
        %11068 = vst [vmem:[%s436 + $0x20] sm:$0xff] %v7421
        %11069 = vst [vmem:[%s436 + $0x28] sm:$0xff] %v7426
        %11070 = vst [vmem:[%s436 + $0x30] sm:$0xff] %v7431
        %11071 = vst [vmem:[%s436 + $0x38] sm:$0xff] %v7436
        %11072 = vst [vmem:[%s436 + $0x40] sm:$0xff] %v7441
        %11073 = vst [vmem:[%s436 + $0x48] sm:$0xff] %v7446
        %11074 = vst [vmem:[%s436 + $0x50] sm:$0xff] %v7451
        %11075 = vst [vmem:[%s436 + $0x58] sm:$0xff] %v7456
        %11076 = vst [vmem:[%s436 + $0x60] sm:$0xff] %v7461
        %11077 = vst [vmem:[%s436 + $0x68] sm:$0xff] %v7466
        %11078 = vst [vmem:[%s436 + $0x70] sm:$0xff] %v7471
        %11079 = vst [vmem:[%s436 + $0x78] sm:$0xff] %v7476
        %11080 = vst [vmem:[%s436 + $0x80] sm:$0xff] %v7481
        %11081 = vst [vmem:[%s436 + $0x88] sm:$0xff] %v7486
        %11082 = vst [vmem:[%s436 + $0x90] sm:$0xff] %v7491
        %11083 = vst [vmem:[%s436 + $0x98] sm:$0xff] %v7496
        %11084 = vst [vmem:[%s436 + $0xa0] sm:$0xff] %v7501
        %11085 = vst [vmem:[%s436 + $0xa8] sm:$0xff] %v7506
        %11086 = vst [vmem:[%s436 + $0xb0] sm:$0xff] %v7511
        %11087 = vst [vmem:[%s436 + $0xb8] sm:$0xff] %v7516
        %11088 = vst [vmem:[%s436 + $0xc0] sm:$0xff] %v7521
        %11089 = vst [vmem:[%s436 + $0xc8] sm:$0xff] %v7526
        %11090 = vst [vmem:[%s436 + $0xd0] sm:$0xff] %v7531
        %11091 = vst [vmem:[%s436 + $0xd8] sm:$0xff] %v7536
        %11092 = vst [vmem:[%s436 + $0xe0] sm:$0xff] %v7541
        %11093 = vst [vmem:[%s436 + $0xe8] sm:$0xff] %v7546
        %11094 = vst [vmem:[%s436 + $0xf0] sm:$0xff] %v7551
        %11095 = vst [vmem:[%s436 + $0xf8] sm:$0xff] %v7556
        %11096 = vst [vmem:[%s436 + $0x100] sm:$0xff] %v7561
        %11097 = vst [vmem:[%s436 + $0x108] sm:$0xff] %v7566
        %11098 = vst [vmem:[%s436 + $0x110] sm:$0xff] %v7571
        %11099 = vst [vmem:[%s436 + $0x118] sm:$0xff] %v7576
        %11100 = vst [vmem:[%s436 + $0x120] sm:$0xff] %v7581
        %11101 = vst [vmem:[%s436 + $0x128] sm:$0xff] %v7586
        %11102 = vst [vmem:[%s436 + $0x130] sm:$0xff] %v7591
        %11103 = vst [vmem:[%s436 + $0x138] sm:$0xff] %v7596
        %11104 = vst [vmem:[%s436 + $0x140] sm:$0xff] %v7601
        %11105 = vst [vmem:[%s436 + $0x148] sm:$0xff] %v7606
        %11106 = vst [vmem:[%s436 + $0x150] sm:$0xff] %v7611
        %11107 = vst [vmem:[%s436 + $0x158] sm:$0xff] %v7616
        %11108 = vst [vmem:[%s436 + $0x160] sm:$0xff] %v7621
        %11109 = vst [vmem:[%s436 + $0x168] sm:$0xff] %v7626
        %11110 = vst [vmem:[%s436 + $0x170] sm:$0xff] %v7631
        %11111 = vst [vmem:[%s436 + $0x178] sm:$0xff] %v7636
        %11112 = vst [vmem:[%s436 + $0x180] sm:$0xff] %v7641
        %11113 = vst [vmem:[%s436 + $0x188] sm:$0xff] %v7646
        %11114 = vst [vmem:[%s436 + $0x190] sm:$0xff] %v7651
        %11115 = vst [vmem:[%s436 + $0x198] sm:$0xff] %v7656
        %11116 = vst [vmem:[%s436 + $0x1a0] sm:$0xff] %v7661
        %11117 = vst [vmem:[%s436 + $0x1a8] sm:$0xff] %v7666
        %11118 = vst [vmem:[%s436 + $0x1b0] sm:$0xff] %v7671
        %11119 = vst [vmem:[%s436 + $0x1b8] sm:$0xff] %v7676
        %11120 = vst [vmem:[%s436 + $0x1c0] sm:$0xff] %v7681
        %11121 = vst [vmem:[%s436 + $0x1c8] sm:$0xff] %v7686
        %11122 = vst [vmem:[%s436 + $0x1d0] sm:$0xff] %v7691
        %11123 = vst [vmem:[%s436 + $0x1d8] sm:$0xff] %v7696
        %11124 = vst [vmem:[%s436 + $0x1e0] sm:$0xff] %v7701
        %11125 = vst [vmem:[%s436 + $0x1e8] sm:$0xff] %v7706
        %11126 = vst [vmem:[%s436 + $0x1f0] sm:$0xff] %v7711
        %11127 = vst [vmem:[%s436 + $0x1f8] sm:$0xff] %v7716
        %11128 = vst [vmem:[%s443] sm:$0xff] %v8323
        %11129 = vst [vmem:[%s443 + $0x8] sm:$0xff] %v8328
        %11130 = vst [vmem:[%s443 + $0x10] sm:$0xff] %v8333
        %11131 = vst [vmem:[%s443 + $0x18] sm:$0xff] %v8338
        %11132 = vst [vmem:[%s443 + $0x20] sm:$0xff] %v8343
        %11133 = vst [vmem:[%s443 + $0x28] sm:$0xff] %v8348
        %11134 = vst [vmem:[%s443 + $0x30] sm:$0xff] %v8353
        %11135 = vst [vmem:[%s443 + $0x38] sm:$0xff] %v8358
        %11136 = vst [vmem:[%s443 + $0x40] sm:$0xff] %v8363
        %11137 = vst [vmem:[%s443 + $0x48] sm:$0xff] %v8368
        %11138 = vst [vmem:[%s443 + $0x50] sm:$0xff] %v8373
        %11139 = vst [vmem:[%s443 + $0x58] sm:$0xff] %v8378
        %11140 = vst [vmem:[%s443 + $0x60] sm:$0xff] %v8383
        %11141 = vst [vmem:[%s443 + $0x68] sm:$0xff] %v8388
        %11142 = vst [vmem:[%s443 + $0x70] sm:$0xff] %v8393
        %11143 = vst [vmem:[%s443 + $0x78] sm:$0xff] %v8398
        %11144 = vst [vmem:[%s443 + $0x80] sm:$0xff] %v8403
        %11145 = vst [vmem:[%s443 + $0x88] sm:$0xff] %v8408
        %11146 = vst [vmem:[%s443 + $0x90] sm:$0xff] %v8413
        %11147 = vst [vmem:[%s443 + $0x98] sm:$0xff] %v8418
        %11148 = vst [vmem:[%s443 + $0xa0] sm:$0xff] %v8423
        %11149 = vst [vmem:[%s443 + $0xa8] sm:$0xff] %v8428
        %11150 = vst [vmem:[%s443 + $0xb0] sm:$0xff] %v8433
        %11151 = vst [vmem:[%s443 + $0xb8] sm:$0xff] %v8438
        %11152 = vst [vmem:[%s443 + $0xc0] sm:$0xff] %v8443
        %11153 = vst [vmem:[%s443 + $0xc8] sm:$0xff] %v8448
        %11154 = vst [vmem:[%s443 + $0xd0] sm:$0xff] %v8453
        %11155 = vst [vmem:[%s443 + $0xd8] sm:$0xff] %v8458
        %11156 = vst [vmem:[%s443 + $0xe0] sm:$0xff] %v8463
        %11157 = vst [vmem:[%s443 + $0xe8] sm:$0xff] %v8468
        %11158 = vst [vmem:[%s443 + $0xf0] sm:$0xff] %v8473
        %11159 = vst [vmem:[%s443 + $0xf8] sm:$0xff] %v8478
        %11160 = vst [vmem:[%s443 + $0x100] sm:$0xff] %v8483
        %11161 = vst [vmem:[%s443 + $0x108] sm:$0xff] %v8488
        %11162 = vst [vmem:[%s443 + $0x110] sm:$0xff] %v8493
        %11163 = vst [vmem:[%s443 + $0x118] sm:$0xff] %v8498
        %11164 = vst [vmem:[%s443 + $0x120] sm:$0xff] %v8503
        %11165 = vst [vmem:[%s443 + $0x128] sm:$0xff] %v8508
        %11166 = vst [vmem:[%s443 + $0x130] sm:$0xff] %v8513
        %11167 = vst [vmem:[%s443 + $0x138] sm:$0xff] %v8518
        %11168 = vst [vmem:[%s443 + $0x140] sm:$0xff] %v8523
        %11169 = vst [vmem:[%s443 + $0x148] sm:$0xff] %v8528
        %11170 = vst [vmem:[%s443 + $0x150] sm:$0xff] %v8533
        %11171 = vst [vmem:[%s443 + $0x158] sm:$0xff] %v8538
        %11172 = vst [vmem:[%s443 + $0x160] sm:$0xff] %v8543
        %11173 = vst [vmem:[%s443 + $0x168] sm:$0xff] %v8548
        %11174 = vst [vmem:[%s443 + $0x170] sm:$0xff] %v8553
        %11175 = vst [vmem:[%s443 + $0x178] sm:$0xff] %v8558
        %11176 = vst [vmem:[%s443 + $0x180] sm:$0xff] %v8563
        %11177 = vst [vmem:[%s443 + $0x188] sm:$0xff] %v8568
        %11178 = vst [vmem:[%s443 + $0x190] sm:$0xff] %v8573
        %11179 = vst [vmem:[%s443 + $0x198] sm:$0xff] %v8578
        %11180 = vst [vmem:[%s443 + $0x1a0] sm:$0xff] %v8583
        %11181 = vst [vmem:[%s443 + $0x1a8] sm:$0xff] %v8588
        %11182 = vst [vmem:[%s443 + $0x1b0] sm:$0xff] %v8593
        %11183 = vst [vmem:[%s443 + $0x1b8] sm:$0xff] %v8598
        %11184 = vst [vmem:[%s443 + $0x1c0] sm:$0xff] %v8603
        %11185 = vst [vmem:[%s443 + $0x1c8] sm:$0xff] %v8608
        %11186 = vst [vmem:[%s443 + $0x1d0] sm:$0xff] %v8613
        %11187 = vst [vmem:[%s443 + $0x1d8] sm:$0xff] %v8618
        %11188 = vst [vmem:[%s443 + $0x1e0] sm:$0xff] %v8623
        %11189 = vst [vmem:[%s443 + $0x1e8] sm:$0xff] %v8628
        %11190 = vst [vmem:[%s443 + $0x1f0] sm:$0xff] %v8633
        %11191 = vst [vmem:[%s443 + $0x1f8] sm:$0xff] %v8638
        %s11192 = sand.u32 %s239, 1
        %s11193 = scalar_lea.sflag [#allocation4], %s11192
        %s11194 = sand.u32 %s239, 1
        %s11195 = smul.addr %s11194, 512
        %s11196 = scalar_lea.vmem [#allocation3], %s11195
        %s11197 = sand.u32 %s32, 1
        %s11198 = scalar_lea.sflag [#allocation6], %s11197
        %s11199 = sand.u32 %s265, 1
        %s11200 = smul.addr %s11199, 512
        %s11201 = scalar_lea.vmem [#allocation5], %s11200
        %s11202 = sand.u32 %s32, 1
        %s11203 = scalar_lea.sflag [#allocation6], %s11202
        %s11204 = sand.u32 %s291, 1
        %s11205 = smul.addr %s11204, 512
        %s11206 = scalar_lea.vmem [#allocation7], %s11205
        %s11207 = smul.u32 64, %s32
        %p11208 = scmp.lt.s32.totalorder %s11207, 255
        %s11209 = scalar_select %p11208, %s11207, 255
        %s11210 = smul.addr %s11209, 8
        %s11211 = scalar_lea.vmem %s12, %s11210
        // Predicated region
        $region57: #{ch_pos_gcl_forward.1} parent=55 // pred_check
          %p11212 = pneg %p249
        $region58: #{ch_pos_gcl_forward.1} parent=55 // pred_check_branch
          %11214 = sbr.rel (%p11212) target = $region60
        $region59: #{ch_pos_gcl_forward.1} parent=55 // pred_region
          %s11215 = smul.u32 64, %s32
          %s11217 = ssub.s32 8192, 8192
          %11218 = vsyncadd %s11193, %s11217
          %s11219 = smul.addr %s11215, 128
          %s11220 = scalar_lea.hbm %s9, %s11219
          %s11221 = sshll.u32 %s11196, 4
          %s11222 = int_to_ptr.vmem [resolvable:$true] %s11221
          %11227 = dma.vmem_to_hbm [thread:$0]  %s11222, 8192, %s11220, %s11193, 128, 128, 8
        $region60: #{ch_pos_gcl_forward.1} parent=55 // pred_fallthru
          _
        // Predicated region
        $region61: #{ch_pos_gcl_forward.1} parent=55 // pred_check
          %p11228 = pneg %p275
        $region62: #{ch_pos_gcl_forward.1} parent=55 // pred_check_branch
          %11230 = sbr.rel (%p11228) target = $region64
        $region63: #{ch_pos_gcl_forward.1} parent=55 // pred_region
          %s11231 = smul.u32 64, %s32
          %s11233 = ssub.s32 8192, 8192
          %11234 = vsyncadd %s11198, %s11233
          %s11235 = smul.addr %s11231, 128
          %s11236 = scalar_lea.hbm %s10, %s11235
          %s11237 = sshll.u32 %s11201, 4
          %s11238 = int_to_ptr.vmem [resolvable:$true] %s11237
          %11243 = dma.vmem_to_hbm [thread:$0]  %s11238, 8192, %s11236, %s11198, 128, 128, 8
        $region64: #{ch_pos_gcl_forward.1} parent=55 // pred_fallthru
          _
        // Predicated region
        $region65: #{ch_pos_gcl_forward.1} parent=55 // pred_check
          %p11244 = pneg %p301
        $region66: #{ch_pos_gcl_forward.1} parent=55 // pred_check_branch
          %11246 = sbr.rel (%p11244) target = $region68
        $region67: #{ch_pos_gcl_forward.1} parent=55 // pred_region
          %s11247 = smul.u32 64, %s32
          %s11249 = ssub.s32 8192, 8192
          %11250 = vsyncadd %s11203, %s11249
          %s11251 = smul.addr %s11247, 128
          %s11252 = scalar_lea.hbm %s11, %s11251
          %s11253 = sshll.u32 %s11206, 4
          %s11254 = int_to_ptr.vmem [resolvable:$true] %s11253
          %11259 = dma.vmem_to_hbm [thread:$0]  %s11254, 8192, %s11252, %s11203, 128, 128, 8
        $region68: #{ch_pos_gcl_forward.1} parent=55 // pred_fallthru
          _
        // Predicated region
        $region69: #{ch_pos_gcl_forward.1} parent=55 // pred_check
          %p11260 = pneg %p327
        $region70: #{ch_pos_gcl_forward.1} parent=55 // pred_check_branch
          %11262 = sbr.rel (%p11260) target = $region72
        $region71: #{ch_pos_gcl_forward.1} parent=55 // pred_region
          %s11263 = smul.u32 64, %s32
        $region72: #{ch_pos_gcl_forward.1} parent=55 // pred_fallthru
          _
      $region56: #{ch_pos_gcl_forward.1} parent=5 // pred_fallthru
        _
      %p11264 = scmp.le.s32.totalorder 2, %s27
      // Predicated region
      $region73: #{ch_pos_gcl_forward.1} parent=5 // pred_check
        %p11265 = pneg %p11264
      $region74: #{ch_pos_gcl_forward.1} parent=5 // pred_check_branch
        %11267 = sbr.rel (%p11265) target = $region76
      $region75: #{ch_pos_gcl_forward.1} parent=5 // pred_region
        %s11268 = ssub.s32 %s27, 2
        // Predicated region
        $region77: #{ch_pos_gcl_forward.1} parent=75 // pred_check
          %p11269 = pneg %p255
        $region78: #{ch_pos_gcl_forward.1} parent=75 // pred_check_branch
          %11271 = sbr.rel (%p11269) target = $region80
        $region79: #{ch_pos_gcl_forward.1} parent=75 // pred_region
          %s11272 = sand.u32 %s240, 1
          %s11273 = scalar_lea.sflag [#allocation4], %s11272
          %s11274 = sand.u32 %s240, 1
          %s11275 = smul.addr %s11274, 512
          %s11276 = scalar_lea.vmem [#allocation3], %s11275
          %11277 = dma.done %s11273, 8192
        $region80: #{ch_pos_gcl_forward.1} parent=75 // pred_fallthru
          _
        // Predicated region
        $region81: #{ch_pos_gcl_forward.1} parent=75 // pred_check
          %p11278 = pneg %p281
        $region82: #{ch_pos_gcl_forward.1} parent=75 // pred_check_branch
          %11280 = sbr.rel (%p11278) target = $region84
        $region83: #{ch_pos_gcl_forward.1} parent=75 // pred_region
          %s11281 = sand.u32 %s33, 1
          %s11282 = scalar_lea.sflag [#allocation6], %s11281
          %s11283 = sand.u32 %s266, 1
          %s11284 = smul.addr %s11283, 512
          %s11285 = scalar_lea.vmem [#allocation5], %s11284
          %11286 = dma.done %s11282, 8192
        $region84: #{ch_pos_gcl_forward.1} parent=75 // pred_fallthru
          _
        // Predicated region
        $region85: #{ch_pos_gcl_forward.1} parent=75 // pred_check
          %p11287 = pneg %p307
        $region86: #{ch_pos_gcl_forward.1} parent=75 // pred_check_branch
          %11289 = sbr.rel (%p11287) target = $region88
        $region87: #{ch_pos_gcl_forward.1} parent=75 // pred_region
          %s11290 = sand.u32 %s33, 1
          %s11291 = scalar_lea.sflag [#allocation6], %s11290
          %s11292 = sand.u32 %s292, 1
          %s11293 = smul.addr %s11292, 512
          %s11294 = scalar_lea.vmem [#allocation7], %s11293
          %11295 = dma.done %s11291, 8192
        $region88: #{ch_pos_gcl_forward.1} parent=75 // pred_fallthru
          _
        // Predicated region
        $region89: #{ch_pos_gcl_forward.1} parent=75 // pred_check
          %p11296 = pneg %p333
        $region90: #{ch_pos_gcl_forward.1} parent=75 // pred_check_branch
          %11298 = sbr.rel (%p11296) target = $region92
        $region91: #{ch_pos_gcl_forward.1} parent=75 // pred_region
          %s11299 = smul.u32 64, %s33
          %p11300 = scmp.lt.s32.totalorder %s11299, 255
          %s11301 = scalar_select %p11300, %s11299, 255
          %s11302 = smul.addr %s11301, 8
          %s11303 = scalar_lea.vmem %s12, %s11302
        $region92: #{ch_pos_gcl_forward.1} parent=75 // pred_fallthru
          _
      $region76: #{ch_pos_gcl_forward.1} parent=5 // pred_fallthru
        _
    $region6: #{ch_pos_gcl_forward.1} parent=1 // loop_footer
      %s31 = sadd.s32 1, %s27
    $region7: #{ch_pos_gcl_forward.1} parent=1 // loop_footer_branch
      %26 = sbr.rel target = $region3
    $region8: #{ch_pos_gcl_forward.1} parent=1 // loop_exit
      _
    %11304 = vsyncpa [#allocation4], 1
    %s11305 = scalar_lea.sflag [#allocation4], 1
    %11306 = vsyncpa %s11305, 1
    %11307 = vsyncpa [#allocation6], 1
    %s11308 = scalar_lea.sflag [#allocation6], 1
    %11309 = vsyncpa %s11308, 1

</llo_original>
